<compile_context>
chip_gen: v7x
topology: tpu7x:2x2x1
jax: 0.10.0
libtpu: 0.0.40
codegen_flags: <defaults>
</compile_context>

<pallas_src>
import functools

import numpy as np
import jax
import jax.numpy as jnp
from jax.experimental import pallas as pl
from jax.experimental.pallas import tpu as pltpu


def _round_up(x, m):
    return ((x + m - 1) // m) * m


def _nbytes(arrs):
    return int(sum(int(a.size) * a.dtype.itemsize for a in arrs))


def _row_bytes(arrs, rows):
    return int(sum(rows * int(a.shape[1]) * a.dtype.itemsize for a in arrs))


def _vmem_capacity_bytes():
    try:
        cap = int(pltpu.get_tpu_info().vmem_capacity_bytes)
        if cap >= (16 << 20):
            return cap
    except Exception:
        pass
    return 128 << 20


def _vmem_limit(est_bytes, vmem_cap):
    # 80% of physical VMEM as a hard ceiling (~51 MiB on v7x, 100 MiB cap on
    # 128 MiB parts), generous 2x of the static estimate otherwise.
    ceiling = min(int(vmem_cap * 4 // 5), 100 << 20)
    return int(max(32 << 20, min(ceiling, 2 * int(est_bytes))))


def _pick_gather_precision():
    """Precision.HIGHEST is only used for the one-hot gather / force-scatter
    dots.  Probe that the Pallas lowering accepts it AND reproduces f32 table
    rows exactly; otherwise fall back to default precision (looser test tol)."""
    def _probe(t_ref, oh_ref, o_ref):
        o_ref[...] = jnp.dot(oh_ref[...], t_ref[...],
                             preferred_element_type=jnp.float32,
                             precision=jax.lax.Precision.HIGHEST)
    try:
        tbl = (jnp.arange(128 * 128, dtype=jnp.float32).reshape(128, 128)
               + jnp.float32(1.0 / 3.0))
        oh = jnp.eye(128, dtype=jnp.float32)[:8]
        out = pl.pallas_call(
            _probe, out_shape=jax.ShapeDtypeStruct((8, 128), jnp.float32))(tbl, oh)
        if bool(jnp.all(out == tbl[:8])):
            return jax.lax.Precision.HIGHEST
    except Exception:  # pragma: no cover - fall back if HIGHEST is unsupported
        pass
    return None


# --------------------------------------------------------------------------
# Kernel 1: per-edge scatter pass.
#   gauss(dist) -> edge embedding -> NodeBlock message + EdgeBlock BondFFN
#   messages, scattered into lane-dense per-split node accumulators.
# --------------------------------------------------------------------------
def _edge_scatter_kernel(
    he_raw_ref, idx_ref,                              # edge-tiled streams
    tbl_ref, offs_ref,                                # resident [hn | pos] + gauss offsets
    emb_we_ref, emb_wg_ref, emb_b_ref,                # edge embedding (row-split)
    w_he_cat_ref, be1_ref, we2_ref, be2_ref,          # fused h_e proj (edge_net L1 + bond_l + bond_r)
    w_xr_cat_ref, bn1_ref, wn2_ref, bn2_ref,          # fused x_r proj (node_net L1 + node_linear_r)
    wm_ref, bm_ref,                                   # NodeBlock msg_net
    wnl_l_ref,                                        # EdgeBlock node_linear (left)
    wi1_l_ref, bi1_l_ref, wi2_l_ref, bi2_l_ref,       # BondFFN inter MLP (left)
    wi1_r_ref, bi1_r_ref, wi2_r_ref, bi2_r_ref,       # BondFFN inter MLP (right)
    he_emb_ref, comb_acc_ref, sl_acc_ref,             # outputs
    *, coeff, node_dim, edge_dim, gather_prec):
    f32 = jnp.float32
    D, Ed = node_dim, edge_dim

    @pl.when(pl.program_id(1) == 0)
    def _init():
        comb_acc_ref[...] = jnp.zeros_like(comb_acc_ref)
        sl_acc_ref[...] = jnp.zeros_like(sl_acc_ref)

    def dot(a, b):          # default-precision MXU, f32 accumulate
        return jnp.dot(a, b, preferred_element_type=f32)

    def dot_hi(a, b):       # exact one-hot gather contraction
        return jnp.dot(a, b, preferred_element_type=f32, precision=gather_prec)

    tile_e = he_raw_ref.shape[0]
    n_pad = tbl_ref.shape[0]
    lane_ids = jax.lax.broadcasted_iota(jnp.int32, (tile_e, n_pad), 1)
    idx = idx_ref[...]
    oh_l = (lane_ids == idx[:, 0:1]).astype(f32)      # [TILE_E, N_pad]
    oh_r = (lane_ids == idx[:, 1:2]).astype(f32)

    tbl = tbl_ref[...]                                # [N_pad, D + 8]
    g_l = dot_hi(oh_l, tbl)
    g_r = dot_hi(oh_r, tbl)
    x_l, p_l = g_l[:, :D], g_l[:, D:]
    x_r, p_r = g_r[:, :D], g_r[:, D:]

    rel = p_l - p_r
    dist = jnp.sqrt(jnp.sum(rel * rel, axis=-1, keepdims=True))      # [TILE_E, 1]
    gdist = jnp.exp(coeff * (dist - offs_ref[...]) ** 2)             # [TILE_E, G]

    # edge embedding of cat([h_edge, gauss(dist)]) (weight pre-split by rows).
    h_e = (dot(he_raw_ref[...], emb_we_ref[...])
           + dot(gdist, emb_wg_ref[...]) + emb_b_ref[...])
    he_emb_ref[...] = h_e

    # Fused h_e projection: NodeBlock edge_net layer-1 + both bond_linear.
    he_proj = dot(h_e, w_he_cat_ref[...])             # [TILE_E, D + 4*Ed]
    he_hidden = jnp.maximum(he_proj[:, :D] + be1_ref[...], 0.0)
    bond_l = he_proj[:, D:D + 2 * Ed]
    bond_r = he_proj[:, D + 2 * Ed:]
    he_net = dot(he_hidden, we2_ref[...]) + be2_ref[...]

    # Fused x_r projection: NodeBlock node_net layer-1 + node_linear (right).
    xr_proj = dot(x_r, w_xr_cat_ref[...])             # [TILE_E, D + 2*Ed]
    hn_hidden = jnp.maximum(xr_proj[:, :D] + bn1_ref[...], 0.0)
    node_r = xr_proj[:, D:]
    hn_net = dot(hn_hidden, wn2_ref[...]) + bn2_ref[...]

    # NodeBlock message (use_gate=False).
    msg = dot(he_net * hn_net, wm_ref[...]) + bm_ref[...]            # [TILE_E, D]

    # EdgeBlock BondFFN messages (use_gate=False).
    inter_l = bond_l * dot(x_l, wnl_l_ref[...])
    inter_r = bond_r * node_r
    msg_l = (dot(jnp.maximum(dot(inter_l, wi1_l_ref[...]) + bi1_l_ref[...], 0.0),
                 wi2_l_ref[...]) + bi2_l_ref[...])                   # [TILE_E, Ed]
    msg_r = (dot(jnp.maximum(dot(inter_r, wi1_r_ref[...]) + bi1_r_ref[...], 0.0),
                 wi2_r_ref[...]) + bi2_r_ref[...])

    # Fused scatter by left index: [msg | msg_bond_right] in one matmul.
    comb_t = jnp.concatenate([msg.T, msg_r.T], axis=0)               # [D+Ed, TILE_E]
    comb_acc_ref[...] += dot(comb_t, oh_l)
    # scatter_sum(msg_bond_left, right)
    sl_acc_ref[...] += dot(msg_l.T, oh_r)


# --------------------------------------------------------------------------
# Kernel 2: per-node NodeBlock finalize (LayerNorm + residual).
#   Aggregation arrives lane-dense as (D, tile_n) blocks; transposed in-kernel.
# --------------------------------------------------------------------------
def _node_update_kernel(x_ref, aggr_t_ref, wc_ref, bc_ref, ln_g_ref, ln_b_ref,
                        wo_ref, bo_ref, out_ref):
    f32 = jnp.float32
    x = x_ref[...]
    aggr = aggr_t_ref[...].T
    out = jnp.dot(x, wc_ref[...], preferred_element_type=f32) + bc_ref[...] + aggr
    mu = jnp.mean(out, axis=-1, keepdims=True)
    var = jnp.mean((out - mu) ** 2, axis=-1, keepdims=True)
    out = (out - mu) * jax.lax.rsqrt(var + 1e-5) * ln_g_ref[...] + ln_b_ref[...]
    out_ref[...] = (x + jnp.dot(jnp.maximum(out, 0.0), wo_ref[...],
                                preferred_element_type=f32) + bo_ref[...])


# --------------------------------------------------------------------------
# Kernel 3: per-edge EdgeBlock combine (h_edge residual) + PosUpdate.
# --------------------------------------------------------------------------
def _edge_combine_pos_kernel(
    he_emb_ref, idx_ref,                              # edge-tiled streams
    tbl_l_ref, tbl_r_ref,                             # resident fused gather tables
    wnfl_ref, bnfl_ref, wnfr_ref, bnfr_ref,           # EdgeBlock node_ffn L/R
    wself_ref, bself_ref, eln_g_ref, eln_b_ref,       # self_ffn + LayerNorm
    wout_ref, bout_ref,                               # out_transform
    wl1_ref, bl1_ref, wl2_ref, bl2_ref,               # PosUpdate left MLP
    wr1_ref, br1_ref, wr2_ref, br2_ref,               # PosUpdate right MLP
    wpb_ref, wpn_ref, wpi1_ref, bpi1_ref,             # PosUpdate BondFFN
    wpi2_row_ref, bpi2_ref,
    he_out_ref, dpos_acc_ref,                         # outputs
    *, node_dim, edge_dim, gather_prec):
    f32 = jnp.float32
    D, Ed = node_dim, edge_dim

    @pl.when(pl.program_id(1) == 0)
    def _init():
        dpos_acc_ref[...] = jnp.zeros_like(dpos_acc_ref)

    def dot(a, b):
        return jnp.dot(a, b, preferred_element_type=f32)

    def dot_hi(a, b):
        return jnp.dot(a, b, preferred_element_type=f32, precision=gather_prec)

    def mlp(x, w1, b1, w2, b2):
        return dot(jnp.maximum(dot(x, w1[...]) + b1[...], 0.0), w2[...]) + b2[...]

    tile_e = he_emb_ref.shape[0]
    n_pad = tbl_l_ref.shape[0]
    lane_ids = jax.lax.broadcasted_iota(jnp.int32, (tile_e, n_pad), 1)
    idx = idx_ref[...]
    oh_l = (lane_ids == idx[:, 0:1]).astype(f32)
    oh_r = (lane_ids == idx[:, 1:2]).astype(f32)

    # table layout: [h_node_old | h_node_new | scatter_msg | pos]
    g_l = dot_hi(oh_l, tbl_l_ref[...])                # [TILE_E, 2D + Ed + 8]
    g_r = dot_hi(oh_r, tbl_r_ref[...])
    x_l_old = g_l[:, :D]
    x_l_new = g_l[:, D:2 * D]
    m_l = g_l[:, 2 * D:2 * D + Ed]        # scatter_sum(msg_left, right)[left]
    p_l = g_l[:, 2 * D + Ed:]
    x_r_old = g_r[:, :D]
    x_r_new = g_r[:, D:2 * D]
    m_r = g_r[:, 2 * D:2 * D + Ed]        # scatter_sum(msg_right, left)[right]
    p_r = g_r[:, 2 * D + Ed:]

    h_e = he_emb_ref[...]

    # ---- EdgeBlock combine (uses pre-update h_node) ----
    h_b = (m_l + m_r
           + dot(x_l_old, wnfl_ref[...]) + bnfl_ref[...]
           + dot(x_r_old, wnfr_ref[...]) + bnfr_ref[...]
           + dot(h_e, wself_ref[...]) + bself_ref[...])
    mu = jnp.mean(h_b, axis=-1, keepdims=True)
    var = jnp.mean((h_b - mu) ** 2, axis=-1, keepdims=True)
    h_b = (h_b - mu) * jax.lax.rsqrt(var + 1e-5) * eln_g_ref[...] + eln_b_ref[...]
    h_e_new = h_e + dot(jnp.maximum(h_b, 0.0), wout_ref[...]) + bout_ref[...]
    he_out_ref[...] = h_e_new

    # ---- PosUpdate (uses post-update h_node and post-update h_edge) ----
    lf = mlp(x_l_new, wl1_ref, bl1_ref, wl2_ref, bl2_ref)
    rf = mlp(x_r_new, wr1_ref, br1_ref, wr2_ref, br2_ref)
    inter = dot(h_e_new, wpb_ref[...]) * dot(lf * rf, wpn_ref[...])
    ih = jnp.maximum(dot(inter, wpi1_ref[...]) + bpi1_ref[...], 0.0)
    # final [*, 1] layer as a VPU multiply + lane reduce (no 1-lane MXU pass)
    weight = jnp.sum(ih * wpi2_row_ref[...], axis=-1, keepdims=True) + bpi2_ref[...]

    rel = p_l - p_r                                                  # [TILE_E, 8]
    dist = jnp.sqrt(jnp.sum(rel * rel, axis=-1, keepdims=True))
    denom = dist * (dist + 1.0)
    # Padded rows (all-zero one-hot) have rel == 0 and dist == 0; the max()
    # keeps them finite so their force is exactly 0 and scatters nothing.
    # NOTE: real edges with coincident nodes would give the reference inf/NaN
    # but a huge finite force here.
    force = weight * rel * (1.0 / jnp.maximum(denom, 1e-20))
    dpos_acc_ref[...] += dot_hi(force.T, oh_l)


# --------------------------------------------------------------------------
# Wrapper: full NodeEdgeNet forward (update_edge=True, update_pos=True,
# use_gate=False).
# --------------------------------------------------------------------------
def node_edge_net_forward(params, h_node, pos_node, h_edge, edge_index, *,
                          num_blocks, cutoff, num_gaussians, tile_e=None,
                          gather_precision=None, num_core_splits=1):
    f32 = jnp.float32
    N, D = h_node.shape
    E = edge_index.shape[1]
    Ed = h_edge.shape[1]
    G = num_gaussians

    n_pad = _round_up(N, 128)
    vmem_cap = _vmem_capacity_bytes()

    if tile_e is None:
        # One-hot temporaries (int32 iota + 2 f32 one-hots) ~ 3*tile_e*n_pad*4 B
        # of live VMEM: cap them at ~VMEM/5 (re-derived per chip, e.g. v7x's
        # 64 MiB); allow 1024-row tiles on 128 MiB parts (v5e/v6e).
        cap = 1024 if vmem_cap >= (96 << 20) else 512
        budget_rows = max(8, (vmem_cap // 5) // (3 * n_pad * 4))
        tile_e = min(cap, budget_rows)
    tile_e = max(8, _round_up(int(tile_e), 8))
    tile_e = min(tile_e, max(8, _round_up(E, 8)))

    ns = max(1, int(num_core_splits))     # set 2 on v7x to use both TensorCores
    e_pad = _round_up(max(E, 1), tile_e * ns)
    tiles_per_split = e_pad // (tile_e * ns)

    hn = jnp.zeros((n_pad, D), f32).at[:N].set(h_node.astype(f32))
    pos = jnp.zeros((n_pad, 8), f32).at[:N, :3].set(pos_node.astype(f32))
    he = jnp.zeros((e_pad, Ed), f32).at[:E].set(h_edge.astype(f32))
    sentinel = n_pad  # out of lane range -> all-zero one-hot row for padded edges
    idx_lr = jnp.full((e_pad, 2), sentinel, jnp.int32).at[:E].set(
        edge_index.astype(jnp.int32).T)

    offsets = jnp.linspace(0.0, float(cutoff), G, dtype=f32).reshape(1, G)
    coeff = -0.5 / (float(cutoff) / (G - 1)) ** 2

    edge_idx_map = lambda c, e: (c * tiles_per_split + e, 0)
    res_idx_map = lambda c, e: (0, 0)

    def edge_spec(ncols):
        return pl.BlockSpec((tile_e, ncols), edge_idx_map)

    def resident_spec(arr):
        return pl.BlockSpec(arr.shape, res_idx_map)

    def acc_spec(rows):
        return pl.BlockSpec((rows, n_pad), lambda c, e: (c, 0))

    for blk in range(num_blocks):
        P = params[blk]
        # fused projection weights (shared-input matmuls)
        w_he_cat = jnp.concatenate(
            [P["nb_we1"], P["eb_wb_l"], P["eb_wb_r"]], axis=1)   # [Ed, D+4Ed]
        w_xr_cat = jnp.concatenate([P["nb_wn1"], P["eb_wn_r"]], axis=1)  # [D, D+2Ed]
        wpi2_row = P["pu_wi2"].reshape(1, D)
        tbl_np = jnp.concatenate([hn, pos], axis=1)              # [N_pad, D+8]

        # -------------------- phase 1: edge scatter pass --------------------
        edge_ins = [he, idx_lr]
        res_ins = [tbl_np, offsets,
                   P["emb_we"], P["emb_wg"], P["emb_b"],
                   w_he_cat, P["nb_be1"], P["nb_we2"], P["nb_be2"],
                   w_xr_cat, P["nb_bn1"], P["nb_wn2"], P["nb_bn2"],
                   P["nb_wm"], P["nb_bm"],
                   P["eb_wn_l"],
                   P["eb_wi1_l"], P["eb_bi1_l"], P["eb_wi2_l"], P["eb_bi2_l"],
                   P["eb_wi1_r"], P["eb_bi1_r"], P["eb_wi2_r"], P["eb_bi2_r"]]
        ins = edge_ins + res_ins
        in_specs = ([edge_spec(a.shape[1]) for a in edge_ins]
                    + [resident_spec(a) for a in res_ins])
        out_shape = (jax.ShapeDtypeStruct((e_pad, Ed), f32),
                     jax.ShapeDtypeStruct((ns * (D + Ed), n_pad), f32),
                     jax.ShapeDtypeStruct((ns * Ed, n_pad), f32))
        out_specs = (edge_spec(Ed), acc_spec(D + Ed), acc_spec(Ed))
        flops1 = 2 * e_pad * (n_pad * (2 * (D + 8) + D + 2 * Ed)
                              + Ed * Ed + G * Ed
                              + Ed * (D + 4 * Ed) + 3 * D * D
                              + D * (D + 2 * Ed) + 2 * D * Ed
                              + 2 * (4 * Ed * Ed + 2 * Ed * Ed))
        bytes1 = _nbytes(ins) + (e_pad * Ed + ns * (D + 2 * Ed) * n_pad) * 4
        est1 = (_nbytes(res_ins)
                + 2 * _row_bytes(edge_ins, tile_e)
                + 2 * tile_e * Ed * 4
                + 2 * (D + 2 * Ed) * n_pad * 4
                + 3 * tile_e * n_pad * 4
                + 32 * tile_e * max(D + 4 * Ed, 2 * Ed, G, 8) * 4)
        he_emb, comb_acc, sl_acc = pl.pallas_call(
            functools.partial(_edge_scatter_kernel, coeff=coeff, node_dim=D,
                              edge_dim=Ed, gather_prec=gather_precision),
            grid=(ns, tiles_per_split),
            in_specs=in_specs,
            out_specs=out_specs,
            out_shape=out_shape,
            compiler_params=pltpu.CompilerParams(
                dimension_semantics=("parallel", "arbitrary"),
                vmem_limit_bytes=_vmem_limit(est1, vmem_cap)),
            cost_estimate=pl.CostEstimate(flops=int(flops1),
                                          transcendentals=int(e_pad * G),
                                          bytes_accessed=int(bytes1)),
        )(*ins)

        comb_sum = jnp.sum(comb_acc.reshape(ns, D + Ed, n_pad), axis=0)
        sl_sum = jnp.sum(sl_acc.reshape(ns, Ed, n_pad), axis=0)
        msg_nodes_t = comb_sum[:D]          # [D, N_pad] (kept lane-dense)
        sr_nodes = comb_sum[D:].T           # [N_pad, Ed]
        sl_nodes = sl_sum.T                 # [N_pad, Ed]

        # -------------------- phase 2: per-node finalize ---------------------
        tile_n = 128
        node_res = [P["nb_wc"], P["nb_bc"], P["nb_ln_g"], P["nb_ln_b"],
                    P["nb_wo"], P["nb_bo"]]
        hn_new = pl.pallas_call(
            _node_update_kernel,
            grid=(n_pad // tile_n,),
            in_specs=([pl.BlockSpec((tile_n, D), lambda n: (n, 0)),
                       pl.BlockSpec((D, tile_n), lambda n: (0, n))]
                      + [pl.BlockSpec(a.shape, lambda n: (0, 0)) for a in node_res]),
            out_specs=pl.BlockSpec((tile_n, D), lambda n: (n, 0)),
            out_shape=jax.ShapeDtypeStruct((n_pad, D), f32),
            compiler_params=pltpu.CompilerParams(
                dimension_semantics=("parallel",)),
            cost_estimate=pl.CostEstimate(flops=int(4 * n_pad * D * D),
                                          transcendentals=0,
                                          bytes_accessed=int(3 * n_pad * D * 4)),
        )(hn, msg_nodes_t, *node_res)

        # ---------------- phase 3: edge combine + pos update -----------------
        tbl_l = jnp.concatenate([hn, hn_new, sl_nodes, pos], axis=1)  # [N_pad, 2D+Ed+8]
        tbl_r = jnp.concatenate([hn, hn_new, sr_nodes, pos], axis=1)
        edge_ins3 = [he_emb, idx_lr]
        res_ins3 = [tbl_l, tbl_r,
                    P["eb_wnfl"], P["eb_bnfl"], P["eb_wnfr"], P["eb_bnfr"],
                    P["eb_wself"], P["eb_bself"],
                    P["eb_ln_g"], P["eb_ln_b"], P["eb_wout"], P["eb_bout"],
                    P["pu_wl1"], P["pu_bl1"], P["pu_wl2"], P["pu_bl2"],
                    P["pu_wr1"], P["pu_br1"], P["pu_wr2"], P["pu_br2"],
                    P["pu_wb"], P["pu_wn"], P["pu_wi1"], P["pu_bi1"],
                    wpi2_row, P["pu_bi2"]]
        ins3 = edge_ins3 + res_ins3
        in_specs3 = ([edge_spec(a.shape[1]) for a in edge_ins3]
                     + [resident_spec(a) for a in res_ins3])
        out_shape3 = (jax.ShapeDtypeStruct((e_pad, Ed), f32),
                      jax.ShapeDtypeStruct((ns * 8, n_pad), f32))
        out_specs3 = (edge_spec(Ed), acc_spec(8))
        flops3 = 2 * e_pad * (n_pad * (2 * (2 * D + Ed + 8) + 8)
                              + 2 * D * Ed + 2 * Ed * Ed
                              + 2 * (D * Ed + Ed * Ed)
                              + 2 * Ed * D + D * D + D)
        bytes3 = _nbytes(ins3) + (e_pad * Ed + ns * 8 * n_pad) * 4
        est3 = (_nbytes(res_ins3)
                + 2 * _row_bytes(edge_ins3, tile_e)
                + 2 * tile_e * Ed * 4
                + 2 * 8 * n_pad * 4
                + 3 * tile_e * n_pad * 4
                + 32 * tile_e * max(2 * D + Ed + 8, 2 * Ed, D, 8) * 4)
        he_new, dpos_acc = pl.pallas_call(
            functools.partial(_edge_combine_pos_kernel, node_dim=D, edge_dim=Ed,
                              gather_prec=gather_precision),
            grid=(ns, tiles_per_split),
            in_specs=in_specs3,
            out_specs=out_specs3,
            out_shape=out_shape3,
            compiler_params=pltpu.CompilerParams(
                dimension_semantics=("parallel", "arbitrary"),
                vmem_limit_bytes=_vmem_limit(est3, vmem_cap)),
            cost_estimate=pl.CostEstimate(flops=int(flops3),
                                          transcendentals=0,
                                          bytes_accessed=int(bytes3)),
        )(*ins3)

        dpos = jnp.sum(dpos_acc.reshape(ns, 8, n_pad), axis=0)

        hn = hn_new
        he = he_new
        pos = pos + dpos.T

    return hn[:N], pos[:N, :3], he[:E]


# --------------------------------------------------------------------------
# Parameters (layout: weights [in, out], biases [1, out]; MLP = Lin-ReLU-Lin).
# --------------------------------------------------------------------------
def init_params(key, node_dim, edge_dim, num_gaussians, num_blocks):
    D, Ed, G = node_dim, edge_dim, num_gaussians
    params = []
    for blk in range(num_blocks):
        keys = iter(jax.random.split(jax.random.fold_in(key, blk), 64))

        def w(i, o, scale=0.1):
            return scale * jax.random.normal(next(keys), (i, o), jnp.float32)

        def b(o, scale=0.02):
            return scale * jax.random.normal(next(keys), (1, o), jnp.float32)

        p = dict(
            # edge embedding: Linear(edge_dim + G, edge_dim) split into row blocks
            emb_we=w(Ed, Ed), emb_wg=w(G, Ed), emb_b=b(Ed),
            # NodeBlock (hidden = node_dim, use_gate=False)
            nb_we1=w(Ed, D), nb_be1=b(D), nb_we2=w(D, D), nb_be2=b(D),
            nb_wn1=w(D, D), nb_bn1=b(D), nb_wn2=w(D, D), nb_bn2=b(D),
            nb_wm=w(D, D), nb_bm=b(D),
            nb_wc=w(D, D), nb_bc=b(D),
            nb_ln_g=1.0 + b(D, 0.1), nb_ln_b=b(D),
            nb_wo=w(D, D), nb_bo=b(D),
            # EdgeBlock (inter_dim = 2*edge_dim, use_gate=False)
            eb_wb_l=w(Ed, 2 * Ed), eb_wn_l=w(D, 2 * Ed),
            eb_wi1_l=w(2 * Ed, 2 * Ed), eb_bi1_l=b(2 * Ed),
            eb_wi2_l=w(2 * Ed, Ed), eb_bi2_l=b(Ed),
            eb_wb_r=w(Ed, 2 * Ed), eb_wn_r=w(D, 2 * Ed),
            eb_wi1_r=w(2 * Ed, 2 * Ed), eb_bi1_r=b(2 * Ed),
            eb_wi2_r=w(2 * Ed, Ed), eb_bi2_r=b(Ed),
            eb_wnfl=w(D, Ed), eb_bnfl=b(Ed), eb_wnfr=w(D, Ed), eb_bnfr=b(Ed),
            eb_wself=w(Ed, Ed), eb_bself=b(Ed),
            eb_ln_g=1.0 + b(Ed, 0.1), eb_ln_b=b(Ed),
            eb_wout=w(Ed, Ed), eb_bout=b(Ed),
            # PosUpdate (hidden = edge_dim, BondFFN inter = node_dim, out = 1)
            pu_wl1=w(D, Ed), pu_bl1=b(Ed), pu_wl2=w(Ed, Ed), pu_bl2=b(Ed),
            pu_wr1=w(D, Ed), pu_br1=b(Ed), pu_wr2=w(Ed, Ed), pu_br2=b(Ed),
            pu_wb=w(Ed, D), pu_wn=w(Ed, D),
            pu_wi1=w(D, D), pu_bi1=b(D), pu_wi2=w(D, 1), pu_bi2=b(1),
        )
        params.append(p)
    return params


# --------------------------------------------------------------------------
# Pure-numpy reference mirroring the torch forward (use_gate=False).
# --------------------------------------------------------------------------
def reference_forward(params, h_node, pos_node, h_edge, edge_index, *,
                      num_blocks, cutoff, num_gaussians):
    hn = np.asarray(h_node, np.float32)
    pos = np.asarray(pos_node, np.float32)
    he = np.asarray(h_edge, np.float32)
    ei = np.asarray(edge_index)
    left, right = ei[0], ei[1]
    N = hn.shape[0]
    G = num_gaussians
    offsets = np.linspace(0.0, cutoff, G, dtype=np.float32)
    coeff = -0.5 / (cutoff / (G - 1)) ** 2

    def mlp(x, w1, b1, w2, b2):
        return np.maximum(x @ w1 + b1, 0.0) @ w2 + b2

    def layer_norm(x, g, b):
        mu = x.mean(-1, keepdims=True)
        var = ((x - mu) ** 2).mean(-1, keepdims=True)
        return (x - mu) / np.sqrt(var + 1e-5) * g + b

    def scatter_sum(src, idx, n):
        out = np.zeros((n, src.shape[1]), np.float32)
        np.add.at(out, idx, src.astype(np.float32))
        return out

    for blk in range(num_blocks):
        P = {k: np.asarray(v) for k, v in params[blk].items()}
        rel = pos[left] - pos[right]
        dist = np.linalg.norm(rel, axis=-1)
        gdist = np.exp(coeff * (dist[:, None] - offsets[None, :]) ** 2)
        h_e = (np.concatenate([he, gdist.astype(np.float32)], -1)
               @ np.concatenate([P["emb_we"], P["emb_wg"]], 0) + P["emb_b"])

        # NodeBlock
        he_net = mlp(h_e, P["nb_we1"], P["nb_be1"], P["nb_we2"], P["nb_be2"])
        hn_net = mlp(hn, P["nb_wn1"], P["nb_bn1"], P["nb_wn2"], P["nb_bn2"])
        msg = (he_net * hn_net[right]) @ P["nb_wm"] + P["nb_bm"]
        aggr = scatter_sum(msg, left, N)
        out = hn @ P["nb_wc"] + P["nb_bc"] + aggr
        out = layer_norm(out, P["nb_ln_g"], P["nb_ln_b"])
        h_node_delta = np.maximum(out, 0.0) @ P["nb_wo"] + P["nb_bo"]

        # EdgeBlock
        def bond_ffn(xn, wb, wn, wi1, bi1, wi2, bi2):
            inter = (h_e @ wb) * (xn @ wn)
            return mlp(inter, wi1, bi1, wi2, bi2)
        msg_l = bond_ffn(hn[left], P["eb_wb_l"], P["eb_wn_l"], P["eb_wi1_l"],
                         P["eb_bi1_l"], P["eb_wi2_l"], P["eb_bi2_l"])
        msg_l = scatter_sum(msg_l, right, N)[left]
        msg_r = bond_ffn(hn[right], P["eb_wb_r"], P["eb_wn_r"], P["eb_wi1_r"],
                         P["eb_bi1_r"], P["eb_wi2_r"], P["eb_bi2_r"])
        msg_r = scatter_sum(msg_r, left, N)[right]
        hb = (msg_l + msg_r
              + hn[left] @ P["eb_wnfl"] + P["eb_bnfl"]
              + hn[right] @ P["eb_wnfr"] + P["eb_bnfr"]
              + h_e @ P["eb_wself"] + P["eb_bself"])
        hb = layer_norm(hb, P["eb_ln_g"], P["eb_ln_b"])
        he_new = h_e + (np.maximum(hb, 0.0) @ P["eb_wout"] + P["eb_bout"])

        hn_new = hn + h_node_delta

        # PosUpdate
        lf = mlp(hn_new[left], P["pu_wl1"], P["pu_bl1"], P["pu_wl2"], P["pu_bl2"])
        rf = mlp(hn_new[right], P["pu_wr1"], P["pu_br1"], P["pu_wr2"], P["pu_br2"])
        inter = (he_new @ P["pu_wb"]) * ((lf * rf) @ P["pu_wn"])
        weight = mlp(inter, P["pu_wi1"], P["pu_bi1"], P["pu_wi2"], P["pu_bi2"])
        force = weight * rel / dist[:, None] / (dist[:, None] + 1.0)
        pos = pos + scatter_sum(force, left, N)

        hn = hn_new
        he = he_new
    return hn, pos, he


if __name__ == "__main__":
    NODE_DIM, EDGE_DIM, NUM_G = 32, 32, 16
    N_NODES, N_EDGES = 12, 24
    NUM_BLOCKS, CUTOFF = 2, 10.0
    TILE_E = 8          # small tile so the test exercises a multi-step grid
    CORE_SPLITS = 2     # exercises the per-core accumulator-slab split (v7x)

    key = jax.random.PRNGKey(0)
    k_hn, k_pos, k_he, k_l, k_off, k_par = jax.random.split(key, 6)
    h_node = jax.random.normal(k_hn, (N_NODES, NODE_DIM), jnp.float32)
    pos_node = 2.0 * jax.random.normal(k_pos, (N_NODES, 3), jnp.float32)
    h_edge = jax.random.normal(k_he, (N_EDGES, EDGE_DIM), jnp.float32)
    left = jax.random.randint(k_l, (N_EDGES,), 0, N_NODES, jnp.int32)
    offs = jax.random.randint(k_off, (N_EDGES,), 1, N_NODES, jnp.int32)
    right = (left + offs) % N_NODES            # no self loops -> distance > 0
    edge_index = jnp.stack([left, right], axis=0)

    params = init_params(k_par, NODE_DIM, EDGE_DIM, NUM_G, NUM_BLOCKS)

    gather_prec = _pick_gather_precision()

    fwd = jax.jit(functools.partial(
        node_edge_net_forward,
        num_blocks=NUM_BLOCKS, cutoff=CUTOFF, num_gaussians=NUM_G,
        tile_e=TILE_E, gather_precision=gather_prec,
        num_core_splits=CORE_SPLITS))
    hn_out, pos_out, he_out = jax.block_until_ready(
        fwd(params, h_node, pos_node, h_edge, edge_index))

    hn_ref, pos_ref, he_ref = reference_forward(
        params, h_node, pos_node, h_edge, edge_index,
        num_blocks=NUM_BLOCKS, cutoff=CUTOFF, num_gaussians=NUM_G)

    # MLP / scatter matmuls run at default (bf16-pass) precision by design;
    # only the gathers (and force scatter) are exact -> bf16-level tolerance.
    tol = 3e-2 if gather_prec == jax.lax.Precision.HIGHEST else 1e-1
    np.testing.assert_allclose(np.asarray(hn_out), hn_ref, rtol=tol, atol=tol)
    np.testing.assert_allclose(np.asarray(pos_out), pos_ref, rtol=tol, atol=tol)
    np.testing.assert_allclose(np.asarray(he_out), he_ref, rtol=tol, atol=tol)

    print("KERNEL_OK")
</pallas_src>

<mosaic_0001>
module attributes {stable_mosaic.version = 11 : i64} {
  func.func @_probe(%arg0: memref<128x128xf32, #tpu.memory_space<vmem>>, %arg1: memref<8x128xf32, #tpu.memory_space<vmem>>, %arg2: memref<8x128xf32, #tpu.memory_space<vmem>>) attributes {dimension_semantics = [], scalar_prefetch = 0 : i64, scratch_operands = 0 : i64, tpu.core_type = #tpu.core_type<tc>} {
    %c0 = arith.constant 0 : index
    %c0_0 = arith.constant 0 : index
    %0 = vector.load %arg1[%c0, %c0_0] : memref<8x128xf32, #tpu.memory_space<vmem>>, vector<8x128xf32>
    %c0_1 = arith.constant 0 : index
    %c0_2 = arith.constant 0 : index
    %1 = vector.load %arg0[%c0_1, %c0_2] : memref<128x128xf32, #tpu.memory_space<vmem>>, vector<128x128xf32>
    %cst = arith.constant dense<0.000000e+00> : vector<8x128xf32>
    %2 = tpu.matmul %0, %1, %cst {dimension_numbers = #tpu.dot_dimension_numbers<[1], [0], [0], [1], [0, 0, 1, 1], [], []>, precision = #tpu.contract_precision<fp32>} : vector<8x128xf32>, vector<128x128xf32>, vector<8x128xf32> -> vector<8x128xf32>
    %c0_3 = arith.constant 0 : index
    %c0_4 = arith.constant 0 : index
    %3 = vector.load %arg2[%c0_3, %c0_4] : memref<8x128xf32, #tpu.memory_space<vmem>>, vector<8x128xf32>
    tpu.vector_store %arg2[%c0_3, %c0_4], %2 {strides = array<i32>} : memref<8x128xf32, #tpu.memory_space<vmem>>, vector<8x128xf32>,
    return
  }
}

module attributes {stable_mosaic.version = 11 : i64} {
  func.func @_edge_combine_pos_kernel(%arg0: i32, %arg1: i32, %arg2: memref<8x32xf32, #tpu.memory_space<vmem>>, %arg3: memref<8x2xi32, #tpu.memory_space<vmem>>, %arg4: memref<128x104xf32, #tpu.memory_space<vmem>>, %arg5: memref<128x104xf32, #tpu.memory_space<vmem>>, %arg6: memref<32x32xf32, #tpu.memory_space<vmem>>, %arg7: memref<1x32xf32, #tpu.memory_space<vmem>>, %arg8: memref<32x32xf32, #tpu.memory_space<vmem>>, %arg9: memref<1x32xf32, #tpu.memory_space<vmem>>, %arg10: memref<32x32xf32, #tpu.memory_space<vmem>>, %arg11: memref<1x32xf32, #tpu.memory_space<vmem>>, %arg12: memref<1x32xf32, #tpu.memory_space<vmem>>, %arg13: memref<1x32xf32, #tpu.memory_space<vmem>>, %arg14: memref<32x32xf32, #tpu.memory_space<vmem>>, %arg15: memref<1x32xf32, #tpu.memory_space<vmem>>, %arg16: memref<32x32xf32, #tpu.memory_space<vmem>>, %arg17: memref<1x32xf32, #tpu.memory_space<vmem>>, %arg18: memref<32x32xf32, #tpu.memory_space<vmem>>, %arg19: memref<1x32xf32, #tpu.memory_space<vmem>>, %arg20: memref<32x32xf32, #tpu.memory_space<vmem>>, %arg21: memref<1x32xf32, #tpu.memory_space<vmem>>, %arg22: memref<32x32xf32, #tpu.memory_space<vmem>>, %arg23: memref<1x32xf32, #tpu.memory_space<vmem>>, %arg24: memref<32x32xf32, #tpu.memory_space<vmem>>, %arg25: memref<32x32xf32, #tpu.memory_space<vmem>>, %arg26: memref<32x32xf32, #tpu.memory_space<vmem>>, %arg27: memref<1x32xf32, #tpu.memory_space<vmem>>, %arg28: memref<1x32xf32, #tpu.memory_space<vmem>>, %arg29: memref<1x1xf32, #tpu.memory_space<vmem>>, %arg30: memref<8x32xf32, #tpu.memory_space<vmem>>, %arg31: memref<8x128xf32, #tpu.memory_space<vmem>>) attributes {dimension_semantics = [#tpu.dimension_semantics<parallel>, #tpu.dimension_semantics<arbitrary>], iteration_bounds = array<i64: 2, 2>, scalar_prefetch = 0 : i64, scratch_operands = 0 : i64, tpu.core_type = #tpu.core_type<tc>, window_params = [{transform_indices = @transform_0, window_bounds = array<i64: 8, 32>}, {transform_indices = @transform_1, window_bounds = array<i64: 8, 2>}, {pipeline_mode = #tpu.pipeline_mode<synchronous>, transform_indices = @transform_2, window_bounds = array<i64: 128, 104>}, {pipeline_mode = #tpu.pipeline_mode<synchronous>, transform_indices = @transform_3, window_bounds = array<i64: 128, 104>}, {pipeline_mode = #tpu.pipeline_mode<synchronous>, transform_indices = @transform_4, window_bounds = array<i64: 32, 32>}, {pipeline_mode = #tpu.pipeline_mode<synchronous>, transform_indices = @transform_5, window_bounds = array<i64: 1, 32>}, {pipeline_mode = #tpu.pipeline_mode<synchronous>, transform_indices = @transform_6, window_bounds = array<i64: 32, 32>}, {pipeline_mode = #tpu.pipeline_mode<synchronous>, transform_indices = @transform_7, window_bounds = array<i64: 1, 32>}, {pipeline_mode = #tpu.pipeline_mode<synchronous>, transform_indices = @transform_8, window_bounds = array<i64: 32, 32>}, {pipeline_mode = #tpu.pipeline_mode<synchronous>, transform_indices = @transform_9, window_bounds = array<i64: 1, 32>}, {pipeline_mode = #tpu.pipeline_mode<synchronous>, transform_indices = @transform_10, window_bounds = array<i64: 1, 32>}, {pipeline_mode = #tpu.pipeline_mode<synchronous>, transform_indices = @transform_11, window_bounds = array<i64: 1, 32>}, {pipeline_mode = #tpu.pipeline_mode<synchronous>, transform_indices = @transform_12, window_bounds = array<i64: 32, 32>}, {pipeline_mode = #tpu.pipeline_mode<synchronous>, transform_indices = @transform_13, window_bounds = array<i64: 1, 32>}, {pipeline_mode = #tpu.pipeline_mode<synchronous>, transform_indices = @transform_14, window_bounds = array<i64: 32, 32>}, {pipeline_mode = #tpu.pipeline_mode<synchronous>, transform_indices = @transform_15, window_bounds = array<i64: 1, 32>}, {pipeline_mode = #tpu.pipeline_mode<synchronous>, transform_indices = @transform_16, window_bounds = array<i64: 32, 32>}, {pipeline_mode = #tpu.pipeline_mode<synchronous>, transform_indices = @transform_17, window_bounds = array<i64: 1, 32>}, {pipeline_mode = #tpu.pipeline_mode<synchronous>, transform_indices = @transform_18, window_bounds = array<i64: 32, 32>}, {pipeline_mode = #tpu.pipeline_mode<synchronous>, transform_indices = @transform_19, window_bounds = array<i64: 1, 32>}, {pipeline_mode = #tpu.pipeline_mode<synchronous>, transform_indices = @transform_20, window_bounds = array<i64: 32, 32>}, {pipeline_mode = #tpu.pipeline_mode<synchronous>, transform_indices = @transform_21, window_bounds = array<i64: 1, 32>}, {pipeline_mode = #tpu.pipeline_mode<synchronous>, transform_indices = @transform_22, window_bounds = array<i64: 32, 32>}, {pipeline_mode = #tpu.pipeline_mode<synchronous>, transform_indices = @transform_23, window_bounds = array<i64: 32, 32>}, {pipeline_mode = #tpu.pipeline_mode<synchronous>, transform_indices = @transform_24, window_bounds = array<i64: 32, 32>}, {pipeline_mode = #tpu.pipeline_mode<synchronous>, transform_indices = @transform_25, window_bounds = array<i64: 1, 32>}, {pipeline_mode = #tpu.pipeline_mode<synchronous>, transform_indices = @transform_26, window_bounds = array<i64: 1, 32>}, {pipeline_mode = #tpu.pipeline_mode<synchronous>, transform_indices = @transform_27, window_bounds = array<i64: 1, 1>}, {transform_indices = @transform_28, window_bounds = array<i64: 8, 32>}, {transform_indices = @transform_29, window_bounds = array<i64: 8, 128>}]} {
    %c0_i32 = arith.constant 0 : i32
    %0 = arith.cmpi eq, %arg1, %c0_i32 : i32
    %1 = arith.extui %0 : i1 to i32
    %c0_i32_0 = arith.constant 0 : i32
    %2 = arith.cmpi ne, %1, %c0_i32_0 : i32
    scf.if %2 {
      %cst_89 = arith.constant 0.000000e+00 : f32
      %146 = vector.broadcast %cst_89 : f32 to vector<8x128xf32>
      %c0_90 = arith.constant 0 : index
      %c0_91 = arith.constant 0 : index
      %147 = vector.load %arg31[%c0_90, %c0_91] : memref<8x128xf32, #tpu.memory_space<vmem>>, vector<8x128xf32>
      tpu.vector_store %arg31[%c0_90, %c0_91], %146 {strides = array<i32>} : memref<8x128xf32, #tpu.memory_space<vmem>>, vector<8x128xf32>,
    } else {
    }
    %3 = tpu.iota {dimensions = array<i32: 1>} : vector<8x128xi32>
    %c0 = arith.constant 0 : index
    %c0_1 = arith.constant 0 : index
    %4 = vector.load %arg3[%c0, %c0_1] : memref<8x2xi32, #tpu.memory_space<vmem>>, vector<8x2xi32>
    %5 = vector.extract_strided_slice %4 {offsets = [0, 0], sizes = [8, 1], strides = [1, 1]} : vector<8x2xi32> to vector<8x1xi32>
    %6 = vector.broadcast %5 : vector<8x1xi32> to vector<8x128xi32>
    %7 = arith.cmpi eq, %3, %6 : vector<8x128xi32>
    %8 = arith.extui %7 : vector<8x128xi1> to vector<8x128xi32>
    %9 = arith.sitofp %8 : vector<8x128xi32> to vector<8x128xf32>
    %10 = vector.extract_strided_slice %4 {offsets = [0, 1], sizes = [8, 1], strides = [1, 1]} : vector<8x2xi32> to vector<8x1xi32>
    %11 = vector.broadcast %10 : vector<8x1xi32> to vector<8x128xi32>
    %12 = arith.cmpi eq, %3, %11 : vector<8x128xi32>
    %13 = arith.extui %12 : vector<8x128xi1> to vector<8x128xi32>
    %14 = arith.sitofp %13 : vector<8x128xi32> to vector<8x128xf32>
    %c0_2 = arith.constant 0 : index
    %c0_3 = arith.constant 0 : index
    %15 = vector.load %arg4[%c0_2, %c0_3] : memref<128x104xf32, #tpu.memory_space<vmem>>, vector<128x104xf32>
    %cst = arith.constant dense<0.000000e+00> : vector<8x104xf32>
    %16 = tpu.matmul %9, %15, %cst {dimension_numbers = #tpu.dot_dimension_numbers<[1], [0], [0], [1], [0, 0, 1, 1], [], []>} : vector<8x128xf32>, vector<128x104xf32>, vector<8x104xf32> -> vector<8x104xf32>
    %c0_4 = arith.constant 0 : index
    %c0_5 = arith.constant 0 : index
    %17 = vector.load %arg5[%c0_4, %c0_5] : memref<128x104xf32, #tpu.memory_space<vmem>>, vector<128x104xf32>
    %cst_6 = arith.constant dense<0.000000e+00> : vector<8x104xf32>
    %18 = tpu.matmul %14, %17, %cst_6 {dimension_numbers = #tpu.dot_dimension_numbers<[1], [0], [0], [1], [0, 0, 1, 1], [], []>} : vector<8x128xf32>, vector<128x104xf32>, vector<8x104xf32> -> vector<8x104xf32>
    %19 = vector.extract_strided_slice %16 {offsets = [0, 0], sizes = [8, 32], strides = [1, 1]} : vector<8x104xf32> to vector<8x32xf32>
    %20 = vector.extract_strided_slice %16 {offsets = [0, 32], sizes = [8, 32], strides = [1, 1]} : vector<8x104xf32> to vector<8x32xf32>
    %21 = vector.extract_strided_slice %16 {offsets = [0, 64], sizes = [8, 32], strides = [1, 1]} : vector<8x104xf32> to vector<8x32xf32>
    %22 = vector.extract_strided_slice %16 {offsets = [0, 96], sizes = [8, 8], strides = [1, 1]} : vector<8x104xf32> to vector<8x8xf32>
    %23 = vector.extract_strided_slice %18 {offsets = [0, 0], sizes = [8, 32], strides = [1, 1]} : vector<8x104xf32> to vector<8x32xf32>
    %24 = vector.extract_strided_slice %18 {offsets = [0, 32], sizes = [8, 32], strides = [1, 1]} : vector<8x104xf32> to vector<8x32xf32>
    %25 = vector.extract_strided_slice %18 {offsets = [0, 64], sizes = [8, 32], strides = [1, 1]} : vector<8x104xf32> to vector<8x32xf32>
    %26 = vector.extract_strided_slice %18 {offsets = [0, 96], sizes = [8, 8], strides = [1, 1]} : vector<8x104xf32> to vector<8x8xf32>
    %c0_7 = arith.constant 0 : index
    %c0_8 = arith.constant 0 : index
    %27 = vector.load %arg2[%c0_7, %c0_8] : memref<8x32xf32, #tpu.memory_space<vmem>>, vector<8x32xf32>
    %28 = arith.addf %21, %25 : vector<8x32xf32>
    %c0_9 = arith.constant 0 : index
    %c0_10 = arith.constant 0 : index
    %29 = vector.load %arg6[%c0_9, %c0_10] : memref<32x32xf32, #tpu.memory_space<vmem>>, vector<32x32xf32>
    %cst_11 = arith.constant dense<0.000000e+00> : vector<8x32xf32>
    %30 = tpu.matmul %19, %29, %cst_11 {dimension_numbers = #tpu.dot_dimension_numbers<[1], [0], [0], [1], [0, 0, 1, 1], [], []>} : vector<8x32xf32>, vector<32x32xf32>, vector<8x32xf32> -> vector<8x32xf32>
    %31 = arith.addf %28, %30 : vector<8x32xf32>
    %c0_12 = arith.constant 0 : index
    %c0_13 = arith.constant 0 : index
    %32 = vector.load %arg7[%c0_12, %c0_13] : memref<1x32xf32, #tpu.memory_space<vmem>>, vector<1x32xf32>
    %33 = vector.broadcast %32 : vector<1x32xf32> to vector<8x32xf32>
    %34 = arith.addf %31, %33 : vector<8x32xf32>
    %c0_14 = arith.constant 0 : index
    %c0_15 = arith.constant 0 : index
    %35 = vector.load %arg8[%c0_14, %c0_15] : memref<32x32xf32, #tpu.memory_space<vmem>>, vector<32x32xf32>
    %cst_16 = arith.constant dense<0.000000e+00> : vector<8x32xf32>
    %36 = tpu.matmul %23, %35, %cst_16 {dimension_numbers = #tpu.dot_dimension_numbers<[1], [0], [0], [1], [0, 0, 1, 1], [], []>} : vector<8x32xf32>, vector<32x32xf32>, vector<8x32xf32> -> vector<8x32xf32>
    %37 = arith.addf %34, %36 : vector<8x32xf32>
    %c0_17 = arith.constant 0 : index
    %c0_18 = arith.constant 0 : index
    %38 = vector.load %arg9[%c0_17, %c0_18] : memref<1x32xf32, #tpu.memory_space<vmem>>, vector<1x32xf32>
    %39 = vector.broadcast %38 : vector<1x32xf32> to vector<8x32xf32>
    %40 = arith.addf %37, %39 : vector<8x32xf32>
    %c0_19 = arith.constant 0 : index
    %c0_20 = arith.constant 0 : index
    %41 = vector.load %arg10[%c0_19, %c0_20] : memref<32x32xf32, #tpu.memory_space<vmem>>, vector<32x32xf32>
    %cst_21 = arith.constant dense<0.000000e+00> : vector<8x32xf32>
    %42 = tpu.matmul %27, %41, %cst_21 {dimension_numbers = #tpu.dot_dimension_numbers<[1], [0], [0], [1], [0, 0, 1, 1], [], []>} : vector<8x32xf32>, vector<32x32xf32>, vector<8x32xf32> -> vector<8x32xf32>
    %43 = arith.addf %40, %42 : vector<8x32xf32>
    %c0_22 = arith.constant 0 : index
    %c0_23 = arith.constant 0 : index
    %44 = vector.load %arg11[%c0_22, %c0_23] : memref<1x32xf32, #tpu.memory_space<vmem>>, vector<1x32xf32>
    %45 = vector.broadcast %44 : vector<1x32xf32> to vector<8x32xf32>
    %46 = arith.addf %43, %45 : vector<8x32xf32>
    %cst_24 = arith.constant dense<0.000000e+00> : vector<8xf32>
    %47 = vector.multi_reduction <add>, %46, %cst_24 [1] : vector<8x32xf32> to vector<8xf32>
    %48 = vector.shape_cast %47 : vector<8xf32> to vector<8x1xf32>
    %cst_25 = arith.constant 3.200000e+01 : f32
    %49 = vector.broadcast %cst_25 : f32 to vector<8x1xf32>
    %50 = arith.divf %48, %49 : vector<8x1xf32>
    %51 = vector.broadcast %50 : vector<8x1xf32> to vector<8x32xf32>
    %52 = arith.subf %46, %51 : vector<8x32xf32>
    %53 = arith.mulf %52, %52 : vector<8x32xf32>
    %cst_26 = arith.constant dense<0.000000e+00> : vector<8xf32>
    %54 = vector.multi_reduction <add>, %53, %cst_26 [1] : vector<8x32xf32> to vector<8xf32>
    %55 = vector.shape_cast %54 : vector<8xf32> to vector<8x1xf32>
    %cst_27 = arith.constant 3.200000e+01 : f32
    %56 = vector.broadcast %cst_27 : f32 to vector<8x1xf32>
    %57 = arith.divf %55, %56 : vector<8x1xf32>
    %58 = vector.broadcast %50 : vector<8x1xf32> to vector<8x32xf32>
    %59 = arith.subf %46, %58 : vector<8x32xf32>
    %cst_28 = arith.constant 9.99999974E-6 : f32
    %60 = vector.broadcast %cst_28 : f32 to vector<8x1xf32>
    %61 = arith.addf %57, %60 : vector<8x1xf32>
    %62 = math.rsqrt %61 : vector<8x1xf32>
    %63 = vector.broadcast %62 : vector<8x1xf32> to vector<8x32xf32>
    %64 = arith.mulf %59, %63 : vector<8x32xf32>
    %c0_29 = arith.constant 0 : index
    %c0_30 = arith.constant 0 : index
    %65 = vector.load %arg12[%c0_29, %c0_30] : memref<1x32xf32, #tpu.memory_space<vmem>>, vector<1x32xf32>
    %66 = vector.broadcast %65 : vector<1x32xf32> to vector<8x32xf32>
    %67 = arith.mulf %64, %66 : vector<8x32xf32>
    %c0_31 = arith.constant 0 : index
    %c0_32 = arith.constant 0 : index
    %68 = vector.load %arg13[%c0_31, %c0_32] : memref<1x32xf32, #tpu.memory_space<vmem>>, vector<1x32xf32>
    %69 = vector.broadcast %68 : vector<1x32xf32> to vector<8x32xf32>
    %70 = arith.addf %67, %69 : vector<8x32xf32>
    %cst_33 = arith.constant 0.000000e+00 : f32
    %71 = vector.broadcast %cst_33 : f32 to vector<8x32xf32>
    %72 = arith.maximumf %70, %71 : vector<8x32xf32>
    %c0_34 = arith.constant 0 : index
    %c0_35 = arith.constant 0 : index
    %73 = vector.load %arg14[%c0_34, %c0_35] : memref<32x32xf32, #tpu.memory_space<vmem>>, vector<32x32xf32>
    %cst_36 = arith.constant dense<0.000000e+00> : vector<8x32xf32>
    %74 = tpu.matmul %72, %73, %cst_36 {dimension_numbers = #tpu.dot_dimension_numbers<[1], [0], [0], [1], [0, 0, 1, 1], [], []>} : vector<8x32xf32>, vector<32x32xf32>, vector<8x32xf32> -> vector<8x32xf32>
    %75 = arith.addf %27, %74 : vector<8x32xf32>
    %c0_37 = arith.constant 0 : index
    %c0_38 = arith.constant 0 : index
    %76 = vector.load %arg15[%c0_37, %c0_38] : memref<1x32xf32, #tpu.memory_space<vmem>>, vector<1x32xf32>
    %77 = vector.broadcast %76 : vector<1x32xf32> to vector<8x32xf32>
    %78 = arith.addf %75, %77 : vector<8x32xf32>
    %c0_39 = arith.constant 0 : index
    %c0_40 = arith.constant 0 : index
    %79 = vector.load %arg30[%c0_39, %c0_40] : memref<8x32xf32, #tpu.memory_space<vmem>>, vector<8x32xf32>
    tpu.vector_store %arg30[%c0_39, %c0_40], %78 {strides = array<i32>} : memref<8x32xf32, #tpu.memory_space<vmem>>, vector<8x32xf32>,
    %c0_41 = arith.constant 0 : index
    %c0_42 = arith.constant 0 : index
    %80 = vector.load %arg16[%c0_41, %c0_42] : memref<32x32xf32, #tpu.memory_space<vmem>>, vector<32x32xf32>
    %cst_43 = arith.constant dense<0.000000e+00> : vector<8x32xf32>
    %81 = tpu.matmul %20, %80, %cst_43 {dimension_numbers = #tpu.dot_dimension_numbers<[1], [0], [0], [1], [0, 0, 1, 1], [], []>} : vector<8x32xf32>, vector<32x32xf32>, vector<8x32xf32> -> vector<8x32xf32>
    %c0_44 = arith.constant 0 : index
    %c0_45 = arith.constant 0 : index
    %82 = vector.load %arg17[%c0_44, %c0_45] : memref<1x32xf32, #tpu.memory_space<vmem>>, vector<1x32xf32>
    %83 = vector.broadcast %82 : vector<1x32xf32> to vector<8x32xf32>
    %84 = arith.addf %81, %83 : vector<8x32xf32>
    %cst_46 = arith.constant 0.000000e+00 : f32
    %85 = vector.broadcast %cst_46 : f32 to vector<8x32xf32>
    %86 = arith.maximumf %84, %85 : vector<8x32xf32>
    %c0_47 = arith.constant 0 : index
    %c0_48 = arith.constant 0 : index
    %87 = vector.load %arg18[%c0_47, %c0_48] : memref<32x32xf32, #tpu.memory_space<vmem>>, vector<32x32xf32>
    %cst_49 = arith.constant dense<0.000000e+00> : vector<8x32xf32>
    %88 = tpu.matmul %86, %87, %cst_49 {dimension_numbers = #tpu.dot_dimension_numbers<[1], [0], [0], [1], [0, 0, 1, 1], [], []>} : vector<8x32xf32>, vector<32x32xf32>, vector<8x32xf32> -> vector<8x32xf32>
    %c0_50 = arith.constant 0 : index
    %c0_51 = arith.constant 0 : index
    %89 = vector.load %arg19[%c0_50, %c0_51] : memref<1x32xf32, #tpu.memory_space<vmem>>, vector<1x32xf32>
    %90 = vector.broadcast %89 : vector<1x32xf32> to vector<8x32xf32>
    %91 = arith.addf %88, %90 : vector<8x32xf32>
    %c0_52 = arith.constant 0 : index
    %c0_53 = arith.constant 0 : index
    %92 = vector.load %arg20[%c0_52, %c0_53] : memref<32x32xf32, #tpu.memory_space<vmem>>, vector<32x32xf32>
    %cst_54 = arith.constant dense<0.000000e+00> : vector<8x32xf32>
    %93 = tpu.matmul %24, %92, %cst_54 {dimension_numbers = #tpu.dot_dimension_numbers<[1], [0], [0], [1], [0, 0, 1, 1], [], []>} : vector<8x32xf32>, vector<32x32xf32>, vector<8x32xf32> -> vector<8x32xf32>
    %c0_55 = arith.constant 0 : index
    %c0_56 = arith.constant 0 : index
    %94 = vector.load %arg21[%c0_55, %c0_56] : memref<1x32xf32, #tpu.memory_space<vmem>>, vector<1x32xf32>
    %95 = vector.broadcast %94 : vector<1x32xf32> to vector<8x32xf32>
    %96 = arith.addf %93, %95 : vector<8x32xf32>
    %cst_57 = arith.constant 0.000000e+00 : f32
    %97 = vector.broadcast %cst_57 : f32 to vector<8x32xf32>
    %98 = arith.maximumf %96, %97 : vector<8x32xf32>
    %c0_58 = arith.constant 0 : index
    %c0_59 = arith.constant 0 : index
    %99 = vector.load %arg22[%c0_58, %c0_59] : memref<32x32xf32, #tpu.memory_space<vmem>>, vector<32x32xf32>
    %cst_60 = arith.constant dense<0.000000e+00> : vector<8x32xf32>
    %100 = tpu.matmul %98, %99, %cst_60 {dimension_numbers = #tpu.dot_dimension_numbers<[1], [0], [0], [1], [0, 0, 1, 1], [], []>} : vector<8x32xf32>, vector<32x32xf32>, vector<8x32xf32> -> vector<8x32xf32>
    %c0_61 = arith.constant 0 : index
    %c0_62 = arith.constant 0 : index
    %101 = vector.load %arg23[%c0_61, %c0_62] : memref<1x32xf32, #tpu.memory_space<vmem>>, vector<1x32xf32>
    %102 = vector.broadcast %101 : vector<1x32xf32> to vector<8x32xf32>
    %103 = arith.addf %100, %102 : vector<8x32xf32>
    %c0_63 = arith.constant 0 : index
    %c0_64 = arith.constant 0 : index
    %104 = vector.load %arg24[%c0_63, %c0_64] : memref<32x32xf32, #tpu.memory_space<vmem>>, vector<32x32xf32>
    %cst_65 = arith.constant dense<0.000000e+00> : vector<8x32xf32>
    %105 = tpu.matmul %78, %104, %cst_65 {dimension_numbers = #tpu.dot_dimension_numbers<[1], [0], [0], [1], [0, 0, 1, 1], [], []>} : vector<8x32xf32>, vector<32x32xf32>, vector<8x32xf32> -> vector<8x32xf32>
    %106 = arith.mulf %91, %103 : vector<8x32xf32>
    %c0_66 = arith.constant 0 : index
    %c0_67 = arith.constant 0 : index
    %107 = vector.load %arg25[%c0_66, %c0_67] : memref<32x32xf32, #tpu.memory_space<vmem>>, vector<32x32xf32>
    %cst_68 = arith.constant dense<0.000000e+00> : vector<8x32xf32>
    %108 = tpu.matmul %106, %107, %cst_68 {dimension_numbers = #tpu.dot_dimension_numbers<[1], [0], [0], [1], [0, 0, 1, 1], [], []>} : vector<8x32xf32>, vector<32x32xf32>, vector<8x32xf32> -> vector<8x32xf32>
    %109 = arith.mulf %105, %108 : vector<8x32xf32>
    %c0_69 = arith.constant 0 : index
    %c0_70 = arith.constant 0 : index
    %110 = vector.load %arg26[%c0_69, %c0_70] : memref<32x32xf32, #tpu.memory_space<vmem>>, vector<32x32xf32>
    %cst_71 = arith.constant dense<0.000000e+00> : vector<8x32xf32>
    %111 = tpu.matmul %109, %110, %cst_71 {dimension_numbers = #tpu.dot_dimension_numbers<[1], [0], [0], [1], [0, 0, 1, 1], [], []>} : vector<8x32xf32>, vector<32x32xf32>, vector<8x32xf32> -> vector<8x32xf32>
    %c0_72 = arith.constant 0 : index
    %c0_73 = arith.constant 0 : index
    %112 = vector.load %arg27[%c0_72, %c0_73] : memref<1x32xf32, #tpu.memory_space<vmem>>, vector<1x32xf32>
    %113 = vector.broadcast %112 : vector<1x32xf32> to vector<8x32xf32>
    %114 = arith.addf %111, %113 : vector<8x32xf32>
    %cst_74 = arith.constant 0.000000e+00 : f32
    %115 = vector.broadcast %cst_74 : f32 to vector<8x32xf32>
    %116 = arith.maximumf %114, %115 : vector<8x32xf32>
    %c0_75 = arith.constant 0 : index
    %c0_76 = arith.constant 0 : index
    %117 = vector.load %arg28[%c0_75, %c0_76] : memref<1x32xf32, #tpu.memory_space<vmem>>, vector<1x32xf32>
    %118 = vector.broadcast %117 : vector<1x32xf32> to vector<8x32xf32>
    %119 = arith.mulf %116, %118 : vector<8x32xf32>
    %cst_77 = arith.constant dense<0.000000e+00> : vector<8xf32>
    %120 = vector.multi_reduction <add>, %119, %cst_77 [1] : vector<8x32xf32> to vector<8xf32>
    %121 = vector.shape_cast %120 : vector<8xf32> to vector<8x1xf32>
    %c0_78 = arith.constant 0 : index
    %c0_79 = arith.constant 0 : index
    %122 = vector.load %arg29[%c0_78, %c0_79] : memref<1x1xf32, #tpu.memory_space<vmem>>, vector<1x1xf32>
    %123 = vector.broadcast %122 : vector<1x1xf32> to vector<8x1xf32>
    %124 = arith.addf %121, %123 : vector<8x1xf32>
    %125 = arith.subf %22, %26 : vector<8x8xf32>
    %126 = arith.mulf %125, %125 : vector<8x8xf32>
    %cst_80 = arith.constant dense<0.000000e+00> : vector<8xf32>
    %127 = vector.multi_reduction <add>, %126, %cst_80 [1] : vector<8x8xf32> to vector<8xf32>
    %128 = vector.shape_cast %127 : vector<8xf32> to vector<8x1xf32>
    %129 = math.sqrt %128 : vector<8x1xf32>
    %cst_81 = arith.constant 1.000000e+00 : f32
    %130 = vector.broadcast %cst_81 : f32 to vector<8x1xf32>
    %131 = arith.addf %129, %130 : vector<8x1xf32>
    %132 = arith.mulf %129, %131 : vector<8x1xf32>
    %133 = vector.broadcast %124 : vector<8x1xf32> to vector<8x8xf32>
    %134 = arith.mulf %133, %125 : vector<8x8xf32>
    %cst_82 = arith.constant 9.99999968E-21 : f32
    %135 = vector.broadcast %cst_82 : f32 to vector<8x1xf32>
    %136 = arith.maximumf %132, %135 : vector<8x1xf32>
    %cst_83 = arith.constant 1.000000e+00 : f32
    %137 = vector.broadcast %cst_83 : f32 to vector<8x1xf32>
    %138 = arith.divf %137, %136 : vector<8x1xf32>
    %139 = vector.broadcast %138 : vector<8x1xf32> to vector<8x8xf32>
    %140 = arith.mulf %134, %139 : vector<8x8xf32>
    %c0_84 = arith.constant 0 : index
    %c0_85 = arith.constant 0 : index
    %141 = vector.load %arg31[%c0_84, %c0_85] : memref<8x128xf32, #tpu.memory_space<vmem>>, vector<8x128xf32>
    %142 = tpu.transpose %140, [1, 0] : vector<8x8xf32> -> vector<8x8xf32>
    %cst_86 = arith.constant dense<0.000000e+00> : vector<8x128xf32>
    %143 = tpu.matmul %142, %9, %cst_86 {dimension_numbers = #tpu.dot_dimension_numbers<[1], [0], [0], [1], [0, 0, 1, 1], [], []>} : vector<8x8xf32>, vector<8x128xf32>, vector<8x128xf32> -> vector<8x128xf32>
    %144 = arith.addf %141, %143 : vector<8x128xf32>
    %c0_87 = arith.constant 0 : index
    %c0_88 = arith.constant 0 : index
    %145 = vector.load %arg31[%c0_87, %c0_88] : memref<8x128xf32, #tpu.memory_space<vmem>>, vector<8x128xf32>
    tpu.vector_store %arg31[%c0_87, %c0_88], %144 {strides = array<i32>} : memref<8x128xf32, #tpu.memory_space<vmem>>, vector<8x128xf32>,
    return
  }
  func.func @transform_0(%arg0: i32, %arg1: i32) -> (i32, i32) {
    %c2_i32 = arith.constant 2 : i32
    %0 = arith.muli %arg0, %c2_i32 : i32
    %1 = arith.addi %0, %arg1 : i32
    %c0_i32 = arith.constant 0 : i32
    %c0_i32_0 = arith.constant 0 : i32
    return %1, %c0_i32 : i32, i32
  }
  func.func @transform_1(%arg0: i32, %arg1: i32) -> (i32, i32) {
    %c2_i32 = arith.constant 2 : i32
    %0 = arith.muli %arg0, %c2_i32 : i32
    %1 = arith.addi %0, %arg1 : i32
    %c0_i32 = arith.constant 0 : i32
    %c0_i32_0 = arith.constant 0 : i32
    return %1, %c0_i32 : i32, i32
  }
  func.func @transform_2(%arg0: i32, %arg1: i32) -> (i32, i32) {
    %c0_i32 = arith.constant 0 : i32
    %c0_i32_0 = arith.constant 0 : i32
    %c0_i32_1 = arith.constant 0 : i32
    return %c0_i32, %c0_i32_0 : i32, i32
  }
  func.func @transform_3(%arg0: i32, %arg1: i32) -> (i32, i32) {
    %c0_i32 = arith.constant 0 : i32
    %c0_i32_0 = arith.constant 0 : i32
    %c0_i32_1 = arith.constant 0 : i32
    return %c0_i32, %c0_i32_0 : i32, i32
  }
  func.func @transform_4(%arg0: i32, %arg1: i32) -> (i32, i32) {
    %c0_i32 = arith.constant 0 : i32
    %c0_i32_0 = arith.constant 0 : i32
    %c0_i32_1 = arith.constant 0 : i32
    return %c0_i32, %c0_i32_0 : i32, i32
  }
  func.func @transform_5(%arg0: i32, %arg1: i32) -> (i32, i32) {
    %c0_i32 = arith.constant 0 : i32
    %c0_i32_0 = arith.constant 0 : i32
    %c0_i32_1 = arith.constant 0 : i32
    return %c0_i32, %c0_i32_0 : i32, i32
  }
  func.func @transform_6(%arg0: i32, %arg1: i32) -> (i32, i32) {
    %c0_i32 = arith.constant 0 : i32
    %c0_i32_0 = arith.constant 0 : i32
    %c0_i32_1 = arith.constant 0 : i32
    return %c0_i32, %c0_i32_0 : i32, i32
  }
  func.func @transform_7(%arg0: i32, %arg1: i32) -> (i32, i32) {
    %c0_i32 = arith.constant 0 : i32
    %c0_i32_0 = arith.constant 0 : i32
    %c0_i32_1 = arith.constant 0 : i32
    return %c0_i32, %c0_i32_0 : i32, i32
  }
  func.func @transform_8(%arg0: i32, %arg1: i32) -> (i32, i32) {
    %c0_i32 = arith.constant 0 : i32
    %c0_i32_0 = arith.constant 0 : i32
    %c0_i32_1 = arith.constant 0 : i32
    return %c0_i32, %c0_i32_0 : i32, i32
  }
  func.func @transform_9(%arg0: i32, %arg1: i32) -> (i32, i32) {
    %c0_i32 = arith.constant 0 : i32
    %c0_i32_0 = arith.constant 0 : i32
    %c0_i32_1 = arith.constant 0 : i32
    return %c0_i32, %c0_i32_0 : i32, i32
  }
  func.func @transform_10(%arg0: i32, %arg1: i32) -> (i32, i32) {
    %c0_i32 = arith.constant 0 : i32
    %c0_i32_0 = arith.constant 0 : i32
    %c0_i32_1 = arith.constant 0 : i32
    return %c0_i32, %c0_i32_0 : i32, i32
  }
  func.func @transform_11(%arg0: i32, %arg1: i32) -> (i32, i32) {
    %c0_i32 = arith.constant 0 : i32
    %c0_i32_0 = arith.constant 0 : i32
    %c0_i32_1 = arith.constant 0 : i32
    return %c0_i32, %c0_i32_0 : i32, i32
  }
  func.func @transform_12(%arg0: i32, %arg1: i32) -> (i32, i32) {
    %c0_i32 = arith.constant 0 : i32
    %c0_i32_0 = arith.constant 0 : i32
    %c0_i32_1 = arith.constant 0 : i32
    return %c0_i32, %c0_i32_0 : i32, i32
  }
  func.func @transform_13(%arg0: i32, %arg1: i32) -> (i32, i32) {
    %c0_i32 = arith.constant 0 : i32
    %c0_i32_0 = arith.constant 0 : i32
    %c0_i32_1 = arith.constant 0 : i32
    return %c0_i32, %c0_i32_0 : i32, i32
  }
  func.func @transform_14(%arg0: i32, %arg1: i32) -> (i32, i32) {
    %c0_i32 = arith.constant 0 : i32
    %c0_i32_0 = arith.constant 0 : i32
    %c0_i32_1 = arith.constant 0 : i32
    return %c0_i32, %c0_i32_0 : i32, i32
  }
  func.func @transform_15(%arg0: i32, %arg1: i32) -> (i32, i32) {
    %c0_i32 = arith.constant 0 : i32
    %c0_i32_0 = arith.constant 0 : i32
    %c0_i32_1 = arith.constant 0 : i32
    return %c0_i32, %c0_i32_0 : i32, i32
  }
  func.func @transform_16(%arg0: i32, %arg1: i32) -> (i32, i32) {
    %c0_i32 = arith.constant 0 : i32
    %c0_i32_0 = arith.constant 0 : i32
    %c0_i32_1 = arith.constant 0 : i32
    return %c0_i32, %c0_i32_0 : i32, i32
  }
  func.func @transform_17(%arg0: i32, %arg1: i32) -> (i32, i32) {
    %c0_i32 = arith.constant 0 : i32
    %c0_i32_0 = arith.constant 0 : i32
    %c0_i32_1 = arith.constant 0 : i32
    return %c0_i32, %c0_i32_0 : i32, i32
  }
  func.func @transform_18(%arg0: i32, %arg1: i32) -> (i32, i32) {
    %c0_i32 = arith.constant 0 : i32
    %c0_i32_0 = arith.constant 0 : i32
    %c0_i32_1 = arith.constant 0 : i32
    return %c0_i32, %c0_i32_0 : i32, i32
  }
  func.func @transform_19(%arg0: i32, %arg1: i32) -> (i32, i32) {
    %c0_i32 = arith.constant 0 : i32
    %c0_i32_0 = arith.constant 0 : i32
    %c0_i32_1 = arith.constant 0 : i32
    return %c0_i32, %c0_i32_0 : i32, i32
  }
  func.func @transform_20(%arg0: i32, %arg1: i32) -> (i32, i32) {
    %c0_i32 = arith.constant 0 : i32
    %c0_i32_0 = arith.constant 0 : i32
    %c0_i32_1 = arith.constant 0 : i32
    return %c0_i32, %c0_i32_0 : i32, i32
  }
  func.func @transform_21(%arg0: i32, %arg1: i32) -> (i32, i32) {
    %c0_i32 = arith.constant 0 : i32
    %c0_i32_0 = arith.constant 0 : i32
    %c0_i32_1 = arith.constant 0 : i32
    return %c0_i32, %c0_i32_0 : i32, i32
  }
  func.func @transform_22(%arg0: i32, %arg1: i32) -> (i32, i32) {
    %c0_i32 = arith.constant 0 : i32
    %c0_i32_0 = arith.constant 0 : i32
    %c0_i32_1 = arith.constant 0 : i32
    return %c0_i32, %c0_i32_0 : i32, i32
  }
  func.func @transform_23(%arg0: i32, %arg1: i32) -> (i32, i32) {
    %c0_i32 = arith.constant 0 : i32
    %c0_i32_0 = arith.constant 0 : i32
    %c0_i32_1 = arith.constant 0 : i32
    return %c0_i32, %c0_i32_0 : i32, i32
  }
  func.func @transform_24(%arg0: i32, %arg1: i32) -> (i32, i32) {
    %c0_i32 = arith.constant 0 : i32
    %c0_i32_0 = arith.constant 0 : i32
    %c0_i32_1 = arith.constant 0 : i32
    return %c0_i32, %c0_i32_0 : i32, i32
  }
  func.func @transform_25(%arg0: i32, %arg1: i32) -> (i32, i32) {
    %c0_i32 = arith.constant 0 : i32
    %c0_i32_0 = arith.constant 0 : i32
    %c0_i32_1 = arith.constant 0 : i32
    return %c0_i32, %c0_i32_0 : i32, i32
  }
  func.func @transform_26(%arg0: i32, %arg1: i32) -> (i32, i32) {
    %c0_i32 = arith.constant 0 : i32
    %c0_i32_0 = arith.constant 0 : i32
    %c0_i32_1 = arith.constant 0 : i32
    return %c0_i32, %c0_i32_0 : i32, i32
  }
  func.func @transform_27(%arg0: i32, %arg1: i32) -> (i32, i32) {
    %c0_i32 = arith.constant 0 : i32
    %c0_i32_0 = arith.constant 0 : i32
    %c0_i32_1 = arith.constant 0 : i32
    return %c0_i32, %c0_i32_0 : i32, i32
  }
  func.func @transform_28(%arg0: i32, %arg1: i32) -> (i32, i32) {
    %c2_i32 = arith.constant 2 : i32
    %0 = arith.muli %arg0, %c2_i32 : i32
    %1 = arith.addi %0, %arg1 : i32
    %c0_i32 = arith.constant 0 : i32
    %c0_i32_0 = arith.constant 0 : i32
    return %1, %c0_i32 : i32, i32
  }
  func.func @transform_29(%arg0: i32, %arg1: i32) -> (i32, i32) {
    %c0_i32 = arith.constant 0 : i32
    %c0_i32_0 = arith.constant 0 : i32
    return %arg0, %c0_i32 : i32, i32
  }
}

module attributes {stable_mosaic.version = 11 : i64} {
  func.func @_node_update_kernel(%arg0: i32, %arg1: memref<128x32xf32, #tpu.memory_space<vmem>>, %arg2: memref<32x128xf32, #tpu.memory_space<vmem>>, %arg3: memref<32x32xf32, #tpu.memory_space<vmem>>, %arg4: memref<1x32xf32, #tpu.memory_space<vmem>>, %arg5: memref<1x32xf32, #tpu.memory_space<vmem>>, %arg6: memref<1x32xf32, #tpu.memory_space<vmem>>, %arg7: memref<32x32xf32, #tpu.memory_space<vmem>>, %arg8: memref<1x32xf32, #tpu.memory_space<vmem>>, %arg9: memref<128x32xf32, #tpu.memory_space<vmem>>) attributes {dimension_semantics = [#tpu.dimension_semantics<parallel>], iteration_bounds = array<i64: 1>, scalar_prefetch = 0 : i64, scratch_operands = 0 : i64, tpu.core_type = #tpu.core_type<tc>, window_params = [{transform_indices = @transform_0, window_bounds = array<i64: 128, 32>}, {transform_indices = @transform_1, window_bounds = array<i64: 32, 128>}, {pipeline_mode = #tpu.pipeline_mode<synchronous>, transform_indices = @transform_2, window_bounds = array<i64: 32, 32>}, {pipeline_mode = #tpu.pipeline_mode<synchronous>, transform_indices = @transform_3, window_bounds = array<i64: 1, 32>}, {pipeline_mode = #tpu.pipeline_mode<synchronous>, transform_indices = @transform_4, window_bounds = array<i64: 1, 32>}, {pipeline_mode = #tpu.pipeline_mode<synchronous>, transform_indices = @transform_5, window_bounds = array<i64: 1, 32>}, {pipeline_mode = #tpu.pipeline_mode<synchronous>, transform_indices = @transform_6, window_bounds = array<i64: 32, 32>}, {pipeline_mode = #tpu.pipeline_mode<synchronous>, transform_indices = @transform_7, window_bounds = array<i64: 1, 32>}, {transform_indices = @transform_8, window_bounds = array<i64: 128, 32>}]} {
    %c0 = arith.constant 0 : index
    %c0_0 = arith.constant 0 : index
    %0 = vector.load %arg1[%c0, %c0_0] : memref<128x32xf32, #tpu.memory_space<vmem>>, vector<128x32xf32>
    %c0_1 = arith.constant 0 : index
    %c0_2 = arith.constant 0 : index
    %1 = vector.load %arg2[%c0_1, %c0_2] : memref<32x128xf32, #tpu.memory_space<vmem>>, vector<32x128xf32>
    %2 = tpu.transpose %1, [1, 0] : vector<32x128xf32> -> vector<128x32xf32>
    %c0_3 = arith.constant 0 : index
    %c0_4 = arith.constant 0 : index
    %3 = vector.load %arg3[%c0_3, %c0_4] : memref<32x32xf32, #tpu.memory_space<vmem>>, vector<32x32xf32>
    %cst = arith.constant dense<0.000000e+00> : vector<128x32xf32>
    %4 = tpu.matmul %0, %3, %cst {dimension_numbers = #tpu.dot_dimension_numbers<[1], [0], [0], [1], [0, 0, 1, 1], [], []>} : vector<128x32xf32>, vector<32x32xf32>, vector<128x32xf32> -> vector<128x32xf32>
    %c0_5 = arith.constant 0 : index
    %c0_6 = arith.constant 0 : index
    %5 = vector.load %arg4[%c0_5, %c0_6] : memref<1x32xf32, #tpu.memory_space<vmem>>, vector<1x32xf32>
    %6 = vector.broadcast %5 : vector<1x32xf32> to vector<128x32xf32>
    %7 = arith.addf %4, %6 : vector<128x32xf32>
    %8 = arith.addf %7, %2 : vector<128x32xf32>
    %cst_7 = arith.constant dense<0.000000e+00> : vector<128xf32>
    %9 = vector.multi_reduction <add>, %8, %cst_7 [1] : vector<128x32xf32> to vector<128xf32>
    %10 = vector.shape_cast %9 : vector<128xf32> to vector<128x1xf32>
    %cst_8 = arith.constant 3.200000e+01 : f32
    %11 = vector.broadcast %cst_8 : f32 to vector<128x1xf32>
    %12 = arith.divf %10, %11 : vector<128x1xf32>
    %13 = vector.broadcast %12 : vector<128x1xf32> to vector<128x32xf32>
    %14 = arith.subf %8, %13 : vector<128x32xf32>
    %15 = arith.mulf %14, %14 : vector<128x32xf32>
    %cst_9 = arith.constant dense<0.000000e+00> : vector<128xf32>
    %16 = vector.multi_reduction <add>, %15, %cst_9 [1] : vector<128x32xf32> to vector<128xf32>
    %17 = vector.shape_cast %16 : vector<128xf32> to vector<128x1xf32>
    %cst_10 = arith.constant 3.200000e+01 : f32
    %18 = vector.broadcast %cst_10 : f32 to vector<128x1xf32>
    %19 = arith.divf %17, %18 : vector<128x1xf32>
    %20 = vector.broadcast %12 : vector<128x1xf32> to vector<128x32xf32>
    %21 = arith.subf %8, %20 : vector<128x32xf32>
    %cst_11 = arith.constant 9.99999974E-6 : f32
    %22 = vector.broadcast %cst_11 : f32 to vector<128x1xf32>
    %23 = arith.addf %19, %22 : vector<128x1xf32>
    %24 = math.rsqrt %23 : vector<128x1xf32>
    %25 = vector.broadcast %24 : vector<128x1xf32> to vector<128x32xf32>
    %26 = arith.mulf %21, %25 : vector<128x32xf32>
    %c0_12 = arith.constant 0 : index
    %c0_13 = arith.constant 0 : index
    %27 = vector.load %arg5[%c0_12, %c0_13] : memref<1x32xf32, #tpu.memory_space<vmem>>, vector<1x32xf32>
    %28 = vector.broadcast %27 : vector<1x32xf32> to vector<128x32xf32>
    %29 = arith.mulf %26, %28 : vector<128x32xf32>
    %c0_14 = arith.constant 0 : index
    %c0_15 = arith.constant 0 : index
    %30 = vector.load %arg6[%c0_14, %c0_15] : memref<1x32xf32, #tpu.memory_space<vmem>>, vector<1x32xf32>
    %31 = vector.broadcast %30 : vector<1x32xf32> to vector<128x32xf32>
    %32 = arith.addf %29, %31 : vector<128x32xf32>
    %cst_16 = arith.constant 0.000000e+00 : f32
    %33 = vector.broadcast %cst_16 : f32 to vector<128x32xf32>
    %34 = arith.maximumf %32, %33 : vector<128x32xf32>
    %c0_17 = arith.constant 0 : index
    %c0_18 = arith.constant 0 : index
    %35 = vector.load %arg7[%c0_17, %c0_18] : memref<32x32xf32, #tpu.memory_space<vmem>>, vector<32x32xf32>
    %cst_19 = arith.constant dense<0.000000e+00> : vector<128x32xf32>
    %36 = tpu.matmul %34, %35, %cst_19 {dimension_numbers = #tpu.dot_dimension_numbers<[1], [0], [0], [1], [0, 0, 1, 1], [], []>} : vector<128x32xf32>, vector<32x32xf32>, vector<128x32xf32> -> vector<128x32xf32>
    %37 = arith.addf %0, %36 : vector<128x32xf32>
    %c0_20 = arith.constant 0 : index
    %c0_21 = arith.constant 0 : index
    %38 = vector.load %arg8[%c0_20, %c0_21] : memref<1x32xf32, #tpu.memory_space<vmem>>, vector<1x32xf32>
    %39 = vector.broadcast %38 : vector<1x32xf32> to vector<128x32xf32>
    %40 = arith.addf %37, %39 : vector<128x32xf32>
    %c0_22 = arith.constant 0 : index
    %c0_23 = arith.constant 0 : index
    %41 = vector.load %arg9[%c0_22, %c0_23] : memref<128x32xf32, #tpu.memory_space<vmem>>, vector<128x32xf32>
    tpu.vector_store %arg9[%c0_22, %c0_23], %40 {strides = array<i32>} : memref<128x32xf32, #tpu.memory_space<vmem>>, vector<128x32xf32>,
    return
  }
  func.func @transform_0(%arg0: i32) -> (i32, i32) {
    %c0_i32 = arith.constant 0 : i32
    %c0_i32_0 = arith.constant 0 : i32
    return %arg0, %c0_i32 : i32, i32
  }
  func.func @transform_1(%arg0: i32) -> (i32, i32) {
    %c0_i32 = arith.constant 0 : i32
    %c0_i32_0 = arith.constant 0 : i32
    return %c0_i32, %arg0 : i32, i32
  }
  func.func @transform_2(%arg0: i32) -> (i32, i32) {
    %c0_i32 = arith.constant 0 : i32
    %c0_i32_0 = arith.constant 0 : i32
    %c0_i32_1 = arith.constant 0 : i32
    return %c0_i32, %c0_i32_0 : i32, i32
  }
  func.func @transform_3(%arg0: i32) -> (i32, i32) {
    %c0_i32 = arith.constant 0 : i32
    %c0_i32_0 = arith.constant 0 : i32
    %c0_i32_1 = arith.constant 0 : i32
    return %c0_i32, %c0_i32_0 : i32, i32
  }
  func.func @transform_4(%arg0: i32) -> (i32, i32) {
    %c0_i32 = arith.constant 0 : i32
    %c0_i32_0 = arith.constant 0 : i32
    %c0_i32_1 = arith.constant 0 : i32
    return %c0_i32, %c0_i32_0 : i32, i32
  }
  func.func @transform_5(%arg0: i32) -> (i32, i32) {
    %c0_i32 = arith.constant 0 : i32
    %c0_i32_0 = arith.constant 0 : i32
    %c0_i32_1 = arith.constant 0 : i32
    return %c0_i32, %c0_i32_0 : i32, i32
  }
  func.func @transform_6(%arg0: i32) -> (i32, i32) {
    %c0_i32 = arith.constant 0 : i32
    %c0_i32_0 = arith.constant 0 : i32
    %c0_i32_1 = arith.constant 0 : i32
    return %c0_i32, %c0_i32_0 : i32, i32
  }
  func.func @transform_7(%arg0: i32) -> (i32, i32) {
    %c0_i32 = arith.constant 0 : i32
    %c0_i32_0 = arith.constant 0 : i32
    %c0_i32_1 = arith.constant 0 : i32
    return %c0_i32, %c0_i32_0 : i32, i32
  }
  func.func @transform_8(%arg0: i32) -> (i32, i32) {
    %c0_i32 = arith.constant 0 : i32
    %c0_i32_0 = arith.constant 0 : i32
    return %arg0, %c0_i32 : i32, i32
  }
}

module attributes {stable_mosaic.version = 11 : i64} {
  func.func @_edge_scatter_kernel(%arg0: i32, %arg1: i32, %arg2: memref<8x32xf32, #tpu.memory_space<vmem>>, %arg3: memref<8x2xi32, #tpu.memory_space<vmem>>, %arg4: memref<128x40xf32, #tpu.memory_space<vmem>>, %arg5: memref<1x16xf32, #tpu.memory_space<vmem>>, %arg6: memref<32x32xf32, #tpu.memory_space<vmem>>, %arg7: memref<16x32xf32, #tpu.memory_space<vmem>>, %arg8: memref<1x32xf32, #tpu.memory_space<vmem>>, %arg9: memref<32x160xf32, #tpu.memory_space<vmem>>, %arg10: memref<1x32xf32, #tpu.memory_space<vmem>>, %arg11: memref<32x32xf32, #tpu.memory_space<vmem>>, %arg12: memref<1x32xf32, #tpu.memory_space<vmem>>, %arg13: memref<32x96xf32, #tpu.memory_space<vmem>>, %arg14: memref<1x32xf32, #tpu.memory_space<vmem>>, %arg15: memref<32x32xf32, #tpu.memory_space<vmem>>, %arg16: memref<1x32xf32, #tpu.memory_space<vmem>>, %arg17: memref<32x32xf32, #tpu.memory_space<vmem>>, %arg18: memref<1x32xf32, #tpu.memory_space<vmem>>, %arg19: memref<32x64xf32, #tpu.memory_space<vmem>>, %arg20: memref<64x64xf32, #tpu.memory_space<vmem>>, %arg21: memref<1x64xf32, #tpu.memory_space<vmem>>, %arg22: memref<64x32xf32, #tpu.memory_space<vmem>>, %arg23: memref<1x32xf32, #tpu.memory_space<vmem>>, %arg24: memref<64x64xf32, #tpu.memory_space<vmem>>, %arg25: memref<1x64xf32, #tpu.memory_space<vmem>>, %arg26: memref<64x32xf32, #tpu.memory_space<vmem>>, %arg27: memref<1x32xf32, #tpu.memory_space<vmem>>, %arg28: memref<8x32xf32, #tpu.memory_space<vmem>>, %arg29: memref<64x128xf32, #tpu.memory_space<vmem>>, %arg30: memref<32x128xf32, #tpu.memory_space<vmem>>) attributes {dimension_semantics = [#tpu.dimension_semantics<parallel>, #tpu.dimension_semantics<arbitrary>], iteration_bounds = array<i64: 2, 2>, scalar_prefetch = 0 : i64, scratch_operands = 0 : i64, tpu.core_type = #tpu.core_type<tc>, window_params = [{transform_indices = @transform_0, window_bounds = array<i64: 8, 32>}, {transform_indices = @transform_1, window_bounds = array<i64: 8, 2>}, {pipeline_mode = #tpu.pipeline_mode<synchronous>, transform_indices = @transform_2, window_bounds = array<i64: 128, 40>}, {pipeline_mode = #tpu.pipeline_mode<synchronous>, transform_indices = @transform_3, window_bounds = array<i64: 1, 16>}, {pipeline_mode = #tpu.pipeline_mode<synchronous>, transform_indices = @transform_4, window_bounds = array<i64: 32, 32>}, {pipeline_mode = #tpu.pipeline_mode<synchronous>, transform_indices = @transform_5, window_bounds = array<i64: 16, 32>}, {pipeline_mode = #tpu.pipeline_mode<synchronous>, transform_indices = @transform_6, window_bounds = array<i64: 1, 32>}, {pipeline_mode = #tpu.pipeline_mode<synchronous>, transform_indices = @transform_7, window_bounds = array<i64: 32, 160>}, {pipeline_mode = #tpu.pipeline_mode<synchronous>, transform_indices = @transform_8, window_bounds = array<i64: 1, 32>}, {pipeline_mode = #tpu.pipeline_mode<synchronous>, transform_indices = @transform_9, window_bounds = array<i64: 32, 32>}, {pipeline_mode = #tpu.pipeline_mode<synchronous>, transform_indices = @transform_10, window_bounds = array<i64: 1, 32>}, {pipeline_mode = #tpu.pipeline_mode<synchronous>, transform_indices = @transform_11, window_bounds = array<i64: 32, 96>}, {pipeline_mode = #tpu.pipeline_mode<synchronous>, transform_indices = @transform_12, window_bounds = array<i64: 1, 32>}, {pipeline_mode = #tpu.pipeline_mode<synchronous>, transform_indices = @transform_13, window_bounds = array<i64: 32, 32>}, {pipeline_mode = #tpu.pipeline_mode<synchronous>, transform_indices = @transform_14, window_bounds = array<i64: 1, 32>}, {pipeline_mode = #tpu.pipeline_mode<synchronous>, transform_indices = @transform_15, window_bounds = array<i64: 32, 32>}, {pipeline_mode = #tpu.pipeline_mode<synchronous>, transform_indices = @transform_16, window_bounds = array<i64: 1, 32>}, {pipeline_mode = #tpu.pipeline_mode<synchronous>, transform_indices = @transform_17, window_bounds = array<i64: 32, 64>}, {pipeline_mode = #tpu.pipeline_mode<synchronous>, transform_indices = @transform_18, window_bounds = array<i64: 64, 64>}, {pipeline_mode = #tpu.pipeline_mode<synchronous>, transform_indices = @transform_19, window_bounds = array<i64: 1, 64>}, {pipeline_mode = #tpu.pipeline_mode<synchronous>, transform_indices = @transform_20, window_bounds = array<i64: 64, 32>}, {pipeline_mode = #tpu.pipeline_mode<synchronous>, transform_indices = @transform_21, window_bounds = array<i64: 1, 32>}, {pipeline_mode = #tpu.pipeline_mode<synchronous>, transform_indices = @transform_22, window_bounds = array<i64: 64, 64>}, {pipeline_mode = #tpu.pipeline_mode<synchronous>, transform_indices = @transform_23, window_bounds = array<i64: 1, 64>}, {pipeline_mode = #tpu.pipeline_mode<synchronous>, transform_indices = @transform_24, window_bounds = array<i64: 64, 32>}, {pipeline_mode = #tpu.pipeline_mode<synchronous>, transform_indices = @transform_25, window_bounds = array<i64: 1, 32>}, {transform_indices = @transform_26, window_bounds = array<i64: 8, 32>}, {transform_indices = @transform_27, window_bounds = array<i64: 64, 128>}, {transform_indices = @transform_28, window_bounds = array<i64: 32, 128>}]} {
    %c0_i32 = arith.constant 0 : i32
    %0 = arith.cmpi eq, %arg1, %c0_i32 : i32
    %1 = arith.extui %0 : i1 to i32
    %c0_i32_0 = arith.constant 0 : i32
    %2 = arith.cmpi ne, %1, %c0_i32_0 : i32
    scf.if %2 {
      %cst_83 = arith.constant 0.000000e+00 : f32
      %120 = vector.broadcast %cst_83 : f32 to vector<64x128xf32>
      %c0_84 = arith.constant 0 : index
      %c0_85 = arith.constant 0 : index
      %121 = vector.load %arg29[%c0_84, %c0_85] : memref<64x128xf32, #tpu.memory_space<vmem>>, vector<64x128xf32>
      tpu.vector_store %arg29[%c0_84, %c0_85], %120 {strides = array<i32>} : memref<64x128xf32, #tpu.memory_space<vmem>>, vector<64x128xf32>,
      %cst_86 = arith.constant 0.000000e+00 : f32
      %122 = vector.broadcast %cst_86 : f32 to vector<32x128xf32>
      %c0_87 = arith.constant 0 : index
      %c0_88 = arith.constant 0 : index
      %123 = vector.load %arg30[%c0_87, %c0_88] : memref<32x128xf32, #tpu.memory_space<vmem>>, vector<32x128xf32>
      tpu.vector_store %arg30[%c0_87, %c0_88], %122 {strides = array<i32>} : memref<32x128xf32, #tpu.memory_space<vmem>>, vector<32x128xf32>,
    } else {
    }
    %3 = tpu.iota {dimensions = array<i32: 1>} : vector<8x128xi32>
    %c0 = arith.constant 0 : index
    %c0_1 = arith.constant 0 : index
    %4 = vector.load %arg3[%c0, %c0_1] : memref<8x2xi32, #tpu.memory_space<vmem>>, vector<8x2xi32>
    %5 = vector.extract_strided_slice %4 {offsets = [0, 0], sizes = [8, 1], strides = [1, 1]} : vector<8x2xi32> to vector<8x1xi32>
    %6 = vector.broadcast %5 : vector<8x1xi32> to vector<8x128xi32>
    %7 = arith.cmpi eq, %3, %6 : vector<8x128xi32>
    %8 = arith.extui %7 : vector<8x128xi1> to vector<8x128xi32>
    %9 = arith.sitofp %8 : vector<8x128xi32> to vector<8x128xf32>
    %10 = vector.extract_strided_slice %4 {offsets = [0, 1], sizes = [8, 1], strides = [1, 1]} : vector<8x2xi32> to vector<8x1xi32>
    %11 = vector.broadcast %10 : vector<8x1xi32> to vector<8x128xi32>
    %12 = arith.cmpi eq, %3, %11 : vector<8x128xi32>
    %13 = arith.extui %12 : vector<8x128xi1> to vector<8x128xi32>
    %14 = arith.sitofp %13 : vector<8x128xi32> to vector<8x128xf32>
    %c0_2 = arith.constant 0 : index
    %c0_3 = arith.constant 0 : index
    %15 = vector.load %arg4[%c0_2, %c0_3] : memref<128x40xf32, #tpu.memory_space<vmem>>, vector<128x40xf32>
    %cst = arith.constant dense<0.000000e+00> : vector<8x40xf32>
    %16 = tpu.matmul %9, %15, %cst {dimension_numbers = #tpu.dot_dimension_numbers<[1], [0], [0], [1], [0, 0, 1, 1], [], []>} : vector<8x128xf32>, vector<128x40xf32>, vector<8x40xf32> -> vector<8x40xf32>
    %cst_4 = arith.constant dense<0.000000e+00> : vector<8x40xf32>
    %17 = tpu.matmul %14, %15, %cst_4 {dimension_numbers = #tpu.dot_dimension_numbers<[1], [0], [0], [1], [0, 0, 1, 1], [], []>} : vector<8x128xf32>, vector<128x40xf32>, vector<8x40xf32> -> vector<8x40xf32>
    %18 = vector.extract_strided_slice %16 {offsets = [0, 0], sizes = [8, 32], strides = [1, 1]} : vector<8x40xf32> to vector<8x32xf32>
    %19 = vector.extract_strided_slice %16 {offsets = [0, 32], sizes = [8, 8], strides = [1, 1]} : vector<8x40xf32> to vector<8x8xf32>
    %20 = vector.extract_strided_slice %17 {offsets = [0, 0], sizes = [8, 32], strides = [1, 1]} : vector<8x40xf32> to vector<8x32xf32>
    %21 = vector.extract_strided_slice %17 {offsets = [0, 32], sizes = [8, 8], strides = [1, 1]} : vector<8x40xf32> to vector<8x8xf32>
    %22 = arith.subf %19, %21 : vector<8x8xf32>
    %23 = arith.mulf %22, %22 : vector<8x8xf32>
    %cst_5 = arith.constant dense<0.000000e+00> : vector<8xf32>
    %24 = vector.multi_reduction <add>, %23, %cst_5 [1] : vector<8x8xf32> to vector<8xf32>
    %25 = vector.shape_cast %24 : vector<8xf32> to vector<8x1xf32>
    %26 = math.sqrt %25 : vector<8x1xf32>
    %c0_6 = arith.constant 0 : index
    %c0_7 = arith.constant 0 : index
    %27 = vector.load %arg5[%c0_6, %c0_7] : memref<1x16xf32, #tpu.memory_space<vmem>>, vector<1x16xf32>
    %28 = vector.broadcast %26 : vector<8x1xf32> to vector<8x16xf32>
    %29 = vector.broadcast %27 : vector<1x16xf32> to vector<8x16xf32>
    %30 = arith.subf %28, %29 : vector<8x16xf32>
    %31 = arith.mulf %30, %30 : vector<8x16xf32>
    %cst_8 = arith.constant -1.125000e+00 : f32
    %32 = vector.broadcast %cst_8 : f32 to vector<8x16xf32>
    %33 = arith.mulf %32, %31 : vector<8x16xf32>
    %34 = math.exp %33 : vector<8x16xf32>
    %c0_9 = arith.constant 0 : index
    %c0_10 = arith.constant 0 : index
    %35 = vector.load %arg2[%c0_9, %c0_10] : memref<8x32xf32, #tpu.memory_space<vmem>>, vector<8x32xf32>
    %c0_11 = arith.constant 0 : index
    %c0_12 = arith.constant 0 : index
    %36 = vector.load %arg6[%c0_11, %c0_12] : memref<32x32xf32, #tpu.memory_space<vmem>>, vector<32x32xf32>
    %cst_13 = arith.constant dense<0.000000e+00> : vector<8x32xf32>
    %37 = tpu.matmul %35, %36, %cst_13 {dimension_numbers = #tpu.dot_dimension_numbers<[1], [0], [0], [1], [0, 0, 1, 1], [], []>} : vector<8x32xf32>, vector<32x32xf32>, vector<8x32xf32> -> vector<8x32xf32>
    %c0_14 = arith.constant 0 : index
    %c0_15 = arith.constant 0 : index
    %38 = vector.load %arg7[%c0_14, %c0_15] : memref<16x32xf32, #tpu.memory_space<vmem>>, vector<16x32xf32>
    %cst_16 = arith.constant dense<0.000000e+00> : vector<8x32xf32>
    %39 = tpu.matmul %34, %38, %cst_16 {dimension_numbers = #tpu.dot_dimension_numbers<[1], [0], [0], [1], [0, 0, 1, 1], [], []>} : vector<8x16xf32>, vector<16x32xf32>, vector<8x32xf32> -> vector<8x32xf32>
    %40 = arith.addf %37, %39 : vector<8x32xf32>
    %c0_17 = arith.constant 0 : index
    %c0_18 = arith.constant 0 : index
    %41 = vector.load %arg8[%c0_17, %c0_18] : memref<1x32xf32, #tpu.memory_space<vmem>>, vector<1x32xf32>
    %42 = vector.broadcast %41 : vector<1x32xf32> to vector<8x32xf32>
    %43 = arith.addf %40, %42 : vector<8x32xf32>
    %c0_19 = arith.constant 0 : index
    %c0_20 = arith.constant 0 : index
    %44 = vector.load %arg28[%c0_19, %c0_20] : memref<8x32xf32, #tpu.memory_space<vmem>>, vector<8x32xf32>
    tpu.vector_store %arg28[%c0_19, %c0_20], %43 {strides = array<i32>} : memref<8x32xf32, #tpu.memory_space<vmem>>, vector<8x32xf32>,
    %c0_21 = arith.constant 0 : index
    %c0_22 = arith.constant 0 : index
    %45 = vector.load %arg9[%c0_21, %c0_22] : memref<32x160xf32, #tpu.memory_space<vmem>>, vector<32x160xf32>
    %cst_23 = arith.constant dense<0.000000e+00> : vector<8x160xf32>
    %46 = tpu.matmul %43, %45, %cst_23 {dimension_numbers = #tpu.dot_dimension_numbers<[1], [0], [0], [1], [0, 0, 1, 1], [], []>} : vector<8x32xf32>, vector<32x160xf32>, vector<8x160xf32> -> vector<8x160xf32>
    %47 = vector.extract_strided_slice %46 {offsets = [0, 0], sizes = [8, 32], strides = [1, 1]} : vector<8x160xf32> to vector<8x32xf32>
    %c0_24 = arith.constant 0 : index
    %c0_25 = arith.constant 0 : index
    %48 = vector.load %arg10[%c0_24, %c0_25] : memref<1x32xf32, #tpu.memory_space<vmem>>, vector<1x32xf32>
    %49 = vector.broadcast %48 : vector<1x32xf32> to vector<8x32xf32>
    %50 = arith.addf %47, %49 : vector<8x32xf32>
    %cst_26 = arith.constant 0.000000e+00 : f32
    %51 = vector.broadcast %cst_26 : f32 to vector<8x32xf32>
    %52 = arith.maximumf %50, %51 : vector<8x32xf32>
    %53 = vector.extract_strided_slice %46 {offsets = [0, 32], sizes = [8, 64], strides = [1, 1]} : vector<8x160xf32> to vector<8x64xf32>
    %54 = vector.extract_strided_slice %46 {offsets = [0, 96], sizes = [8, 64], strides = [1, 1]} : vector<8x160xf32> to vector<8x64xf32>
    %c0_27 = arith.constant 0 : index
    %c0_28 = arith.constant 0 : index
    %55 = vector.load %arg11[%c0_27, %c0_28] : memref<32x32xf32, #tpu.memory_space<vmem>>, vector<32x32xf32>
    %cst_29 = arith.constant dense<0.000000e+00> : vector<8x32xf32>
    %56 = tpu.matmul %52, %55, %cst_29 {dimension_numbers = #tpu.dot_dimension_numbers<[1], [0], [0], [1], [0, 0, 1, 1], [], []>} : vector<8x32xf32>, vector<32x32xf32>, vector<8x32xf32> -> vector<8x32xf32>
    %c0_30 = arith.constant 0 : index
    %c0_31 = arith.constant 0 : index
    %57 = vector.load %arg12[%c0_30, %c0_31] : memref<1x32xf32, #tpu.memory_space<vmem>>, vector<1x32xf32>
    %58 = vector.broadcast %57 : vector<1x32xf32> to vector<8x32xf32>
    %59 = arith.addf %56, %58 : vector<8x32xf32>
    %c0_32 = arith.constant 0 : index
    %c0_33 = arith.constant 0 : index
    %60 = vector.load %arg13[%c0_32, %c0_33] : memref<32x96xf32, #tpu.memory_space<vmem>>, vector<32x96xf32>
    %cst_34 = arith.constant dense<0.000000e+00> : vector<8x96xf32>
    %61 = tpu.matmul %20, %60, %cst_34 {dimension_numbers = #tpu.dot_dimension_numbers<[1], [0], [0], [1], [0, 0, 1, 1], [], []>} : vector<8x32xf32>, vector<32x96xf32>, vector<8x96xf32> -> vector<8x96xf32>
    %62 = vector.extract_strided_slice %61 {offsets = [0, 0], sizes = [8, 32], strides = [1, 1]} : vector<8x96xf32> to vector<8x32xf32>
    %c0_35 = arith.constant 0 : index
    %c0_36 = arith.constant 0 : index
    %63 = vector.load %arg14[%c0_35, %c0_36] : memref<1x32xf32, #tpu.memory_space<vmem>>, vector<1x32xf32>
    %64 = vector.broadcast %63 : vector<1x32xf32> to vector<8x32xf32>
    %65 = arith.addf %62, %64 : vector<8x32xf32>
    %cst_37 = arith.constant 0.000000e+00 : f32
    %66 = vector.broadcast %cst_37 : f32 to vector<8x32xf32>
    %67 = arith.maximumf %65, %66 : vector<8x32xf32>
    %68 = vector.extract_strided_slice %61 {offsets = [0, 32], sizes = [8, 64], strides = [1, 1]} : vector<8x96xf32> to vector<8x64xf32>
    %c0_38 = arith.constant 0 : index
    %c0_39 = arith.constant 0 : index
    %69 = vector.load %arg15[%c0_38, %c0_39] : memref<32x32xf32, #tpu.memory_space<vmem>>, vector<32x32xf32>
    %cst_40 = arith.constant dense<0.000000e+00> : vector<8x32xf32>
    %70 = tpu.matmul %67, %69, %cst_40 {dimension_numbers = #tpu.dot_dimension_numbers<[1], [0], [0], [1], [0, 0, 1, 1], [], []>} : vector<8x32xf32>, vector<32x32xf32>, vector<8x32xf32> -> vector<8x32xf32>
    %c0_41 = arith.constant 0 : index
    %c0_42 = arith.constant 0 : index
    %71 = vector.load %arg16[%c0_41, %c0_42] : memref<1x32xf32, #tpu.memory_space<vmem>>, vector<1x32xf32>
    %72 = vector.broadcast %71 : vector<1x32xf32> to vector<8x32xf32>
    %73 = arith.addf %70, %72 : vector<8x32xf32>
    %74 = arith.mulf %59, %73 : vector<8x32xf32>
    %c0_43 = arith.constant 0 : index
    %c0_44 = arith.constant 0 : index
    %75 = vector.load %arg17[%c0_43, %c0_44] : memref<32x32xf32, #tpu.memory_space<vmem>>, vector<32x32xf32>
    %cst_45 = arith.constant dense<0.000000e+00> : vector<8x32xf32>
    %76 = tpu.matmul %74, %75, %cst_45 {dimension_numbers = #tpu.dot_dimension_numbers<[1], [0], [0], [1], [0, 0, 1, 1], [], []>} : vector<8x32xf32>, vector<32x32xf32>, vector<8x32xf32> -> vector<8x32xf32>
    %c0_46 = arith.constant 0 : index
    %c0_47 = arith.constant 0 : index
    %77 = vector.load %arg18[%c0_46, %c0_47] : memref<1x32xf32, #tpu.memory_space<vmem>>, vector<1x32xf32>
    %78 = vector.broadcast %77 : vector<1x32xf32> to vector<8x32xf32>
    %79 = arith.addf %76, %78 : vector<8x32xf32>
    %c0_48 = arith.constant 0 : index
    %c0_49 = arith.constant 0 : index
    %80 = vector.load %arg19[%c0_48, %c0_49] : memref<32x64xf32, #tpu.memory_space<vmem>>, vector<32x64xf32>
    %cst_50 = arith.constant dense<0.000000e+00> : vector<8x64xf32>
    %81 = tpu.matmul %18, %80, %cst_50 {dimension_numbers = #tpu.dot_dimension_numbers<[1], [0], [0], [1], [0, 0, 1, 1], [], []>} : vector<8x32xf32>, vector<32x64xf32>, vector<8x64xf32> -> vector<8x64xf32>
    %82 = arith.mulf %53, %81 : vector<8x64xf32>
    %83 = arith.mulf %54, %68 : vector<8x64xf32>
    %c0_51 = arith.constant 0 : index
    %c0_52 = arith.constant 0 : index
    %84 = vector.load %arg20[%c0_51, %c0_52] : memref<64x64xf32, #tpu.memory_space<vmem>>, vector<64x64xf32>
    %cst_53 = arith.constant dense<0.000000e+00> : vector<8x64xf32>
    %85 = tpu.matmul %82, %84, %cst_53 {dimension_numbers = #tpu.dot_dimension_numbers<[1], [0], [0], [1], [0, 0, 1, 1], [], []>} : vector<8x64xf32>, vector<64x64xf32>, vector<8x64xf32> -> vector<8x64xf32>
    %c0_54 = arith.constant 0 : index
    %c0_55 = arith.constant 0 : index
    %86 = vector.load %arg21[%c0_54, %c0_55] : memref<1x64xf32, #tpu.memory_space<vmem>>, vector<1x64xf32>
    %87 = vector.broadcast %86 : vector<1x64xf32> to vector<8x64xf32>
    %88 = arith.addf %85, %87 : vector<8x64xf32>
    %cst_56 = arith.constant 0.000000e+00 : f32
    %89 = vector.broadcast %cst_56 : f32 to vector<8x64xf32>
    %90 = arith.maximumf %88, %89 : vector<8x64xf32>
    %c0_57 = arith.constant 0 : index
    %c0_58 = arith.constant 0 : index
    %91 = vector.load %arg22[%c0_57, %c0_58] : memref<64x32xf32, #tpu.memory_space<vmem>>, vector<64x32xf32>
    %cst_59 = arith.constant dense<0.000000e+00> : vector<8x32xf32>
    %92 = tpu.matmul %90, %91, %cst_59 {dimension_numbers = #tpu.dot_dimension_numbers<[1], [0], [0], [1], [0, 0, 1, 1], [], []>} : vector<8x64xf32>, vector<64x32xf32>, vector<8x32xf32> -> vector<8x32xf32>
    %c0_60 = arith.constant 0 : index
    %c0_61 = arith.constant 0 : index
    %93 = vector.load %arg23[%c0_60, %c0_61] : memref<1x32xf32, #tpu.memory_space<vmem>>, vector<1x32xf32>
    %94 = vector.broadcast %93 : vector<1x32xf32> to vector<8x32xf32>
    %95 = arith.addf %92, %94 : vector<8x32xf32>
    %c0_62 = arith.constant 0 : index
    %c0_63 = arith.constant 0 : index
    %96 = vector.load %arg24[%c0_62, %c0_63] : memref<64x64xf32, #tpu.memory_space<vmem>>, vector<64x64xf32>
    %cst_64 = arith.constant dense<0.000000e+00> : vector<8x64xf32>
    %97 = tpu.matmul %83, %96, %cst_64 {dimension_numbers = #tpu.dot_dimension_numbers<[1], [0], [0], [1], [0, 0, 1, 1], [], []>} : vector<8x64xf32>, vector<64x64xf32>, vector<8x64xf32> -> vector<8x64xf32>
    %c0_65 = arith.constant 0 : index
    %c0_66 = arith.constant 0 : index
    %98 = vector.load %arg25[%c0_65, %c0_66] : memref<1x64xf32, #tpu.memory_space<vmem>>, vector<1x64xf32>
    %99 = vector.broadcast %98 : vector<1x64xf32> to vector<8x64xf32>
    %100 = arith.addf %97, %99 : vector<8x64xf32>
    %cst_67 = arith.constant 0.000000e+00 : f32
    %101 = vector.broadcast %cst_67 : f32 to vector<8x64xf32>
    %102 = arith.maximumf %100, %101 : vector<8x64xf32>
    %c0_68 = arith.constant 0 : index
    %c0_69 = arith.constant 0 : index
    %103 = vector.load %arg26[%c0_68, %c0_69] : memref<64x32xf32, #tpu.memory_space<vmem>>, vector<64x32xf32>
    %cst_70 = arith.constant dense<0.000000e+00> : vector<8x32xf32>
    %104 = tpu.matmul %102, %103, %cst_70 {dimension_numbers = #tpu.dot_dimension_numbers<[1], [0], [0], [1], [0, 0, 1, 1], [], []>} : vector<8x64xf32>, vector<64x32xf32>, vector<8x32xf32> -> vector<8x32xf32>
    %c0_71 = arith.constant 0 : index
    %c0_72 = arith.constant 0 : index
    %105 = vector.load %arg27[%c0_71, %c0_72] : memref<1x32xf32, #tpu.memory_space<vmem>>, vector<1x32xf32>
    %106 = vector.broadcast %105 : vector<1x32xf32> to vector<8x32xf32>
    %107 = arith.addf %104, %106 : vector<8x32xf32>
    %108 = tpu.transpose %79, [1, 0] : vector<8x32xf32> -> vector<32x8xf32>
    %109 = tpu.transpose %107, [1, 0] : vector<8x32xf32> -> vector<32x8xf32>
    %110 = tpu.concatenate %108, %109 in 0 : vector<32x8xf32>, vector<32x8xf32> -> vector<64x8xf32>
    %c0_73 = arith.constant 0 : index
    %c0_74 = arith.constant 0 : index
    %111 = vector.load %arg29[%c0_73, %c0_74] : memref<64x128xf32, #tpu.memory_space<vmem>>, vector<64x128xf32>
    %cst_75 = arith.constant dense<0.000000e+00> : vector<64x128xf32>
    %112 = tpu.matmul %110, %9, %cst_75 {dimension_numbers = #tpu.dot_dimension_numbers<[1], [0], [0], [1], [0, 0, 1, 1], [], []>} : vector<64x8xf32>, vector<8x128xf32>, vector<64x128xf32> -> vector<64x128xf32>
    %113 = arith.addf %111, %112 : vector<64x128xf32>
    %c0_76 = arith.constant 0 : index
    %c0_77 = arith.constant 0 : index
    %114 = vector.load %arg29[%c0_76, %c0_77] : memref<64x128xf32, #tpu.memory_space<vmem>>, vector<64x128xf32>
    tpu.vector_store %arg29[%c0_76, %c0_77], %113 {strides = array<i32>} : memref<64x128xf32, #tpu.memory_space<vmem>>, vector<64x128xf32>,
    %c0_78 = arith.constant 0 : index
    %c0_79 = arith.constant 0 : index
    %115 = vector.load %arg30[%c0_78, %c0_79] : memref<32x128xf32, #tpu.memory_space<vmem>>, vector<32x128xf32>
    %116 = tpu.transpose %95, [1, 0] : vector<8x32xf32> -> vector<32x8xf32>
    %cst_80 = arith.constant dense<0.000000e+00> : vector<32x128xf32>
    %117 = tpu.matmul %116, %14, %cst_80 {dimension_numbers = #tpu.dot_dimension_numbers<[1], [0], [0], [1], [0, 0, 1, 1], [], []>} : vector<32x8xf32>, vector<8x128xf32>, vector<32x128xf32> -> vector<32x128xf32>
    %118 = arith.addf %115, %117 : vector<32x128xf32>
    %c0_81 = arith.constant 0 : index
    %c0_82 = arith.constant 0 : index
    %119 = vector.load %arg30[%c0_81, %c0_82] : memref<32x128xf32, #tpu.memory_space<vmem>>, vector<32x128xf32>
    tpu.vector_store %arg30[%c0_81, %c0_82], %118 {strides = array<i32>} : memref<32x128xf32, #tpu.memory_space<vmem>>, vector<32x128xf32>,
    return
  }
  func.func @transform_0(%arg0: i32, %arg1: i32) -> (i32, i32) {
    %c2_i32 = arith.constant 2 : i32
    %0 = arith.muli %arg0, %c2_i32 : i32
    %1 = arith.addi %0, %arg1 : i32
    %c0_i32 = arith.constant 0 : i32
    %c0_i32_0 = arith.constant 0 : i32
    return %1, %c0_i32 : i32, i32
  }
  func.func @transform_1(%arg0: i32, %arg1: i32) -> (i32, i32) {
    %c2_i32 = arith.constant 2 : i32
    %0 = arith.muli %arg0, %c2_i32 : i32
    %1 = arith.addi %0, %arg1 : i32
    %c0_i32 = arith.constant 0 : i32
    %c0_i32_0 = arith.constant 0 : i32
    return %1, %c0_i32 : i32, i32
  }
  func.func @transform_2(%arg0: i32, %arg1: i32) -> (i32, i32) {
    %c0_i32 = arith.constant 0 : i32
    %c0_i32_0 = arith.constant 0 : i32
    %c0_i32_1 = arith.constant 0 : i32
    return %c0_i32, %c0_i32_0 : i32, i32
  }
  func.func @transform_3(%arg0: i32, %arg1: i32) -> (i32, i32) {
    %c0_i32 = arith.constant 0 : i32
    %c0_i32_0 = arith.constant 0 : i32
    %c0_i32_1 = arith.constant 0 : i32
    return %c0_i32, %c0_i32_0 : i32, i32
  }
  func.func @transform_4(%arg0: i32, %arg1: i32) -> (i32, i32) {
    %c0_i32 = arith.constant 0 : i32
    %c0_i32_0 = arith.constant 0 : i32
    %c0_i32_1 = arith.constant 0 : i32
    return %c0_i32, %c0_i32_0 : i32, i32
  }
  func.func @transform_5(%arg0: i32, %arg1: i32) -> (i32, i32) {
    %c0_i32 = arith.constant 0 : i32
    %c0_i32_0 = arith.constant 0 : i32
    %c0_i32_1 = arith.constant 0 : i32
    return %c0_i32, %c0_i32_0 : i32, i32
  }
  func.func @transform_6(%arg0: i32, %arg1: i32) -> (i32, i32) {
    %c0_i32 = arith.constant 0 : i32
    %c0_i32_0 = arith.constant 0 : i32
    %c0_i32_1 = arith.constant 0 : i32
    return %c0_i32, %c0_i32_0 : i32, i32
  }
  func.func @transform_7(%arg0: i32, %arg1: i32) -> (i32, i32) {
    %c0_i32 = arith.constant 0 : i32
    %c0_i32_0 = arith.constant 0 : i32
    %c0_i32_1 = arith.constant 0 : i32
    return %c0_i32, %c0_i32_0 : i32, i32
  }
  func.func @transform_8(%arg0: i32, %arg1: i32) -> (i32, i32) {
    %c0_i32 = arith.constant 0 : i32
    %c0_i32_0 = arith.constant 0 : i32
    %c0_i32_1 = arith.constant 0 : i32
    return %c0_i32, %c0_i32_0 : i32, i32
  }
  func.func @transform_9(%arg0: i32, %arg1: i32) -> (i32, i32) {
    %c0_i32 = arith.constant 0 : i32
    %c0_i32_0 = arith.constant 0 : i32
    %c0_i32_1 = arith.constant 0 : i32
    return %c0_i32, %c0_i32_0 : i32, i32
  }
  func.func @transform_10(%arg0: i32, %arg1: i32) -> (i32, i32) {
    %c0_i32 = arith.constant 0 : i32
    %c0_i32_0 = arith.constant 0 : i32
    %c0_i32_1 = arith.constant 0 : i32
    return %c0_i32, %c0_i32_0 : i32, i32
  }
  func.func @transform_11(%arg0: i32, %arg1: i32) -> (i32, i32) {
    %c0_i32 = arith.constant 0 : i32
    %c0_i32_0 = arith.constant 0 : i32
    %c0_i32_1 = arith.constant 0 : i32
    return %c0_i32, %c0_i32_0 : i32, i32
  }
  func.func @transform_12(%arg0: i32, %arg1: i32) -> (i32, i32) {
    %c0_i32 = arith.constant 0 : i32
    %c0_i32_0 = arith.constant 0 : i32
    %c0_i32_1 = arith.constant 0 : i32
    return %c0_i32, %c0_i32_0 : i32, i32
  }
  func.func @transform_13(%arg0: i32, %arg1: i32) -> (i32, i32) {
    %c0_i32 = arith.constant 0 : i32
    %c0_i32_0 = arith.constant 0 : i32
    %c0_i32_1 = arith.constant 0 : i32
    return %c0_i32, %c0_i32_0 : i32, i32
  }
  func.func @transform_14(%arg0: i32, %arg1: i32) -> (i32, i32) {
    %c0_i32 = arith.constant 0 : i32
    %c0_i32_0 = arith.constant 0 : i32
    %c0_i32_1 = arith.constant 0 : i32
    return %c0_i32, %c0_i32_0 : i32, i32
  }
  func.func @transform_15(%arg0: i32, %arg1: i32) -> (i32, i32) {
    %c0_i32 = arith.constant 0 : i32
    %c0_i32_0 = arith.constant 0 : i32
    %c0_i32_1 = arith.constant 0 : i32
    return %c0_i32, %c0_i32_0 : i32, i32
  }
  func.func @transform_16(%arg0: i32, %arg1: i32) -> (i32, i32) {
    %c0_i32 = arith.constant 0 : i32
    %c0_i32_0 = arith.constant 0 : i32
    %c0_i32_1 = arith.constant 0 : i32
    return %c0_i32, %c0_i32_0 : i32, i32
  }
  func.func @transform_17(%arg0: i32, %arg1: i32) -> (i32, i32) {
    %c0_i32 = arith.constant 0 : i32
    %c0_i32_0 = arith.constant 0 : i32
    %c0_i32_1 = arith.constant 0 : i32
    return %c0_i32, %c0_i32_0 : i32, i32
  }
  func.func @transform_18(%arg0: i32, %arg1: i32) -> (i32, i32) {
    %c0_i32 = arith.constant 0 : i32
    %c0_i32_0 = arith.constant 0 : i32
    %c0_i32_1 = arith.constant 0 : i32
    return %c0_i32, %c0_i32_0 : i32, i32
  }
  func.func @transform_19(%arg0: i32, %arg1: i32) -> (i32, i32) {
    %c0_i32 = arith.constant 0 : i32
    %c0_i32_0 = arith.constant 0 : i32
    %c0_i32_1 = arith.constant 0 : i32
    return %c0_i32, %c0_i32_0 : i32, i32
  }
  func.func @transform_20(%arg0: i32, %arg1: i32) -> (i32, i32) {
    %c0_i32 = arith.constant 0 : i32
    %c0_i32_0 = arith.constant 0 : i32
    %c0_i32_1 = arith.constant 0 : i32
    return %c0_i32, %c0_i32_0 : i32, i32
  }
  func.func @transform_21(%arg0: i32, %arg1: i32) -> (i32, i32) {
    %c0_i32 = arith.constant 0 : i32
    %c0_i32_0 = arith.constant 0 : i32
    %c0_i32_1 = arith.constant 0 : i32
    return %c0_i32, %c0_i32_0 : i32, i32
  }
  func.func @transform_22(%arg0: i32, %arg1: i32) -> (i32, i32) {
    %c0_i32 = arith.constant 0 : i32
    %c0_i32_0 = arith.constant 0 : i32
    %c0_i32_1 = arith.constant 0 : i32
    return %c0_i32, %c0_i32_0 : i32, i32
  }
  func.func @transform_23(%arg0: i32, %arg1: i32) -> (i32, i32) {
    %c0_i32 = arith.constant 0 : i32
    %c0_i32_0 = arith.constant 0 : i32
    %c0_i32_1 = arith.constant 0 : i32
    return %c0_i32, %c0_i32_0 : i32, i32
  }
  func.func @transform_24(%arg0: i32, %arg1: i32) -> (i32, i32) {
    %c0_i32 = arith.constant 0 : i32
    %c0_i32_0 = arith.constant 0 : i32
    %c0_i32_1 = arith.constant 0 : i32
    return %c0_i32, %c0_i32_0 : i32, i32
  }
  func.func @transform_25(%arg0: i32, %arg1: i32) -> (i32, i32) {
    %c0_i32 = arith.constant 0 : i32
    %c0_i32_0 = arith.constant 0 : i32
    %c0_i32_1 = arith.constant 0 : i32
    return %c0_i32, %c0_i32_0 : i32, i32
  }
  func.func @transform_26(%arg0: i32, %arg1: i32) -> (i32, i32) {
    %c2_i32 = arith.constant 2 : i32
    %0 = arith.muli %arg0, %c2_i32 : i32
    %1 = arith.addi %0, %arg1 : i32
    %c0_i32 = arith.constant 0 : i32
    %c0_i32_0 = arith.constant 0 : i32
    return %1, %c0_i32 : i32, i32
  }
  func.func @transform_27(%arg0: i32, %arg1: i32) -> (i32, i32) {
    %c0_i32 = arith.constant 0 : i32
    %c0_i32_0 = arith.constant 0 : i32
    return %arg0, %c0_i32 : i32, i32
  }
  func.func @transform_28(%arg0: i32, %arg1: i32) -> (i32, i32) {
    %c0_i32 = arith.constant 0 : i32
    %c0_i32_0 = arith.constant 0 : i32
    return %arg0, %c0_i32 : i32, i32
  }
}

</mosaic_0001>

<llo_original>
// kernel: tpu_custom_call.1
$region0: #{tpu_custom_call.1}
  #allocation0 [shape = 'u32[]', space=smem, size = 0x4, offset = 0x4, fixed_abs, tag = 'smem constant byte address 0x4 - core index']
  #allocation1 [shape = 'u32[144,128]{1,0:T(1,128)}', space=vmem, size = 0x12000, scoped, tag = 'internal scratch']
  %s0 = inlined_call_operand.hbm [shape: f32[128,128], index: 0, kind: input, shape index: {}]
  %s1 = inlined_call_operand.hbm [shape: f32[8,128], index: 1, kind: input, shape index: {}]
  %s2 = inlined_call_operand.hbm [shape: f32[8,128], index: 2, kind: output, shape index: {}]
  %s3 = sld [smem:[#allocation0]]
  $region26: #{tpu_custom_call.1} parent=0
    _
  %s5 = ssub.s32 1, %s3
  %s6 = scalar_select 0, %s5, %s3
  $region1: #{tpu_custom_call.1} parent=0
    #allocation2 [shape = 'u8[65536]{0}', space=vmem, size = 0x10000, scoped, tag = 'input window, operand 0, single buffered']
    #allocation3 [shape = 's32[1]{0}', space=sflag, size = 0x4, scoped, tag = 'scoped memory for tpu_custom_call.1']
    #allocation4 [shape = 's32[1]{0}', space=sflag, size = 0x4, scoped, tag = 'scoped memory for tpu_custom_call.1']
    #allocation5 [shape = 'u8[4096]{0}', space=vmem, size = 0x1000, scoped, tag = 'input window, operand 1, single buffered']
    #allocation6 [shape = 's32[1]{0}', space=sflag, size = 0x4, scoped, tag = 'scoped memory for tpu_custom_call.1']
    #allocation7 [shape = 'u8[4096]{0}', space=vmem, size = 0x1000, scoped, tag = 'output window, operand 0, single buffered']
    %7 = vsyncpa [#allocation3], 0
    %8 = vsyncpa [#allocation6], 0
    %9 = vsyncpa [#allocation4], 0
    // Predicated region
    $region2: #{tpu_custom_call.1} parent=1 // pred_check
      _
    $region3: #{tpu_custom_call.1} parent=1 // pred_check_branch
      %11 = sbr.rel (0) target = $region5
    $region4: #{tpu_custom_call.1} parent=1 // pred_region
      %s13 = ssub.s32 2048, 2048
      %14 = vsyncadd [#allocation3], %s13
      %s15 = sshll.u32 [#allocation2], 4
      %s16 = int_to_ptr.vmem [resolvable:$true] %s15
      %21 = dma.hbm_to_vmem [thread:$0]  %s0, 2048, %s16, [#allocation3], 128, 128, 8
    $region5: #{tpu_custom_call.1} parent=1 // pred_fallthru
      _
    // Predicated region
    $region6: #{tpu_custom_call.1} parent=1 // pred_check
      _
    $region7: #{tpu_custom_call.1} parent=1 // pred_check_branch
      %23 = sbr.rel (0) target = $region9
    $region8: #{tpu_custom_call.1} parent=1 // pred_region
      %s25 = ssub.s32 128, 128
      %26 = vsyncadd [#allocation6], %s25
      %s28 = sshll.u32 [#allocation5], 4
      %s29 = int_to_ptr.vmem [resolvable:$true] %s28
      %31 = dma.hbm_to_vmem [thread:$0]  %s1, 128, %s29, [#allocation6]
    $region9: #{tpu_custom_call.1} parent=1 // pred_fallthru
      _
    // Predicated region
    $region10: #{tpu_custom_call.1} parent=1 // pred_check
      _
    $region11: #{tpu_custom_call.1} parent=1 // pred_check_branch
      %33 = sbr.rel (0) target = $region13
    $region12: #{tpu_custom_call.1} parent=1 // pred_region
      %34 = dma.done [#allocation3], 2048
    $region13: #{tpu_custom_call.1} parent=1 // pred_fallthru
      _
    // Predicated region
    $region14: #{tpu_custom_call.1} parent=1 // pred_check
      _
    $region15: #{tpu_custom_call.1} parent=1 // pred_check_branch
      %36 = sbr.rel (0) target = $region17
    $region16: #{tpu_custom_call.1} parent=1 // pred_region
      %37 = dma.done [#allocation6], 128
    $region17: #{tpu_custom_call.1} parent=1 // pred_fallthru
      _
    %v38 = vld [vmem:[#allocation5] sm:$0xff]
    %v39 = vld [vmem:[#allocation2] sm:$0xff]
    %v40 = vld [vmem:[#allocation2 + $0x8] sm:$0xff]
    %v41 = vld [vmem:[#allocation2 + $0x10] sm:$0xff]
    %v42 = vld [vmem:[#allocation2 + $0x18] sm:$0xff]
    %v43 = vld [vmem:[#allocation2 + $0x20] sm:$0xff]
    %v44 = vld [vmem:[#allocation2 + $0x28] sm:$0xff]
    %v45 = vld [vmem:[#allocation2 + $0x30] sm:$0xff]
    %v46 = vld [vmem:[#allocation2 + $0x38] sm:$0xff]
    %v47 = vld [vmem:[#allocation2 + $0x40] sm:$0xff]
    %v48 = vld [vmem:[#allocation2 + $0x48] sm:$0xff]
    %v49 = vld [vmem:[#allocation2 + $0x50] sm:$0xff]
    %v50 = vld [vmem:[#allocation2 + $0x58] sm:$0xff]
    %v51 = vld [vmem:[#allocation2 + $0x60] sm:$0xff]
    %v52 = vld [vmem:[#allocation2 + $0x68] sm:$0xff]
    %v53 = vld [vmem:[#allocation2 + $0x70] sm:$0xff]
    %v54 = vld [vmem:[#allocation2 + $0x78] sm:$0xff]
    %55 = vmatprep.subr.mxu0 0.0
    %v56 = vand.u32 %v39, 4294901760
    %57 = vmatpush1.msra.mxu0 %v56
    %58 = vmatprep.subr.mxu0 0.0
    %v59 = vand.u32 %v40, 4294901760
    %60 = vmatpush1.msra.mxu0 %v59
    %61 = vmatprep.subr.mxu0 0.0
    %v62 = vand.u32 %v41, 4294901760
    %63 = vmatpush1.msra.mxu0 %v62
    %64 = vmatprep.subr.mxu0 0.0
    %v65 = vand.u32 %v42, 4294901760
    %66 = vmatpush1.msra.mxu0 %v65
    %67 = vmatprep.subr.mxu0 0.0
    %v68 = vand.u32 %v43, 4294901760
    %69 = vmatpush1.msra.mxu0 %v68
    %70 = vmatprep.subr.mxu0 0.0
    %v71 = vand.u32 %v44, 4294901760
    %72 = vmatpush1.msra.mxu0 %v71
    %73 = vmatprep.subr.mxu0 0.0
    %v74 = vand.u32 %v45, 4294901760
    %75 = vmatpush1.msra.mxu0 %v74
    %76 = vmatprep.subr.mxu0 0.0
    %v77 = vand.u32 %v46, 4294901760
    %78 = vmatpush1.msra.mxu0 %v77
    %79 = vmatprep.subr.mxu0 0.0
    %v80 = vand.u32 %v47, 4294901760
    %81 = vmatpush1.msra.mxu0 %v80
    %82 = vmatprep.subr.mxu0 0.0
    %v83 = vand.u32 %v48, 4294901760
    %84 = vmatpush1.msra.mxu0 %v83
    %85 = vmatprep.subr.mxu0 0.0
    %v86 = vand.u32 %v49, 4294901760
    %87 = vmatpush1.msra.mxu0 %v86
    %88 = vmatprep.subr.mxu0 0.0
    %v89 = vand.u32 %v50, 4294901760
    %90 = vmatpush1.msra.mxu0 %v89
    %91 = vmatprep.subr.mxu0 0.0
    %v92 = vand.u32 %v51, 4294901760
    %93 = vmatpush1.msra.mxu0 %v92
    %94 = vmatprep.subr.mxu0 0.0
    %v95 = vand.u32 %v52, 4294901760
    %96 = vmatpush1.msra.mxu0 %v95
    %97 = vmatprep.subr.mxu0 0.0
    %v98 = vand.u32 %v53, 4294901760
    %99 = vmatpush1.msra.mxu0 %v98
    %100 = vmatprep.subr.mxu0 0.0
    %v101 = vand.u32 %v54, 4294901760
    %102 = vmatpush1.msra.mxu0 %v101
    %103 = vmatprep.subr.mxu0 0.0
    %104 = vmatpush1.msra.mxu0 0.0
    %105 = vmatprep.subr.mxu0 0.0
    %106 = vmatpush1.msra.mxu0 0.0
    %107 = vmatprep.subr.mxu0 0.0
    %108 = vmatpush1.msra.mxu0 0.0
    %109 = vmatprep.subr.mxu0 0.0
    %110 = vmatpush1.msra.mxu0 0.0
    %111 = vmatprep.subr.mxu0 0.0
    %112 = vmatpush1.msra.mxu0 0.0
    %113 = vmatprep.subr.mxu0 0.0
    %114 = vmatpush1.msra.mxu0 0.0
    %115 = vmatprep.subr.mxu0 0.0
    %116 = vmatpush1.msra.mxu0 0.0
    %117 = vmatprep.subr.mxu0 0.0
    %118 = vmatpush1.msra.mxu0 0.0
    %119 = vmatprep.subr.mxu0 0.0
    %120 = vmatpush1.msra.mxu0 0.0
    %121 = vmatprep.subr.mxu0 0.0
    %122 = vmatpush1.msra.mxu0 0.0
    %123 = vmatprep.subr.mxu0 0.0
    %124 = vmatpush1.msra.mxu0 0.0
    %125 = vmatprep.subr.mxu0 0.0
    %126 = vmatpush1.msra.mxu0 0.0
    %127 = vmatprep.subr.mxu0 0.0
    %128 = vmatpush1.msra.mxu0 0.0
    %129 = vmatprep.subr.mxu0 0.0
    %130 = vmatpush1.msra.mxu0 0.0
    %131 = vmatprep.subr.mxu0 0.0
    %132 = vmatpush1.msra.mxu0 0.0
    %133 = vmatprep.subr.mxu0 0.0
    %134 = vmatpush1.msra.mxu0 0.0
    %135 = vmatprep.mubr.f32.mxu0 0.0
    %v136 = vand.u32 %v38, 4294901760
    %v137 = vsub.f32 %v38, %v136
    %v138 = vand.u32 %v137, 4294901760
    %v139 = vsub.f32 %v137, %v138
    %v140 = vand.u32 %v139, 4294901760
    %141 = vmatmul.mubr.f32.gmra.mrb[0].mxu0 %v140
    %v142 = vpop.f32.mrb[0].mxu0
    %v143 = vadd.f32 0.0, %v142
    %v144 = vpop.f32.mrb[0].mxu0
    %145 = vdwg.mxu0
    %146 = vmatprep.subr.mxu0 0.0
    %v147 = vand.u32 %v39, 4294901760
    %v148 = vsub.f32 %v39, %v147
    %v149 = vand.u32 %v148, 4294901760
    %v150 = vsub.f32 %v148, %v149
    %v151 = vand.u32 %v150, 4294901760
    %152 = vmatpush1.msra.mxu0 %v151
    %153 = vmatprep.subr.mxu0 0.0
    %v154 = vand.u32 %v40, 4294901760
    %v155 = vsub.f32 %v40, %v154
    %v156 = vand.u32 %v155, 4294901760
    %v157 = vsub.f32 %v155, %v156
    %v158 = vand.u32 %v157, 4294901760
    %159 = vmatpush1.msra.mxu0 %v158
    %160 = vmatprep.subr.mxu0 0.0
    %v161 = vand.u32 %v41, 4294901760
    %v162 = vsub.f32 %v41, %v161
    %v163 = vand.u32 %v162, 4294901760
    %v164 = vsub.f32 %v162, %v163
    %v165 = vand.u32 %v164, 4294901760
    %166 = vmatpush1.msra.mxu0 %v165
    %167 = vmatprep.subr.mxu0 0.0
    %v168 = vand.u32 %v42, 4294901760
    %v169 = vsub.f32 %v42, %v168
    %v170 = vand.u32 %v169, 4294901760
    %v171 = vsub.f32 %v169, %v170
    %v172 = vand.u32 %v171, 4294901760
    %173 = vmatpush1.msra.mxu0 %v172
    %174 = vmatprep.subr.mxu0 0.0
    %v175 = vand.u32 %v43, 4294901760
    %v176 = vsub.f32 %v43, %v175
    %v177 = vand.u32 %v176, 4294901760
    %v178 = vsub.f32 %v176, %v177
    %v179 = vand.u32 %v178, 4294901760
    %180 = vmatpush1.msra.mxu0 %v179
    %181 = vmatprep.subr.mxu0 0.0
    %v182 = vand.u32 %v44, 4294901760
    %v183 = vsub.f32 %v44, %v182
    %v184 = vand.u32 %v183, 4294901760
    %v185 = vsub.f32 %v183, %v184
    %v186 = vand.u32 %v185, 4294901760
    %187 = vmatpush1.msra.mxu0 %v186
    %188 = vmatprep.subr.mxu0 0.0
    %v189 = vand.u32 %v45, 4294901760
    %v190 = vsub.f32 %v45, %v189
    %v191 = vand.u32 %v190, 4294901760
    %v192 = vsub.f32 %v190, %v191
    %v193 = vand.u32 %v192, 4294901760
    %194 = vmatpush1.msra.mxu0 %v193
    %195 = vmatprep.subr.mxu0 0.0
    %v196 = vand.u32 %v46, 4294901760
    %v197 = vsub.f32 %v46, %v196
    %v198 = vand.u32 %v197, 4294901760
    %v199 = vsub.f32 %v197, %v198
    %v200 = vand.u32 %v199, 4294901760
    %201 = vmatpush1.msra.mxu0 %v200
    %202 = vmatprep.subr.mxu0 0.0
    %v203 = vand.u32 %v47, 4294901760
    %v204 = vsub.f32 %v47, %v203
    %v205 = vand.u32 %v204, 4294901760
    %v206 = vsub.f32 %v204, %v205
    %v207 = vand.u32 %v206, 4294901760
    %208 = vmatpush1.msra.mxu0 %v207
    %209 = vmatprep.subr.mxu0 0.0
    %v210 = vand.u32 %v48, 4294901760
    %v211 = vsub.f32 %v48, %v210
    %v212 = vand.u32 %v211, 4294901760
    %v213 = vsub.f32 %v211, %v212
    %v214 = vand.u32 %v213, 4294901760
    %215 = vmatpush1.msra.mxu0 %v214
    %216 = vmatprep.subr.mxu0 0.0
    %v217 = vand.u32 %v49, 4294901760
    %v218 = vsub.f32 %v49, %v217
    %v219 = vand.u32 %v218, 4294901760
    %v220 = vsub.f32 %v218, %v219
    %v221 = vand.u32 %v220, 4294901760
    %222 = vmatpush1.msra.mxu0 %v221
    %223 = vmatprep.subr.mxu0 0.0
    %v224 = vand.u32 %v50, 4294901760
    %v225 = vsub.f32 %v50, %v224
    %v226 = vand.u32 %v225, 4294901760
    %v227 = vsub.f32 %v225, %v226
    %v228 = vand.u32 %v227, 4294901760
    %229 = vmatpush1.msra.mxu0 %v228
    %230 = vmatprep.subr.mxu0 0.0
    %v231 = vand.u32 %v51, 4294901760
    %v232 = vsub.f32 %v51, %v231
    %v233 = vand.u32 %v232, 4294901760
    %v234 = vsub.f32 %v232, %v233
    %v235 = vand.u32 %v234, 4294901760
    %236 = vmatpush1.msra.mxu0 %v235
    %237 = vmatprep.subr.mxu0 0.0
    %v238 = vand.u32 %v52, 4294901760
    %v239 = vsub.f32 %v52, %v238
    %v240 = vand.u32 %v239, 4294901760
    %v241 = vsub.f32 %v239, %v240
    %v242 = vand.u32 %v241, 4294901760
    %243 = vmatpush1.msra.mxu0 %v242
    %244 = vmatprep.subr.mxu0 0.0
    %v245 = vand.u32 %v53, 4294901760
    %v246 = vsub.f32 %v53, %v245
    %v247 = vand.u32 %v246, 4294901760
    %v248 = vsub.f32 %v246, %v247
    %v249 = vand.u32 %v248, 4294901760
    %250 = vmatpush1.msra.mxu0 %v249
    %251 = vmatprep.subr.mxu0 0.0
    %v252 = vand.u32 %v54, 4294901760
    %v253 = vsub.f32 %v54, %v252
    %v254 = vand.u32 %v253, 4294901760
    %v255 = vsub.f32 %v253, %v254
    %v256 = vand.u32 %v255, 4294901760
    %257 = vmatpush1.msra.mxu0 %v256
    %258 = vmatprep.subr.mxu0 0.0
    %259 = vmatpush1.msra.mxu0 0.0
    %260 = vmatprep.subr.mxu0 0.0
    %261 = vmatpush1.msra.mxu0 0.0
    %262 = vmatprep.subr.mxu0 0.0
    %263 = vmatpush1.msra.mxu0 0.0
    %264 = vmatprep.subr.mxu0 0.0
    %265 = vmatpush1.msra.mxu0 0.0
    %266 = vmatprep.subr.mxu0 0.0
    %267 = vmatpush1.msra.mxu0 0.0
    %268 = vmatprep.subr.mxu0 0.0
    %269 = vmatpush1.msra.mxu0 0.0
    %270 = vmatprep.subr.mxu0 0.0
    %271 = vmatpush1.msra.mxu0 0.0
    %272 = vmatprep.subr.mxu0 0.0
    %273 = vmatpush1.msra.mxu0 0.0
    %274 = vmatprep.subr.mxu0 0.0
    %275 = vmatpush1.msra.mxu0 0.0
    %276 = vmatprep.subr.mxu0 0.0
    %277 = vmatpush1.msra.mxu0 0.0
    %278 = vmatprep.subr.mxu0 0.0
    %279 = vmatpush1.msra.mxu0 0.0
    %280 = vmatprep.subr.mxu0 0.0
    %281 = vmatpush1.msra.mxu0 0.0
    %282 = vmatprep.subr.mxu0 0.0
    %283 = vmatpush1.msra.mxu0 0.0
    %284 = vmatprep.subr.mxu0 0.0
    %285 = vmatpush1.msra.mxu0 0.0
    %286 = vmatprep.subr.mxu0 0.0
    %287 = vmatpush1.msra.mxu0 0.0
    %288 = vmatprep.subr.mxu0 0.0
    %289 = vmatpush1.msra.mxu0 0.0
    %290 = vmatprep.mubr.f32.mxu0 0.0
    %v291 = vand.u32 %v38, 4294901760
    %292 = vmatmul.mubr.f32.gmra.mrb[0].mxu0 %v291
    %v293 = vpop.f32.mrb[0].mxu0
    %v294 = vadd.f32 %v143, %v293
    %v295 = vpop.f32.mrb[0].mxu0
    %296 = vdwg.mxu0
    %297 = vmatprep.subr.mxu0 0.0
    %v298 = vand.u32 %v39, 4294901760
    %v299 = vsub.f32 %v39, %v298
    %300 = vmatpush1.msra.mxu0 %v299
    %301 = vmatprep.subr.mxu0 0.0
    %v302 = vand.u32 %v40, 4294901760
    %v303 = vsub.f32 %v40, %v302
    %304 = vmatpush1.msra.mxu0 %v303
    %305 = vmatprep.subr.mxu0 0.0
    %v306 = vand.u32 %v41, 4294901760
    %v307 = vsub.f32 %v41, %v306
    %308 = vmatpush1.msra.mxu0 %v307
    %309 = vmatprep.subr.mxu0 0.0
    %v310 = vand.u32 %v42, 4294901760
    %v311 = vsub.f32 %v42, %v310
    %312 = vmatpush1.msra.mxu0 %v311
    %313 = vmatprep.subr.mxu0 0.0
    %v314 = vand.u32 %v43, 4294901760
    %v315 = vsub.f32 %v43, %v314
    %316 = vmatpush1.msra.mxu0 %v315
    %317 = vmatprep.subr.mxu0 0.0
    %v318 = vand.u32 %v44, 4294901760
    %v319 = vsub.f32 %v44, %v318
    %320 = vmatpush1.msra.mxu0 %v319
    %321 = vmatprep.subr.mxu0 0.0
    %v322 = vand.u32 %v45, 4294901760
    %v323 = vsub.f32 %v45, %v322
    %324 = vmatpush1.msra.mxu0 %v323
    %325 = vmatprep.subr.mxu0 0.0
    %v326 = vand.u32 %v46, 4294901760
    %v327 = vsub.f32 %v46, %v326
    %328 = vmatpush1.msra.mxu0 %v327
    %329 = vmatprep.subr.mxu0 0.0
    %v330 = vand.u32 %v47, 4294901760
    %v331 = vsub.f32 %v47, %v330
    %332 = vmatpush1.msra.mxu0 %v331
    %333 = vmatprep.subr.mxu0 0.0
    %v334 = vand.u32 %v48, 4294901760
    %v335 = vsub.f32 %v48, %v334
    %336 = vmatpush1.msra.mxu0 %v335
    %337 = vmatprep.subr.mxu0 0.0
    %v338 = vand.u32 %v49, 4294901760
    %v339 = vsub.f32 %v49, %v338
    %340 = vmatpush1.msra.mxu0 %v339
    %341 = vmatprep.subr.mxu0 0.0
    %v342 = vand.u32 %v50, 4294901760
    %v343 = vsub.f32 %v50, %v342
    %344 = vmatpush1.msra.mxu0 %v343
    %345 = vmatprep.subr.mxu0 0.0
    %v346 = vand.u32 %v51, 4294901760
    %v347 = vsub.f32 %v51, %v346
    %348 = vmatpush1.msra.mxu0 %v347
    %349 = vmatprep.subr.mxu0 0.0
    %v350 = vand.u32 %v52, 4294901760
    %v351 = vsub.f32 %v52, %v350
    %352 = vmatpush1.msra.mxu0 %v351
    %353 = vmatprep.subr.mxu0 0.0
    %v354 = vand.u32 %v53, 4294901760
    %v355 = vsub.f32 %v53, %v354
    %356 = vmatpush1.msra.mxu0 %v355
    %357 = vmatprep.subr.mxu0 0.0
    %v358 = vand.u32 %v54, 4294901760
    %v359 = vsub.f32 %v54, %v358
    %360 = vmatpush1.msra.mxu0 %v359
    %361 = vmatprep.subr.mxu0 0.0
    %362 = vmatpush1.msra.mxu0 0.0
    %363 = vmatprep.subr.mxu0 0.0
    %364 = vmatpush1.msra.mxu0 0.0
    %365 = vmatprep.subr.mxu0 0.0
    %366 = vmatpush1.msra.mxu0 0.0
    %367 = vmatprep.subr.mxu0 0.0
    %368 = vmatpush1.msra.mxu0 0.0
    %369 = vmatprep.subr.mxu0 0.0
    %370 = vmatpush1.msra.mxu0 0.0
    %371 = vmatprep.subr.mxu0 0.0
    %372 = vmatpush1.msra.mxu0 0.0
    %373 = vmatprep.subr.mxu0 0.0
    %374 = vmatpush1.msra.mxu0 0.0
    %375 = vmatprep.subr.mxu0 0.0
    %376 = vmatpush1.msra.mxu0 0.0
    %377 = vmatprep.subr.mxu0 0.0
    %378 = vmatpush1.msra.mxu0 0.0
    %379 = vmatprep.subr.mxu0 0.0
    %380 = vmatpush1.msra.mxu0 0.0
    %381 = vmatprep.subr.mxu0 0.0
    %382 = vmatpush1.msra.mxu0 0.0
    %383 = vmatprep.subr.mxu0 0.0
    %384 = vmatpush1.msra.mxu0 0.0
    %385 = vmatprep.subr.mxu0 0.0
    %386 = vmatpush1.msra.mxu0 0.0
    %387 = vmatprep.subr.mxu0 0.0
    %388 = vmatpush1.msra.mxu0 0.0
    %389 = vmatprep.subr.mxu0 0.0
    %390 = vmatpush1.msra.mxu0 0.0
    %391 = vmatprep.subr.mxu0 0.0
    %392 = vmatpush1.msra.mxu0 0.0
    %393 = vmatprep.mubr.f32.mxu0 0.0
    %v394 = vand.u32 %v38, 4294901760
    %v395 = vsub.f32 %v38, %v394
    %396 = vmatmul.mubr.f32.gmra.mrb[0].mxu0 %v395
    %v397 = vpop.f32.mrb[0].mxu0
    %v398 = vadd.f32 %v294, %v397
    %v399 = vpop.f32.mrb[0].mxu0
    %400 = vdwg.mxu0
    %401 = vmatprep.subr.mxu0 0.0
    %v402 = vand.u32 %v39, 4294901760
    %403 = vmatpush1.msra.mxu0 %v402
    %404 = vmatprep.subr.mxu0 0.0
    %v405 = vand.u32 %v40, 4294901760
    %406 = vmatpush1.msra.mxu0 %v405
    %407 = vmatprep.subr.mxu0 0.0
    %v408 = vand.u32 %v41, 4294901760
    %409 = vmatpush1.msra.mxu0 %v408
    %410 = vmatprep.subr.mxu0 0.0
    %v411 = vand.u32 %v42, 4294901760
    %412 = vmatpush1.msra.mxu0 %v411
    %413 = vmatprep.subr.mxu0 0.0
    %v414 = vand.u32 %v43, 4294901760
    %415 = vmatpush1.msra.mxu0 %v414
    %416 = vmatprep.subr.mxu0 0.0
    %v417 = vand.u32 %v44, 4294901760
    %418 = vmatpush1.msra.mxu0 %v417
    %419 = vmatprep.subr.mxu0 0.0
    %v420 = vand.u32 %v45, 4294901760
    %421 = vmatpush1.msra.mxu0 %v420
    %422 = vmatprep.subr.mxu0 0.0
    %v423 = vand.u32 %v46, 4294901760
    %424 = vmatpush1.msra.mxu0 %v423
    %425 = vmatprep.subr.mxu0 0.0
    %v426 = vand.u32 %v47, 4294901760
    %427 = vmatpush1.msra.mxu0 %v426
    %428 = vmatprep.subr.mxu0 0.0
    %v429 = vand.u32 %v48, 4294901760
    %430 = vmatpush1.msra.mxu0 %v429
    %431 = vmatprep.subr.mxu0 0.0
    %v432 = vand.u32 %v49, 4294901760
    %433 = vmatpush1.msra.mxu0 %v432
    %434 = vmatprep.subr.mxu0 0.0
    %v435 = vand.u32 %v50, 4294901760
    %436 = vmatpush1.msra.mxu0 %v435
    %437 = vmatprep.subr.mxu0 0.0
    %v438 = vand.u32 %v51, 4294901760
    %439 = vmatpush1.msra.mxu0 %v438
    %440 = vmatprep.subr.mxu0 0.0
    %v441 = vand.u32 %v52, 4294901760
    %442 = vmatpush1.msra.mxu0 %v441
    %443 = vmatprep.subr.mxu0 0.0
    %v444 = vand.u32 %v53, 4294901760
    %445 = vmatpush1.msra.mxu0 %v444
    %446 = vmatprep.subr.mxu0 0.0
    %v447 = vand.u32 %v54, 4294901760
    %448 = vmatpush1.msra.mxu0 %v447
    %449 = vmatprep.subr.mxu0 0.0
    %450 = vmatpush1.msra.mxu0 0.0
    %451 = vmatprep.subr.mxu0 0.0
    %452 = vmatpush1.msra.mxu0 0.0
    %453 = vmatprep.subr.mxu0 0.0
    %454 = vmatpush1.msra.mxu0 0.0
    %455 = vmatprep.subr.mxu0 0.0
    %456 = vmatpush1.msra.mxu0 0.0
    %457 = vmatprep.subr.mxu0 0.0
    %458 = vmatpush1.msra.mxu0 0.0
    %459 = vmatprep.subr.mxu0 0.0
    %460 = vmatpush1.msra.mxu0 0.0
    %461 = vmatprep.subr.mxu0 0.0
    %462 = vmatpush1.msra.mxu0 0.0
    %463 = vmatprep.subr.mxu0 0.0
    %464 = vmatpush1.msra.mxu0 0.0
    %465 = vmatprep.subr.mxu0 0.0
    %466 = vmatpush1.msra.mxu0 0.0
    %467 = vmatprep.subr.mxu0 0.0
    %468 = vmatpush1.msra.mxu0 0.0
    %469 = vmatprep.subr.mxu0 0.0
    %470 = vmatpush1.msra.mxu0 0.0
    %471 = vmatprep.subr.mxu0 0.0
    %472 = vmatpush1.msra.mxu0 0.0
    %473 = vmatprep.subr.mxu0 0.0
    %474 = vmatpush1.msra.mxu0 0.0
    %475 = vmatprep.subr.mxu0 0.0
    %476 = vmatpush1.msra.mxu0 0.0
    %477 = vmatprep.subr.mxu0 0.0
    %478 = vmatpush1.msra.mxu0 0.0
    %479 = vmatprep.subr.mxu0 0.0
    %480 = vmatpush1.msra.mxu0 0.0
    %481 = vmatprep.mubr.f32.mxu0 0.0
    %v482 = vand.u32 %v38, 4294901760
    %v483 = vsub.f32 %v38, %v482
    %v484 = vand.u32 %v483, 4294901760
    %485 = vmatmul.mubr.f32.gmra.mrb[0].mxu0 %v484
    %v486 = vpop.f32.mrb[0].mxu0
    %v487 = vadd.f32 %v398, %v486
    %v488 = vpop.f32.mrb[0].mxu0
    %489 = vdwg.mxu0
    %490 = vmatprep.subr.mxu0 0.0
    %v491 = vand.u32 %v39, 4294901760
    %v492 = vsub.f32 %v39, %v491
    %v493 = vand.u32 %v492, 4294901760
    %494 = vmatpush1.msra.mxu0 %v493
    %495 = vmatprep.subr.mxu0 0.0
    %v496 = vand.u32 %v40, 4294901760
    %v497 = vsub.f32 %v40, %v496
    %v498 = vand.u32 %v497, 4294901760
    %499 = vmatpush1.msra.mxu0 %v498
    %500 = vmatprep.subr.mxu0 0.0
    %v501 = vand.u32 %v41, 4294901760
    %v502 = vsub.f32 %v41, %v501
    %v503 = vand.u32 %v502, 4294901760
    %504 = vmatpush1.msra.mxu0 %v503
    %505 = vmatprep.subr.mxu0 0.0
    %v506 = vand.u32 %v42, 4294901760
    %v507 = vsub.f32 %v42, %v506
    %v508 = vand.u32 %v507, 4294901760
    %509 = vmatpush1.msra.mxu0 %v508
    %510 = vmatprep.subr.mxu0 0.0
    %v511 = vand.u32 %v43, 4294901760
    %v512 = vsub.f32 %v43, %v511
    %v513 = vand.u32 %v512, 4294901760
    %514 = vmatpush1.msra.mxu0 %v513
    %515 = vmatprep.subr.mxu0 0.0
    %v516 = vand.u32 %v44, 4294901760
    %v517 = vsub.f32 %v44, %v516
    %v518 = vand.u32 %v517, 4294901760
    %519 = vmatpush1.msra.mxu0 %v518
    %520 = vmatprep.subr.mxu0 0.0
    %v521 = vand.u32 %v45, 4294901760
    %v522 = vsub.f32 %v45, %v521
    %v523 = vand.u32 %v522, 4294901760
    %524 = vmatpush1.msra.mxu0 %v523
    %525 = vmatprep.subr.mxu0 0.0
    %v526 = vand.u32 %v46, 4294901760
    %v527 = vsub.f32 %v46, %v526
    %v528 = vand.u32 %v527, 4294901760
    %529 = vmatpush1.msra.mxu0 %v528
    %530 = vmatprep.subr.mxu0 0.0
    %v531 = vand.u32 %v47, 4294901760
    %v532 = vsub.f32 %v47, %v531
    %v533 = vand.u32 %v532, 4294901760
    %534 = vmatpush1.msra.mxu0 %v533
    %535 = vmatprep.subr.mxu0 0.0
    %v536 = vand.u32 %v48, 4294901760
    %v537 = vsub.f32 %v48, %v536
    %v538 = vand.u32 %v537, 4294901760
    %539 = vmatpush1.msra.mxu0 %v538
    %540 = vmatprep.subr.mxu0 0.0
    %v541 = vand.u32 %v49, 4294901760
    %v542 = vsub.f32 %v49, %v541
    %v543 = vand.u32 %v542, 4294901760
    %544 = vmatpush1.msra.mxu0 %v543
    %545 = vmatprep.subr.mxu0 0.0
    %v546 = vand.u32 %v50, 4294901760
    %v547 = vsub.f32 %v50, %v546
    %v548 = vand.u32 %v547, 4294901760
    %549 = vmatpush1.msra.mxu0 %v548
    %550 = vmatprep.subr.mxu0 0.0
    %v551 = vand.u32 %v51, 4294901760
    %v552 = vsub.f32 %v51, %v551
    %v553 = vand.u32 %v552, 4294901760
    %554 = vmatpush1.msra.mxu0 %v553
    %555 = vmatprep.subr.mxu0 0.0
    %v556 = vand.u32 %v52, 4294901760
    %v557 = vsub.f32 %v52, %v556
    %v558 = vand.u32 %v557, 4294901760
    %559 = vmatpush1.msra.mxu0 %v558
    %560 = vmatprep.subr.mxu0 0.0
    %v561 = vand.u32 %v53, 4294901760
    %v562 = vsub.f32 %v53, %v561
    %v563 = vand.u32 %v562, 4294901760
    %564 = vmatpush1.msra.mxu0 %v563
    %565 = vmatprep.subr.mxu0 0.0
    %v566 = vand.u32 %v54, 4294901760
    %v567 = vsub.f32 %v54, %v566
    %v568 = vand.u32 %v567, 4294901760
    %569 = vmatpush1.msra.mxu0 %v568
    %570 = vmatprep.subr.mxu0 0.0
    %571 = vmatpush1.msra.mxu0 0.0
    %572 = vmatprep.subr.mxu0 0.0
    %573 = vmatpush1.msra.mxu0 0.0
    %574 = vmatprep.subr.mxu0 0.0
    %575 = vmatpush1.msra.mxu0 0.0
    %576 = vmatprep.subr.mxu0 0.0
    %577 = vmatpush1.msra.mxu0 0.0
    %578 = vmatprep.subr.mxu0 0.0
    %579 = vmatpush1.msra.mxu0 0.0
    %580 = vmatprep.subr.mxu0 0.0
    %581 = vmatpush1.msra.mxu0 0.0
    %582 = vmatprep.subr.mxu0 0.0
    %583 = vmatpush1.msra.mxu0 0.0
    %584 = vmatprep.subr.mxu0 0.0
    %585 = vmatpush1.msra.mxu0 0.0
    %586 = vmatprep.subr.mxu0 0.0
    %587 = vmatpush1.msra.mxu0 0.0
    %588 = vmatprep.subr.mxu0 0.0
    %589 = vmatpush1.msra.mxu0 0.0
    %590 = vmatprep.subr.mxu0 0.0
    %591 = vmatpush1.msra.mxu0 0.0
    %592 = vmatprep.subr.mxu0 0.0
    %593 = vmatpush1.msra.mxu0 0.0
    %594 = vmatprep.subr.mxu0 0.0
    %595 = vmatpush1.msra.mxu0 0.0
    %596 = vmatprep.subr.mxu0 0.0
    %597 = vmatpush1.msra.mxu0 0.0
    %598 = vmatprep.subr.mxu0 0.0
    %599 = vmatpush1.msra.mxu0 0.0
    %600 = vmatprep.subr.mxu0 0.0
    %601 = vmatpush1.msra.mxu0 0.0
    %602 = vmatprep.mubr.f32.mxu0 0.0
    %v603 = vand.u32 %v38, 4294901760
    %604 = vmatmul.mubr.f32.gmra.mrb[0].mxu0 %v603
    %v605 = vpop.f32.mrb[0].mxu0
    %v606 = vadd.f32 %v487, %v605
    %v607 = vpop.f32.mrb[0].mxu0
    %608 = vdwg.mxu0
    %609 = vmatprep.subr.mxu0 0.0
    %v610 = vand.u32 %v39, 4294901760
    %611 = vmatpush1.msra.mxu0 %v610
    %612 = vmatprep.subr.mxu0 0.0
    %v613 = vand.u32 %v40, 4294901760
    %614 = vmatpush1.msra.mxu0 %v613
    %615 = vmatprep.subr.mxu0 0.0
    %v616 = vand.u32 %v41, 4294901760
    %617 = vmatpush1.msra.mxu0 %v616
    %618 = vmatprep.subr.mxu0 0.0
    %v619 = vand.u32 %v42, 4294901760
    %620 = vmatpush1.msra.mxu0 %v619
    %621 = vmatprep.subr.mxu0 0.0
    %v622 = vand.u32 %v43, 4294901760
    %623 = vmatpush1.msra.mxu0 %v622
    %624 = vmatprep.subr.mxu0 0.0
    %v625 = vand.u32 %v44, 4294901760
    %626 = vmatpush1.msra.mxu0 %v625
    %627 = vmatprep.subr.mxu0 0.0
    %v628 = vand.u32 %v45, 4294901760
    %629 = vmatpush1.msra.mxu0 %v628
    %630 = vmatprep.subr.mxu0 0.0
    %v631 = vand.u32 %v46, 4294901760
    %632 = vmatpush1.msra.mxu0 %v631
    %633 = vmatprep.subr.mxu0 0.0
    %v634 = vand.u32 %v47, 4294901760
    %635 = vmatpush1.msra.mxu0 %v634
    %636 = vmatprep.subr.mxu0 0.0
    %v637 = vand.u32 %v48, 4294901760
    %638 = vmatpush1.msra.mxu0 %v637
    %639 = vmatprep.subr.mxu0 0.0
    %v640 = vand.u32 %v49, 4294901760
    %641 = vmatpush1.msra.mxu0 %v640
    %642 = vmatprep.subr.mxu0 0.0
    %v643 = vand.u32 %v50, 4294901760
    %644 = vmatpush1.msra.mxu0 %v643
    %645 = vmatprep.subr.mxu0 0.0
    %v646 = vand.u32 %v51, 4294901760
    %647 = vmatpush1.msra.mxu0 %v646
    %648 = vmatprep.subr.mxu0 0.0
    %v649 = vand.u32 %v52, 4294901760
    %650 = vmatpush1.msra.mxu0 %v649
    %651 = vmatprep.subr.mxu0 0.0
    %v652 = vand.u32 %v53, 4294901760
    %653 = vmatpush1.msra.mxu0 %v652
    %654 = vmatprep.subr.mxu0 0.0
    %v655 = vand.u32 %v54, 4294901760
    %656 = vmatpush1.msra.mxu0 %v655
    %657 = vmatprep.subr.mxu0 0.0
    %658 = vmatpush1.msra.mxu0 0.0
    %659 = vmatprep.subr.mxu0 0.0
    %660 = vmatpush1.msra.mxu0 0.0
    %661 = vmatprep.subr.mxu0 0.0
    %662 = vmatpush1.msra.mxu0 0.0
    %663 = vmatprep.subr.mxu0 0.0
    %664 = vmatpush1.msra.mxu0 0.0
    %665 = vmatprep.subr.mxu0 0.0
    %666 = vmatpush1.msra.mxu0 0.0
    %667 = vmatprep.subr.mxu0 0.0
    %668 = vmatpush1.msra.mxu0 0.0
    %669 = vmatprep.subr.mxu0 0.0
    %670 = vmatpush1.msra.mxu0 0.0
    %671 = vmatprep.subr.mxu0 0.0
    %672 = vmatpush1.msra.mxu0 0.0
    %673 = vmatprep.subr.mxu0 0.0
    %674 = vmatpush1.msra.mxu0 0.0
    %675 = vmatprep.subr.mxu0 0.0
    %676 = vmatpush1.msra.mxu0 0.0
    %677 = vmatprep.subr.mxu0 0.0
    %678 = vmatpush1.msra.mxu0 0.0
    %679 = vmatprep.subr.mxu0 0.0
    %680 = vmatpush1.msra.mxu0 0.0
    %681 = vmatprep.subr.mxu0 0.0
    %682 = vmatpush1.msra.mxu0 0.0
    %683 = vmatprep.subr.mxu0 0.0
    %684 = vmatpush1.msra.mxu0 0.0
    %685 = vmatprep.subr.mxu0 0.0
    %686 = vmatpush1.msra.mxu0 0.0
    %687 = vmatprep.subr.mxu0 0.0
    %688 = vmatpush1.msra.mxu0 0.0
    %689 = vmatprep.mubr.f32.mxu0 0.0
    %v690 = vand.u32 %v38, 4294901760
    %691 = vmatmul.mubr.f32.gmra.mrb[0].mxu0 %v690
    %v692 = vpop.f32.mrb[0].mxu0
    %v693 = vadd.f32 %v606, %v692
    %v694 = vpop.f32.mrb[0].mxu0
    %695 = vdwg.mxu0
    %696 = vst [vmem:[#allocation7] sm:$0xff] %v693
    // Predicated region
    $region18: #{tpu_custom_call.1} parent=1 // pred_check
      _
    $region19: #{tpu_custom_call.1} parent=1 // pred_check_branch
      %698 = sbr.rel (0) target = $region21
    $region20: #{tpu_custom_call.1} parent=1 // pred_region
      %s700 = ssub.s32 128, 128
      %701 = vsyncadd [#allocation4], %s700
      %s703 = sshll.u32 [#allocation7], 4
      %s704 = int_to_ptr.vmem [resolvable:$true] %s703
      %706 = dma.vmem_to_hbm [thread:$0]  %s704, 128, %s2, [#allocation4]
    $region21: #{tpu_custom_call.1} parent=1 // pred_fallthru
      _
    // Predicated region
    $region22: #{tpu_custom_call.1} parent=1 // pred_check
      _
    $region23: #{tpu_custom_call.1} parent=1 // pred_check_branch
      %708 = sbr.rel (0) target = $region25
    $region24: #{tpu_custom_call.1} parent=1 // pred_region
      %709 = dma.done [#allocation4], 128
    $region25: #{tpu_custom_call.1} parent=1 // pred_fallthru
      _
    %710 = vsyncpa [#allocation3], 1
    %711 = vsyncpa [#allocation6], 1
    %712 = vsyncpa [#allocation4], 1

// kernel: node_edge_net_forward.7
$region0: #{node_edge_net_forward.7}
  #allocation0 [shape = 'u32[]', space=smem, size = 0x4, offset = 0x4, fixed_abs, tag = 'smem constant byte address 0x4 - core index']
  #allocation1 [shape = 'u32[144,128]{1,0:T(1,128)}', space=vmem, size = 0x12000, scoped, tag = 'internal scratch']
  %s0 = inlined_call_operand.vmem [shape: f32[128,32], index: 0, kind: input, shape index: {}]
  %s1 = inlined_call_operand.vmem [shape: f32[32,128], index: 1, kind: input, shape index: {}]
  %s2 = inlined_call_operand.vmem [shape: f32[32,32], index: 2, kind: input, shape index: {}]
  %s3 = inlined_call_operand.vmem [shape: f32[1,32], index: 3, kind: input, shape index: {}]
  %s4 = inlined_call_operand.vmem [shape: f32[1,32], index: 4, kind: input, shape index: {}]
  %s5 = inlined_call_operand.vmem [shape: f32[1,32], index: 5, kind: input, shape index: {}]
  %s6 = inlined_call_operand.vmem [shape: f32[32,32], index: 6, kind: input, shape index: {}]
  %s7 = inlined_call_operand.vmem [shape: f32[1,32], index: 7, kind: input, shape index: {}]
  %s8 = inlined_call_operand.vmem [shape: f32[128,32], index: 8, kind: output, shape index: {}]
  %s9 = sld [smem:[#allocation0]]
  $region42: #{node_edge_net_forward.7} parent=0
    _
  %s11 = ssub.s32 1, %s9
  %s12 = scalar_select 0, %s11, %s9
  // Predicated region
  $region2: #{node_edge_net_forward.7} parent=0 // pred_check
    _
  $region3: #{node_edge_net_forward.7} parent=0 // pred_check_branch
    %14 = sbr.rel (0) target = $region5
  $region4: #{node_edge_net_forward.7} parent=0 // pred_region
    _
  $region5: #{node_edge_net_forward.7} parent=0 // pred_fallthru
    _
  // Predicated region
  $region6: #{node_edge_net_forward.7} parent=0 // pred_check
    _
  $region7: #{node_edge_net_forward.7} parent=0 // pred_check_branch
    %16 = sbr.rel (0) target = $region9
  $region8: #{node_edge_net_forward.7} parent=0 // pred_region
    _
  $region9: #{node_edge_net_forward.7} parent=0 // pred_fallthru
    _
  // Predicated region
  $region10: #{node_edge_net_forward.7} parent=0 // pred_check
    _
  $region11: #{node_edge_net_forward.7} parent=0 // pred_check_branch
    %18 = sbr.rel (0) target = $region13
  $region12: #{node_edge_net_forward.7} parent=0 // pred_region
    _
  $region13: #{node_edge_net_forward.7} parent=0 // pred_fallthru
    _
  // Predicated region
  $region14: #{node_edge_net_forward.7} parent=0 // pred_check
    _
  $region15: #{node_edge_net_forward.7} parent=0 // pred_check_branch
    %20 = sbr.rel (0) target = $region17
  $region16: #{node_edge_net_forward.7} parent=0 // pred_region
    _
  $region17: #{node_edge_net_forward.7} parent=0 // pred_fallthru
    _
  // Predicated region
  $region18: #{node_edge_net_forward.7} parent=0 // pred_check
    _
  $region19: #{node_edge_net_forward.7} parent=0 // pred_check_branch
    %22 = sbr.rel (0) target = $region21
  $region20: #{node_edge_net_forward.7} parent=0 // pred_region
    _
  $region21: #{node_edge_net_forward.7} parent=0 // pred_fallthru
    _
  // Predicated region
  $region22: #{node_edge_net_forward.7} parent=0 // pred_check
    _
  $region23: #{node_edge_net_forward.7} parent=0 // pred_check_branch
    %24 = sbr.rel (0) target = $region25
  $region24: #{node_edge_net_forward.7} parent=0 // pred_region
    _
  $region25: #{node_edge_net_forward.7} parent=0 // pred_fallthru
    _
  // Predicated region
  $region26: #{node_edge_net_forward.7} parent=0 // pred_check
    _
  $region27: #{node_edge_net_forward.7} parent=0 // pred_check_branch
    %26 = sbr.rel (0) target = $region29
  $region28: #{node_edge_net_forward.7} parent=0 // pred_region
    _
  $region29: #{node_edge_net_forward.7} parent=0 // pred_fallthru
    _
  // Predicated region
  $region30: #{node_edge_net_forward.7} parent=0 // pred_check
    _
  $region31: #{node_edge_net_forward.7} parent=0 // pred_check_branch
    %28 = sbr.rel (0) target = $region33
  $region32: #{node_edge_net_forward.7} parent=0 // pred_region
    _
  $region33: #{node_edge_net_forward.7} parent=0 // pred_fallthru
    _
  %v29 = vld [vmem:[%s0] sm:$0xff]
  %v30 = vld [vmem:[%s0 + $0x8] sm:$0xff]
  %v31 = vld [vmem:[%s0 + $0x10] sm:$0xff]
  %v32 = vld [vmem:[%s0 + $0x18] sm:$0xff]
  %v33 = vld [vmem:[%s0 + $0x20] sm:$0xff]
  %v34 = vld [vmem:[%s0 + $0x28] sm:$0xff]
  %v35 = vld [vmem:[%s0 + $0x30] sm:$0xff]
  %v36 = vld [vmem:[%s0 + $0x38] sm:$0xff]
  %v37 = vld [vmem:[%s0 + $0x40] sm:$0xff]
  %v38 = vld [vmem:[%s0 + $0x48] sm:$0xff]
  %v39 = vld [vmem:[%s0 + $0x50] sm:$0xff]
  %v40 = vld [vmem:[%s0 + $0x58] sm:$0xff]
  %v41 = vld [vmem:[%s0 + $0x60] sm:$0xff]
  %v42 = vld [vmem:[%s0 + $0x68] sm:$0xff]
  %v43 = vld [vmem:[%s0 + $0x70] sm:$0xff]
  %v44 = vld [vmem:[%s0 + $0x78] sm:$0xff]
  %v45 = vld [vmem:[%s1] sm:$0xff]
  %v46 = vld [vmem:[%s1 + $0x8] sm:$0xff]
  %v47 = vld [vmem:[%s1 + $0x10] sm:$0xff]
  %v48 = vld [vmem:[%s1 + $0x18] sm:$0xff]
  %49 = vxpose.xlu0.b32.start [1/16] %v45, 128
  %50 = vxpose.xlu0.b32.cont [2/16] %v46, 128
  %51 = vxpose.xlu0.b32.cont [3/16] %v47, 128
  %52 = vxpose.xlu0.b32.cont [4/16] %v48, 128
  %53 = vxpose.xlu0.b32.cont [5/16] 0.0, 128
  %54 = vxpose.xlu0.b32.cont [6/16] 0.0, 128
  %55 = vxpose.xlu0.b32.cont [7/16] 0.0, 128
  %56 = vxpose.xlu0.b32.cont [8/16] 0.0, 128
  %57 = vxpose.xlu0.b32.cont [9/16] 0.0, 128
  %58 = vxpose.xlu0.b32.cont [10/16] 0.0, 128
  %59 = vxpose.xlu0.b32.cont [11/16] 0.0, 128
  %60 = vxpose.xlu0.b32.cont [12/16] 0.0, 128
  %61 = vxpose.xlu0.b32.cont [13/16] 0.0, 128
  %62 = vxpose.xlu0.b32.cont [14/16] 0.0, 128
  %63 = vxpose.xlu0.b32.cont [15/16] 0.0, 128
  %64 = vxpose.xlu0.b32.end [16/16] 0.0, 128
  %v65 = vpop.trf.xlu0
  %v66 = vpop.trf.xlu0
  %v67 = vpop.trf.xlu0
  %v68 = vpop.trf.xlu0
  %v69 = vpop.trf.xlu0
  %v70 = vpop.trf.xlu0
  %v71 = vpop.trf.xlu0
  %v72 = vpop.trf.xlu0
  %v73 = vpop.trf.xlu0
  %v74 = vpop.trf.xlu0
  %v75 = vpop.trf.xlu0
  %v76 = vpop.trf.xlu0
  %v77 = vpop.trf.xlu0
  %v78 = vpop.trf.xlu0
  %v79 = vpop.trf.xlu0
  %v80 = vpop.trf.xlu0
  %v81 = vld [vmem:[%s2] sm:$0xff]
  %v82 = vld [vmem:[%s2 + $0x8] sm:$0xff]
  %v83 = vld [vmem:[%s2 + $0x10] sm:$0xff]
  %v84 = vld [vmem:[%s2 + $0x18] sm:$0xff]
  %v85 = vld [vmem:[%s3] sm:$0x1]
  %v87 = vlaneseq
  %v88 = vshrl.u32 %v87, 7
  %v89 = vsub.s32 0, %v88
  %v90 = vrot.slane %v85, %v89
  %vm92 = vcmask 261120
  %v94 = vsel %vm92, %v29, 0
  %v97 = vsel %vm92, %v30, 0
  %v100 = vsel %vm92, %v31, 0
  %v103 = vsel %vm92, %v32, 0
  %v106 = vsel %vm92, %v33, 0
  %v109 = vsel %vm92, %v34, 0
  %v112 = vsel %vm92, %v35, 0
  %v115 = vsel %vm92, %v36, 0
  %v118 = vsel %vm92, %v37, 0
  %v121 = vsel %vm92, %v38, 0
  %v124 = vsel %vm92, %v39, 0
  %v127 = vsel %vm92, %v40, 0
  %v130 = vsel %vm92, %v41, 0
  %v133 = vsel %vm92, %v42, 0
  %v136 = vsel %vm92, %v43, 0
  %v139 = vsel %vm92, %v44, 0
  %141 = vmatprep.subr.mxu0 0.0
  %142 = vmatpush1.msra.mxu0 %v81
  %143 = vmatprep.subr.mxu0 0.0
  %144 = vmatpush1.msra.mxu0 %v82
  %145 = vmatprep.subr.mxu0 0.0
  %146 = vmatpush1.msra.mxu0 %v83
  %147 = vmatprep.subr.mxu0 0.0
  %148 = vmatpush1.msra.mxu0 %v84
  %149 = vmatprep.subr.mxu0 0.0
  %150 = vmatpush1.msra.mxu0 0.0
  %151 = vmatprep.subr.mxu0 0.0
  %152 = vmatpush1.msra.mxu0 0.0
  %153 = vmatprep.subr.mxu0 0.0
  %154 = vmatpush1.msra.mxu0 0.0
  %155 = vmatprep.subr.mxu0 0.0
  %156 = vmatpush1.msra.mxu0 0.0
  %157 = vmatprep.subr.mxu0 0.0
  %158 = vmatpush1.msra.mxu0 0.0
  %159 = vmatprep.subr.mxu0 0.0
  %160 = vmatpush1.msra.mxu0 0.0
  %161 = vmatprep.subr.mxu0 0.0
  %162 = vmatpush1.msra.mxu0 0.0
  %163 = vmatprep.subr.mxu0 0.0
  %164 = vmatpush1.msra.mxu0 0.0
  %165 = vmatprep.subr.mxu0 0.0
  %166 = vmatpush1.msra.mxu0 0.0
  %167 = vmatprep.subr.mxu0 0.0
  %168 = vmatpush1.msra.mxu0 0.0
  %169 = vmatprep.subr.mxu0 0.0
  %170 = vmatpush1.msra.mxu0 0.0
  %171 = vmatprep.subr.mxu0 0.0
  %172 = vmatpush1.msra.mxu0 0.0
  %173 = vmatprep.subr.mxu0 0.0
  %174 = vmatpush1.msra.mxu0 0.0
  %175 = vmatprep.subr.mxu0 0.0
  %176 = vmatpush1.msra.mxu0 0.0
  %177 = vmatprep.subr.mxu0 0.0
  %178 = vmatpush1.msra.mxu0 0.0
  %179 = vmatprep.subr.mxu0 0.0
  %180 = vmatpush1.msra.mxu0 0.0
  %181 = vmatprep.subr.mxu0 0.0
  %182 = vmatpush1.msra.mxu0 0.0
  %183 = vmatprep.subr.mxu0 0.0
  %184 = vmatpush1.msra.mxu0 0.0
  %185 = vmatprep.subr.mxu0 0.0
  %186 = vmatpush1.msra.mxu0 0.0
  %187 = vmatprep.subr.mxu0 0.0
  %188 = vmatpush1.msra.mxu0 0.0
  %189 = vmatprep.subr.mxu0 0.0
  %190 = vmatpush1.msra.mxu0 0.0
  %191 = vmatprep.subr.mxu0 0.0
  %192 = vmatpush1.msra.mxu0 0.0
  %193 = vmatprep.subr.mxu0 0.0
  %194 = vmatpush1.msra.mxu0 0.0
  %195 = vmatprep.subr.mxu0 0.0
  %196 = vmatpush1.msra.mxu0 0.0
  %197 = vmatprep.subr.mxu0 0.0
  %198 = vmatpush1.msra.mxu0 0.0
  %199 = vmatprep.subr.mxu0 0.0
  %200 = vmatpush1.msra.mxu0 0.0
  %201 = vmatprep.subr.mxu0 0.0
  %202 = vmatpush1.msra.mxu0 0.0
  %203 = vmatprep.subr.mxu0 0.0
  %204 = vmatpush1.msra.mxu0 0.0
  %205 = vmatprep.mubr.f32.mxu0 0.0
  %206 = vmatmul.mubr.f32.gmra.mrb[0].mxu0 %v94
  %v207 = vpop.f32.mrb[0].mxu0
  %v208 = vadd.f32 %v90, %v207
  %v209 = vpop.f32.mrb[0].mxu0
  %210 = vmatprep.mubr.f32.mxu0 0.0
  %211 = vmatmul.mubr.f32.gmra.mrb[0].mxu0 %v97
  %v212 = vpop.f32.mrb[0].mxu0
  %v213 = vadd.f32 %v90, %v212
  %v214 = vpop.f32.mrb[0].mxu0
  %215 = vmatprep.mubr.f32.mxu0 0.0
  %216 = vmatmul.mubr.f32.gmra.mrb[0].mxu0 %v100
  %v217 = vpop.f32.mrb[0].mxu0
  %v218 = vadd.f32 %v90, %v217
  %v219 = vpop.f32.mrb[0].mxu0
  %220 = vmatprep.mubr.f32.mxu0 0.0
  %221 = vmatmul.mubr.f32.gmra.mrb[0].mxu0 %v103
  %v222 = vpop.f32.mrb[0].mxu0
  %v223 = vadd.f32 %v90, %v222
  %v224 = vpop.f32.mrb[0].mxu0
  %225 = vmatprep.mubr.f32.mxu0 0.0
  %226 = vmatmul.mubr.f32.gmra.mrb[0].mxu0 %v106
  %v227 = vpop.f32.mrb[0].mxu0
  %v228 = vadd.f32 %v90, %v227
  %v229 = vpop.f32.mrb[0].mxu0
  %230 = vmatprep.mubr.f32.mxu0 0.0
  %231 = vmatmul.mubr.f32.gmra.mrb[0].mxu0 %v109
  %v232 = vpop.f32.mrb[0].mxu0
  %v233 = vadd.f32 %v90, %v232
  %v234 = vpop.f32.mrb[0].mxu0
  %235 = vmatprep.mubr.f32.mxu0 0.0
  %236 = vmatmul.mubr.f32.gmra.mrb[0].mxu0 %v112
  %v237 = vpop.f32.mrb[0].mxu0
  %v238 = vadd.f32 %v90, %v237
  %v239 = vpop.f32.mrb[0].mxu0
  %240 = vmatprep.mubr.f32.mxu0 0.0
  %241 = vmatmul.mubr.f32.gmra.mrb[0].mxu0 %v115
  %v242 = vpop.f32.mrb[0].mxu0
  %v243 = vadd.f32 %v90, %v242
  %v244 = vpop.f32.mrb[0].mxu0
  %245 = vmatprep.mubr.f32.mxu0 0.0
  %246 = vmatmul.mubr.f32.gmra.mrb[0].mxu0 %v118
  %v247 = vpop.f32.mrb[0].mxu0
  %v248 = vadd.f32 %v90, %v247
  %v249 = vpop.f32.mrb[0].mxu0
  %250 = vmatprep.mubr.f32.mxu0 0.0
  %251 = vmatmul.mubr.f32.gmra.mrb[0].mxu0 %v121
  %v252 = vpop.f32.mrb[0].mxu0
  %v253 = vadd.f32 %v90, %v252
  %v254 = vpop.f32.mrb[0].mxu0
  %255 = vmatprep.mubr.f32.mxu0 0.0
  %256 = vmatmul.mubr.f32.gmra.mrb[0].mxu0 %v124
  %v257 = vpop.f32.mrb[0].mxu0
  %v258 = vadd.f32 %v90, %v257
  %v259 = vpop.f32.mrb[0].mxu0
  %260 = vmatprep.mubr.f32.mxu0 0.0
  %261 = vmatmul.mubr.f32.gmra.mrb[0].mxu0 %v127
  %v262 = vpop.f32.mrb[0].mxu0
  %v263 = vadd.f32 %v90, %v262
  %v264 = vpop.f32.mrb[0].mxu0
  %265 = vmatprep.mubr.f32.mxu0 0.0
  %266 = vmatmul.mubr.f32.gmra.mrb[0].mxu0 %v130
  %v267 = vpop.f32.mrb[0].mxu0
  %v268 = vadd.f32 %v90, %v267
  %v269 = vpop.f32.mrb[0].mxu0
  %270 = vmatprep.mubr.f32.mxu0 0.0
  %271 = vmatmul.mubr.f32.gmra.mrb[0].mxu0 %v133
  %v272 = vpop.f32.mrb[0].mxu0
  %v273 = vadd.f32 %v90, %v272
  %v274 = vpop.f32.mrb[0].mxu0
  %275 = vmatprep.mubr.f32.mxu0 0.0
  %276 = vmatmul.mubr.f32.gmra.mrb[0].mxu0 %v136
  %v277 = vpop.f32.mrb[0].mxu0
  %v278 = vadd.f32 %v90, %v277
  %v279 = vpop.f32.mrb[0].mxu0
  %280 = vmatprep.mubr.f32.mxu0 0.0
  %281 = vmatmul.mubr.f32.gmra.mrb[0].mxu0 %v139
  %v282 = vpop.f32.mrb[0].mxu0
  %v283 = vadd.f32 %v90, %v282
  %v284 = vpop.f32.mrb[0].mxu0
  %285 = vdwg.mxu0
  %v286 = vadd.f32 %v208, %v65
  %v287 = vadd.f32 %v213, %v66
  %v288 = vadd.f32 %v218, %v67
  %v289 = vadd.f32 %v223, %v68
  %v290 = vadd.f32 %v228, %v69
  %v291 = vadd.f32 %v233, %v70
  %v292 = vadd.f32 %v238, %v71
  %v293 = vadd.f32 %v243, %v72
  %v294 = vadd.f32 %v248, %v73
  %v295 = vadd.f32 %v253, %v74
  %v296 = vadd.f32 %v258, %v75
  %v297 = vadd.f32 %v263, %v76
  %v298 = vadd.f32 %v268, %v77
  %v299 = vadd.f32 %v273, %v78
  %v300 = vadd.f32 %v278, %v79
  %v301 = vadd.f32 %v283, %v80
  %v302 = vsel %vm92, %v286, 0.0
  %303 = vadd.xlane.f32.xlu0 %v302
  %v304 = vpop.xlane.xlu0 %303
  %v305 = vsel %vm92, %v287, 0.0
  %306 = vadd.xlane.f32.xlu0 %v305
  %v307 = vpop.xlane.xlu0 %306
  %v308 = vsel %vm92, %v288, 0.0
  %309 = vadd.xlane.f32.xlu0 %v308
  %v310 = vpop.xlane.xlu0 %309
  %v311 = vsel %vm92, %v289, 0.0
  %312 = vadd.xlane.f32.xlu0 %v311
  %v313 = vpop.xlane.xlu0 %312
  %v314 = vsel %vm92, %v290, 0.0
  %315 = vadd.xlane.f32.xlu0 %v314
  %v316 = vpop.xlane.xlu0 %315
  %v317 = vsel %vm92, %v291, 0.0
  %318 = vadd.xlane.f32.xlu0 %v317
  %v319 = vpop.xlane.xlu0 %318
  %v320 = vsel %vm92, %v292, 0.0
  %321 = vadd.xlane.f32.xlu0 %v320
  %v322 = vpop.xlane.xlu0 %321
  %v323 = vsel %vm92, %v293, 0.0
  %324 = vadd.xlane.f32.xlu0 %v323
  %v325 = vpop.xlane.xlu0 %324
  %v326 = vsel %vm92, %v294, 0.0
  %327 = vadd.xlane.f32.xlu0 %v326
  %v328 = vpop.xlane.xlu0 %327
  %v329 = vsel %vm92, %v295, 0.0
  %330 = vadd.xlane.f32.xlu0 %v329
  %v331 = vpop.xlane.xlu0 %330
  %v332 = vsel %vm92, %v296, 0.0
  %333 = vadd.xlane.f32.xlu0 %v332
  %v334 = vpop.xlane.xlu0 %333
  %v335 = vsel %vm92, %v297, 0.0
  %336 = vadd.xlane.f32.xlu0 %v335
  %v337 = vpop.xlane.xlu0 %336
  %v338 = vsel %vm92, %v298, 0.0
  %339 = vadd.xlane.f32.xlu0 %v338
  %v340 = vpop.xlane.xlu0 %339
  %v341 = vsel %vm92, %v299, 0.0
  %342 = vadd.xlane.f32.xlu0 %v341
  %v343 = vpop.xlane.xlu0 %342
  %v344 = vsel %vm92, %v300, 0.0
  %345 = vadd.xlane.f32.xlu0 %v344
  %v346 = vpop.xlane.xlu0 %345
  %v347 = vsel %vm92, %v301, 0.0
  %348 = vadd.xlane.f32.xlu0 %v347
  %v349 = vpop.xlane.xlu0 %348
  %v350 = vrcp.pop 32.0
  %v351 = vmul.f32 %v304, %v350
  %v352 = vmul.f32 %v307, %v350
  %v353 = vmul.f32 %v310, %v350
  %v354 = vmul.f32 %v313, %v350
  %v355 = vmul.f32 %v316, %v350
  %v356 = vmul.f32 %v319, %v350
  %v357 = vmul.f32 %v322, %v350
  %v358 = vmul.f32 %v325, %v350
  %v359 = vmul.f32 %v328, %v350
  %v360 = vmul.f32 %v331, %v350
  %v361 = vmul.f32 %v334, %v350
  %v362 = vmul.f32 %v337, %v350
  %v363 = vmul.f32 %v340, %v350
  %v364 = vmul.f32 %v343, %v350
  %v365 = vmul.f32 %v346, %v350
  %v366 = vmul.f32 %v349, %v350
  %v367 = vsub.f32 %v286, %v351
  %v368 = vsub.f32 %v287, %v352
  %v369 = vsub.f32 %v288, %v353
  %v370 = vsub.f32 %v289, %v354
  %v371 = vsub.f32 %v290, %v355
  %v372 = vsub.f32 %v291, %v356
  %v373 = vsub.f32 %v292, %v357
  %v374 = vsub.f32 %v293, %v358
  %v375 = vsub.f32 %v294, %v359
  %v376 = vsub.f32 %v295, %v360
  %v377 = vsub.f32 %v296, %v361
  %v378 = vsub.f32 %v297, %v362
  %v379 = vsub.f32 %v298, %v363
  %v380 = vsub.f32 %v299, %v364
  %v381 = vsub.f32 %v300, %v365
  %v382 = vsub.f32 %v301, %v366
  %v383 = vmul.f32 %v367, %v367
  %v384 = vmul.f32 %v368, %v368
  %v385 = vmul.f32 %v369, %v369
  %v386 = vmul.f32 %v370, %v370
  %v387 = vmul.f32 %v371, %v371
  %v388 = vmul.f32 %v372, %v372
  %v389 = vmul.f32 %v373, %v373
  %v390 = vmul.f32 %v374, %v374
  %v391 = vmul.f32 %v375, %v375
  %v392 = vmul.f32 %v376, %v376
  %v393 = vmul.f32 %v377, %v377
  %v394 = vmul.f32 %v378, %v378
  %v395 = vmul.f32 %v379, %v379
  %v396 = vmul.f32 %v380, %v380
  %v397 = vmul.f32 %v381, %v381
  %v398 = vmul.f32 %v382, %v382
  %v399 = vsel %vm92, %v383, 0.0
  %400 = vadd.xlane.f32.xlu0 %v399
  %v401 = vpop.xlane.xlu0 %400
  %v402 = vsel %vm92, %v384, 0.0
  %403 = vadd.xlane.f32.xlu0 %v402
  %v404 = vpop.xlane.xlu0 %403
  %v405 = vsel %vm92, %v385, 0.0
  %406 = vadd.xlane.f32.xlu0 %v405
  %v407 = vpop.xlane.xlu0 %406
  %v408 = vsel %vm92, %v386, 0.0
  %409 = vadd.xlane.f32.xlu0 %v408
  %v410 = vpop.xlane.xlu0 %409
  %v411 = vsel %vm92, %v387, 0.0
  %412 = vadd.xlane.f32.xlu0 %v411
  %v413 = vpop.xlane.xlu0 %412
  %v414 = vsel %vm92, %v388, 0.0
  %415 = vadd.xlane.f32.xlu0 %v414
  %v416 = vpop.xlane.xlu0 %415
  %v417 = vsel %vm92, %v389, 0.0
  %418 = vadd.xlane.f32.xlu0 %v417
  %v419 = vpop.xlane.xlu0 %418
  %v420 = vsel %vm92, %v390, 0.0
  %421 = vadd.xlane.f32.xlu0 %v420
  %v422 = vpop.xlane.xlu0 %421
  %v423 = vsel %vm92, %v391, 0.0
  %424 = vadd.xlane.f32.xlu0 %v423
  %v425 = vpop.xlane.xlu0 %424
  %v426 = vsel %vm92, %v392, 0.0
  %427 = vadd.xlane.f32.xlu0 %v426
  %v428 = vpop.xlane.xlu0 %427
  %v429 = vsel %vm92, %v393, 0.0
  %430 = vadd.xlane.f32.xlu0 %v429
  %v431 = vpop.xlane.xlu0 %430
  %v432 = vsel %vm92, %v394, 0.0
  %433 = vadd.xlane.f32.xlu0 %v432
  %v434 = vpop.xlane.xlu0 %433
  %v435 = vsel %vm92, %v395, 0.0
  %436 = vadd.xlane.f32.xlu0 %v435
  %v437 = vpop.xlane.xlu0 %436
  %v438 = vsel %vm92, %v396, 0.0
  %439 = vadd.xlane.f32.xlu0 %v438
  %v440 = vpop.xlane.xlu0 %439
  %v441 = vsel %vm92, %v397, 0.0
  %442 = vadd.xlane.f32.xlu0 %v441
  %v443 = vpop.xlane.xlu0 %442
  %v444 = vsel %vm92, %v398, 0.0
  %445 = vadd.xlane.f32.xlu0 %v444
  %v446 = vpop.xlane.xlu0 %445
  %v447 = vmul.f32 %v401, %v350
  %v448 = vmul.f32 %v404, %v350
  %v449 = vmul.f32 %v407, %v350
  %v450 = vmul.f32 %v410, %v350
  %v451 = vmul.f32 %v413, %v350
  %v452 = vmul.f32 %v416, %v350
  %v453 = vmul.f32 %v419, %v350
  %v454 = vmul.f32 %v422, %v350
  %v455 = vmul.f32 %v425, %v350
  %v456 = vmul.f32 %v428, %v350
  %v457 = vmul.f32 %v431, %v350
  %v458 = vmul.f32 %v434, %v350
  %v459 = vmul.f32 %v437, %v350
  %v460 = vmul.f32 %v440, %v350
  %v461 = vmul.f32 %v443, %v350
  %v462 = vmul.f32 %v446, %v350
  %v463 = vadd.f32 %v447, 1e-05
  %v464 = vadd.f32 %v448, 1e-05
  %v465 = vadd.f32 %v449, 1e-05
  %v466 = vadd.f32 %v450, 1e-05
  %v467 = vadd.f32 %v451, 1e-05
  %v468 = vadd.f32 %v452, 1e-05
  %v469 = vadd.f32 %v453, 1e-05
  %v470 = vadd.f32 %v454, 1e-05
  %v471 = vadd.f32 %v455, 1e-05
  %v472 = vadd.f32 %v456, 1e-05
  %v473 = vadd.f32 %v457, 1e-05
  %v474 = vadd.f32 %v458, 1e-05
  %v475 = vadd.f32 %v459, 1e-05
  %v476 = vadd.f32 %v460, 1e-05
  %v477 = vadd.f32 %v461, 1e-05
  %v478 = vadd.f32 %v462, 1e-05
  %v479 = vrsqrt.pop %v463
  %v480 = vrsqrt.pop %v464
  %v481 = vrsqrt.pop %v465
  %v482 = vrsqrt.pop %v466
  %v483 = vrsqrt.pop %v467
  %v484 = vrsqrt.pop %v468
  %v485 = vrsqrt.pop %v469
  %v486 = vrsqrt.pop %v470
  %v487 = vrsqrt.pop %v471
  %v488 = vrsqrt.pop %v472
  %v489 = vrsqrt.pop %v473
  %v490 = vrsqrt.pop %v474
  %v491 = vrsqrt.pop %v475
  %v492 = vrsqrt.pop %v476
  %v493 = vrsqrt.pop %v477
  %v494 = vrsqrt.pop %v478
  %v495 = vmul.f32 %v367, %v479
  %v496 = vmul.f32 %v368, %v480
  %v497 = vmul.f32 %v369, %v481
  %v498 = vmul.f32 %v370, %v482
  %v499 = vmul.f32 %v371, %v483
  %v500 = vmul.f32 %v372, %v484
  %v501 = vmul.f32 %v373, %v485
  %v502 = vmul.f32 %v374, %v486
  %v503 = vmul.f32 %v375, %v487
  %v504 = vmul.f32 %v376, %v488
  %v505 = vmul.f32 %v377, %v489
  %v506 = vmul.f32 %v378, %v490
  %v507 = vmul.f32 %v379, %v491
  %v508 = vmul.f32 %v380, %v492
  %v509 = vmul.f32 %v381, %v493
  %v510 = vmul.f32 %v382, %v494
  %v511 = vld [vmem:[%s4] sm:$0x1]
  %v513 = vlaneseq
  %v514 = vshrl.u32 %v513, 7
  %v515 = vsub.s32 0, %v514
  %v516 = vrot.slane %v511, %v515
  %v518 = vmul.f32 %v495, %v516
  %v519 = vmul.f32 %v496, %v516
  %v520 = vmul.f32 %v497, %v516
  %v521 = vmul.f32 %v498, %v516
  %v522 = vmul.f32 %v499, %v516
  %v523 = vmul.f32 %v500, %v516
  %v524 = vmul.f32 %v501, %v516
  %v525 = vmul.f32 %v502, %v516
  %v526 = vmul.f32 %v503, %v516
  %v527 = vmul.f32 %v504, %v516
  %v528 = vmul.f32 %v505, %v516
  %v529 = vmul.f32 %v506, %v516
  %v530 = vmul.f32 %v507, %v516
  %v531 = vmul.f32 %v508, %v516
  %v532 = vmul.f32 %v509, %v516
  %v533 = vmul.f32 %v510, %v516
  %v534 = vld [vmem:[%s5] sm:$0x1]
  %v536 = vlaneseq
  %v537 = vshrl.u32 %v536, 7
  %v538 = vsub.s32 0, %v537
  %v539 = vrot.slane %v534, %v538
  %v541 = vadd.f32 %v518, %v539
  %v542 = vadd.f32 %v519, %v539
  %v543 = vadd.f32 %v520, %v539
  %v544 = vadd.f32 %v521, %v539
  %v545 = vadd.f32 %v522, %v539
  %v546 = vadd.f32 %v523, %v539
  %v547 = vadd.f32 %v524, %v539
  %v548 = vadd.f32 %v525, %v539
  %v549 = vadd.f32 %v526, %v539
  %v550 = vadd.f32 %v527, %v539
  %v551 = vadd.f32 %v528, %v539
  %v552 = vadd.f32 %v529, %v539
  %v553 = vadd.f32 %v530, %v539
  %v554 = vadd.f32 %v531, %v539
  %v555 = vadd.f32 %v532, %v539
  %v556 = vadd.f32 %v533, %v539
  %v557 = vmax.f32 %v541, 0.0
  %v558 = vmax.f32 %v542, 0.0
  %v559 = vmax.f32 %v543, 0.0
  %v560 = vmax.f32 %v544, 0.0
  %v561 = vmax.f32 %v545, 0.0
  %v562 = vmax.f32 %v546, 0.0
  %v563 = vmax.f32 %v547, 0.0
  %v564 = vmax.f32 %v548, 0.0
  %v565 = vmax.f32 %v549, 0.0
  %v566 = vmax.f32 %v550, 0.0
  %v567 = vmax.f32 %v551, 0.0
  %v568 = vmax.f32 %v552, 0.0
  %v569 = vmax.f32 %v553, 0.0
  %v570 = vmax.f32 %v554, 0.0
  %v571 = vmax.f32 %v555, 0.0
  %v572 = vmax.f32 %v556, 0.0
  %v573 = vld [vmem:[%s6] sm:$0xff]
  %v574 = vld [vmem:[%s6 + $0x8] sm:$0xff]
  %v575 = vld [vmem:[%s6 + $0x10] sm:$0xff]
  %v576 = vld [vmem:[%s6 + $0x18] sm:$0xff]
  %v578 = vsel %vm92, %v557, 0
  %v581 = vsel %vm92, %v558, 0
  %v584 = vsel %vm92, %v559, 0
  %v587 = vsel %vm92, %v560, 0
  %v590 = vsel %vm92, %v561, 0
  %v593 = vsel %vm92, %v562, 0
  %v596 = vsel %vm92, %v563, 0
  %v599 = vsel %vm92, %v564, 0
  %v602 = vsel %vm92, %v565, 0
  %v605 = vsel %vm92, %v566, 0
  %v608 = vsel %vm92, %v567, 0
  %v611 = vsel %vm92, %v568, 0
  %v614 = vsel %vm92, %v569, 0
  %v617 = vsel %vm92, %v570, 0
  %v620 = vsel %vm92, %v571, 0
  %v623 = vsel %vm92, %v572, 0
  %625 = vmatprep.subr.mxu0 0.0
  %626 = vmatpush1.msra.mxu0 %v573
  %627 = vmatprep.subr.mxu0 0.0
  %628 = vmatpush1.msra.mxu0 %v574
  %629 = vmatprep.subr.mxu0 0.0
  %630 = vmatpush1.msra.mxu0 %v575
  %631 = vmatprep.subr.mxu0 0.0
  %632 = vmatpush1.msra.mxu0 %v576
  %633 = vmatprep.subr.mxu0 0.0
  %634 = vmatpush1.msra.mxu0 0.0
  %635 = vmatprep.subr.mxu0 0.0
  %636 = vmatpush1.msra.mxu0 0.0
  %637 = vmatprep.subr.mxu0 0.0
  %638 = vmatpush1.msra.mxu0 0.0
  %639 = vmatprep.subr.mxu0 0.0
  %640 = vmatpush1.msra.mxu0 0.0
  %641 = vmatprep.subr.mxu0 0.0
  %642 = vmatpush1.msra.mxu0 0.0
  %643 = vmatprep.subr.mxu0 0.0
  %644 = vmatpush1.msra.mxu0 0.0
  %645 = vmatprep.subr.mxu0 0.0
  %646 = vmatpush1.msra.mxu0 0.0
  %647 = vmatprep.subr.mxu0 0.0
  %648 = vmatpush1.msra.mxu0 0.0
  %649 = vmatprep.subr.mxu0 0.0
  %650 = vmatpush1.msra.mxu0 0.0
  %651 = vmatprep.subr.mxu0 0.0
  %652 = vmatpush1.msra.mxu0 0.0
  %653 = vmatprep.subr.mxu0 0.0
  %654 = vmatpush1.msra.mxu0 0.0
  %655 = vmatprep.subr.mxu0 0.0
  %656 = vmatpush1.msra.mxu0 0.0
  %657 = vmatprep.subr.mxu0 0.0
  %658 = vmatpush1.msra.mxu0 0.0
  %659 = vmatprep.subr.mxu0 0.0
  %660 = vmatpush1.msra.mxu0 0.0
  %661 = vmatprep.subr.mxu0 0.0
  %662 = vmatpush1.msra.mxu0 0.0
  %663 = vmatprep.subr.mxu0 0.0
  %664 = vmatpush1.msra.mxu0 0.0
  %665 = vmatprep.subr.mxu0 0.0
  %666 = vmatpush1.msra.mxu0 0.0
  %667 = vmatprep.subr.mxu0 0.0
  %668 = vmatpush1.msra.mxu0 0.0
  %669 = vmatprep.subr.mxu0 0.0
  %670 = vmatpush1.msra.mxu0 0.0
  %671 = vmatprep.subr.mxu0 0.0
  %672 = vmatpush1.msra.mxu0 0.0
  %673 = vmatprep.subr.mxu0 0.0
  %674 = vmatpush1.msra.mxu0 0.0
  %675 = vmatprep.subr.mxu0 0.0
  %676 = vmatpush1.msra.mxu0 0.0
  %677 = vmatprep.subr.mxu0 0.0
  %678 = vmatpush1.msra.mxu0 0.0
  %679 = vmatprep.subr.mxu0 0.0
  %680 = vmatpush1.msra.mxu0 0.0
  %681 = vmatprep.subr.mxu0 0.0
  %682 = vmatpush1.msra.mxu0 0.0
  %683 = vmatprep.subr.mxu0 0.0
  %684 = vmatpush1.msra.mxu0 0.0
  %685 = vmatprep.subr.mxu0 0.0
  %686 = vmatpush1.msra.mxu0 0.0
  %687 = vmatprep.subr.mxu0 0.0
  %688 = vmatpush1.msra.mxu0 0.0
  %689 = vmatprep.mubr.f32.mxu0 0.0
  %690 = vmatmul.mubr.f32.gmra.mrb[0].mxu0 %v578
  %v691 = vpop.f32.mrb[0].mxu0
  %v692 = vadd.f32 0.0, %v691
  %v693 = vpop.f32.mrb[0].mxu0
  %694 = vmatprep.mubr.f32.mxu0 0.0
  %695 = vmatmul.mubr.f32.gmra.mrb[0].mxu0 %v581
  %v696 = vpop.f32.mrb[0].mxu0
  %v697 = vadd.f32 0.0, %v696
  %v698 = vpop.f32.mrb[0].mxu0
  %699 = vmatprep.mubr.f32.mxu0 0.0
  %700 = vmatmul.mubr.f32.gmra.mrb[0].mxu0 %v584
  %v701 = vpop.f32.mrb[0].mxu0
  %v702 = vadd.f32 0.0, %v701
  %v703 = vpop.f32.mrb[0].mxu0
  %704 = vmatprep.mubr.f32.mxu0 0.0
  %705 = vmatmul.mubr.f32.gmra.mrb[0].mxu0 %v587
  %v706 = vpop.f32.mrb[0].mxu0
  %v707 = vadd.f32 0.0, %v706
  %v708 = vpop.f32.mrb[0].mxu0
  %709 = vmatprep.mubr.f32.mxu0 0.0
  %710 = vmatmul.mubr.f32.gmra.mrb[0].mxu0 %v590
  %v711 = vpop.f32.mrb[0].mxu0
  %v712 = vadd.f32 0.0, %v711
  %v713 = vpop.f32.mrb[0].mxu0
  %714 = vmatprep.mubr.f32.mxu0 0.0
  %715 = vmatmul.mubr.f32.gmra.mrb[0].mxu0 %v593
  %v716 = vpop.f32.mrb[0].mxu0
  %v717 = vadd.f32 0.0, %v716
  %v718 = vpop.f32.mrb[0].mxu0
  %719 = vmatprep.mubr.f32.mxu0 0.0
  %720 = vmatmul.mubr.f32.gmra.mrb[0].mxu0 %v596
  %v721 = vpop.f32.mrb[0].mxu0
  %v722 = vadd.f32 0.0, %v721
  %v723 = vpop.f32.mrb[0].mxu0
  %724 = vmatprep.mubr.f32.mxu0 0.0
  %725 = vmatmul.mubr.f32.gmra.mrb[0].mxu0 %v599
  %v726 = vpop.f32.mrb[0].mxu0
  %v727 = vadd.f32 0.0, %v726
  %v728 = vpop.f32.mrb[0].mxu0
  %729 = vmatprep.mubr.f32.mxu0 0.0
  %730 = vmatmul.mubr.f32.gmra.mrb[0].mxu0 %v602
  %v731 = vpop.f32.mrb[0].mxu0
  %v732 = vadd.f32 0.0, %v731
  %v733 = vpop.f32.mrb[0].mxu0
  %734 = vmatprep.mubr.f32.mxu0 0.0
  %735 = vmatmul.mubr.f32.gmra.mrb[0].mxu0 %v605
  %v736 = vpop.f32.mrb[0].mxu0
  %v737 = vadd.f32 0.0, %v736
  %v738 = vpop.f32.mrb[0].mxu0
  %739 = vmatprep.mubr.f32.mxu0 0.0
  %740 = vmatmul.mubr.f32.gmra.mrb[0].mxu0 %v608
  %v741 = vpop.f32.mrb[0].mxu0
  %v742 = vadd.f32 0.0, %v741
  %v743 = vpop.f32.mrb[0].mxu0
  %744 = vmatprep.mubr.f32.mxu0 0.0
  %745 = vmatmul.mubr.f32.gmra.mrb[0].mxu0 %v611
  %v746 = vpop.f32.mrb[0].mxu0
  %v747 = vadd.f32 0.0, %v746
  %v748 = vpop.f32.mrb[0].mxu0
  %749 = vmatprep.mubr.f32.mxu0 0.0
  %750 = vmatmul.mubr.f32.gmra.mrb[0].mxu0 %v614
  %v751 = vpop.f32.mrb[0].mxu0
  %v752 = vadd.f32 0.0, %v751
  %v753 = vpop.f32.mrb[0].mxu0
  %754 = vmatprep.mubr.f32.mxu0 0.0
  %755 = vmatmul.mubr.f32.gmra.mrb[0].mxu0 %v617
  %v756 = vpop.f32.mrb[0].mxu0
  %v757 = vadd.f32 0.0, %v756
  %v758 = vpop.f32.mrb[0].mxu0
  %759 = vmatprep.mubr.f32.mxu0 0.0
  %760 = vmatmul.mubr.f32.gmra.mrb[0].mxu0 %v620
  %v761 = vpop.f32.mrb[0].mxu0
  %v762 = vadd.f32 0.0, %v761
  %v763 = vpop.f32.mrb[0].mxu0
  %764 = vmatprep.mubr.f32.mxu0 0.0
  %765 = vmatmul.mubr.f32.gmra.mrb[0].mxu0 %v623
  %v766 = vpop.f32.mrb[0].mxu0
  %v767 = vadd.f32 0.0, %v766
  %v768 = vpop.f32.mrb[0].mxu0
  %769 = vdwg.mxu0
  %v770 = vadd.f32 %v29, %v692
  %v771 = vadd.f32 %v30, %v697
  %v772 = vadd.f32 %v31, %v702
  %v773 = vadd.f32 %v32, %v707
  %v774 = vadd.f32 %v33, %v712
  %v775 = vadd.f32 %v34, %v717
  %v776 = vadd.f32 %v35, %v722
  %v777 = vadd.f32 %v36, %v727
  %v778 = vadd.f32 %v37, %v732
  %v779 = vadd.f32 %v38, %v737
  %v780 = vadd.f32 %v39, %v742
  %v781 = vadd.f32 %v40, %v747
  %v782 = vadd.f32 %v41, %v752
  %v783 = vadd.f32 %v42, %v757
  %v784 = vadd.f32 %v43, %v762
  %v785 = vadd.f32 %v44, %v767
  %v786 = vld [vmem:[%s7] sm:$0x1]
  %v788 = vlaneseq
  %v789 = vshrl.u32 %v788, 7
  %v790 = vsub.s32 0, %v789
  %v791 = vrot.slane %v786, %v790
  %v793 = vadd.f32 %v770, %v791
  %v794 = vadd.f32 %v771, %v791
  %v795 = vadd.f32 %v772, %v791
  %v796 = vadd.f32 %v773, %v791
  %v797 = vadd.f32 %v774, %v791
  %v798 = vadd.f32 %v775, %v791
  %v799 = vadd.f32 %v776, %v791
  %v800 = vadd.f32 %v777, %v791
  %v801 = vadd.f32 %v778, %v791
  %v802 = vadd.f32 %v779, %v791
  %v803 = vadd.f32 %v780, %v791
  %v804 = vadd.f32 %v781, %v791
  %v805 = vadd.f32 %v782, %v791
  %v806 = vadd.f32 %v783, %v791
  %v807 = vadd.f32 %v784, %v791
  %v808 = vadd.f32 %v785, %v791
  %809 = vst.msk [vmem:[%s8] sm:$0xff] %vm92, %v793
  %810 = vst.msk [vmem:[%s8 + $0x8] sm:$0xff] %vm92, %v794
  %811 = vst.msk [vmem:[%s8 + $0x10] sm:$0xff] %vm92, %v795
  %812 = vst.msk [vmem:[%s8 + $0x18] sm:$0xff] %vm92, %v796
  %813 = vst.msk [vmem:[%s8 + $0x20] sm:$0xff] %vm92, %v797
  %814 = vst.msk [vmem:[%s8 + $0x28] sm:$0xff] %vm92, %v798
  %815 = vst.msk [vmem:[%s8 + $0x30] sm:$0xff] %vm92, %v799
  %816 = vst.msk [vmem:[%s8 + $0x38] sm:$0xff] %vm92, %v800
  %817 = vst.msk [vmem:[%s8 + $0x40] sm:$0xff] %vm92, %v801
  %818 = vst.msk [vmem:[%s8 + $0x48] sm:$0xff] %vm92, %v802
  %819 = vst.msk [vmem:[%s8 + $0x50] sm:$0xff] %vm92, %v803
  %820 = vst.msk [vmem:[%s8 + $0x58] sm:$0xff] %vm92, %v804
  %821 = vst.msk [vmem:[%s8 + $0x60] sm:$0xff] %vm92, %v805
  %822 = vst.msk [vmem:[%s8 + $0x68] sm:$0xff] %vm92, %v806
  %823 = vst.msk [vmem:[%s8 + $0x70] sm:$0xff] %vm92, %v807
  %824 = vst.msk [vmem:[%s8 + $0x78] sm:$0xff] %vm92, %v808
  // Predicated region
  $region34: #{node_edge_net_forward.7} parent=0 // pred_check
    _
  $region35: #{node_edge_net_forward.7} parent=0 // pred_check_branch
    %826 = sbr.rel (0) target = $region37
  $region36: #{node_edge_net_forward.7} parent=0 // pred_region
    _
  $region37: #{node_edge_net_forward.7} parent=0 // pred_fallthru
    _
  // Predicated region
  $region38: #{node_edge_net_forward.7} parent=0 // pred_check
    _
  $region39: #{node_edge_net_forward.7} parent=0 // pred_check_branch
    %828 = sbr.rel (0) target = $region41
  $region40: #{node_edge_net_forward.7} parent=0 // pred_region
    _
  $region41: #{node_edge_net_forward.7} parent=0 // pred_fallthru
    _

// kernel: node_edge_net_forward.6
$region0: #{node_edge_net_forward.6}
  #allocation0 [shape = 'u32[]', space=smem, size = 0x4, offset = 0x4, fixed_abs, tag = 'smem constant byte address 0x4 - core index']
  #allocation1 [shape = 'u32[144,128]{1,0:T(1,128)}', space=vmem, size = 0x12000, scoped, tag = 'internal scratch']
  %s0 = inlined_call_operand.vmem [shape: f32[32,32], index: 0, kind: input, shape index: {}]
  %s1 = inlined_call_operand.vmem [shape: s32[32,2], index: 1, kind: input, shape index: {}]
  %s2 = inlined_call_operand.vmem [shape: f32[128,40], index: 2, kind: input, shape index: {}]
  %s3 = inlined_call_operand.vmem [shape: f32[1,16], index: 3, kind: input, shape index: {}]
  %s4 = inlined_call_operand.vmem [shape: f32[32,32], index: 4, kind: input, shape index: {}]
  %s5 = inlined_call_operand.vmem [shape: f32[16,32], index: 5, kind: input, shape index: {}]
  %s6 = inlined_call_operand.vmem [shape: f32[1,32], index: 6, kind: input, shape index: {}]
  %s7 = inlined_call_operand.vmem [shape: f32[32,160], index: 7, kind: input, shape index: {}]
  %s8 = inlined_call_operand.vmem [shape: f32[1,32], index: 8, kind: input, shape index: {}]
  %s9 = inlined_call_operand.vmem [shape: f32[32,32], index: 9, kind: input, shape index: {}]
  %s10 = inlined_call_operand.vmem [shape: f32[1,32], index: 10, kind: input, shape index: {}]
  %s11 = inlined_call_operand.vmem [shape: f32[32,96], index: 11, kind: input, shape index: {}]
  %s12 = inlined_call_operand.vmem [shape: f32[1,32], index: 12, kind: input, shape index: {}]
  %s13 = inlined_call_operand.vmem [shape: f32[32,32], index: 13, kind: input, shape index: {}]
  %s14 = inlined_call_operand.vmem [shape: f32[1,32], index: 14, kind: input, shape index: {}]
  %s15 = inlined_call_operand.vmem [shape: f32[32,32], index: 15, kind: input, shape index: {}]
  %s16 = inlined_call_operand.vmem [shape: f32[1,32], index: 16, kind: input, shape index: {}]
  %s17 = inlined_call_operand.vmem [shape: f32[32,64], index: 17, kind: input, shape index: {}]
  %s18 = inlined_call_operand.vmem [shape: f32[64,64], index: 18, kind: input, shape index: {}]
  %s19 = inlined_call_operand.vmem [shape: f32[1,64], index: 19, kind: input, shape index: {}]
  %s20 = inlined_call_operand.vmem [shape: f32[64,32], index: 20, kind: input, shape index: {}]
  %s21 = inlined_call_operand.vmem [shape: f32[1,32], index: 21, kind: input, shape index: {}]
  %s22 = inlined_call_operand.vmem [shape: f32[64,64], index: 22, kind: input, shape index: {}]
  %s23 = inlined_call_operand.vmem [shape: f32[1,64], index: 23, kind: input, shape index: {}]
  %s24 = inlined_call_operand.vmem [shape: f32[64,32], index: 24, kind: input, shape index: {}]
  %s25 = inlined_call_operand.vmem [shape: f32[1,32], index: 25, kind: input, shape index: {}]
  %s26 = inlined_call_operand.vmem [shape: f32[32,32], index: 26, kind: output, shape index: {0}]
  %s27 = inlined_call_operand.vmem [shape: f32[128,128], index: 27, kind: output, shape index: {1}]
  %s28 = inlined_call_operand.vmem [shape: f32[64,128], index: 28, kind: output, shape index: {2}]
  %29 = xla_tuple %s26, %s27, %s28
  %s30 = sld [smem:[#allocation0]]
  $region157: #{node_edge_net_forward.6} parent=0
    _
  %s32 = ssub.s32 1, %s30
  %s33 = scalar_select 0, %s32, %s30
  loop: start=0, step=1, limit=6
  $region2: #{node_edge_net_forward.6} parent=0 // loop_pre_header
    _
  $region3: #{node_edge_net_forward.6} parent=0 // loop_header
    %s35 = sphi 0, %s39
    %p36 = scmp.ge.s32.totalorder %s35, 6
    %s42 = sphi 0, %s54
    %s43 = sphi 0, %s50
    %s44 = sphi 0, %s42
    %s45 = sphi 0, %s43
    %s46 = sphi 0, %s44
    %s47 = sphi 0, %s45
    %s61 = sphi 0, %s63
    %s64 = sphi 0, %s61
    %s65 = sphi 0, %s64
    %s81 = sphi 0, %s65
    %s91 = sphi 0, %s93
    %s94 = sphi 0, %s91
    %s95 = sphi 0, %s94
    %s111 = sphi 0, %s95
    %s115 = sphi 0, %s115
    %s117 = sphi 0, %s115
    %s118 = sphi 0, %s117
    %s132 = sphi 0, %s118
    %s136 = sphi 0, %s136
    %s138 = sphi 0, %s136
    %s139 = sphi 0, %s138
    %s153 = sphi 0, %s139
    %s157 = sphi 0, %s157
    %s159 = sphi 0, %s157
    %s160 = sphi 0, %s159
    %s174 = sphi 0, %s160
    %s178 = sphi 0, %s178
    %s180 = sphi 0, %s178
    %s181 = sphi 0, %s180
    %s195 = sphi 0, %s181
    %s199 = sphi 0, %s199
    %s201 = sphi 0, %s199
    %s202 = sphi 0, %s201
    %s216 = sphi 0, %s202
    %s220 = sphi 0, %s220
    %s222 = sphi 0, %s220
    %s223 = sphi 0, %s222
    %s237 = sphi 0, %s223
    %s241 = sphi 0, %s241
    %s243 = sphi 0, %s241
    %s244 = sphi 0, %s243
    %s258 = sphi 0, %s244
    %s262 = sphi 0, %s262
    %s264 = sphi 0, %s262
    %s265 = sphi 0, %s264
    %s279 = sphi 0, %s265
    %s283 = sphi 0, %s283
    %s285 = sphi 0, %s283
    %s286 = sphi 0, %s285
    %s300 = sphi 0, %s286
    %s304 = sphi 0, %s304
    %s306 = sphi 0, %s304
    %s307 = sphi 0, %s306
    %s321 = sphi 0, %s307
    %s325 = sphi 0, %s325
    %s327 = sphi 0, %s325
    %s328 = sphi 0, %s327
    %s342 = sphi 0, %s328
    %s346 = sphi 0, %s346
    %s348 = sphi 0, %s346
    %s349 = sphi 0, %s348
    %s363 = sphi 0, %s349
    %s367 = sphi 0, %s367
    %s369 = sphi 0, %s367
    %s370 = sphi 0, %s369
    %s384 = sphi 0, %s370
    %s388 = sphi 0, %s388
    %s390 = sphi 0, %s388
    %s391 = sphi 0, %s390
    %s405 = sphi 0, %s391
    %s409 = sphi 0, %s409
    %s411 = sphi 0, %s409
    %s412 = sphi 0, %s411
    %s426 = sphi 0, %s412
    %s430 = sphi 0, %s430
    %s432 = sphi 0, %s430
    %s433 = sphi 0, %s432
    %s447 = sphi 0, %s433
    %s451 = sphi 0, %s451
    %s453 = sphi 0, %s451
    %s454 = sphi 0, %s453
    %s468 = sphi 0, %s454
    %s472 = sphi 0, %s472
    %s474 = sphi 0, %s472
    %s475 = sphi 0, %s474
    %s489 = sphi 0, %s475
    %s493 = sphi 0, %s493
    %s495 = sphi 0, %s493
    %s496 = sphi 0, %s495
    %s510 = sphi 0, %s496
    %s514 = sphi 0, %s514
    %s516 = sphi 0, %s514
    %s517 = sphi 0, %s516
    %s531 = sphi 0, %s517
    %s535 = sphi 0, %s535
    %s537 = sphi 0, %s535
    %s538 = sphi 0, %s537
    %s552 = sphi 0, %s538
    %s556 = sphi 0, %s556
    %s558 = sphi 0, %s556
    %s559 = sphi 0, %s558
    %s573 = sphi 0, %s559
    %s577 = sphi 0, %s577
    %s579 = sphi 0, %s577
    %s580 = sphi 0, %s579
    %s594 = sphi 0, %s580
    %s598 = sphi 0, %s598
    %s600 = sphi 0, %s598
    %s601 = sphi 0, %s600
    %s615 = sphi 0, %s601
    %s625 = sphi 0, %s627
    %s628 = sphi 0, %s625
    %s629 = sphi 0, %s628
    %s645 = sphi 0, %s629
    %s651 = sphi 0, %s653
    %s654 = sphi 0, %s651
    %s655 = sphi 0, %s654
    %s671 = sphi 0, %s655
    %s677 = sphi 0, %s679
    %s680 = sphi 0, %s677
    %s681 = sphi 0, %s680
    %s697 = sphi 0, %s681
  $region4: #{node_edge_net_forward.6} parent=0 // loop_header_branch
    %38 = sbr.rel (%p36) target = $region8
  $region5: #{node_edge_net_forward.6} parent=0 // loop_body
    %s40 = ssub.s32 %s35, 1
    %s41 = ssub.s32 %s35, 2
    %s48 = sadd.s32 1, %s43
    %p49 = scmp.ge.s32.totalorder %s48, 2
    %s50 = scalar_select %p49, 0, %s48
    %s51 = sadd.s32 1, %s42
    %s52 = scalar_select %p49, %s51, %s42
    %p53 = scmp.ge.s32.totalorder %s52, 2
    %s54 = scalar_select %p53, 0, %s52
    %s55 = smul.u32 %s42, 2
    %s56 = sadd.s32 %s55, %s43
    %s57 = smul.u32 %s54, 2
    %s58 = sadd.s32 %s57, %s50
    %s59 = ssub.s32 %s56, %s58
    %p60 = scmp.eq.s32.totalorder %s59, 0
    %s62 = sadd.s32 %s61, 1
    %s63 = scalar_select %p60, %s61, %s62
    %p66 = pneg %p60
    %p67 = scmp.eq.s32.totalorder %s35, 3
    %p68 = por %p66, %p67
    %p69 = scmp.ne.s32.totalorder %s61, %s64
    %p70 = scmp.eq.s32.totalorder %s35, 0
    %p71 = por %p69, %p70
    %p72 = scmp.ne.s32.totalorder %s61, %s64
    %p73 = scmp.eq.s32.totalorder %s40, 3
    %p74 = por %p72, %p73
    %p75 = scmp.ne.s32.totalorder %s64, %s65
    %p76 = scmp.eq.s32.totalorder %s40, 0
    %p77 = por %p75, %p76
    %p78 = scmp.ne.s32.totalorder %s64, %s65
    %p79 = scmp.eq.s32.totalorder %s41, 3
    %p80 = por %p78, %p79
    %p82 = scmp.ne.s32.totalorder %s65, %s81
    %p83 = scmp.eq.s32.totalorder %s41, 0
    %p84 = por %p82, %p83
    %s85 = smul.u32 %s42, 2
    %s86 = sadd.s32 %s85, %s43
    %s87 = smul.u32 %s54, 2
    %s88 = sadd.s32 %s87, %s50
    %s89 = ssub.s32 %s86, %s88
    %p90 = scmp.eq.s32.totalorder %s89, 0
    %s92 = sadd.s32 %s91, 1
    %s93 = scalar_select %p90, %s91, %s92
    %p96 = pneg %p90
    %p97 = scmp.eq.s32.totalorder %s35, 3
    %p98 = por %p96, %p97
    %p99 = scmp.ne.s32.totalorder %s91, %s94
    %p100 = scmp.eq.s32.totalorder %s35, 0
    %p101 = por %p99, %p100
    %p102 = scmp.ne.s32.totalorder %s91, %s94
    %p103 = scmp.eq.s32.totalorder %s40, 3
    %p104 = por %p102, %p103
    %p105 = scmp.ne.s32.totalorder %s94, %s95
    %p106 = scmp.eq.s32.totalorder %s40, 0
    %p107 = por %p105, %p106
    %p108 = scmp.ne.s32.totalorder %s94, %s95
    %p109 = scmp.eq.s32.totalorder %s41, 3
    %p110 = por %p108, %p109
    %p112 = scmp.ne.s32.totalorder %s95, %s111
    %p113 = scmp.eq.s32.totalorder %s41, 0
    %p114 = por %p112, %p113
    %s116 = sadd.s32 %s115, 1
    %p119 = scmp.eq.s32.totalorder %s35, 3
    %p120 = scmp.ne.s32.totalorder %s115, %s117
    %p121 = scmp.eq.s32.totalorder %s35, 0
    %p122 = por %p120, %p121
    %p123 = scmp.ne.s32.totalorder %s115, %s117
    %p124 = scmp.eq.s32.totalorder %s40, 3
    %p125 = por %p123, %p124
    %p126 = scmp.ne.s32.totalorder %s117, %s118
    %p127 = scmp.eq.s32.totalorder %s40, 0
    %p128 = por %p126, %p127
    %p129 = scmp.ne.s32.totalorder %s117, %s118
    %p130 = scmp.eq.s32.totalorder %s41, 3
    %p131 = por %p129, %p130
    %p133 = scmp.ne.s32.totalorder %s118, %s132
    %p134 = scmp.eq.s32.totalorder %s41, 0
    %p135 = por %p133, %p134
    %s137 = sadd.s32 %s136, 1
    %p140 = scmp.eq.s32.totalorder %s35, 3
    %p141 = scmp.ne.s32.totalorder %s136, %s138
    %p142 = scmp.eq.s32.totalorder %s35, 0
    %p143 = por %p141, %p142
    %p144 = scmp.ne.s32.totalorder %s136, %s138
    %p145 = scmp.eq.s32.totalorder %s40, 3
    %p146 = por %p144, %p145
    %p147 = scmp.ne.s32.totalorder %s138, %s139
    %p148 = scmp.eq.s32.totalorder %s40, 0
    %p149 = por %p147, %p148
    %p150 = scmp.ne.s32.totalorder %s138, %s139
    %p151 = scmp.eq.s32.totalorder %s41, 3
    %p152 = por %p150, %p151
    %p154 = scmp.ne.s32.totalorder %s139, %s153
    %p155 = scmp.eq.s32.totalorder %s41, 0
    %p156 = por %p154, %p155
    %s158 = sadd.s32 %s157, 1
    %p161 = scmp.eq.s32.totalorder %s35, 3
    %p162 = scmp.ne.s32.totalorder %s157, %s159
    %p163 = scmp.eq.s32.totalorder %s35, 0
    %p164 = por %p162, %p163
    %p165 = scmp.ne.s32.totalorder %s157, %s159
    %p166 = scmp.eq.s32.totalorder %s40, 3
    %p167 = por %p165, %p166
    %p168 = scmp.ne.s32.totalorder %s159, %s160
    %p169 = scmp.eq.s32.totalorder %s40, 0
    %p170 = por %p168, %p169
    %p171 = scmp.ne.s32.totalorder %s159, %s160
    %p172 = scmp.eq.s32.totalorder %s41, 3
    %p173 = por %p171, %p172
    %p175 = scmp.ne.s32.totalorder %s160, %s174
    %p176 = scmp.eq.s32.totalorder %s41, 0
    %p177 = por %p175, %p176
    %s179 = sadd.s32 %s178, 1
    %p182 = scmp.eq.s32.totalorder %s35, 3
    %p183 = scmp.ne.s32.totalorder %s178, %s180
    %p184 = scmp.eq.s32.totalorder %s35, 0
    %p185 = por %p183, %p184
    %p186 = scmp.ne.s32.totalorder %s178, %s180
    %p187 = scmp.eq.s32.totalorder %s40, 3
    %p188 = por %p186, %p187
    %p189 = scmp.ne.s32.totalorder %s180, %s181
    %p190 = scmp.eq.s32.totalorder %s40, 0
    %p191 = por %p189, %p190
    %p192 = scmp.ne.s32.totalorder %s180, %s181
    %p193 = scmp.eq.s32.totalorder %s41, 3
    %p194 = por %p192, %p193
    %p196 = scmp.ne.s32.totalorder %s181, %s195
    %p197 = scmp.eq.s32.totalorder %s41, 0
    %p198 = por %p196, %p197
    %s200 = sadd.s32 %s199, 1
    %p203 = scmp.eq.s32.totalorder %s35, 3
    %p204 = scmp.ne.s32.totalorder %s199, %s201
    %p205 = scmp.eq.s32.totalorder %s35, 0
    %p206 = por %p204, %p205
    %p207 = scmp.ne.s32.totalorder %s199, %s201
    %p208 = scmp.eq.s32.totalorder %s40, 3
    %p209 = por %p207, %p208
    %p210 = scmp.ne.s32.totalorder %s201, %s202
    %p211 = scmp.eq.s32.totalorder %s40, 0
    %p212 = por %p210, %p211
    %p213 = scmp.ne.s32.totalorder %s201, %s202
    %p214 = scmp.eq.s32.totalorder %s41, 3
    %p215 = por %p213, %p214
    %p217 = scmp.ne.s32.totalorder %s202, %s216
    %p218 = scmp.eq.s32.totalorder %s41, 0
    %p219 = por %p217, %p218
    %s221 = sadd.s32 %s220, 1
    %p224 = scmp.eq.s32.totalorder %s35, 3
    %p225 = scmp.ne.s32.totalorder %s220, %s222
    %p226 = scmp.eq.s32.totalorder %s35, 0
    %p227 = por %p225, %p226
    %p228 = scmp.ne.s32.totalorder %s220, %s222
    %p229 = scmp.eq.s32.totalorder %s40, 3
    %p230 = por %p228, %p229
    %p231 = scmp.ne.s32.totalorder %s222, %s223
    %p232 = scmp.eq.s32.totalorder %s40, 0
    %p233 = por %p231, %p232
    %p234 = scmp.ne.s32.totalorder %s222, %s223
    %p235 = scmp.eq.s32.totalorder %s41, 3
    %p236 = por %p234, %p235
    %p238 = scmp.ne.s32.totalorder %s223, %s237
    %p239 = scmp.eq.s32.totalorder %s41, 0
    %p240 = por %p238, %p239
    %s242 = sadd.s32 %s241, 1
    %p245 = scmp.eq.s32.totalorder %s35, 3
    %p246 = scmp.ne.s32.totalorder %s241, %s243
    %p247 = scmp.eq.s32.totalorder %s35, 0
    %p248 = por %p246, %p247
    %p249 = scmp.ne.s32.totalorder %s241, %s243
    %p250 = scmp.eq.s32.totalorder %s40, 3
    %p251 = por %p249, %p250
    %p252 = scmp.ne.s32.totalorder %s243, %s244
    %p253 = scmp.eq.s32.totalorder %s40, 0
    %p254 = por %p252, %p253
    %p255 = scmp.ne.s32.totalorder %s243, %s244
    %p256 = scmp.eq.s32.totalorder %s41, 3
    %p257 = por %p255, %p256
    %p259 = scmp.ne.s32.totalorder %s244, %s258
    %p260 = scmp.eq.s32.totalorder %s41, 0
    %p261 = por %p259, %p260
    %s263 = sadd.s32 %s262, 1
    %p266 = scmp.eq.s32.totalorder %s35, 3
    %p267 = scmp.ne.s32.totalorder %s262, %s264
    %p268 = scmp.eq.s32.totalorder %s35, 0
    %p269 = por %p267, %p268
    %p270 = scmp.ne.s32.totalorder %s262, %s264
    %p271 = scmp.eq.s32.totalorder %s40, 3
    %p272 = por %p270, %p271
    %p273 = scmp.ne.s32.totalorder %s264, %s265
    %p274 = scmp.eq.s32.totalorder %s40, 0
    %p275 = por %p273, %p274
    %p276 = scmp.ne.s32.totalorder %s264, %s265
    %p277 = scmp.eq.s32.totalorder %s41, 3
    %p278 = por %p276, %p277
    %p280 = scmp.ne.s32.totalorder %s265, %s279
    %p281 = scmp.eq.s32.totalorder %s41, 0
    %p282 = por %p280, %p281
    %s284 = sadd.s32 %s283, 1
    %p287 = scmp.eq.s32.totalorder %s35, 3
    %p288 = scmp.ne.s32.totalorder %s283, %s285
    %p289 = scmp.eq.s32.totalorder %s35, 0
    %p290 = por %p288, %p289
    %p291 = scmp.ne.s32.totalorder %s283, %s285
    %p292 = scmp.eq.s32.totalorder %s40, 3
    %p293 = por %p291, %p292
    %p294 = scmp.ne.s32.totalorder %s285, %s286
    %p295 = scmp.eq.s32.totalorder %s40, 0
    %p296 = por %p294, %p295
    %p297 = scmp.ne.s32.totalorder %s285, %s286
    %p298 = scmp.eq.s32.totalorder %s41, 3
    %p299 = por %p297, %p298
    %p301 = scmp.ne.s32.totalorder %s286, %s300
    %p302 = scmp.eq.s32.totalorder %s41, 0
    %p303 = por %p301, %p302
    %s305 = sadd.s32 %s304, 1
    %p308 = scmp.eq.s32.totalorder %s35, 3
    %p309 = scmp.ne.s32.totalorder %s304, %s306
    %p310 = scmp.eq.s32.totalorder %s35, 0
    %p311 = por %p309, %p310
    %p312 = scmp.ne.s32.totalorder %s304, %s306
    %p313 = scmp.eq.s32.totalorder %s40, 3
    %p314 = por %p312, %p313
    %p315 = scmp.ne.s32.totalorder %s306, %s307
    %p316 = scmp.eq.s32.totalorder %s40, 0
    %p317 = por %p315, %p316
    %p318 = scmp.ne.s32.totalorder %s306, %s307
    %p319 = scmp.eq.s32.totalorder %s41, 3
    %p320 = por %p318, %p319
    %p322 = scmp.ne.s32.totalorder %s307, %s321
    %p323 = scmp.eq.s32.totalorder %s41, 0
    %p324 = por %p322, %p323
    %s326 = sadd.s32 %s325, 1
    %p329 = scmp.eq.s32.totalorder %s35, 3
    %p330 = scmp.ne.s32.totalorder %s325, %s327
    %p331 = scmp.eq.s32.totalorder %s35, 0
    %p332 = por %p330, %p331
    %p333 = scmp.ne.s32.totalorder %s325, %s327
    %p334 = scmp.eq.s32.totalorder %s40, 3
    %p335 = por %p333, %p334
    %p336 = scmp.ne.s32.totalorder %s327, %s328
    %p337 = scmp.eq.s32.totalorder %s40, 0
    %p338 = por %p336, %p337
    %p339 = scmp.ne.s32.totalorder %s327, %s328
    %p340 = scmp.eq.s32.totalorder %s41, 3
    %p341 = por %p339, %p340
    %p343 = scmp.ne.s32.totalorder %s328, %s342
    %p344 = scmp.eq.s32.totalorder %s41, 0
    %p345 = por %p343, %p344
    %s347 = sadd.s32 %s346, 1
    %p350 = scmp.eq.s32.totalorder %s35, 3
    %p351 = scmp.ne.s32.totalorder %s346, %s348
    %p352 = scmp.eq.s32.totalorder %s35, 0
    %p353 = por %p351, %p352
    %p354 = scmp.ne.s32.totalorder %s346, %s348
    %p355 = scmp.eq.s32.totalorder %s40, 3
    %p356 = por %p354, %p355
    %p357 = scmp.ne.s32.totalorder %s348, %s349
    %p358 = scmp.eq.s32.totalorder %s40, 0
    %p359 = por %p357, %p358
    %p360 = scmp.ne.s32.totalorder %s348, %s349
    %p361 = scmp.eq.s32.totalorder %s41, 3
    %p362 = por %p360, %p361
    %p364 = scmp.ne.s32.totalorder %s349, %s363
    %p365 = scmp.eq.s32.totalorder %s41, 0
    %p366 = por %p364, %p365
    %s368 = sadd.s32 %s367, 1
    %p371 = scmp.eq.s32.totalorder %s35, 3
    %p372 = scmp.ne.s32.totalorder %s367, %s369
    %p373 = scmp.eq.s32.totalorder %s35, 0
    %p374 = por %p372, %p373
    %p375 = scmp.ne.s32.totalorder %s367, %s369
    %p376 = scmp.eq.s32.totalorder %s40, 3
    %p377 = por %p375, %p376
    %p378 = scmp.ne.s32.totalorder %s369, %s370
    %p379 = scmp.eq.s32.totalorder %s40, 0
    %p380 = por %p378, %p379
    %p381 = scmp.ne.s32.totalorder %s369, %s370
    %p382 = scmp.eq.s32.totalorder %s41, 3
    %p383 = por %p381, %p382
    %p385 = scmp.ne.s32.totalorder %s370, %s384
    %p386 = scmp.eq.s32.totalorder %s41, 0
    %p387 = por %p385, %p386
    %s389 = sadd.s32 %s388, 1
    %p392 = scmp.eq.s32.totalorder %s35, 3
    %p393 = scmp.ne.s32.totalorder %s388, %s390
    %p394 = scmp.eq.s32.totalorder %s35, 0
    %p395 = por %p393, %p394
    %p396 = scmp.ne.s32.totalorder %s388, %s390
    %p397 = scmp.eq.s32.totalorder %s40, 3
    %p398 = por %p396, %p397
    %p399 = scmp.ne.s32.totalorder %s390, %s391
    %p400 = scmp.eq.s32.totalorder %s40, 0
    %p401 = por %p399, %p400
    %p402 = scmp.ne.s32.totalorder %s390, %s391
    %p403 = scmp.eq.s32.totalorder %s41, 3
    %p404 = por %p402, %p403
    %p406 = scmp.ne.s32.totalorder %s391, %s405
    %p407 = scmp.eq.s32.totalorder %s41, 0
    %p408 = por %p406, %p407
    %s410 = sadd.s32 %s409, 1
    %p413 = scmp.eq.s32.totalorder %s35, 3
    %p414 = scmp.ne.s32.totalorder %s409, %s411
    %p415 = scmp.eq.s32.totalorder %s35, 0
    %p416 = por %p414, %p415
    %p417 = scmp.ne.s32.totalorder %s409, %s411
    %p418 = scmp.eq.s32.totalorder %s40, 3
    %p419 = por %p417, %p418
    %p420 = scmp.ne.s32.totalorder %s411, %s412
    %p421 = scmp.eq.s32.totalorder %s40, 0
    %p422 = por %p420, %p421
    %p423 = scmp.ne.s32.totalorder %s411, %s412
    %p424 = scmp.eq.s32.totalorder %s41, 3
    %p425 = por %p423, %p424
    %p427 = scmp.ne.s32.totalorder %s412, %s426
    %p428 = scmp.eq.s32.totalorder %s41, 0
    %p429 = por %p427, %p428
    %s431 = sadd.s32 %s430, 1
    %p434 = scmp.eq.s32.totalorder %s35, 3
    %p435 = scmp.ne.s32.totalorder %s430, %s432
    %p436 = scmp.eq.s32.totalorder %s35, 0
    %p437 = por %p435, %p436
    %p438 = scmp.ne.s32.totalorder %s430, %s432
    %p439 = scmp.eq.s32.totalorder %s40, 3
    %p440 = por %p438, %p439
    %p441 = scmp.ne.s32.totalorder %s432, %s433
    %p442 = scmp.eq.s32.totalorder %s40, 0
    %p443 = por %p441, %p442
    %p444 = scmp.ne.s32.totalorder %s432, %s433
    %p445 = scmp.eq.s32.totalorder %s41, 3
    %p446 = por %p444, %p445
    %p448 = scmp.ne.s32.totalorder %s433, %s447
    %p449 = scmp.eq.s32.totalorder %s41, 0
    %p450 = por %p448, %p449
    %s452 = sadd.s32 %s451, 1
    %p455 = scmp.eq.s32.totalorder %s35, 3
    %p456 = scmp.ne.s32.totalorder %s451, %s453
    %p457 = scmp.eq.s32.totalorder %s35, 0
    %p458 = por %p456, %p457
    %p459 = scmp.ne.s32.totalorder %s451, %s453
    %p460 = scmp.eq.s32.totalorder %s40, 3
    %p461 = por %p459, %p460
    %p462 = scmp.ne.s32.totalorder %s453, %s454
    %p463 = scmp.eq.s32.totalorder %s40, 0
    %p464 = por %p462, %p463
    %p465 = scmp.ne.s32.totalorder %s453, %s454
    %p466 = scmp.eq.s32.totalorder %s41, 3
    %p467 = por %p465, %p466
    %p469 = scmp.ne.s32.totalorder %s454, %s468
    %p470 = scmp.eq.s32.totalorder %s41, 0
    %p471 = por %p469, %p470
    %s473 = sadd.s32 %s472, 1
    %p476 = scmp.eq.s32.totalorder %s35, 3
    %p477 = scmp.ne.s32.totalorder %s472, %s474
    %p478 = scmp.eq.s32.totalorder %s35, 0
    %p479 = por %p477, %p478
    %p480 = scmp.ne.s32.totalorder %s472, %s474
    %p481 = scmp.eq.s32.totalorder %s40, 3
    %p482 = por %p480, %p481
    %p483 = scmp.ne.s32.totalorder %s474, %s475
    %p484 = scmp.eq.s32.totalorder %s40, 0
    %p485 = por %p483, %p484
    %p486 = scmp.ne.s32.totalorder %s474, %s475
    %p487 = scmp.eq.s32.totalorder %s41, 3
    %p488 = por %p486, %p487
    %p490 = scmp.ne.s32.totalorder %s475, %s489
    %p491 = scmp.eq.s32.totalorder %s41, 0
    %p492 = por %p490, %p491
    %s494 = sadd.s32 %s493, 1
    %p497 = scmp.eq.s32.totalorder %s35, 3
    %p498 = scmp.ne.s32.totalorder %s493, %s495
    %p499 = scmp.eq.s32.totalorder %s35, 0
    %p500 = por %p498, %p499
    %p501 = scmp.ne.s32.totalorder %s493, %s495
    %p502 = scmp.eq.s32.totalorder %s40, 3
    %p503 = por %p501, %p502
    %p504 = scmp.ne.s32.totalorder %s495, %s496
    %p505 = scmp.eq.s32.totalorder %s40, 0
    %p506 = por %p504, %p505
    %p507 = scmp.ne.s32.totalorder %s495, %s496
    %p508 = scmp.eq.s32.totalorder %s41, 3
    %p509 = por %p507, %p508
    %p511 = scmp.ne.s32.totalorder %s496, %s510
    %p512 = scmp.eq.s32.totalorder %s41, 0
    %p513 = por %p511, %p512
    %s515 = sadd.s32 %s514, 1
    %p518 = scmp.eq.s32.totalorder %s35, 3
    %p519 = scmp.ne.s32.totalorder %s514, %s516
    %p520 = scmp.eq.s32.totalorder %s35, 0
    %p521 = por %p519, %p520
    %p522 = scmp.ne.s32.totalorder %s514, %s516
    %p523 = scmp.eq.s32.totalorder %s40, 3
    %p524 = por %p522, %p523
    %p525 = scmp.ne.s32.totalorder %s516, %s517
    %p526 = scmp.eq.s32.totalorder %s40, 0
    %p527 = por %p525, %p526
    %p528 = scmp.ne.s32.totalorder %s516, %s517
    %p529 = scmp.eq.s32.totalorder %s41, 3
    %p530 = por %p528, %p529
    %p532 = scmp.ne.s32.totalorder %s517, %s531
    %p533 = scmp.eq.s32.totalorder %s41, 0
    %p534 = por %p532, %p533
    %s536 = sadd.s32 %s535, 1
    %p539 = scmp.eq.s32.totalorder %s35, 3
    %p540 = scmp.ne.s32.totalorder %s535, %s537
    %p541 = scmp.eq.s32.totalorder %s35, 0
    %p542 = por %p540, %p541
    %p543 = scmp.ne.s32.totalorder %s535, %s537
    %p544 = scmp.eq.s32.totalorder %s40, 3
    %p545 = por %p543, %p544
    %p546 = scmp.ne.s32.totalorder %s537, %s538
    %p547 = scmp.eq.s32.totalorder %s40, 0
    %p548 = por %p546, %p547
    %p549 = scmp.ne.s32.totalorder %s537, %s538
    %p550 = scmp.eq.s32.totalorder %s41, 3
    %p551 = por %p549, %p550
    %p553 = scmp.ne.s32.totalorder %s538, %s552
    %p554 = scmp.eq.s32.totalorder %s41, 0
    %p555 = por %p553, %p554
    %s557 = sadd.s32 %s556, 1
    %p560 = scmp.eq.s32.totalorder %s35, 3
    %p561 = scmp.ne.s32.totalorder %s556, %s558
    %p562 = scmp.eq.s32.totalorder %s35, 0
    %p563 = por %p561, %p562
    %p564 = scmp.ne.s32.totalorder %s556, %s558
    %p565 = scmp.eq.s32.totalorder %s40, 3
    %p566 = por %p564, %p565
    %p567 = scmp.ne.s32.totalorder %s558, %s559
    %p568 = scmp.eq.s32.totalorder %s40, 0
    %p569 = por %p567, %p568
    %p570 = scmp.ne.s32.totalorder %s558, %s559
    %p571 = scmp.eq.s32.totalorder %s41, 3
    %p572 = por %p570, %p571
    %p574 = scmp.ne.s32.totalorder %s559, %s573
    %p575 = scmp.eq.s32.totalorder %s41, 0
    %p576 = por %p574, %p575
    %s578 = sadd.s32 %s577, 1
    %p581 = scmp.eq.s32.totalorder %s35, 3
    %p582 = scmp.ne.s32.totalorder %s577, %s579
    %p583 = scmp.eq.s32.totalorder %s35, 0
    %p584 = por %p582, %p583
    %p585 = scmp.ne.s32.totalorder %s577, %s579
    %p586 = scmp.eq.s32.totalorder %s40, 3
    %p587 = por %p585, %p586
    %p588 = scmp.ne.s32.totalorder %s579, %s580
    %p589 = scmp.eq.s32.totalorder %s40, 0
    %p590 = por %p588, %p589
    %p591 = scmp.ne.s32.totalorder %s579, %s580
    %p592 = scmp.eq.s32.totalorder %s41, 3
    %p593 = por %p591, %p592
    %p595 = scmp.ne.s32.totalorder %s580, %s594
    %p596 = scmp.eq.s32.totalorder %s41, 0
    %p597 = por %p595, %p596
    %s599 = sadd.s32 %s598, 1
    %p602 = scmp.eq.s32.totalorder %s35, 3
    %p603 = scmp.ne.s32.totalorder %s598, %s600
    %p604 = scmp.eq.s32.totalorder %s35, 0
    %p605 = por %p603, %p604
    %p606 = scmp.ne.s32.totalorder %s598, %s600
    %p607 = scmp.eq.s32.totalorder %s40, 3
    %p608 = por %p606, %p607
    %p609 = scmp.ne.s32.totalorder %s600, %s601
    %p610 = scmp.eq.s32.totalorder %s40, 0
    %p611 = por %p609, %p610
    %p612 = scmp.ne.s32.totalorder %s600, %s601
    %p613 = scmp.eq.s32.totalorder %s41, 3
    %p614 = por %p612, %p613
    %p616 = scmp.ne.s32.totalorder %s601, %s615
    %p617 = scmp.eq.s32.totalorder %s41, 0
    %p618 = por %p616, %p617
    %s619 = smul.u32 %s42, 2
    %s620 = sadd.s32 %s619, %s43
    %s621 = smul.u32 %s54, 2
    %s622 = sadd.s32 %s621, %s50
    %s623 = ssub.s32 %s620, %s622
    %p624 = scmp.eq.s32.totalorder %s623, 0
    %s626 = sadd.s32 %s625, 1
    %s627 = scalar_select %p624, %s625, %s626
    %p630 = pneg %p624
    %p631 = scmp.eq.s32.totalorder %s35, 3
    %p632 = por %p630, %p631
    %p633 = scmp.ne.s32.totalorder %s625, %s628
    %p634 = scmp.eq.s32.totalorder %s35, 0
    %p635 = por %p633, %p634
    %p636 = scmp.ne.s32.totalorder %s625, %s628
    %p637 = scmp.eq.s32.totalorder %s40, 3
    %p638 = por %p636, %p637
    %p639 = scmp.ne.s32.totalorder %s628, %s629
    %p640 = scmp.eq.s32.totalorder %s40, 0
    %p641 = por %p639, %p640
    %p642 = scmp.ne.s32.totalorder %s628, %s629
    %p643 = scmp.eq.s32.totalorder %s41, 3
    %p644 = por %p642, %p643
    %p646 = scmp.ne.s32.totalorder %s629, %s645
    %p647 = scmp.eq.s32.totalorder %s41, 0
    %p648 = por %p646, %p647
    %s649 = ssub.s32 %s42, %s54
    %p650 = scmp.eq.s32.totalorder %s649, 0
    %s652 = sadd.s32 %s651, 1
    %s653 = scalar_select %p650, %s651, %s652
    %p656 = pneg %p650
    %p657 = scmp.eq.s32.totalorder %s35, 3
    %p658 = por %p656, %p657
    %p659 = scmp.ne.s32.totalorder %s651, %s654
    %p660 = scmp.eq.s32.totalorder %s35, 0
    %p661 = por %p659, %p660
    %p662 = scmp.ne.s32.totalorder %s651, %s654
    %p663 = scmp.eq.s32.totalorder %s40, 3
    %p664 = por %p662, %p663
    %p665 = scmp.ne.s32.totalorder %s654, %s655
    %p666 = scmp.eq.s32.totalorder %s40, 0
    %p667 = por %p665, %p666
    %p668 = scmp.ne.s32.totalorder %s654, %s655
    %p669 = scmp.eq.s32.totalorder %s41, 3
    %p670 = por %p668, %p669
    %p672 = scmp.ne.s32.totalorder %s655, %s671
    %p673 = scmp.eq.s32.totalorder %s41, 0
    %p674 = por %p672, %p673
    %s675 = ssub.s32 %s42, %s54
    %p676 = scmp.eq.s32.totalorder %s675, 0
    %s678 = sadd.s32 %s677, 1
    %s679 = scalar_select %p676, %s677, %s678
    %p682 = pneg %p676
    %p683 = scmp.eq.s32.totalorder %s35, 3
    %p684 = por %p682, %p683
    %p685 = scmp.ne.s32.totalorder %s677, %s680
    %p686 = scmp.eq.s32.totalorder %s35, 0
    %p687 = por %p685, %p686
    %p688 = scmp.ne.s32.totalorder %s677, %s680
    %p689 = scmp.eq.s32.totalorder %s40, 3
    %p690 = por %p688, %p689
    %p691 = scmp.ne.s32.totalorder %s680, %s681
    %p692 = scmp.eq.s32.totalorder %s40, 0
    %p693 = por %p691, %p692
    %p694 = scmp.ne.s32.totalorder %s680, %s681
    %p695 = scmp.eq.s32.totalorder %s41, 3
    %p696 = por %p694, %p695
    %p698 = scmp.ne.s32.totalorder %s681, %s697
    %p699 = scmp.eq.s32.totalorder %s41, 0
    %p700 = por %p698, %p699
    %p701 = scmp.le.s32.totalorder 1, %s35
    %p702 = scmp.lt.s32.totalorder %s35, 5
    %p703 = pnand %p701, %p702
    %p704 = pneg %p703
    // Predicated region
    $region9: #{node_edge_net_forward.6} parent=5 // pred_check
      _
    $region10: #{node_edge_net_forward.6} parent=5 // pred_check_branch
      %706 = sbr.rel (%p703) target = $region12
    $region11: #{node_edge_net_forward.6} parent=5 // pred_region
      %s707 = ssub.s32 %s35, 1
      // Predicated region
      $region13: #{node_edge_net_forward.6} parent=11 // pred_check
        %p708 = pneg %p128
      $region14: #{node_edge_net_forward.6} parent=11 // pred_check_branch
        %710 = sbr.rel (%p708) target = $region16
      $region15: #{node_edge_net_forward.6} parent=11 // pred_region
        _
      $region16: #{node_edge_net_forward.6} parent=11 // pred_fallthru
        _
      // Predicated region
      $region17: #{node_edge_net_forward.6} parent=11 // pred_check
        %p711 = pneg %p149
      $region18: #{node_edge_net_forward.6} parent=11 // pred_check_branch
        %713 = sbr.rel (%p711) target = $region20
      $region19: #{node_edge_net_forward.6} parent=11 // pred_region
        _
      $region20: #{node_edge_net_forward.6} parent=11 // pred_fallthru
        _
      // Predicated region
      $region21: #{node_edge_net_forward.6} parent=11 // pred_check
        %p714 = pneg %p170
      $region22: #{node_edge_net_forward.6} parent=11 // pred_check_branch
        %716 = sbr.rel (%p714) target = $region24
      $region23: #{node_edge_net_forward.6} parent=11 // pred_region
        _
      $region24: #{node_edge_net_forward.6} parent=11 // pred_fallthru
        _
      // Predicated region
      $region25: #{node_edge_net_forward.6} parent=11 // pred_check
        %p717 = pneg %p191
      $region26: #{node_edge_net_forward.6} parent=11 // pred_check_branch
        %719 = sbr.rel (%p717) target = $region28
      $region27: #{node_edge_net_forward.6} parent=11 // pred_region
        _
      $region28: #{node_edge_net_forward.6} parent=11 // pred_fallthru
        _
      // Predicated region
      $region29: #{node_edge_net_forward.6} parent=11 // pred_check
        %p720 = pneg %p212
      $region30: #{node_edge_net_forward.6} parent=11 // pred_check_branch
        %722 = sbr.rel (%p720) target = $region32
      $region31: #{node_edge_net_forward.6} parent=11 // pred_region
        _
      $region32: #{node_edge_net_forward.6} parent=11 // pred_fallthru
        _
      // Predicated region
      $region33: #{node_edge_net_forward.6} parent=11 // pred_check
        %p723 = pneg %p233
      $region34: #{node_edge_net_forward.6} parent=11 // pred_check_branch
        %725 = sbr.rel (%p723) target = $region36
      $region35: #{node_edge_net_forward.6} parent=11 // pred_region
        _
      $region36: #{node_edge_net_forward.6} parent=11 // pred_fallthru
        _
      // Predicated region
      $region37: #{node_edge_net_forward.6} parent=11 // pred_check
        %p726 = pneg %p254
      $region38: #{node_edge_net_forward.6} parent=11 // pred_check_branch
        %728 = sbr.rel (%p726) target = $region40
      $region39: #{node_edge_net_forward.6} parent=11 // pred_region
        _
      $region40: #{node_edge_net_forward.6} parent=11 // pred_fallthru
        _
      // Predicated region
      $region41: #{node_edge_net_forward.6} parent=11 // pred_check
        %p729 = pneg %p275
      $region42: #{node_edge_net_forward.6} parent=11 // pred_check_branch
        %731 = sbr.rel (%p729) target = $region44
      $region43: #{node_edge_net_forward.6} parent=11 // pred_region
        _
      $region44: #{node_edge_net_forward.6} parent=11 // pred_fallthru
        _
      // Predicated region
      $region45: #{node_edge_net_forward.6} parent=11 // pred_check
        %p732 = pneg %p296
      $region46: #{node_edge_net_forward.6} parent=11 // pred_check_branch
        %734 = sbr.rel (%p732) target = $region48
      $region47: #{node_edge_net_forward.6} parent=11 // pred_region
        _
      $region48: #{node_edge_net_forward.6} parent=11 // pred_fallthru
        _
      // Predicated region
      $region49: #{node_edge_net_forward.6} parent=11 // pred_check
        %p735 = pneg %p317
      $region50: #{node_edge_net_forward.6} parent=11 // pred_check_branch
        %737 = sbr.rel (%p735) target = $region52
      $region51: #{node_edge_net_forward.6} parent=11 // pred_region
        _
      $region52: #{node_edge_net_forward.6} parent=11 // pred_fallthru
        _
      // Predicated region
      $region53: #{node_edge_net_forward.6} parent=11 // pred_check
        %p738 = pneg %p338
      $region54: #{node_edge_net_forward.6} parent=11 // pred_check_branch
        %740 = sbr.rel (%p738) target = $region56
      $region55: #{node_edge_net_forward.6} parent=11 // pred_region
        _
      $region56: #{node_edge_net_forward.6} parent=11 // pred_fallthru
        _
      // Predicated region
      $region57: #{node_edge_net_forward.6} parent=11 // pred_check
        %p741 = pneg %p359
      $region58: #{node_edge_net_forward.6} parent=11 // pred_check_branch
        %743 = sbr.rel (%p741) target = $region60
      $region59: #{node_edge_net_forward.6} parent=11 // pred_region
        _
      $region60: #{node_edge_net_forward.6} parent=11 // pred_fallthru
        _
      // Predicated region
      $region61: #{node_edge_net_forward.6} parent=11 // pred_check
        %p744 = pneg %p380
      $region62: #{node_edge_net_forward.6} parent=11 // pred_check_branch
        %746 = sbr.rel (%p744) target = $region64
      $region63: #{node_edge_net_forward.6} parent=11 // pred_region
        _
      $region64: #{node_edge_net_forward.6} parent=11 // pred_fallthru
        _
      // Predicated region
      $region65: #{node_edge_net_forward.6} parent=11 // pred_check
        %p747 = pneg %p401
      $region66: #{node_edge_net_forward.6} parent=11 // pred_check_branch
        %749 = sbr.rel (%p747) target = $region68
      $region67: #{node_edge_net_forward.6} parent=11 // pred_region
        _
      $region68: #{node_edge_net_forward.6} parent=11 // pred_fallthru
        _
      // Predicated region
      $region69: #{node_edge_net_forward.6} parent=11 // pred_check
        %p750 = pneg %p422
      $region70: #{node_edge_net_forward.6} parent=11 // pred_check_branch
        %752 = sbr.rel (%p750) target = $region72
      $region71: #{node_edge_net_forward.6} parent=11 // pred_region
        _
      $region72: #{node_edge_net_forward.6} parent=11 // pred_fallthru
        _
      // Predicated region
      $region73: #{node_edge_net_forward.6} parent=11 // pred_check
        %p753 = pneg %p443
      $region74: #{node_edge_net_forward.6} parent=11 // pred_check_branch
        %755 = sbr.rel (%p753) target = $region76
      $region75: #{node_edge_net_forward.6} parent=11 // pred_region
        _
      $region76: #{node_edge_net_forward.6} parent=11 // pred_fallthru
        _
      // Predicated region
      $region77: #{node_edge_net_forward.6} parent=11 // pred_check
        %p756 = pneg %p464
      $region78: #{node_edge_net_forward.6} parent=11 // pred_check_branch
        %758 = sbr.rel (%p756) target = $region80
      $region79: #{node_edge_net_forward.6} parent=11 // pred_region
        _
      $region80: #{node_edge_net_forward.6} parent=11 // pred_fallthru
        _
      // Predicated region
      $region81: #{node_edge_net_forward.6} parent=11 // pred_check
        %p759 = pneg %p485
      $region82: #{node_edge_net_forward.6} parent=11 // pred_check_branch
        %761 = sbr.rel (%p759) target = $region84
      $region83: #{node_edge_net_forward.6} parent=11 // pred_region
        _
      $region84: #{node_edge_net_forward.6} parent=11 // pred_fallthru
        _
      // Predicated region
      $region85: #{node_edge_net_forward.6} parent=11 // pred_check
        %p762 = pneg %p506
      $region86: #{node_edge_net_forward.6} parent=11 // pred_check_branch
        %764 = sbr.rel (%p762) target = $region88
      $region87: #{node_edge_net_forward.6} parent=11 // pred_region
        _
      $region88: #{node_edge_net_forward.6} parent=11 // pred_fallthru
        _
      // Predicated region
      $region89: #{node_edge_net_forward.6} parent=11 // pred_check
        %p765 = pneg %p527
      $region90: #{node_edge_net_forward.6} parent=11 // pred_check_branch
        %767 = sbr.rel (%p765) target = $region92
      $region91: #{node_edge_net_forward.6} parent=11 // pred_region
        _
      $region92: #{node_edge_net_forward.6} parent=11 // pred_fallthru
        _
      // Predicated region
      $region93: #{node_edge_net_forward.6} parent=11 // pred_check
        %p768 = pneg %p548
      $region94: #{node_edge_net_forward.6} parent=11 // pred_check_branch
        %770 = sbr.rel (%p768) target = $region96
      $region95: #{node_edge_net_forward.6} parent=11 // pred_region
        _
      $region96: #{node_edge_net_forward.6} parent=11 // pred_fallthru
        _
      // Predicated region
      $region97: #{node_edge_net_forward.6} parent=11 // pred_check
        %p771 = pneg %p569
      $region98: #{node_edge_net_forward.6} parent=11 // pred_check_branch
        %773 = sbr.rel (%p771) target = $region100
      $region99: #{node_edge_net_forward.6} parent=11 // pred_region
        _
      $region100: #{node_edge_net_forward.6} parent=11 // pred_fallthru
        _
      // Predicated region
      $region101: #{node_edge_net_forward.6} parent=11 // pred_check
        %p774 = pneg %p590
      $region102: #{node_edge_net_forward.6} parent=11 // pred_check_branch
        %776 = sbr.rel (%p774) target = $region104
      $region103: #{node_edge_net_forward.6} parent=11 // pred_region
        _
      $region104: #{node_edge_net_forward.6} parent=11 // pred_fallthru
        _
      // Predicated region
      $region105: #{node_edge_net_forward.6} parent=11 // pred_check
        %p777 = pneg %p611
      $region106: #{node_edge_net_forward.6} parent=11 // pred_check_branch
        %779 = sbr.rel (%p777) target = $region108
      $region107: #{node_edge_net_forward.6} parent=11 // pred_region
        _
      $region108: #{node_edge_net_forward.6} parent=11 // pred_fallthru
        _
    $region12: #{node_edge_net_forward.6} parent=5 // pred_fallthru
      _
    %p780 = scmp.lt.s32.totalorder %s35, 4
    // Predicated region
    $region109: #{node_edge_net_forward.6} parent=5 // pred_check
      %p781 = pneg %p780
    $region110: #{node_edge_net_forward.6} parent=5 // pred_check_branch
      %783 = sbr.rel (%p781) target = $region112
    $region111: #{node_edge_net_forward.6} parent=5 // pred_region
      // Predicated region
      $region113: #{node_edge_net_forward.6} parent=111 // pred_check
        %p784 = pneg %p71
      $region114: #{node_edge_net_forward.6} parent=111 // pred_check_branch
        %786 = sbr.rel (%p784) target = $region116
      $region115: #{node_edge_net_forward.6} parent=111 // pred_region
        %s787 = smul.u32 %s42, 2
        %s788 = sadd.s32 %s787, %s43
        %p789 = scmp.lt.s32.totalorder %s788, 3
        %s790 = scalar_select %p789, %s788, 3
        %s791 = smul.addr %s790, 8
        %s792 = scalar_lea.vmem %s0, %s791
        %s793 = smul.u32 %s42, 2
        %s794 = sadd.s32 %s793, %s43
      $region116: #{node_edge_net_forward.6} parent=111 // pred_fallthru
        _
      // Predicated region
      $region117: #{node_edge_net_forward.6} parent=111 // pred_check
        %p795 = pneg %p101
      $region118: #{node_edge_net_forward.6} parent=111 // pred_check_branch
        %797 = sbr.rel (%p795) target = $region120
      $region119: #{node_edge_net_forward.6} parent=111 // pred_region
        %s798 = smul.u32 %s42, 2
        %s799 = sadd.s32 %s798, %s43
        %p800 = scmp.lt.s32.totalorder %s799, 3
        %s801 = scalar_select %p800, %s799, 3
        %s802 = smul.addr %s801, 8
        %s803 = scalar_lea.vmem %s1, %s802
        %s804 = smul.u32 %s42, 2
        %s805 = sadd.s32 %s804, %s43
      $region120: #{node_edge_net_forward.6} parent=111 // pred_fallthru
        _
    $region112: #{node_edge_net_forward.6} parent=5 // pred_fallthru
      _
    %p806 = scmp.le.s32.totalorder 1, %s35
    %p807 = scmp.lt.s32.totalorder %s35, 5
    %p808 = pnand %p806, %p807
    %p809 = pneg %p808
    // Predicated region
    $region121: #{node_edge_net_forward.6} parent=5 // pred_check
      _
    $region122: #{node_edge_net_forward.6} parent=5 // pred_check_branch
      %811 = sbr.rel (%p808) target = $region124
    $region123: #{node_edge_net_forward.6} parent=5 // pred_region
      %s812 = ssub.s32 %s35, 1
      %s813 = smul.u32 %s44, 2
      %s814 = sadd.s32 %s813, %s45
      %p815 = scmp.lt.s32.totalorder %s814, 3
      %s816 = scalar_select %p815, %s814, 3
      %s817 = smul.addr %s816, 8
      %s818 = scalar_lea.vmem %s0, %s817
      %p819 = pneg %p77
      %p820 = pneg %p74
      %s821 = smul.u32 %s44, 2
      %s822 = sadd.s32 %s821, %s45
      %p823 = scmp.lt.s32.totalorder %s822, 3
      %s824 = scalar_select %p823, %s822, 3
      %s825 = smul.addr %s824, 8
      %s826 = scalar_lea.vmem %s1, %s825
      %p827 = pneg %p107
      %p828 = pneg %p104
      %p829 = pneg %p128
      %p830 = pneg %p125
      %p831 = pneg %p149
      %p832 = pneg %p146
      %p833 = pneg %p170
      %p834 = pneg %p167
      %p835 = pneg %p191
      %p836 = pneg %p188
      %p837 = pneg %p212
      %p838 = pneg %p209
      %p839 = pneg %p233
      %p840 = pneg %p230
      %p841 = pneg %p254
      %p842 = pneg %p251
      %p843 = pneg %p275
      %p844 = pneg %p272
      %p845 = pneg %p296
      %p846 = pneg %p293
      %p847 = pneg %p317
      %p848 = pneg %p314
      %p849 = pneg %p338
      %p850 = pneg %p335
      %p851 = pneg %p359
      %p852 = pneg %p356
      %p853 = pneg %p380
      %p854 = pneg %p377
      %p855 = pneg %p401
      %p856 = pneg %p398
      %p857 = pneg %p422
      %p858 = pneg %p419
      %p859 = pneg %p443
      %p860 = pneg %p440
      %p861 = pneg %p464
      %p862 = pneg %p461
      %p863 = pneg %p485
      %p864 = pneg %p482
      %p865 = pneg %p506
      %p866 = pneg %p503
      %p867 = pneg %p527
      %p868 = pneg %p524
      %p869 = pneg %p548
      %p870 = pneg %p545
      %p871 = pneg %p569
      %p872 = pneg %p566
      %p873 = pneg %p590
      %p874 = pneg %p587
      %p875 = pneg %p611
      %p876 = pneg %p608
      %p877 = pneg %p641
      %p878 = pneg %p638
      %s879 = smul.u32 %s44, 2
      %s880 = sadd.s32 %s879, %s45
      %p881 = scmp.lt.s32.totalorder %s880, 3
      %s882 = scalar_select %p881, %s880, 3
      %s883 = smul.addr %s882, 8
      %s884 = scalar_lea.vmem %s26, %s883
      %p885 = pneg %p667
      %p886 = pneg %p664
      %s887 = smul.u32 8, %s44
      %p888 = scmp.lt.s32.totalorder %s887, 15
      %s889 = scalar_select %p888, %s887, 15
      %s890 = smul.addr %s889, 8
      %s891 = scalar_lea.vmem %s27, %s890
      %p892 = pneg %p693
      %p893 = pneg %p690
      %s894 = smul.u32 4, %s44
      %p895 = scmp.lt.s32.totalorder %s894, 7
      %s896 = scalar_select %p895, %s894, 7
      %s897 = smul.addr %s896, 8
      %s898 = scalar_lea.vmem %s28, %s897
      %s899 = smul.u32 %s44, 2
      %s900 = sadd.s32 %s899, %s45
      %p901 = scmp.lt.s32.totalorder %s900, 3
      %s902 = scalar_select %p901, %s900, 3
      %s903 = smul.addr %s902, 8
      %s904 = scalar_lea.vmem %s0, %s903
      %s905 = smul.u32 %s44, 2
      %s906 = sadd.s32 %s905, %s45
      %s907 = smul.u32 %s44, 2
      %s908 = sadd.s32 %s907, %s45
      %p909 = scmp.lt.s32.totalorder %s908, 3
      %s910 = scalar_select %p909, %s908, 3
      %s911 = smul.addr %s910, 8
      %s912 = scalar_lea.vmem %s1, %s911
      %s913 = smul.u32 %s44, 2
      %s914 = sadd.s32 %s913, %s45
      %s915 = smul.u32 %s44, 2
      %s916 = sadd.s32 %s915, %s45
      %p917 = scmp.lt.s32.totalorder %s916, 3
      %s918 = scalar_select %p917, %s916, 3
      %s919 = smul.addr %s918, 8
      %s920 = scalar_lea.vmem %s26, %s919
      %s921 = smul.u32 %s44, 2
      %s922 = sadd.s32 %s921, %s45
      %s923 = smul.u32 8, %s44
      %p924 = scmp.lt.s32.totalorder %s923, 15
      %s925 = scalar_select %p924, %s923, 15
      %s926 = smul.addr %s925, 8
      %s927 = scalar_lea.vmem %s27, %s926
      %s928 = smul.u32 8, %s44
      %s929 = smul.u32 4, %s44
      %p930 = scmp.lt.s32.totalorder %s929, 7
      %s931 = scalar_select %p930, %s929, 7
      %s932 = smul.addr %s931, 8
      %s933 = scalar_lea.vmem %s28, %s932
      %s934 = smul.u32 4, %s44
      %p935 = scmp.eq.s32.totalorder %s45, 0
      // Predicated region
      $region125: #{node_edge_net_forward.6} parent=123 // pred_check
        %p936 = pneg %p935
      $region126: #{node_edge_net_forward.6} parent=123 // pred_check_branch
        %938 = sbr.rel (%p936) target = $region128
      $region127: #{node_edge_net_forward.6} parent=123 // pred_region
        %939 = vst [vmem:[%s927] sm:$0xff] 0.0
        %940 = vst [vmem:[%s927 + $0x8] sm:$0xff] 0.0
        %941 = vst [vmem:[%s927 + $0x10] sm:$0xff] 0.0
        %942 = vst [vmem:[%s927 + $0x18] sm:$0xff] 0.0
        %943 = vst [vmem:[%s927 + $0x20] sm:$0xff] 0.0
        %944 = vst [vmem:[%s927 + $0x28] sm:$0xff] 0.0
        %945 = vst [vmem:[%s927 + $0x30] sm:$0xff] 0.0
        %946 = vst [vmem:[%s927 + $0x38] sm:$0xff] 0.0
        %947 = vst [vmem:[%s933] sm:$0xff] 0.0
        %948 = vst [vmem:[%s933 + $0x8] sm:$0xff] 0.0
        %949 = vst [vmem:[%s933 + $0x10] sm:$0xff] 0.0
        %950 = vst [vmem:[%s933 + $0x18] sm:$0xff] 0.0
      $region128: #{node_edge_net_forward.6} parent=123 // pred_fallthru
        _
      %v951 = vlaneseq
      %v952 = vand.u32 %v951, 127
      %v953 = vld [vmem:[%s912] sm:$0xff]
      %954 = vset.pattern.permute.xlu0 0
      %955 = vperm.xlu0 %954, %v953
      %v956 = vpop.permute.xlu0 %955
      %vm957 = vcmp.eq.s32.totalorder %v952, %v956
      %v958 = vsel %vm957, 1, 0
      %v959 = vcvt.s32.f32 %v958
      %960 = vset.pattern.permute.xlu0 1
      %961 = vperm.xlu0 %960, %v953
      %v962 = vpop.permute.xlu0 %961
      %vm963 = vcmp.eq.s32.totalorder %v952, %v962
      %v964 = vsel %vm963, 1, 0
      %v965 = vcvt.s32.f32 %v964
      %v966 = vld [vmem:[%s2] sm:$0xff]
      %v967 = vld [vmem:[%s2 + $0x8] sm:$0xff]
      %v968 = vld [vmem:[%s2 + $0x10] sm:$0xff]
      %v969 = vld [vmem:[%s2 + $0x18] sm:$0xff]
      %v970 = vld [vmem:[%s2 + $0x20] sm:$0xff]
      %v971 = vld [vmem:[%s2 + $0x28] sm:$0xff]
      %v972 = vld [vmem:[%s2 + $0x30] sm:$0xff]
      %v973 = vld [vmem:[%s2 + $0x38] sm:$0xff]
      %v974 = vld [vmem:[%s2 + $0x40] sm:$0xff]
      %v975 = vld [vmem:[%s2 + $0x48] sm:$0xff]
      %v976 = vld [vmem:[%s2 + $0x50] sm:$0xff]
      %v977 = vld [vmem:[%s2 + $0x58] sm:$0xff]
      %v978 = vld [vmem:[%s2 + $0x60] sm:$0xff]
      %v979 = vld [vmem:[%s2 + $0x68] sm:$0xff]
      %v980 = vld [vmem:[%s2 + $0x70] sm:$0xff]
      %v981 = vld [vmem:[%s2 + $0x78] sm:$0xff]
      %982 = vmatprep.subr.mxu0 0.0
      %983 = vmatpush1.msra.mxu0 %v966
      %984 = vmatprep.subr.mxu0 0.0
      %985 = vmatpush1.msra.mxu0 %v967
      %986 = vmatprep.subr.mxu0 0.0
      %987 = vmatpush1.msra.mxu0 %v968
      %988 = vmatprep.subr.mxu0 0.0
      %989 = vmatpush1.msra.mxu0 %v969
      %990 = vmatprep.subr.mxu0 0.0
      %991 = vmatpush1.msra.mxu0 %v970
      %992 = vmatprep.subr.mxu0 0.0
      %993 = vmatpush1.msra.mxu0 %v971
      %994 = vmatprep.subr.mxu0 0.0
      %995 = vmatpush1.msra.mxu0 %v972
      %996 = vmatprep.subr.mxu0 0.0
      %997 = vmatpush1.msra.mxu0 %v973
      %998 = vmatprep.subr.mxu0 0.0
      %999 = vmatpush1.msra.mxu0 %v974
      %1000 = vmatprep.subr.mxu0 0.0
      %1001 = vmatpush1.msra.mxu0 %v975
      %1002 = vmatprep.subr.mxu0 0.0
      %1003 = vmatpush1.msra.mxu0 %v976
      %1004 = vmatprep.subr.mxu0 0.0
      %1005 = vmatpush1.msra.mxu0 %v977
      %1006 = vmatprep.subr.mxu0 0.0
      %1007 = vmatpush1.msra.mxu0 %v978
      %1008 = vmatprep.subr.mxu0 0.0
      %1009 = vmatpush1.msra.mxu0 %v979
      %1010 = vmatprep.subr.mxu0 0.0
      %1011 = vmatpush1.msra.mxu0 %v980
      %1012 = vmatprep.subr.mxu0 0.0
      %1013 = vmatpush1.msra.mxu0 %v981
      %1014 = vmatprep.subr.mxu0 0.0
      %1015 = vmatpush1.msra.mxu0 0.0
      %1016 = vmatprep.subr.mxu0 0.0
      %1017 = vmatpush1.msra.mxu0 0.0
      %1018 = vmatprep.subr.mxu0 0.0
      %1019 = vmatpush1.msra.mxu0 0.0
      %1020 = vmatprep.subr.mxu0 0.0
      %1021 = vmatpush1.msra.mxu0 0.0
      %1022 = vmatprep.subr.mxu0 0.0
      %1023 = vmatpush1.msra.mxu0 0.0
      %1024 = vmatprep.subr.mxu0 0.0
      %1025 = vmatpush1.msra.mxu0 0.0
      %1026 = vmatprep.subr.mxu0 0.0
      %1027 = vmatpush1.msra.mxu0 0.0
      %1028 = vmatprep.subr.mxu0 0.0
      %1029 = vmatpush1.msra.mxu0 0.0
      %1030 = vmatprep.subr.mxu0 0.0
      %1031 = vmatpush1.msra.mxu0 0.0
      %1032 = vmatprep.subr.mxu0 0.0
      %1033 = vmatpush1.msra.mxu0 0.0
      %1034 = vmatprep.subr.mxu0 0.0
      %1035 = vmatpush1.msra.mxu0 0.0
      %1036 = vmatprep.subr.mxu0 0.0
      %1037 = vmatpush1.msra.mxu0 0.0
      %1038 = vmatprep.subr.mxu0 0.0
      %1039 = vmatpush1.msra.mxu0 0.0
      %1040 = vmatprep.subr.mxu0 0.0
      %1041 = vmatpush1.msra.mxu0 0.0
      %1042 = vmatprep.subr.mxu0 0.0
      %1043 = vmatpush1.msra.mxu0 0.0
      %1044 = vmatprep.subr.mxu0 0.0
      %1045 = vmatpush1.msra.mxu0 0.0
      %1046 = vmatprep.mubr.f32.mxu0 0.0
      %1047 = vmatmul.mubr.f32.gmra.mrb[0].mxu0 %v959
      %v1048 = vpop.f32.mrb[0].mxu0
      %v1049 = vadd.f32 0.0, %v1048
      %v1050 = vpop.f32.mrb[0].mxu0
      %1051 = vdwg.mxu0
      %1052 = vmatprep.subr.mxu0 0.0
      %1053 = vmatpush1.msra.mxu0 %v966
      %1054 = vmatprep.subr.mxu0 0.0
      %1055 = vmatpush1.msra.mxu0 %v967
      %1056 = vmatprep.subr.mxu0 0.0
      %1057 = vmatpush1.msra.mxu0 %v968
      %1058 = vmatprep.subr.mxu0 0.0
      %1059 = vmatpush1.msra.mxu0 %v969
      %1060 = vmatprep.subr.mxu0 0.0
      %1061 = vmatpush1.msra.mxu0 %v970
      %1062 = vmatprep.subr.mxu0 0.0
      %1063 = vmatpush1.msra.mxu0 %v971
      %1064 = vmatprep.subr.mxu0 0.0
      %1065 = vmatpush1.msra.mxu0 %v972
      %1066 = vmatprep.subr.mxu0 0.0
      %1067 = vmatpush1.msra.mxu0 %v973
      %1068 = vmatprep.subr.mxu0 0.0
      %1069 = vmatpush1.msra.mxu0 %v974
      %1070 = vmatprep.subr.mxu0 0.0
      %1071 = vmatpush1.msra.mxu0 %v975
      %1072 = vmatprep.subr.mxu0 0.0
      %1073 = vmatpush1.msra.mxu0 %v976
      %1074 = vmatprep.subr.mxu0 0.0
      %1075 = vmatpush1.msra.mxu0 %v977
      %1076 = vmatprep.subr.mxu0 0.0
      %1077 = vmatpush1.msra.mxu0 %v978
      %1078 = vmatprep.subr.mxu0 0.0
      %1079 = vmatpush1.msra.mxu0 %v979
      %1080 = vmatprep.subr.mxu0 0.0
      %1081 = vmatpush1.msra.mxu0 %v980
      %1082 = vmatprep.subr.mxu0 0.0
      %1083 = vmatpush1.msra.mxu0 %v981
      %1084 = vmatprep.subr.mxu0 0.0
      %1085 = vmatpush1.msra.mxu0 0.0
      %1086 = vmatprep.subr.mxu0 0.0
      %1087 = vmatpush1.msra.mxu0 0.0
      %1088 = vmatprep.subr.mxu0 0.0
      %1089 = vmatpush1.msra.mxu0 0.0
      %1090 = vmatprep.subr.mxu0 0.0
      %1091 = vmatpush1.msra.mxu0 0.0
      %1092 = vmatprep.subr.mxu0 0.0
      %1093 = vmatpush1.msra.mxu0 0.0
      %1094 = vmatprep.subr.mxu0 0.0
      %1095 = vmatpush1.msra.mxu0 0.0
      %1096 = vmatprep.subr.mxu0 0.0
      %1097 = vmatpush1.msra.mxu0 0.0
      %1098 = vmatprep.subr.mxu0 0.0
      %1099 = vmatpush1.msra.mxu0 0.0
      %1100 = vmatprep.subr.mxu0 0.0
      %1101 = vmatpush1.msra.mxu0 0.0
      %1102 = vmatprep.subr.mxu0 0.0
      %1103 = vmatpush1.msra.mxu0 0.0
      %1104 = vmatprep.subr.mxu0 0.0
      %1105 = vmatpush1.msra.mxu0 0.0
      %1106 = vmatprep.subr.mxu0 0.0
      %1107 = vmatpush1.msra.mxu0 0.0
      %1108 = vmatprep.subr.mxu0 0.0
      %1109 = vmatpush1.msra.mxu0 0.0
      %1110 = vmatprep.subr.mxu0 0.0
      %1111 = vmatpush1.msra.mxu0 0.0
      %1112 = vmatprep.subr.mxu0 0.0
      %1113 = vmatpush1.msra.mxu0 0.0
      %1114 = vmatprep.subr.mxu0 0.0
      %1115 = vmatpush1.msra.mxu0 0.0
      %1116 = vmatprep.mubr.f32.mxu0 0.0
      %1117 = vmatmul.mubr.f32.gmra.mrb[0].mxu0 %v965
      %v1118 = vpop.f32.mrb[0].mxu0
      %v1119 = vadd.f32 0.0, %v1118
      %v1120 = vpop.f32.mrb[0].mxu0
      %1121 = vdwg.mxu0
      %v1122 = vsub.f32 %v1049, %v1119
      %v1123 = vmul.f32 %v1122, %v1122
      %1125 = vrot.lane.b32.xlu0 %v1123, 96
      %v1126 = vpop.permute.xlu0 %1125
      %vm1128 = vcmask 64512
      %v1129 = vsel %vm1128, %v1126, 0.0
      %1130 = vadd.xlane.f32.xlu0 %v1129
      %v1131 = vpop.xlane.xlu0 %1130
      %v1132 = vrsqrt.pop %v1131
      %v1133 = vmul.f32 %v1131, %v1132
      %vm1134 = vcmp.eq.f32.partialorder %v1131, inf
      %v1135 = vsel %vm1134, %v1131, %v1133
      %vm1136 = vcmp.eq.f32.partialorder %v1131, 0.0
      %v1137 = vand.u32 %v1131, 2147483648
      %v1138 = vsel %vm1136, %v1137, %v1135
      %v1139 = vld [vmem:[%s3] sm:$0x1]
      %v1141 = vlaneseq
      %v1142 = vshrl.u32 %v1141, 7
      %v1143 = vsub.s32 0, %v1142
      %v1144 = vrot.slane %v1139, %v1143
      %v1146 = vsub.f32 %v1138, %v1144
      %v1147 = vmul.f32 %v1146, %v1146
      %v1148 = vmul.f32 %v1147, -1.125
      %v1149 = vmul.f32 %v1148, 1.442695
      %v1150 = vpow.pop %v1149
      %v1151 = vld [vmem:[%s904] sm:$0xff]
      %v1152 = vld [vmem:[%s4] sm:$0xff]
      %v1153 = vld [vmem:[%s4 + $0x8] sm:$0xff]
      %v1154 = vld [vmem:[%s4 + $0x10] sm:$0xff]
      %v1155 = vld [vmem:[%s4 + $0x18] sm:$0xff]
      %v1156 = vld [vmem:[%s5] sm:$0xff]
      %v1157 = vld [vmem:[%s5 + $0x8] sm:$0xff]
      %vm1158 = vcmask 130048
      %v1160 = vsel %vm1158, %v1150, 0
      %1162 = vmatprep.subr.mxu0 0.0
      %1163 = vmatpush1.msra.mxu0 %v1156
      %1164 = vmatprep.subr.mxu0 0.0
      %1165 = vmatpush1.msra.mxu0 %v1157
      %1166 = vmatprep.subr.mxu0 0.0
      %1167 = vmatpush1.msra.mxu0 0.0
      %1168 = vmatprep.subr.mxu0 0.0
      %1169 = vmatpush1.msra.mxu0 0.0
      %1170 = vmatprep.subr.mxu0 0.0
      %1171 = vmatpush1.msra.mxu0 0.0
      %1172 = vmatprep.subr.mxu0 0.0
      %1173 = vmatpush1.msra.mxu0 0.0
      %1174 = vmatprep.subr.mxu0 0.0
      %1175 = vmatpush1.msra.mxu0 0.0
      %1176 = vmatprep.subr.mxu0 0.0
      %1177 = vmatpush1.msra.mxu0 0.0
      %1178 = vmatprep.subr.mxu0 0.0
      %1179 = vmatpush1.msra.mxu0 0.0
      %1180 = vmatprep.subr.mxu0 0.0
      %1181 = vmatpush1.msra.mxu0 0.0
      %1182 = vmatprep.subr.mxu0 0.0
      %1183 = vmatpush1.msra.mxu0 0.0
      %1184 = vmatprep.subr.mxu0 0.0
      %1185 = vmatpush1.msra.mxu0 0.0
      %1186 = vmatprep.subr.mxu0 0.0
      %1187 = vmatpush1.msra.mxu0 0.0
      %1188 = vmatprep.subr.mxu0 0.0
      %1189 = vmatpush1.msra.mxu0 0.0
      %1190 = vmatprep.subr.mxu0 0.0
      %1191 = vmatpush1.msra.mxu0 0.0
      %1192 = vmatprep.subr.mxu0 0.0
      %1193 = vmatpush1.msra.mxu0 0.0
      %1194 = vmatprep.subr.mxu0 0.0
      %1195 = vmatpush1.msra.mxu0 0.0
      %1196 = vmatprep.subr.mxu0 0.0
      %1197 = vmatpush1.msra.mxu0 0.0
      %1198 = vmatprep.subr.mxu0 0.0
      %1199 = vmatpush1.msra.mxu0 0.0
      %1200 = vmatprep.subr.mxu0 0.0
      %1201 = vmatpush1.msra.mxu0 0.0
      %1202 = vmatprep.subr.mxu0 0.0
      %1203 = vmatpush1.msra.mxu0 0.0
      %1204 = vmatprep.subr.mxu0 0.0
      %1205 = vmatpush1.msra.mxu0 0.0
      %1206 = vmatprep.subr.mxu0 0.0
      %1207 = vmatpush1.msra.mxu0 0.0
      %1208 = vmatprep.subr.mxu0 0.0
      %1209 = vmatpush1.msra.mxu0 0.0
      %1210 = vmatprep.subr.mxu0 0.0
      %1211 = vmatpush1.msra.mxu0 0.0
      %1212 = vmatprep.subr.mxu0 0.0
      %1213 = vmatpush1.msra.mxu0 0.0
      %1214 = vmatprep.subr.mxu0 0.0
      %1215 = vmatpush1.msra.mxu0 0.0
      %1216 = vmatprep.subr.mxu0 0.0
      %1217 = vmatpush1.msra.mxu0 0.0
      %1218 = vmatprep.subr.mxu0 0.0
      %1219 = vmatpush1.msra.mxu0 0.0
      %1220 = vmatprep.subr.mxu0 0.0
      %1221 = vmatpush1.msra.mxu0 0.0
      %1222 = vmatprep.subr.mxu0 0.0
      %1223 = vmatpush1.msra.mxu0 0.0
      %1224 = vmatprep.subr.mxu0 0.0
      %1225 = vmatpush1.msra.mxu0 0.0
      %1226 = vmatprep.mubr.f32.mxu0 0.0
      %1227 = vmatmul.mubr.f32.gmra.mrb[0].mxu0 %v1160
      %v1228 = vpop.f32.mrb[0].mxu0
      %v1229 = vadd.f32 0.0, %v1228
      %v1230 = vpop.f32.mrb[0].mxu0
      %1231 = vdwg.mxu0
      %vm1232 = vcmask 261120
      %v1234 = vsel %vm1232, %v1151, 0
      %1236 = vmatprep.subr.mxu0 0.0
      %1237 = vmatpush1.msra.mxu0 %v1152
      %1238 = vmatprep.subr.mxu0 0.0
      %1239 = vmatpush1.msra.mxu0 %v1153
      %1240 = vmatprep.subr.mxu0 0.0
      %1241 = vmatpush1.msra.mxu0 %v1154
      %1242 = vmatprep.subr.mxu0 0.0
      %1243 = vmatpush1.msra.mxu0 %v1155
      %1244 = vmatprep.subr.mxu0 0.0
      %1245 = vmatpush1.msra.mxu0 0.0
      %1246 = vmatprep.subr.mxu0 0.0
      %1247 = vmatpush1.msra.mxu0 0.0
      %1248 = vmatprep.subr.mxu0 0.0
      %1249 = vmatpush1.msra.mxu0 0.0
      %1250 = vmatprep.subr.mxu0 0.0
      %1251 = vmatpush1.msra.mxu0 0.0
      %1252 = vmatprep.subr.mxu0 0.0
      %1253 = vmatpush1.msra.mxu0 0.0
      %1254 = vmatprep.subr.mxu0 0.0
      %1255 = vmatpush1.msra.mxu0 0.0
      %1256 = vmatprep.subr.mxu0 0.0
      %1257 = vmatpush1.msra.mxu0 0.0
      %1258 = vmatprep.subr.mxu0 0.0
      %1259 = vmatpush1.msra.mxu0 0.0
      %1260 = vmatprep.subr.mxu0 0.0
      %1261 = vmatpush1.msra.mxu0 0.0
      %1262 = vmatprep.subr.mxu0 0.0
      %1263 = vmatpush1.msra.mxu0 0.0
      %1264 = vmatprep.subr.mxu0 0.0
      %1265 = vmatpush1.msra.mxu0 0.0
      %1266 = vmatprep.subr.mxu0 0.0
      %1267 = vmatpush1.msra.mxu0 0.0
      %1268 = vmatprep.subr.mxu0 0.0
      %1269 = vmatpush1.msra.mxu0 0.0
      %1270 = vmatprep.subr.mxu0 0.0
      %1271 = vmatpush1.msra.mxu0 0.0
      %1272 = vmatprep.subr.mxu0 0.0
      %1273 = vmatpush1.msra.mxu0 0.0
      %1274 = vmatprep.subr.mxu0 0.0
      %1275 = vmatpush1.msra.mxu0 0.0
      %1276 = vmatprep.subr.mxu0 0.0
      %1277 = vmatpush1.msra.mxu0 0.0
      %1278 = vmatprep.subr.mxu0 0.0
      %1279 = vmatpush1.msra.mxu0 0.0
      %1280 = vmatprep.subr.mxu0 0.0
      %1281 = vmatpush1.msra.mxu0 0.0
      %1282 = vmatprep.subr.mxu0 0.0
      %1283 = vmatpush1.msra.mxu0 0.0
      %1284 = vmatprep.subr.mxu0 0.0
      %1285 = vmatpush1.msra.mxu0 0.0
      %1286 = vmatprep.subr.mxu0 0.0
      %1287 = vmatpush1.msra.mxu0 0.0
      %1288 = vmatprep.subr.mxu0 0.0
      %1289 = vmatpush1.msra.mxu0 0.0
      %1290 = vmatprep.subr.mxu0 0.0
      %1291 = vmatpush1.msra.mxu0 0.0
      %1292 = vmatprep.subr.mxu0 0.0
      %1293 = vmatpush1.msra.mxu0 0.0
      %1294 = vmatprep.subr.mxu0 0.0
      %1295 = vmatpush1.msra.mxu0 0.0
      %1296 = vmatprep.subr.mxu0 0.0
      %1297 = vmatpush1.msra.mxu0 0.0
      %1298 = vmatprep.subr.mxu0 0.0
      %1299 = vmatpush1.msra.mxu0 0.0
      %1300 = vmatprep.mubr.f32.mxu0 0.0
      %1301 = vmatmul.mubr.f32.gmra.mrb[0].mxu0 %v1234
      %v1302 = vpop.f32.mrb[0].mxu0
      %v1303 = vadd.f32 %v1229, %v1302
      %v1304 = vpop.f32.mrb[0].mxu0
      %1305 = vdwg.mxu0
      %v1306 = vld [vmem:[%s6] sm:$0x1]
      %v1308 = vlaneseq
      %v1309 = vshrl.u32 %v1308, 7
      %v1310 = vsub.s32 0, %v1309
      %v1311 = vrot.slane %v1306, %v1310
      %v1313 = vadd.f32 %v1303, %v1311
      %1314 = vst.msk [vmem:[%s920] sm:$0xff] %vm1232, %v1313
      %v1315 = vld [vmem:[%s7] sm:$0xff]
      %v1316 = vld [vmem:[%s7 + $0x8] sm:$0xff]
      %v1317 = vld [vmem:[%s7 + $0x10] sm:$0xff]
      %v1318 = vld [vmem:[%s7 + $0x18] sm:$0xff]
      %v1319 = vld [vmem:[%s7 + $0x20] sm:$0xff]
      %v1320 = vld [vmem:[%s7 + $0x28] sm:$0xff]
      %v1321 = vld [vmem:[%s7 + $0x30] sm:$0xff]
      %v1322 = vld [vmem:[%s7 + $0x38] sm:$0xff]
      %v1324 = vsel %vm1232, %v1313, 0
      %1326 = vmatprep.subr.mxu0 %v1316
      %1327 = vmatpush1.msra.mxu0 %v1315
      %1328 = vmatprep.subr.mxu0 %v1318
      %1329 = vmatpush1.msra.mxu0 %v1317
      %1330 = vmatprep.subr.mxu0 %v1320
      %1331 = vmatpush1.msra.mxu0 %v1319
      %1332 = vmatprep.subr.mxu0 %v1322
      %1333 = vmatpush1.msra.mxu0 %v1321
      %1334 = vmatprep.subr.mxu0 0.0
      %1335 = vmatpush1.msra.mxu0 0.0
      %1336 = vmatprep.subr.mxu0 0.0
      %1337 = vmatpush1.msra.mxu0 0.0
      %1338 = vmatprep.subr.mxu0 0.0
      %1339 = vmatpush1.msra.mxu0 0.0
      %1340 = vmatprep.subr.mxu0 0.0
      %1341 = vmatpush1.msra.mxu0 0.0
      %1342 = vmatprep.subr.mxu0 0.0
      %1343 = vmatpush1.msra.mxu0 0.0
      %1344 = vmatprep.subr.mxu0 0.0
      %1345 = vmatpush1.msra.mxu0 0.0
      %1346 = vmatprep.subr.mxu0 0.0
      %1347 = vmatpush1.msra.mxu0 0.0
      %1348 = vmatprep.subr.mxu0 0.0
      %1349 = vmatpush1.msra.mxu0 0.0
      %1350 = vmatprep.subr.mxu0 0.0
      %1351 = vmatpush1.msra.mxu0 0.0
      %1352 = vmatprep.subr.mxu0 0.0
      %1353 = vmatpush1.msra.mxu0 0.0
      %1354 = vmatprep.subr.mxu0 0.0
      %1355 = vmatpush1.msra.mxu0 0.0
      %1356 = vmatprep.subr.mxu0 0.0
      %1357 = vmatpush1.msra.mxu0 0.0
      %1358 = vmatprep.subr.mxu0 0.0
      %1359 = vmatpush1.msra.mxu0 0.0
      %1360 = vmatprep.subr.mxu0 0.0
      %1361 = vmatpush1.msra.mxu0 0.0
      %1362 = vmatprep.subr.mxu0 0.0
      %1363 = vmatpush1.msra.mxu0 0.0
      %1364 = vmatprep.subr.mxu0 0.0
      %1365 = vmatpush1.msra.mxu0 0.0
      %1366 = vmatprep.subr.mxu0 0.0
      %1367 = vmatpush1.msra.mxu0 0.0
      %1368 = vmatprep.subr.mxu0 0.0
      %1369 = vmatpush1.msra.mxu0 0.0
      %1370 = vmatprep.subr.mxu0 0.0
      %1371 = vmatpush1.msra.mxu0 0.0
      %1372 = vmatprep.subr.mxu0 0.0
      %1373 = vmatpush1.msra.mxu0 0.0
      %1374 = vmatprep.subr.mxu0 0.0
      %1375 = vmatpush1.msra.mxu0 0.0
      %1376 = vmatprep.subr.mxu0 0.0
      %1377 = vmatpush1.msra.mxu0 0.0
      %1378 = vmatprep.subr.mxu0 0.0
      %1379 = vmatpush1.msra.mxu0 0.0
      %1380 = vmatprep.subr.mxu0 0.0
      %1381 = vmatpush1.msra.mxu0 0.0
      %1382 = vmatprep.subr.mxu0 0.0
      %1383 = vmatpush1.msra.mxu0 0.0
      %1384 = vmatprep.subr.mxu0 0.0
      %1385 = vmatpush1.msra.mxu0 0.0
      %1386 = vmatprep.subr.mxu0 0.0
      %1387 = vmatpush1.msra.mxu0 0.0
      %1388 = vmatprep.subr.mxu0 0.0
      %1389 = vmatpush1.msra.mxu0 0.0
      %1390 = vmatprep.mubr.f32.mxu0 0.0
      %1391 = vmatmul.mubr.f32.gmra.mrb[0].mxu0 %v1324
      %v1392 = vpop.f32.mrb[0].mxu0
      %v1393 = vadd.f32 0.0, %v1392
      %v1394 = vpop.f32.mrb[0].mxu0
      %v1395 = vadd.f32 0.0, %v1394
      %1396 = vdwg.mxu0
      %v1397 = vld [vmem:[%s8] sm:$0x1]
      %v1399 = vlaneseq
      %v1400 = vshrl.u32 %v1399, 7
      %v1401 = vsub.s32 0, %v1400
      %v1402 = vrot.slane %v1397, %v1401
      %v1404 = vadd.f32 %v1393, %v1402
      %v1405 = vmax.f32 %v1404, 0.0
      %v1406 = vld [vmem:[%s9] sm:$0xff]
      %v1407 = vld [vmem:[%s9 + $0x8] sm:$0xff]
      %v1408 = vld [vmem:[%s9 + $0x10] sm:$0xff]
      %v1409 = vld [vmem:[%s9 + $0x18] sm:$0xff]
      %v1410 = vld [vmem:[%s10] sm:$0x1]
      %v1412 = vlaneseq
      %v1413 = vshrl.u32 %v1412, 7
      %v1414 = vsub.s32 0, %v1413
      %v1415 = vrot.slane %v1410, %v1414
      %v1418 = vsel %vm1232, %v1405, 0
      %1420 = vmatprep.subr.mxu0 0.0
      %1421 = vmatpush1.msra.mxu0 %v1406
      %1422 = vmatprep.subr.mxu0 0.0
      %1423 = vmatpush1.msra.mxu0 %v1407
      %1424 = vmatprep.subr.mxu0 0.0
      %1425 = vmatpush1.msra.mxu0 %v1408
      %1426 = vmatprep.subr.mxu0 0.0
      %1427 = vmatpush1.msra.mxu0 %v1409
      %1428 = vmatprep.subr.mxu0 0.0
      %1429 = vmatpush1.msra.mxu0 0.0
      %1430 = vmatprep.subr.mxu0 0.0
      %1431 = vmatpush1.msra.mxu0 0.0
      %1432 = vmatprep.subr.mxu0 0.0
      %1433 = vmatpush1.msra.mxu0 0.0
      %1434 = vmatprep.subr.mxu0 0.0
      %1435 = vmatpush1.msra.mxu0 0.0
      %1436 = vmatprep.subr.mxu0 0.0
      %1437 = vmatpush1.msra.mxu0 0.0
      %1438 = vmatprep.subr.mxu0 0.0
      %1439 = vmatpush1.msra.mxu0 0.0
      %1440 = vmatprep.subr.mxu0 0.0
      %1441 = vmatpush1.msra.mxu0 0.0
      %1442 = vmatprep.subr.mxu0 0.0
      %1443 = vmatpush1.msra.mxu0 0.0
      %1444 = vmatprep.subr.mxu0 0.0
      %1445 = vmatpush1.msra.mxu0 0.0
      %1446 = vmatprep.subr.mxu0 0.0
      %1447 = vmatpush1.msra.mxu0 0.0
      %1448 = vmatprep.subr.mxu0 0.0
      %1449 = vmatpush1.msra.mxu0 0.0
      %1450 = vmatprep.subr.mxu0 0.0
      %1451 = vmatpush1.msra.mxu0 0.0
      %1452 = vmatprep.subr.mxu0 0.0
      %1453 = vmatpush1.msra.mxu0 0.0
      %1454 = vmatprep.subr.mxu0 0.0
      %1455 = vmatpush1.msra.mxu0 0.0
      %1456 = vmatprep.subr.mxu0 0.0
      %1457 = vmatpush1.msra.mxu0 0.0
      %1458 = vmatprep.subr.mxu0 0.0
      %1459 = vmatpush1.msra.mxu0 0.0
      %1460 = vmatprep.subr.mxu0 0.0
      %1461 = vmatpush1.msra.mxu0 0.0
      %1462 = vmatprep.subr.mxu0 0.0
      %1463 = vmatpush1.msra.mxu0 0.0
      %1464 = vmatprep.subr.mxu0 0.0
      %1465 = vmatpush1.msra.mxu0 0.0
      %1466 = vmatprep.subr.mxu0 0.0
      %1467 = vmatpush1.msra.mxu0 0.0
      %1468 = vmatprep.subr.mxu0 0.0
      %1469 = vmatpush1.msra.mxu0 0.0
      %1470 = vmatprep.subr.mxu0 0.0
      %1471 = vmatpush1.msra.mxu0 0.0
      %1472 = vmatprep.subr.mxu0 0.0
      %1473 = vmatpush1.msra.mxu0 0.0
      %1474 = vmatprep.subr.mxu0 0.0
      %1475 = vmatpush1.msra.mxu0 0.0
      %1476 = vmatprep.subr.mxu0 0.0
      %1477 = vmatpush1.msra.mxu0 0.0
      %1478 = vmatprep.subr.mxu0 0.0
      %1479 = vmatpush1.msra.mxu0 0.0
      %1480 = vmatprep.subr.mxu0 0.0
      %1481 = vmatpush1.msra.mxu0 0.0
      %1482 = vmatprep.subr.mxu0 0.0
      %1483 = vmatpush1.msra.mxu0 0.0
      %1484 = vmatprep.mubr.f32.mxu0 0.0
      %1485 = vmatmul.mubr.f32.gmra.mrb[0].mxu0 %v1418
      %v1486 = vpop.f32.mrb[0].mxu0
      %v1487 = vadd.f32 %v1415, %v1486
      %v1488 = vpop.f32.mrb[0].mxu0
      %1489 = vdwg.mxu0
      %v1490 = vld [vmem:[%s11] sm:$0xff]
      %v1491 = vld [vmem:[%s11 + $0x8] sm:$0xff]
      %v1492 = vld [vmem:[%s11 + $0x10] sm:$0xff]
      %v1493 = vld [vmem:[%s11 + $0x18] sm:$0xff]
      %v1495 = vsel %vm1232, %v1119, 0
      %1497 = vmatprep.subr.mxu0 0.0
      %1498 = vmatpush1.msra.mxu0 %v1490
      %1499 = vmatprep.subr.mxu0 0.0
      %1500 = vmatpush1.msra.mxu0 %v1491
      %1501 = vmatprep.subr.mxu0 0.0
      %1502 = vmatpush1.msra.mxu0 %v1492
      %1503 = vmatprep.subr.mxu0 0.0
      %1504 = vmatpush1.msra.mxu0 %v1493
      %1505 = vmatprep.subr.mxu0 0.0
      %1506 = vmatpush1.msra.mxu0 0.0
      %1507 = vmatprep.subr.mxu0 0.0
      %1508 = vmatpush1.msra.mxu0 0.0
      %1509 = vmatprep.subr.mxu0 0.0
      %1510 = vmatpush1.msra.mxu0 0.0
      %1511 = vmatprep.subr.mxu0 0.0
      %1512 = vmatpush1.msra.mxu0 0.0
      %1513 = vmatprep.subr.mxu0 0.0
      %1514 = vmatpush1.msra.mxu0 0.0
      %1515 = vmatprep.subr.mxu0 0.0
      %1516 = vmatpush1.msra.mxu0 0.0
      %1517 = vmatprep.subr.mxu0 0.0
      %1518 = vmatpush1.msra.mxu0 0.0
      %1519 = vmatprep.subr.mxu0 0.0
      %1520 = vmatpush1.msra.mxu0 0.0
      %1521 = vmatprep.subr.mxu0 0.0
      %1522 = vmatpush1.msra.mxu0 0.0
      %1523 = vmatprep.subr.mxu0 0.0
      %1524 = vmatpush1.msra.mxu0 0.0
      %1525 = vmatprep.subr.mxu0 0.0
      %1526 = vmatpush1.msra.mxu0 0.0
      %1527 = vmatprep.subr.mxu0 0.0
      %1528 = vmatpush1.msra.mxu0 0.0
      %1529 = vmatprep.subr.mxu0 0.0
      %1530 = vmatpush1.msra.mxu0 0.0
      %1531 = vmatprep.subr.mxu0 0.0
      %1532 = vmatpush1.msra.mxu0 0.0
      %1533 = vmatprep.subr.mxu0 0.0
      %1534 = vmatpush1.msra.mxu0 0.0
      %1535 = vmatprep.subr.mxu0 0.0
      %1536 = vmatpush1.msra.mxu0 0.0
      %1537 = vmatprep.subr.mxu0 0.0
      %1538 = vmatpush1.msra.mxu0 0.0
      %1539 = vmatprep.subr.mxu0 0.0
      %1540 = vmatpush1.msra.mxu0 0.0
      %1541 = vmatprep.subr.mxu0 0.0
      %1542 = vmatpush1.msra.mxu0 0.0
      %1543 = vmatprep.subr.mxu0 0.0
      %1544 = vmatpush1.msra.mxu0 0.0
      %1545 = vmatprep.subr.mxu0 0.0
      %1546 = vmatpush1.msra.mxu0 0.0
      %1547 = vmatprep.subr.mxu0 0.0
      %1548 = vmatpush1.msra.mxu0 0.0
      %1549 = vmatprep.subr.mxu0 0.0
      %1550 = vmatpush1.msra.mxu0 0.0
      %1551 = vmatprep.subr.mxu0 0.0
      %1552 = vmatpush1.msra.mxu0 0.0
      %1553 = vmatprep.subr.mxu0 0.0
      %1554 = vmatpush1.msra.mxu0 0.0
      %1555 = vmatprep.subr.mxu0 0.0
      %1556 = vmatpush1.msra.mxu0 0.0
      %1557 = vmatprep.subr.mxu0 0.0
      %1558 = vmatpush1.msra.mxu0 0.0
      %1559 = vmatprep.subr.mxu0 0.0
      %1560 = vmatpush1.msra.mxu0 0.0
      %1561 = vmatprep.mubr.f32.mxu0 0.0
      %1562 = vmatmul.mubr.f32.gmra.mrb[0].mxu0 %v1495
      %v1563 = vpop.f32.mrb[0].mxu0
      %v1564 = vadd.f32 0.0, %v1563
      %v1565 = vpop.f32.mrb[0].mxu0
      %1566 = vdwg.mxu0
      %v1567 = vld [vmem:[%s12] sm:$0x1]
      %v1569 = vlaneseq
      %v1570 = vshrl.u32 %v1569, 7
      %v1571 = vsub.s32 0, %v1570
      %v1572 = vrot.slane %v1567, %v1571
      %v1574 = vadd.f32 %v1564, %v1572
      %v1575 = vmax.f32 %v1574, 0.0
      %v1576 = vld [vmem:[%s13] sm:$0xff]
      %v1577 = vld [vmem:[%s13 + $0x8] sm:$0xff]
      %v1578 = vld [vmem:[%s13 + $0x10] sm:$0xff]
      %v1579 = vld [vmem:[%s13 + $0x18] sm:$0xff]
      %v1580 = vld [vmem:[%s14] sm:$0x1]
      %v1582 = vlaneseq
      %v1583 = vshrl.u32 %v1582, 7
      %v1584 = vsub.s32 0, %v1583
      %v1585 = vrot.slane %v1580, %v1584
      %v1588 = vsel %vm1232, %v1575, 0
      %1590 = vmatprep.subr.mxu0 0.0
      %1591 = vmatpush1.msra.mxu0 %v1576
      %1592 = vmatprep.subr.mxu0 0.0
      %1593 = vmatpush1.msra.mxu0 %v1577
      %1594 = vmatprep.subr.mxu0 0.0
      %1595 = vmatpush1.msra.mxu0 %v1578
      %1596 = vmatprep.subr.mxu0 0.0
      %1597 = vmatpush1.msra.mxu0 %v1579
      %1598 = vmatprep.subr.mxu0 0.0
      %1599 = vmatpush1.msra.mxu0 0.0
      %1600 = vmatprep.subr.mxu0 0.0
      %1601 = vmatpush1.msra.mxu0 0.0
      %1602 = vmatprep.subr.mxu0 0.0
      %1603 = vmatpush1.msra.mxu0 0.0
      %1604 = vmatprep.subr.mxu0 0.0
      %1605 = vmatpush1.msra.mxu0 0.0
      %1606 = vmatprep.subr.mxu0 0.0
      %1607 = vmatpush1.msra.mxu0 0.0
      %1608 = vmatprep.subr.mxu0 0.0
      %1609 = vmatpush1.msra.mxu0 0.0
      %1610 = vmatprep.subr.mxu0 0.0
      %1611 = vmatpush1.msra.mxu0 0.0
      %1612 = vmatprep.subr.mxu0 0.0
      %1613 = vmatpush1.msra.mxu0 0.0
      %1614 = vmatprep.subr.mxu0 0.0
      %1615 = vmatpush1.msra.mxu0 0.0
      %1616 = vmatprep.subr.mxu0 0.0
      %1617 = vmatpush1.msra.mxu0 0.0
      %1618 = vmatprep.subr.mxu0 0.0
      %1619 = vmatpush1.msra.mxu0 0.0
      %1620 = vmatprep.subr.mxu0 0.0
      %1621 = vmatpush1.msra.mxu0 0.0
      %1622 = vmatprep.subr.mxu0 0.0
      %1623 = vmatpush1.msra.mxu0 0.0
      %1624 = vmatprep.subr.mxu0 0.0
      %1625 = vmatpush1.msra.mxu0 0.0
      %1626 = vmatprep.subr.mxu0 0.0
      %1627 = vmatpush1.msra.mxu0 0.0
      %1628 = vmatprep.subr.mxu0 0.0
      %1629 = vmatpush1.msra.mxu0 0.0
      %1630 = vmatprep.subr.mxu0 0.0
      %1631 = vmatpush1.msra.mxu0 0.0
      %1632 = vmatprep.subr.mxu0 0.0
      %1633 = vmatpush1.msra.mxu0 0.0
      %1634 = vmatprep.subr.mxu0 0.0
      %1635 = vmatpush1.msra.mxu0 0.0
      %1636 = vmatprep.subr.mxu0 0.0
      %1637 = vmatpush1.msra.mxu0 0.0
      %1638 = vmatprep.subr.mxu0 0.0
      %1639 = vmatpush1.msra.mxu0 0.0
      %1640 = vmatprep.subr.mxu0 0.0
      %1641 = vmatpush1.msra.mxu0 0.0
      %1642 = vmatprep.subr.mxu0 0.0
      %1643 = vmatpush1.msra.mxu0 0.0
      %1644 = vmatprep.subr.mxu0 0.0
      %1645 = vmatpush1.msra.mxu0 0.0
      %1646 = vmatprep.subr.mxu0 0.0
      %1647 = vmatpush1.msra.mxu0 0.0
      %1648 = vmatprep.subr.mxu0 0.0
      %1649 = vmatpush1.msra.mxu0 0.0
      %1650 = vmatprep.subr.mxu0 0.0
      %1651 = vmatpush1.msra.mxu0 0.0
      %1652 = vmatprep.subr.mxu0 0.0
      %1653 = vmatpush1.msra.mxu0 0.0
      %1654 = vmatprep.mubr.f32.mxu0 0.0
      %1655 = vmatmul.mubr.f32.gmra.mrb[0].mxu0 %v1588
      %v1656 = vpop.f32.mrb[0].mxu0
      %v1657 = vadd.f32 %v1585, %v1656
      %v1658 = vpop.f32.mrb[0].mxu0
      %1659 = vdwg.mxu0
      %v1660 = vmul.f32 %v1487, %v1657
      %v1661 = vld [vmem:[%s15] sm:$0xff]
      %v1662 = vld [vmem:[%s15 + $0x8] sm:$0xff]
      %v1663 = vld [vmem:[%s15 + $0x10] sm:$0xff]
      %v1664 = vld [vmem:[%s15 + $0x18] sm:$0xff]
      %v1665 = vld [vmem:[%s16] sm:$0x1]
      %v1667 = vlaneseq
      %v1668 = vshrl.u32 %v1667, 7
      %v1669 = vsub.s32 0, %v1668
      %v1670 = vrot.slane %v1665, %v1669
      %v1673 = vsel %vm1232, %v1660, 0
      %1675 = vmatprep.subr.mxu0 0.0
      %1676 = vmatpush1.msra.mxu0 %v1661
      %1677 = vmatprep.subr.mxu0 0.0
      %1678 = vmatpush1.msra.mxu0 %v1662
      %1679 = vmatprep.subr.mxu0 0.0
      %1680 = vmatpush1.msra.mxu0 %v1663
      %1681 = vmatprep.subr.mxu0 0.0
      %1682 = vmatpush1.msra.mxu0 %v1664
      %1683 = vmatprep.subr.mxu0 0.0
      %1684 = vmatpush1.msra.mxu0 0.0
      %1685 = vmatprep.subr.mxu0 0.0
      %1686 = vmatpush1.msra.mxu0 0.0
      %1687 = vmatprep.subr.mxu0 0.0
      %1688 = vmatpush1.msra.mxu0 0.0
      %1689 = vmatprep.subr.mxu0 0.0
      %1690 = vmatpush1.msra.mxu0 0.0
      %1691 = vmatprep.subr.mxu0 0.0
      %1692 = vmatpush1.msra.mxu0 0.0
      %1693 = vmatprep.subr.mxu0 0.0
      %1694 = vmatpush1.msra.mxu0 0.0
      %1695 = vmatprep.subr.mxu0 0.0
      %1696 = vmatpush1.msra.mxu0 0.0
      %1697 = vmatprep.subr.mxu0 0.0
      %1698 = vmatpush1.msra.mxu0 0.0
      %1699 = vmatprep.subr.mxu0 0.0
      %1700 = vmatpush1.msra.mxu0 0.0
      %1701 = vmatprep.subr.mxu0 0.0
      %1702 = vmatpush1.msra.mxu0 0.0
      %1703 = vmatprep.subr.mxu0 0.0
      %1704 = vmatpush1.msra.mxu0 0.0
      %1705 = vmatprep.subr.mxu0 0.0
      %1706 = vmatpush1.msra.mxu0 0.0
      %1707 = vmatprep.subr.mxu0 0.0
      %1708 = vmatpush1.msra.mxu0 0.0
      %1709 = vmatprep.subr.mxu0 0.0
      %1710 = vmatpush1.msra.mxu0 0.0
      %1711 = vmatprep.subr.mxu0 0.0
      %1712 = vmatpush1.msra.mxu0 0.0
      %1713 = vmatprep.subr.mxu0 0.0
      %1714 = vmatpush1.msra.mxu0 0.0
      %1715 = vmatprep.subr.mxu0 0.0
      %1716 = vmatpush1.msra.mxu0 0.0
      %1717 = vmatprep.subr.mxu0 0.0
      %1718 = vmatpush1.msra.mxu0 0.0
      %1719 = vmatprep.subr.mxu0 0.0
      %1720 = vmatpush1.msra.mxu0 0.0
      %1721 = vmatprep.subr.mxu0 0.0
      %1722 = vmatpush1.msra.mxu0 0.0
      %1723 = vmatprep.subr.mxu0 0.0
      %1724 = vmatpush1.msra.mxu0 0.0
      %1725 = vmatprep.subr.mxu0 0.0
      %1726 = vmatpush1.msra.mxu0 0.0
      %1727 = vmatprep.subr.mxu0 0.0
      %1728 = vmatpush1.msra.mxu0 0.0
      %1729 = vmatprep.subr.mxu0 0.0
      %1730 = vmatpush1.msra.mxu0 0.0
      %1731 = vmatprep.subr.mxu0 0.0
      %1732 = vmatpush1.msra.mxu0 0.0
      %1733 = vmatprep.subr.mxu0 0.0
      %1734 = vmatpush1.msra.mxu0 0.0
      %1735 = vmatprep.subr.mxu0 0.0
      %1736 = vmatpush1.msra.mxu0 0.0
      %1737 = vmatprep.subr.mxu0 0.0
      %1738 = vmatpush1.msra.mxu0 0.0
      %1739 = vmatprep.mubr.f32.mxu0 0.0
      %1740 = vmatmul.mubr.f32.gmra.mrb[0].mxu0 %v1673
      %v1741 = vpop.f32.mrb[0].mxu0
      %v1742 = vadd.f32 %v1670, %v1741
      %v1743 = vpop.f32.mrb[0].mxu0
      %1744 = vdwg.mxu0
      %v1745 = vld [vmem:[%s17] sm:$0xff]
      %v1746 = vld [vmem:[%s17 + $0x8] sm:$0xff]
      %v1747 = vld [vmem:[%s17 + $0x10] sm:$0xff]
      %v1748 = vld [vmem:[%s17 + $0x18] sm:$0xff]
      %v1750 = vsel %vm1232, %v1049, 0
      %1752 = vmatprep.subr.mxu0 0.0
      %1753 = vmatpush1.msra.mxu0 %v1745
      %1754 = vmatprep.subr.mxu0 0.0
      %1755 = vmatpush1.msra.mxu0 %v1746
      %1756 = vmatprep.subr.mxu0 0.0
      %1757 = vmatpush1.msra.mxu0 %v1747
      %1758 = vmatprep.subr.mxu0 0.0
      %1759 = vmatpush1.msra.mxu0 %v1748
      %1760 = vmatprep.subr.mxu0 0.0
      %1761 = vmatpush1.msra.mxu0 0.0
      %1762 = vmatprep.subr.mxu0 0.0
      %1763 = vmatpush1.msra.mxu0 0.0
      %1764 = vmatprep.subr.mxu0 0.0
      %1765 = vmatpush1.msra.mxu0 0.0
      %1766 = vmatprep.subr.mxu0 0.0
      %1767 = vmatpush1.msra.mxu0 0.0
      %1768 = vmatprep.subr.mxu0 0.0
      %1769 = vmatpush1.msra.mxu0 0.0
      %1770 = vmatprep.subr.mxu0 0.0
      %1771 = vmatpush1.msra.mxu0 0.0
      %1772 = vmatprep.subr.mxu0 0.0
      %1773 = vmatpush1.msra.mxu0 0.0
      %1774 = vmatprep.subr.mxu0 0.0
      %1775 = vmatpush1.msra.mxu0 0.0
      %1776 = vmatprep.subr.mxu0 0.0
      %1777 = vmatpush1.msra.mxu0 0.0
      %1778 = vmatprep.subr.mxu0 0.0
      %1779 = vmatpush1.msra.mxu0 0.0
      %1780 = vmatprep.subr.mxu0 0.0
      %1781 = vmatpush1.msra.mxu0 0.0
      %1782 = vmatprep.subr.mxu0 0.0
      %1783 = vmatpush1.msra.mxu0 0.0
      %1784 = vmatprep.subr.mxu0 0.0
      %1785 = vmatpush1.msra.mxu0 0.0
      %1786 = vmatprep.subr.mxu0 0.0
      %1787 = vmatpush1.msra.mxu0 0.0
      %1788 = vmatprep.subr.mxu0 0.0
      %1789 = vmatpush1.msra.mxu0 0.0
      %1790 = vmatprep.subr.mxu0 0.0
      %1791 = vmatpush1.msra.mxu0 0.0
      %1792 = vmatprep.subr.mxu0 0.0
      %1793 = vmatpush1.msra.mxu0 0.0
      %1794 = vmatprep.subr.mxu0 0.0
      %1795 = vmatpush1.msra.mxu0 0.0
      %1796 = vmatprep.subr.mxu0 0.0
      %1797 = vmatpush1.msra.mxu0 0.0
      %1798 = vmatprep.subr.mxu0 0.0
      %1799 = vmatpush1.msra.mxu0 0.0
      %1800 = vmatprep.subr.mxu0 0.0
      %1801 = vmatpush1.msra.mxu0 0.0
      %1802 = vmatprep.subr.mxu0 0.0
      %1803 = vmatpush1.msra.mxu0 0.0
      %1804 = vmatprep.subr.mxu0 0.0
      %1805 = vmatpush1.msra.mxu0 0.0
      %1806 = vmatprep.subr.mxu0 0.0
      %1807 = vmatpush1.msra.mxu0 0.0
      %1808 = vmatprep.subr.mxu0 0.0
      %1809 = vmatpush1.msra.mxu0 0.0
      %1810 = vmatprep.subr.mxu0 0.0
      %1811 = vmatpush1.msra.mxu0 0.0
      %1812 = vmatprep.subr.mxu0 0.0
      %1813 = vmatpush1.msra.mxu0 0.0
      %1814 = vmatprep.subr.mxu0 0.0
      %1815 = vmatpush1.msra.mxu0 0.0
      %1816 = vmatprep.mubr.f32.mxu0 0.0
      %1817 = vmatmul.mubr.f32.gmra.mrb[0].mxu0 %v1750
      %v1818 = vpop.f32.mrb[0].mxu0
      %v1819 = vadd.f32 0.0, %v1818
      %v1820 = vpop.f32.mrb[0].mxu0
      %1821 = vdwg.mxu0
      %1823 = vrot.lane.b32.xlu0 %v1819, 32
      %v1824 = vpop.permute.xlu0 %1823
      %v1826 = vmul.f32 %v1393, %v1824
      %1828 = vrot.lane.b32.xlu0 %v1564, 64
      %v1829 = vpop.permute.xlu0 %1828
      %v1831 = vmul.f32 %v1393, %v1829
      %v1832 = vmul.f32 %v1395, %v1829
      %v1833 = vld [vmem:[%s18] sm:$0xff]
      %v1834 = vld [vmem:[%s18 + $0x8] sm:$0xff]
      %v1835 = vld [vmem:[%s18 + $0x10] sm:$0xff]
      %v1836 = vld [vmem:[%s18 + $0x18] sm:$0xff]
      %v1837 = vld [vmem:[%s18 + $0x20] sm:$0xff]
      %v1838 = vld [vmem:[%s18 + $0x28] sm:$0xff]
      %v1839 = vld [vmem:[%s18 + $0x30] sm:$0xff]
      %v1840 = vld [vmem:[%s18 + $0x38] sm:$0xff]
      %v1841 = vld [vmem:[%s19] sm:$0x1]
      %v1843 = vlaneseq
      %v1844 = vshrl.u32 %v1843, 7
      %v1845 = vsub.s32 0, %v1844
      %v1846 = vrot.slane %v1841, %v1845
      %1849 = vrot.lane.b32.xlu0 %v1826, 96
      %v1850 = vpop.permute.xlu0 %1849
      %vm1851 = vcmask 523264
      %v1852 = vsel %vm1851, %v1850, 0
      %1854 = vmatprep.subr.mxu0 0.0
      %1855 = vmatpush1.msra.mxu0 %v1833
      %1856 = vmatprep.subr.mxu0 0.0
      %1857 = vmatpush1.msra.mxu0 %v1834
      %1858 = vmatprep.subr.mxu0 0.0
      %1859 = vmatpush1.msra.mxu0 %v1835
      %1860 = vmatprep.subr.mxu0 0.0
      %1861 = vmatpush1.msra.mxu0 %v1836
      %1862 = vmatprep.subr.mxu0 0.0
      %1863 = vmatpush1.msra.mxu0 %v1837
      %1864 = vmatprep.subr.mxu0 0.0
      %1865 = vmatpush1.msra.mxu0 %v1838
      %1866 = vmatprep.subr.mxu0 0.0
      %1867 = vmatpush1.msra.mxu0 %v1839
      %1868 = vmatprep.subr.mxu0 0.0
      %1869 = vmatpush1.msra.mxu0 %v1840
      %1870 = vmatprep.subr.mxu0 0.0
      %1871 = vmatpush1.msra.mxu0 0.0
      %1872 = vmatprep.subr.mxu0 0.0
      %1873 = vmatpush1.msra.mxu0 0.0
      %1874 = vmatprep.subr.mxu0 0.0
      %1875 = vmatpush1.msra.mxu0 0.0
      %1876 = vmatprep.subr.mxu0 0.0
      %1877 = vmatpush1.msra.mxu0 0.0
      %1878 = vmatprep.subr.mxu0 0.0
      %1879 = vmatpush1.msra.mxu0 0.0
      %1880 = vmatprep.subr.mxu0 0.0
      %1881 = vmatpush1.msra.mxu0 0.0
      %1882 = vmatprep.subr.mxu0 0.0
      %1883 = vmatpush1.msra.mxu0 0.0
      %1884 = vmatprep.subr.mxu0 0.0
      %1885 = vmatpush1.msra.mxu0 0.0
      %1886 = vmatprep.subr.mxu0 0.0
      %1887 = vmatpush1.msra.mxu0 0.0
      %1888 = vmatprep.subr.mxu0 0.0
      %1889 = vmatpush1.msra.mxu0 0.0
      %1890 = vmatprep.subr.mxu0 0.0
      %1891 = vmatpush1.msra.mxu0 0.0
      %1892 = vmatprep.subr.mxu0 0.0
      %1893 = vmatpush1.msra.mxu0 0.0
      %1894 = vmatprep.subr.mxu0 0.0
      %1895 = vmatpush1.msra.mxu0 0.0
      %1896 = vmatprep.subr.mxu0 0.0
      %1897 = vmatpush1.msra.mxu0 0.0
      %1898 = vmatprep.subr.mxu0 0.0
      %1899 = vmatpush1.msra.mxu0 0.0
      %1900 = vmatprep.subr.mxu0 0.0
      %1901 = vmatpush1.msra.mxu0 0.0
      %1902 = vmatprep.subr.mxu0 0.0
      %1903 = vmatpush1.msra.mxu0 0.0
      %1904 = vmatprep.subr.mxu0 0.0
      %1905 = vmatpush1.msra.mxu0 0.0
      %1906 = vmatprep.subr.mxu0 0.0
      %1907 = vmatpush1.msra.mxu0 0.0
      %1908 = vmatprep.subr.mxu0 0.0
      %1909 = vmatpush1.msra.mxu0 0.0
      %1910 = vmatprep.subr.mxu0 0.0
      %1911 = vmatpush1.msra.mxu0 0.0
      %1912 = vmatprep.subr.mxu0 0.0
      %1913 = vmatpush1.msra.mxu0 0.0
      %1914 = vmatprep.subr.mxu0 0.0
      %1915 = vmatpush1.msra.mxu0 0.0
      %1916 = vmatprep.subr.mxu0 0.0
      %1917 = vmatpush1.msra.mxu0 0.0
      %1918 = vmatprep.mubr.f32.mxu0 0.0
      %1919 = vmatmul.mubr.f32.gmra.mrb[0].mxu0 %v1852
      %v1920 = vpop.f32.mrb[0].mxu0
      %v1921 = vadd.f32 %v1846, %v1920
      %v1922 = vpop.f32.mrb[0].mxu0
      %1923 = vdwg.mxu0
      %v1924 = vmax.f32 %v1921, 0.0
      %v1925 = vld [vmem:[%s20] sm:$0xff]
      %v1926 = vld [vmem:[%s20 + $0x8] sm:$0xff]
      %v1927 = vld [vmem:[%s20 + $0x10] sm:$0xff]
      %v1928 = vld [vmem:[%s20 + $0x18] sm:$0xff]
      %v1929 = vld [vmem:[%s20 + $0x20] sm:$0xff]
      %v1930 = vld [vmem:[%s20 + $0x28] sm:$0xff]
      %v1931 = vld [vmem:[%s20 + $0x30] sm:$0xff]
      %v1932 = vld [vmem:[%s20 + $0x38] sm:$0xff]
      %v1933 = vld [vmem:[%s21] sm:$0x1]
      %v1935 = vlaneseq
      %v1936 = vshrl.u32 %v1935, 7
      %v1937 = vsub.s32 0, %v1936
      %v1938 = vrot.slane %v1933, %v1937
      %v1941 = vsel %vm1851, %v1924, 0
      %1943 = vmatprep.subr.mxu0 0.0
      %1944 = vmatpush1.msra.mxu0 %v1925
      %1945 = vmatprep.subr.mxu0 0.0
      %1946 = vmatpush1.msra.mxu0 %v1926
      %1947 = vmatprep.subr.mxu0 0.0
      %1948 = vmatpush1.msra.mxu0 %v1927
      %1949 = vmatprep.subr.mxu0 0.0
      %1950 = vmatpush1.msra.mxu0 %v1928
      %1951 = vmatprep.subr.mxu0 0.0
      %1952 = vmatpush1.msra.mxu0 %v1929
      %1953 = vmatprep.subr.mxu0 0.0
      %1954 = vmatpush1.msra.mxu0 %v1930
      %1955 = vmatprep.subr.mxu0 0.0
      %1956 = vmatpush1.msra.mxu0 %v1931
      %1957 = vmatprep.subr.mxu0 0.0
      %1958 = vmatpush1.msra.mxu0 %v1932
      %1959 = vmatprep.subr.mxu0 0.0
      %1960 = vmatpush1.msra.mxu0 0.0
      %1961 = vmatprep.subr.mxu0 0.0
      %1962 = vmatpush1.msra.mxu0 0.0
      %1963 = vmatprep.subr.mxu0 0.0
      %1964 = vmatpush1.msra.mxu0 0.0
      %1965 = vmatprep.subr.mxu0 0.0
      %1966 = vmatpush1.msra.mxu0 0.0
      %1967 = vmatprep.subr.mxu0 0.0
      %1968 = vmatpush1.msra.mxu0 0.0
      %1969 = vmatprep.subr.mxu0 0.0
      %1970 = vmatpush1.msra.mxu0 0.0
      %1971 = vmatprep.subr.mxu0 0.0
      %1972 = vmatpush1.msra.mxu0 0.0
      %1973 = vmatprep.subr.mxu0 0.0
      %1974 = vmatpush1.msra.mxu0 0.0
      %1975 = vmatprep.subr.mxu0 0.0
      %1976 = vmatpush1.msra.mxu0 0.0
      %1977 = vmatprep.subr.mxu0 0.0
      %1978 = vmatpush1.msra.mxu0 0.0
      %1979 = vmatprep.subr.mxu0 0.0
      %1980 = vmatpush1.msra.mxu0 0.0
      %1981 = vmatprep.subr.mxu0 0.0
      %1982 = vmatpush1.msra.mxu0 0.0
      %1983 = vmatprep.subr.mxu0 0.0
      %1984 = vmatpush1.msra.mxu0 0.0
      %1985 = vmatprep.subr.mxu0 0.0
      %1986 = vmatpush1.msra.mxu0 0.0
      %1987 = vmatprep.subr.mxu0 0.0
      %1988 = vmatpush1.msra.mxu0 0.0
      %1989 = vmatprep.subr.mxu0 0.0
      %1990 = vmatpush1.msra.mxu0 0.0
      %1991 = vmatprep.subr.mxu0 0.0
      %1992 = vmatpush1.msra.mxu0 0.0
      %1993 = vmatprep.subr.mxu0 0.0
      %1994 = vmatpush1.msra.mxu0 0.0
      %1995 = vmatprep.subr.mxu0 0.0
      %1996 = vmatpush1.msra.mxu0 0.0
      %1997 = vmatprep.subr.mxu0 0.0
      %1998 = vmatpush1.msra.mxu0 0.0
      %1999 = vmatprep.subr.mxu0 0.0
      %2000 = vmatpush1.msra.mxu0 0.0
      %2001 = vmatprep.subr.mxu0 0.0
      %2002 = vmatpush1.msra.mxu0 0.0
      %2003 = vmatprep.subr.mxu0 0.0
      %2004 = vmatpush1.msra.mxu0 0.0
      %2005 = vmatprep.subr.mxu0 0.0
      %2006 = vmatpush1.msra.mxu0 0.0
      %2007 = vmatprep.mubr.f32.mxu0 0.0
      %2008 = vmatmul.mubr.f32.gmra.mrb[0].mxu0 %v1941
      %v2009 = vpop.f32.mrb[0].mxu0
      %v2010 = vadd.f32 %v1938, %v2009
      %v2011 = vpop.f32.mrb[0].mxu0
      %2012 = vdwg.mxu0
      %v2013 = vld [vmem:[%s22] sm:$0xff]
      %v2014 = vld [vmem:[%s22 + $0x8] sm:$0xff]
      %v2015 = vld [vmem:[%s22 + $0x10] sm:$0xff]
      %v2016 = vld [vmem:[%s22 + $0x18] sm:$0xff]
      %v2017 = vld [vmem:[%s22 + $0x20] sm:$0xff]
      %v2018 = vld [vmem:[%s22 + $0x28] sm:$0xff]
      %v2019 = vld [vmem:[%s22 + $0x30] sm:$0xff]
      %v2020 = vld [vmem:[%s22 + $0x38] sm:$0xff]
      %v2021 = vld [vmem:[%s23] sm:$0x1]
      %v2023 = vlaneseq
      %v2024 = vshrl.u32 %v2023, 7
      %v2025 = vsub.s32 0, %v2024
      %v2026 = vrot.slane %v2021, %v2025
      %2030 = vrot.lane.b32.xlu0 %v1831, 32
      %v2031 = vpop.permute.xlu0 %2030
      %2032 = vrot.lane.b32.xlu0 %v1832, 32
      %v2033 = vpop.permute.xlu0 %2032
      %v2034 = vsel %vm1232, %v2031, %v2033
      %v2035 = vsel %vm1851, %v2034, 0
      %2037 = vmatprep.subr.mxu0 0.0
      %2038 = vmatpush1.msra.mxu0 %v2013
      %2039 = vmatprep.subr.mxu0 0.0
      %2040 = vmatpush1.msra.mxu0 %v2014
      %2041 = vmatprep.subr.mxu0 0.0
      %2042 = vmatpush1.msra.mxu0 %v2015
      %2043 = vmatprep.subr.mxu0 0.0
      %2044 = vmatpush1.msra.mxu0 %v2016
      %2045 = vmatprep.subr.mxu0 0.0
      %2046 = vmatpush1.msra.mxu0 %v2017
      %2047 = vmatprep.subr.mxu0 0.0
      %2048 = vmatpush1.msra.mxu0 %v2018
      %2049 = vmatprep.subr.mxu0 0.0
      %2050 = vmatpush1.msra.mxu0 %v2019
      %2051 = vmatprep.subr.mxu0 0.0
      %2052 = vmatpush1.msra.mxu0 %v2020
      %2053 = vmatprep.subr.mxu0 0.0
      %2054 = vmatpush1.msra.mxu0 0.0
      %2055 = vmatprep.subr.mxu0 0.0
      %2056 = vmatpush1.msra.mxu0 0.0
      %2057 = vmatprep.subr.mxu0 0.0
      %2058 = vmatpush1.msra.mxu0 0.0
      %2059 = vmatprep.subr.mxu0 0.0
      %2060 = vmatpush1.msra.mxu0 0.0
      %2061 = vmatprep.subr.mxu0 0.0
      %2062 = vmatpush1.msra.mxu0 0.0
      %2063 = vmatprep.subr.mxu0 0.0
      %2064 = vmatpush1.msra.mxu0 0.0
      %2065 = vmatprep.subr.mxu0 0.0
      %2066 = vmatpush1.msra.mxu0 0.0
      %2067 = vmatprep.subr.mxu0 0.0
      %2068 = vmatpush1.msra.mxu0 0.0
      %2069 = vmatprep.subr.mxu0 0.0
      %2070 = vmatpush1.msra.mxu0 0.0
      %2071 = vmatprep.subr.mxu0 0.0
      %2072 = vmatpush1.msra.mxu0 0.0
      %2073 = vmatprep.subr.mxu0 0.0
      %2074 = vmatpush1.msra.mxu0 0.0
      %2075 = vmatprep.subr.mxu0 0.0
      %2076 = vmatpush1.msra.mxu0 0.0
      %2077 = vmatprep.subr.mxu0 0.0
      %2078 = vmatpush1.msra.mxu0 0.0
      %2079 = vmatprep.subr.mxu0 0.0
      %2080 = vmatpush1.msra.mxu0 0.0
      %2081 = vmatprep.subr.mxu0 0.0
      %2082 = vmatpush1.msra.mxu0 0.0
      %2083 = vmatprep.subr.mxu0 0.0
      %2084 = vmatpush1.msra.mxu0 0.0
      %2085 = vmatprep.subr.mxu0 0.0
      %2086 = vmatpush1.msra.mxu0 0.0
      %2087 = vmatprep.subr.mxu0 0.0
      %2088 = vmatpush1.msra.mxu0 0.0
      %2089 = vmatprep.subr.mxu0 0.0
      %2090 = vmatpush1.msra.mxu0 0.0
      %2091 = vmatprep.subr.mxu0 0.0
      %2092 = vmatpush1.msra.mxu0 0.0
      %2093 = vmatprep.subr.mxu0 0.0
      %2094 = vmatpush1.msra.mxu0 0.0
      %2095 = vmatprep.subr.mxu0 0.0
      %2096 = vmatpush1.msra.mxu0 0.0
      %2097 = vmatprep.subr.mxu0 0.0
      %2098 = vmatpush1.msra.mxu0 0.0
      %2099 = vmatprep.subr.mxu0 0.0
      %2100 = vmatpush1.msra.mxu0 0.0
      %2101 = vmatprep.mubr.f32.mxu0 0.0
      %2102 = vmatmul.mubr.f32.gmra.mrb[0].mxu0 %v2035
      %v2103 = vpop.f32.mrb[0].mxu0
      %v2104 = vadd.f32 %v2026, %v2103
      %v2105 = vpop.f32.mrb[0].mxu0
      %2106 = vdwg.mxu0
      %v2107 = vmax.f32 %v2104, 0.0
      %v2108 = vld [vmem:[%s24] sm:$0xff]
      %v2109 = vld [vmem:[%s24 + $0x8] sm:$0xff]
      %v2110 = vld [vmem:[%s24 + $0x10] sm:$0xff]
      %v2111 = vld [vmem:[%s24 + $0x18] sm:$0xff]
      %v2112 = vld [vmem:[%s24 + $0x20] sm:$0xff]
      %v2113 = vld [vmem:[%s24 + $0x28] sm:$0xff]
      %v2114 = vld [vmem:[%s24 + $0x30] sm:$0xff]
      %v2115 = vld [vmem:[%s24 + $0x38] sm:$0xff]
      %v2116 = vld [vmem:[%s25] sm:$0x1]
      %v2118 = vlaneseq
      %v2119 = vshrl.u32 %v2118, 7
      %v2120 = vsub.s32 0, %v2119
      %v2121 = vrot.slane %v2116, %v2120
      %v2124 = vsel %vm1851, %v2107, 0
      %2126 = vmatprep.subr.mxu0 0.0
      %2127 = vmatpush1.msra.mxu0 %v2108
      %2128 = vmatprep.subr.mxu0 0.0
      %2129 = vmatpush1.msra.mxu0 %v2109
      %2130 = vmatprep.subr.mxu0 0.0
      %2131 = vmatpush1.msra.mxu0 %v2110
      %2132 = vmatprep.subr.mxu0 0.0
      %2133 = vmatpush1.msra.mxu0 %v2111
      %2134 = vmatprep.subr.mxu0 0.0
      %2135 = vmatpush1.msra.mxu0 %v2112
      %2136 = vmatprep.subr.mxu0 0.0
      %2137 = vmatpush1.msra.mxu0 %v2113
      %2138 = vmatprep.subr.mxu0 0.0
      %2139 = vmatpush1.msra.mxu0 %v2114
      %2140 = vmatprep.subr.mxu0 0.0
      %2141 = vmatpush1.msra.mxu0 %v2115
      %2142 = vmatprep.subr.mxu0 0.0
      %2143 = vmatpush1.msra.mxu0 0.0
      %2144 = vmatprep.subr.mxu0 0.0
      %2145 = vmatpush1.msra.mxu0 0.0
      %2146 = vmatprep.subr.mxu0 0.0
      %2147 = vmatpush1.msra.mxu0 0.0
      %2148 = vmatprep.subr.mxu0 0.0
      %2149 = vmatpush1.msra.mxu0 0.0
      %2150 = vmatprep.subr.mxu0 0.0
      %2151 = vmatpush1.msra.mxu0 0.0
      %2152 = vmatprep.subr.mxu0 0.0
      %2153 = vmatpush1.msra.mxu0 0.0
      %2154 = vmatprep.subr.mxu0 0.0
      %2155 = vmatpush1.msra.mxu0 0.0
      %2156 = vmatprep.subr.mxu0 0.0
      %2157 = vmatpush1.msra.mxu0 0.0
      %2158 = vmatprep.subr.mxu0 0.0
      %2159 = vmatpush1.msra.mxu0 0.0
      %2160 = vmatprep.subr.mxu0 0.0
      %2161 = vmatpush1.msra.mxu0 0.0
      %2162 = vmatprep.subr.mxu0 0.0
      %2163 = vmatpush1.msra.mxu0 0.0
      %2164 = vmatprep.subr.mxu0 0.0
      %2165 = vmatpush1.msra.mxu0 0.0
      %2166 = vmatprep.subr.mxu0 0.0
      %2167 = vmatpush1.msra.mxu0 0.0
      %2168 = vmatprep.subr.mxu0 0.0
      %2169 = vmatpush1.msra.mxu0 0.0
      %2170 = vmatprep.subr.mxu0 0.0
      %2171 = vmatpush1.msra.mxu0 0.0
      %2172 = vmatprep.subr.mxu0 0.0
      %2173 = vmatpush1.msra.mxu0 0.0
      %2174 = vmatprep.subr.mxu0 0.0
      %2175 = vmatpush1.msra.mxu0 0.0
      %2176 = vmatprep.subr.mxu0 0.0
      %2177 = vmatpush1.msra.mxu0 0.0
      %2178 = vmatprep.subr.mxu0 0.0
      %2179 = vmatpush1.msra.mxu0 0.0
      %2180 = vmatprep.subr.mxu0 0.0
      %2181 = vmatpush1.msra.mxu0 0.0
      %2182 = vmatprep.subr.mxu0 0.0
      %2183 = vmatpush1.msra.mxu0 0.0
      %2184 = vmatprep.subr.mxu0 0.0
      %2185 = vmatpush1.msra.mxu0 0.0
      %2186 = vmatprep.subr.mxu0 0.0
      %2187 = vmatpush1.msra.mxu0 0.0
      %2188 = vmatprep.subr.mxu0 0.0
      %2189 = vmatpush1.msra.mxu0 0.0
      %2190 = vmatprep.mubr.f32.mxu0 0.0
      %2191 = vmatmul.mubr.f32.gmra.mrb[0].mxu0 %v2124
      %v2192 = vpop.f32.mrb[0].mxu0
      %v2193 = vadd.f32 %v2121, %v2192
      %v2194 = vpop.f32.mrb[0].mxu0
      %2195 = vdwg.mxu0
      %2196 = vxpose.xlu0.b32.start [1/16] %v1742, 128
      %2197 = vxpose.xlu0.b32.cont [2/16] 0.0, 128
      %2198 = vxpose.xlu0.b32.cont [3/16] 0.0, 128
      %2199 = vxpose.xlu0.b32.cont [4/16] 0.0, 128
      %2200 = vxpose.xlu0.b32.cont [5/16] 0.0, 128
      %2201 = vxpose.xlu0.b32.cont [6/16] 0.0, 128
      %2202 = vxpose.xlu0.b32.cont [7/16] 0.0, 128
      %2203 = vxpose.xlu0.b32.cont [8/16] 0.0, 128
      %2204 = vxpose.xlu0.b32.cont [9/16] 0.0, 128
      %2205 = vxpose.xlu0.b32.cont [10/16] 0.0, 128
      %2206 = vxpose.xlu0.b32.cont [11/16] 0.0, 128
      %2207 = vxpose.xlu0.b32.cont [12/16] 0.0, 128
      %2208 = vxpose.xlu0.b32.cont [13/16] 0.0, 128
      %2209 = vxpose.xlu0.b32.cont [14/16] 0.0, 128
      %2210 = vxpose.xlu0.b32.cont [15/16] 0.0, 128
      %2211 = vxpose.xlu0.b32.end [16/16] 0.0, 128
      %v2212 = vpop.trf.xlu0
      %v2213 = vpop.trf.xlu0
      %v2214 = vpop.trf.xlu0
      %v2215 = vpop.trf.xlu0
      %v2216 = vpop.trf.xlu0
      %v2217 = vpop.trf.xlu0
      %v2218 = vpop.trf.xlu0
      %v2219 = vpop.trf.xlu0
      %v2220 = vpop.trf.xlu0
      %v2221 = vpop.trf.xlu0
      %v2222 = vpop.trf.xlu0
      %v2223 = vpop.trf.xlu0
      %v2224 = vpop.trf.xlu0
      %v2225 = vpop.trf.xlu0
      %v2226 = vpop.trf.xlu0
      %v2227 = vpop.trf.xlu0
      %2228 = vxpose.xlu0.b32.start [1/16] %v2193, 128
      %2229 = vxpose.xlu0.b32.cont [2/16] 0.0, 128
      %2230 = vxpose.xlu0.b32.cont [3/16] 0.0, 128
      %2231 = vxpose.xlu0.b32.cont [4/16] 0.0, 128
      %2232 = vxpose.xlu0.b32.cont [5/16] 0.0, 128
      %2233 = vxpose.xlu0.b32.cont [6/16] 0.0, 128
      %2234 = vxpose.xlu0.b32.cont [7/16] 0.0, 128
      %2235 = vxpose.xlu0.b32.cont [8/16] 0.0, 128
      %2236 = vxpose.xlu0.b32.cont [9/16] 0.0, 128
      %2237 = vxpose.xlu0.b32.cont [10/16] 0.0, 128
      %2238 = vxpose.xlu0.b32.cont [11/16] 0.0, 128
      %2239 = vxpose.xlu0.b32.cont [12/16] 0.0, 128
      %2240 = vxpose.xlu0.b32.cont [13/16] 0.0, 128
      %2241 = vxpose.xlu0.b32.cont [14/16] 0.0, 128
      %2242 = vxpose.xlu0.b32.cont [15/16] 0.0, 128
      %2243 = vxpose.xlu0.b32.end [16/16] 0.0, 128
      %v2244 = vpop.trf.xlu0
      %v2245 = vpop.trf.xlu0
      %v2246 = vpop.trf.xlu0
      %v2247 = vpop.trf.xlu0
      %v2248 = vpop.trf.xlu0
      %v2249 = vpop.trf.xlu0
      %v2250 = vpop.trf.xlu0
      %v2251 = vpop.trf.xlu0
      %v2252 = vpop.trf.xlu0
      %v2253 = vpop.trf.xlu0
      %v2254 = vpop.trf.xlu0
      %v2255 = vpop.trf.xlu0
      %v2256 = vpop.trf.xlu0
      %v2257 = vpop.trf.xlu0
      %v2258 = vpop.trf.xlu0
      %v2259 = vpop.trf.xlu0
      %v2260 = vld [vmem:[%s927] sm:$0xff]
      %v2261 = vld [vmem:[%s927 + $0x8] sm:$0xff]
      %v2262 = vld [vmem:[%s927 + $0x10] sm:$0xff]
      %v2263 = vld [vmem:[%s927 + $0x18] sm:$0xff]
      %v2264 = vld [vmem:[%s927 + $0x20] sm:$0xff]
      %v2265 = vld [vmem:[%s927 + $0x28] sm:$0xff]
      %v2266 = vld [vmem:[%s927 + $0x30] sm:$0xff]
      %v2267 = vld [vmem:[%s927 + $0x38] sm:$0xff]
      %v2269 = vsel %vm1128, %v2212, 0
      %v2272 = vsel %vm1128, %v2213, 0
      %v2275 = vsel %vm1128, %v2214, 0
      %v2278 = vsel %vm1128, %v2215, 0
      %v2281 = vsel %vm1128, %v2244, 0
      %v2284 = vsel %vm1128, %v2245, 0
      %v2287 = vsel %vm1128, %v2246, 0
      %v2290 = vsel %vm1128, %v2247, 0
      %2292 = vmatprep.subr.mxu0 0.0
      %2293 = vmatpush1.msra.mxu0 %v959
      %2294 = vmatprep.subr.mxu0 0.0
      %2295 = vmatpush1.msra.mxu0 0.0
      %2296 = vmatprep.subr.mxu0 0.0
      %2297 = vmatpush1.msra.mxu0 0.0
      %2298 = vmatprep.subr.mxu0 0.0
      %2299 = vmatpush1.msra.mxu0 0.0
      %2300 = vmatprep.subr.mxu0 0.0
      %2301 = vmatpush1.msra.mxu0 0.0
      %2302 = vmatprep.subr.mxu0 0.0
      %2303 = vmatpush1.msra.mxu0 0.0
      %2304 = vmatprep.subr.mxu0 0.0
      %2305 = vmatpush1.msra.mxu0 0.0
      %2306 = vmatprep.subr.mxu0 0.0
      %2307 = vmatpush1.msra.mxu0 0.0
      %2308 = vmatprep.subr.mxu0 0.0
      %2309 = vmatpush1.msra.mxu0 0.0
      %2310 = vmatprep.subr.mxu0 0.0
      %2311 = vmatpush1.msra.mxu0 0.0
      %2312 = vmatprep.subr.mxu0 0.0
      %2313 = vmatpush1.msra.mxu0 0.0
      %2314 = vmatprep.subr.mxu0 0.0
      %2315 = vmatpush1.msra.mxu0 0.0
      %2316 = vmatprep.subr.mxu0 0.0
      %2317 = vmatpush1.msra.mxu0 0.0
      %2318 = vmatprep.subr.mxu0 0.0
      %2319 = vmatpush1.msra.mxu0 0.0
      %2320 = vmatprep.subr.mxu0 0.0
      %2321 = vmatpush1.msra.mxu0 0.0
      %2322 = vmatprep.subr.mxu0 0.0
      %2323 = vmatpush1.msra.mxu0 0.0
      %2324 = vmatprep.subr.mxu0 0.0
      %2325 = vmatpush1.msra.mxu0 0.0
      %2326 = vmatprep.subr.mxu0 0.0
      %2327 = vmatpush1.msra.mxu0 0.0
      %2328 = vmatprep.subr.mxu0 0.0
      %2329 = vmatpush1.msra.mxu0 0.0
      %2330 = vmatprep.subr.mxu0 0.0
      %2331 = vmatpush1.msra.mxu0 0.0
      %2332 = vmatprep.subr.mxu0 0.0
      %2333 = vmatpush1.msra.mxu0 0.0
      %2334 = vmatprep.subr.mxu0 0.0
      %2335 = vmatpush1.msra.mxu0 0.0
      %2336 = vmatprep.subr.mxu0 0.0
      %2337 = vmatpush1.msra.mxu0 0.0
      %2338 = vmatprep.subr.mxu0 0.0
      %2339 = vmatpush1.msra.mxu0 0.0
      %2340 = vmatprep.subr.mxu0 0.0
      %2341 = vmatpush1.msra.mxu0 0.0
      %2342 = vmatprep.subr.mxu0 0.0
      %2343 = vmatpush1.msra.mxu0 0.0
      %2344 = vmatprep.subr.mxu0 0.0
      %2345 = vmatpush1.msra.mxu0 0.0
      %2346 = vmatprep.subr.mxu0 0.0
      %2347 = vmatpush1.msra.mxu0 0.0
      %2348 = vmatprep.subr.mxu0 0.0
      %2349 = vmatpush1.msra.mxu0 0.0
      %2350 = vmatprep.subr.mxu0 0.0
      %2351 = vmatpush1.msra.mxu0 0.0
      %2352 = vmatprep.subr.mxu0 0.0
      %2353 = vmatpush1.msra.mxu0 0.0
      %2354 = vmatprep.subr.mxu0 0.0
      %2355 = vmatpush1.msra.mxu0 0.0
      %2356 = vmatprep.mubr.f32.mxu0 0.0
      %2357 = vmatmul.mubr.f32.gmra.mrb[0].mxu0 %v2269
      %v2358 = vpop.f32.mrb[0].mxu0
      %v2359 = vadd.f32 0.0, %v2358
      %v2360 = vpop.f32.mrb[0].mxu0
      %2361 = vmatprep.mubr.f32.mxu0 0.0
      %2362 = vmatmul.mubr.f32.gmra.mrb[0].mxu0 %v2272
      %v2363 = vpop.f32.mrb[0].mxu0
      %v2364 = vadd.f32 0.0, %v2363
      %v2365 = vpop.f32.mrb[0].mxu0
      %2366 = vmatprep.mubr.f32.mxu0 0.0
      %2367 = vmatmul.mubr.f32.gmra.mrb[0].mxu0 %v2275
      %v2368 = vpop.f32.mrb[0].mxu0
      %v2369 = vadd.f32 0.0, %v2368
      %v2370 = vpop.f32.mrb[0].mxu0
      %2371 = vmatprep.mubr.f32.mxu0 0.0
      %2372 = vmatmul.mubr.f32.gmra.mrb[0].mxu0 %v2278
      %v2373 = vpop.f32.mrb[0].mxu0
      %v2374 = vadd.f32 0.0, %v2373
      %v2375 = vpop.f32.mrb[0].mxu0
      %2376 = vmatprep.mubr.f32.mxu0 0.0
      %2377 = vmatmul.mubr.f32.gmra.mrb[0].mxu0 %v2281
      %v2378 = vpop.f32.mrb[0].mxu0
      %v2379 = vadd.f32 0.0, %v2378
      %v2380 = vpop.f32.mrb[0].mxu0
      %2381 = vmatprep.mubr.f32.mxu0 0.0
      %2382 = vmatmul.mubr.f32.gmra.mrb[0].mxu0 %v2284
      %v2383 = vpop.f32.mrb[0].mxu0
      %v2384 = vadd.f32 0.0, %v2383
      %v2385 = vpop.f32.mrb[0].mxu0
      %2386 = vmatprep.mubr.f32.mxu0 0.0
      %2387 = vmatmul.mubr.f32.gmra.mrb[0].mxu0 %v2287
      %v2388 = vpop.f32.mrb[0].mxu0
      %v2389 = vadd.f32 0.0, %v2388
      %v2390 = vpop.f32.mrb[0].mxu0
      %2391 = vmatprep.mubr.f32.mxu0 0.0
      %2392 = vmatmul.mubr.f32.gmra.mrb[0].mxu0 %v2290
      %v2393 = vpop.f32.mrb[0].mxu0
      %v2394 = vadd.f32 0.0, %v2393
      %v2395 = vpop.f32.mrb[0].mxu0
      %2396 = vdwg.mxu0
      %v2397 = vadd.f32 %v2260, %v2359
      %v2398 = vadd.f32 %v2261, %v2364
      %v2399 = vadd.f32 %v2262, %v2369
      %v2400 = vadd.f32 %v2263, %v2374
      %v2401 = vadd.f32 %v2264, %v2379
      %v2402 = vadd.f32 %v2265, %v2384
      %v2403 = vadd.f32 %v2266, %v2389
      %v2404 = vadd.f32 %v2267, %v2394
      %2405 = vst [vmem:[%s927] sm:$0xff] %v2397
      %2406 = vst [vmem:[%s927 + $0x8] sm:$0xff] %v2398
      %2407 = vst [vmem:[%s927 + $0x10] sm:$0xff] %v2399
      %2408 = vst [vmem:[%s927 + $0x18] sm:$0xff] %v2400
      %2409 = vst [vmem:[%s927 + $0x20] sm:$0xff] %v2401
      %2410 = vst [vmem:[%s927 + $0x28] sm:$0xff] %v2402
      %2411 = vst [vmem:[%s927 + $0x30] sm:$0xff] %v2403
      %2412 = vst [vmem:[%s927 + $0x38] sm:$0xff] %v2404
      %v2413 = vld [vmem:[%s933] sm:$0xff]
      %v2414 = vld [vmem:[%s933 + $0x8] sm:$0xff]
      %v2415 = vld [vmem:[%s933 + $0x10] sm:$0xff]
      %v2416 = vld [vmem:[%s933 + $0x18] sm:$0xff]
      %2417 = vxpose.xlu0.b32.start [1/16] %v2010, 128
      %2418 = vxpose.xlu0.b32.cont [2/16] 0.0, 128
      %2419 = vxpose.xlu0.b32.cont [3/16] 0.0, 128
      %2420 = vxpose.xlu0.b32.cont [4/16] 0.0, 128
      %2421 = vxpose.xlu0.b32.cont [5/16] 0.0, 128
      %2422 = vxpose.xlu0.b32.cont [6/16] 0.0, 128
      %2423 = vxpose.xlu0.b32.cont [7/16] 0.0, 128
      %2424 = vxpose.xlu0.b32.cont [8/16] 0.0, 128
      %2425 = vxpose.xlu0.b32.cont [9/16] 0.0, 128
      %2426 = vxpose.xlu0.b32.cont [10/16] 0.0, 128
      %2427 = vxpose.xlu0.b32.cont [11/16] 0.0, 128
      %2428 = vxpose.xlu0.b32.cont [12/16] 0.0, 128
      %2429 = vxpose.xlu0.b32.cont [13/16] 0.0, 128
      %2430 = vxpose.xlu0.b32.cont [14/16] 0.0, 128
      %2431 = vxpose.xlu0.b32.cont [15/16] 0.0, 128
      %2432 = vxpose.xlu0.b32.end [16/16] 0.0, 128
      %v2433 = vpop.trf.xlu0
      %v2434 = vpop.trf.xlu0
      %v2435 = vpop.trf.xlu0
      %v2436 = vpop.trf.xlu0
      %v2437 = vpop.trf.xlu0
      %v2438 = vpop.trf.xlu0
      %v2439 = vpop.trf.xlu0
      %v2440 = vpop.trf.xlu0
      %v2441 = vpop.trf.xlu0
      %v2442 = vpop.trf.xlu0
      %v2443 = vpop.trf.xlu0
      %v2444 = vpop.trf.xlu0
      %v2445 = vpop.trf.xlu0
      %v2446 = vpop.trf.xlu0
      %v2447 = vpop.trf.xlu0
      %v2448 = vpop.trf.xlu0
      %v2450 = vsel %vm1128, %v2433, 0
      %v2453 = vsel %vm1128, %v2434, 0
      %v2456 = vsel %vm1128, %v2435, 0
      %v2459 = vsel %vm1128, %v2436, 0
      %2461 = vmatprep.subr.mxu0 0.0
      %2462 = vmatpush1.msra.mxu0 %v965
      %2463 = vmatprep.subr.mxu0 0.0
      %2464 = vmatpush1.msra.mxu0 0.0
      %2465 = vmatprep.subr.mxu0 0.0
      %2466 = vmatpush1.msra.mxu0 0.0
      %2467 = vmatprep.subr.mxu0 0.0
      %2468 = vmatpush1.msra.mxu0 0.0
      %2469 = vmatprep.subr.mxu0 0.0
      %2470 = vmatpush1.msra.mxu0 0.0
      %2471 = vmatprep.subr.mxu0 0.0
      %2472 = vmatpush1.msra.mxu0 0.0
      %2473 = vmatprep.subr.mxu0 0.0
      %2474 = vmatpush1.msra.mxu0 0.0
      %2475 = vmatprep.subr.mxu0 0.0
      %2476 = vmatpush1.msra.mxu0 0.0
      %2477 = vmatprep.subr.mxu0 0.0
      %2478 = vmatpush1.msra.mxu0 0.0
      %2479 = vmatprep.subr.mxu0 0.0
      %2480 = vmatpush1.msra.mxu0 0.0
      %2481 = vmatprep.subr.mxu0 0.0
      %2482 = vmatpush1.msra.mxu0 0.0
      %2483 = vmatprep.subr.mxu0 0.0
      %2484 = vmatpush1.msra.mxu0 0.0
      %2485 = vmatprep.subr.mxu0 0.0
      %2486 = vmatpush1.msra.mxu0 0.0
      %2487 = vmatprep.subr.mxu0 0.0
      %2488 = vmatpush1.msra.mxu0 0.0
      %2489 = vmatprep.subr.mxu0 0.0
      %2490 = vmatpush1.msra.mxu0 0.0
      %2491 = vmatprep.subr.mxu0 0.0
      %2492 = vmatpush1.msra.mxu0 0.0
      %2493 = vmatprep.subr.mxu0 0.0
      %2494 = vmatpush1.msra.mxu0 0.0
      %2495 = vmatprep.subr.mxu0 0.0
      %2496 = vmatpush1.msra.mxu0 0.0
      %2497 = vmatprep.subr.mxu0 0.0
      %2498 = vmatpush1.msra.mxu0 0.0
      %2499 = vmatprep.subr.mxu0 0.0
      %2500 = vmatpush1.msra.mxu0 0.0
      %2501 = vmatprep.subr.mxu0 0.0
      %2502 = vmatpush1.msra.mxu0 0.0
      %2503 = vmatprep.subr.mxu0 0.0
      %2504 = vmatpush1.msra.mxu0 0.0
      %2505 = vmatprep.subr.mxu0 0.0
      %2506 = vmatpush1.msra.mxu0 0.0
      %2507 = vmatprep.subr.mxu0 0.0
      %2508 = vmatpush1.msra.mxu0 0.0
      %2509 = vmatprep.subr.mxu0 0.0
      %2510 = vmatpush1.msra.mxu0 0.0
      %2511 = vmatprep.subr.mxu0 0.0
      %2512 = vmatpush1.msra.mxu0 0.0
      %2513 = vmatprep.subr.mxu0 0.0
      %2514 = vmatpush1.msra.mxu0 0.0
      %2515 = vmatprep.subr.mxu0 0.0
      %2516 = vmatpush1.msra.mxu0 0.0
      %2517 = vmatprep.subr.mxu0 0.0
      %2518 = vmatpush1.msra.mxu0 0.0
      %2519 = vmatprep.subr.mxu0 0.0
      %2520 = vmatpush1.msra.mxu0 0.0
      %2521 = vmatprep.subr.mxu0 0.0
      %2522 = vmatpush1.msra.mxu0 0.0
      %2523 = vmatprep.subr.mxu0 0.0
      %2524 = vmatpush1.msra.mxu0 0.0
      %2525 = vmatprep.mubr.f32.mxu0 0.0
      %2526 = vmatmul.mubr.f32.gmra.mrb[0].mxu0 %v2450
      %v2527 = vpop.f32.mrb[0].mxu0
      %v2528 = vadd.f32 0.0, %v2527
      %v2529 = vpop.f32.mrb[0].mxu0
      %2530 = vmatprep.mubr.f32.mxu0 0.0
      %2531 = vmatmul.mubr.f32.gmra.mrb[0].mxu0 %v2453
      %v2532 = vpop.f32.mrb[0].mxu0
      %v2533 = vadd.f32 0.0, %v2532
      %v2534 = vpop.f32.mrb[0].mxu0
      %2535 = vmatprep.mubr.f32.mxu0 0.0
      %2536 = vmatmul.mubr.f32.gmra.mrb[0].mxu0 %v2456
      %v2537 = vpop.f32.mrb[0].mxu0
      %v2538 = vadd.f32 0.0, %v2537
      %v2539 = vpop.f32.mrb[0].mxu0
      %2540 = vmatprep.mubr.f32.mxu0 0.0
      %2541 = vmatmul.mubr.f32.gmra.mrb[0].mxu0 %v2459
      %v2542 = vpop.f32.mrb[0].mxu0
      %v2543 = vadd.f32 0.0, %v2542
      %v2544 = vpop.f32.mrb[0].mxu0
      %2545 = vdwg.mxu0
      %v2546 = vadd.f32 %v2413, %v2528
      %v2547 = vadd.f32 %v2414, %v2533
      %v2548 = vadd.f32 %v2415, %v2538
      %v2549 = vadd.f32 %v2416, %v2543
      %2550 = vst [vmem:[%s933] sm:$0xff] %v2546
      %2551 = vst [vmem:[%s933 + $0x8] sm:$0xff] %v2547
      %2552 = vst [vmem:[%s933 + $0x10] sm:$0xff] %v2548
      %2553 = vst [vmem:[%s933 + $0x18] sm:$0xff] %v2549
      %s2554 = smul.u32 %s44, 2
      %s2555 = sadd.s32 %s2554, %s45
      %p2556 = scmp.lt.s32.totalorder %s2555, 3
      %s2557 = scalar_select %p2556, %s2555, 3
      %s2558 = smul.addr %s2557, 8
      %s2559 = scalar_lea.vmem %s26, %s2558
      %s2560 = smul.u32 8, %s44
      %p2561 = scmp.lt.s32.totalorder %s2560, 15
      %s2562 = scalar_select %p2561, %s2560, 15
      %s2563 = smul.addr %s2562, 8
      %s2564 = scalar_lea.vmem %s27, %s2563
      %s2565 = smul.u32 4, %s44
      %p2566 = scmp.lt.s32.totalorder %s2565, 7
      %s2567 = scalar_select %p2566, %s2565, 7
      %s2568 = smul.addr %s2567, 8
      %s2569 = scalar_lea.vmem %s28, %s2568
      // Predicated region
      $region129: #{node_edge_net_forward.6} parent=123 // pred_check
        %p2570 = pneg %p638
      $region130: #{node_edge_net_forward.6} parent=123 // pred_check_branch
        %2572 = sbr.rel (%p2570) target = $region132
      $region131: #{node_edge_net_forward.6} parent=123 // pred_region
        %s2573 = smul.u32 %s44, 2
        %s2574 = sadd.s32 %s2573, %s45
      $region132: #{node_edge_net_forward.6} parent=123 // pred_fallthru
        _
      // Predicated region
      $region133: #{node_edge_net_forward.6} parent=123 // pred_check
        %p2575 = pneg %p664
      $region134: #{node_edge_net_forward.6} parent=123 // pred_check_branch
        %2577 = sbr.rel (%p2575) target = $region136
      $region135: #{node_edge_net_forward.6} parent=123 // pred_region
        %s2578 = smul.u32 8, %s44
      $region136: #{node_edge_net_forward.6} parent=123 // pred_fallthru
        _
      // Predicated region
      $region137: #{node_edge_net_forward.6} parent=123 // pred_check
        %p2579 = pneg %p690
      $region138: #{node_edge_net_forward.6} parent=123 // pred_check_branch
        %2581 = sbr.rel (%p2579) target = $region140
      $region139: #{node_edge_net_forward.6} parent=123 // pred_region
        %s2582 = smul.u32 4, %s44
      $region140: #{node_edge_net_forward.6} parent=123 // pred_fallthru
        _
    $region124: #{node_edge_net_forward.6} parent=5 // pred_fallthru
      _
    %p2583 = scmp.le.s32.totalorder 2, %s35
    // Predicated region
    $region141: #{node_edge_net_forward.6} parent=5 // pred_check
      %p2584 = pneg %p2583
    $region142: #{node_edge_net_forward.6} parent=5 // pred_check_branch
      %2586 = sbr.rel (%p2584) target = $region144
    $region143: #{node_edge_net_forward.6} parent=5 // pred_region
      %s2587 = ssub.s32 %s35, 2
      // Predicated region
      $region145: #{node_edge_net_forward.6} parent=143 // pred_check
        %p2588 = pneg %p644
      $region146: #{node_edge_net_forward.6} parent=143 // pred_check_branch
        %2590 = sbr.rel (%p2588) target = $region148
      $region147: #{node_edge_net_forward.6} parent=143 // pred_region
        %s2591 = smul.u32 %s46, 2
        %s2592 = sadd.s32 %s2591, %s47
        %p2593 = scmp.lt.s32.totalorder %s2592, 3
        %s2594 = scalar_select %p2593, %s2592, 3
        %s2595 = smul.addr %s2594, 8
        %s2596 = scalar_lea.vmem %s26, %s2595
      $region148: #{node_edge_net_forward.6} parent=143 // pred_fallthru
        _
      // Predicated region
      $region149: #{node_edge_net_forward.6} parent=143 // pred_check
        %p2597 = pneg %p670
      $region150: #{node_edge_net_forward.6} parent=143 // pred_check_branch
        %2599 = sbr.rel (%p2597) target = $region152
      $region151: #{node_edge_net_forward.6} parent=143 // pred_region
        %s2600 = smul.u32 8, %s46
        %p2601 = scmp.lt.s32.totalorder %s2600, 15
        %s2602 = scalar_select %p2601, %s2600, 15
        %s2603 = smul.addr %s2602, 8
        %s2604 = scalar_lea.vmem %s27, %s2603
      $region152: #{node_edge_net_forward.6} parent=143 // pred_fallthru
        _
      // Predicated region
      $region153: #{node_edge_net_forward.6} parent=143 // pred_check
        %p2605 = pneg %p696
      $region154: #{node_edge_net_forward.6} parent=143 // pred_check_branch
        %2607 = sbr.rel (%p2605) target = $region156
      $region155: #{node_edge_net_forward.6} parent=143 // pred_region
        %s2608 = smul.u32 4, %s46
        %p2609 = scmp.lt.s32.totalorder %s2608, 7
        %s2610 = scalar_select %p2609, %s2608, 7
        %s2611 = smul.addr %s2610, 8
        %s2612 = scalar_lea.vmem %s28, %s2611
      $region156: #{node_edge_net_forward.6} parent=143 // pred_fallthru
        _
    $region144: #{node_edge_net_forward.6} parent=5 // pred_fallthru
      _
  $region6: #{node_edge_net_forward.6} parent=0 // loop_footer
    %s39 = sadd.s32 1, %s35
  $region7: #{node_edge_net_forward.6} parent=0 // loop_footer_branch
    %34 = sbr.rel target = $region3
  $region8: #{node_edge_net_forward.6} parent=0 // loop_exit
    _

// kernel: node_edge_net_forward.8
$region0: #{node_edge_net_forward.8}
  #allocation0 [shape = 'u32[]', space=smem, size = 0x4, offset = 0x4, fixed_abs, tag = 'smem constant byte address 0x4 - core index']
  #allocation1 [shape = 'u32[144,128]{1,0:T(1,128)}', space=vmem, size = 0x12000, scoped, tag = 'internal scratch']
  #allocation2 [shape = 'f32[1,1]{1,0:T(1,128)S(1)}', space=vmem, size = 0x200, scoped, tag = 'scoped memory for node_edge_net_forward.8']
  %s0 = inlined_call_operand.smem [shape: u32[30], index: -1, kind: input, shape index: {}]
  %s1 = sld [smem:[%s0]]
  %s2 = scalar_lea.smem %s0, 1
  %s3 = sld [smem:[%s2]]
  %s4 = scalar_lea.smem %s0, 2
  %s5 = sld [smem:[%s4]]
  %s6 = scalar_lea.smem %s0, 3
  %s7 = sld [smem:[%s6]]
  %s8 = scalar_lea.smem %s0, 4
  %s9 = sld [smem:[%s8]]
  %s10 = scalar_lea.smem %s0, 5
  %s11 = sld [smem:[%s10]]
  %s12 = scalar_lea.smem %s0, 6
  %s13 = sld [smem:[%s12]]
  %s14 = scalar_lea.smem %s0, 7
  %s15 = sld [smem:[%s14]]
  %s16 = scalar_lea.smem %s0, 8
  %s17 = sld [smem:[%s16]]
  %s18 = scalar_lea.smem %s0, 9
  %s19 = sld [smem:[%s18]]
  %s20 = scalar_lea.smem %s0, 10
  %s21 = sld [smem:[%s20]]
  %s22 = scalar_lea.smem %s0, 11
  %s23 = sld [smem:[%s22]]
  %s24 = scalar_lea.smem %s0, 12
  %s25 = sld [smem:[%s24]]
  %s26 = scalar_lea.smem %s0, 13
  %s27 = sld [smem:[%s26]]
  %s28 = scalar_lea.smem %s0, 14
  %s29 = sld [smem:[%s28]]
  %s30 = scalar_lea.smem %s0, 15
  %s31 = sld [smem:[%s30]]
  %s32 = scalar_lea.smem %s0, 16
  %s33 = sld [smem:[%s32]]
  %s34 = scalar_lea.smem %s0, 17
  %s35 = sld [smem:[%s34]]
  %s36 = scalar_lea.smem %s0, 18
  %s37 = sld [smem:[%s36]]
  %s38 = scalar_lea.smem %s0, 19
  %s39 = sld [smem:[%s38]]
  %s40 = scalar_lea.smem %s0, 20
  %s41 = sld [smem:[%s40]]
  %s42 = scalar_lea.smem %s0, 21
  %s43 = sld [smem:[%s42]]
  %s44 = scalar_lea.smem %s0, 22
  %s45 = sld [smem:[%s44]]
  %s46 = scalar_lea.smem %s0, 23
  %s47 = sld [smem:[%s46]]
  %s48 = scalar_lea.smem %s0, 24
  %s49 = sld [smem:[%s48]]
  %s50 = scalar_lea.smem %s0, 25
  %s51 = sld [smem:[%s50]]
  %s52 = scalar_lea.smem %s0, 26
  %s53 = sld [smem:[%s52]]
  %s54 = scalar_lea.smem %s0, 27
  %s55 = sld [smem:[%s54]]
  %s56 = scalar_lea.smem %s0, 28
  %s57 = sld [smem:[%s56]]
  %s58 = scalar_lea.smem %s0, 29
  %s59 = sld [smem:[%s58]]
  %60 = xla_tuple %s57, %s59
  %s61 = sld [smem:[#allocation0]]
  $region157: #{node_edge_net_forward.8} parent=0
    _
  %s63 = ssub.s32 1, %s61
  %s64 = scalar_select 0, %s63, %s61
  %v65 = vstv %s55
  %66 = vst [vmem:[#allocation2] sm:$0x1] %v65
  loop: start=0, step=1, limit=6
  $region2: #{node_edge_net_forward.8} parent=0 // loop_pre_header
    _
  $region3: #{node_edge_net_forward.8} parent=0 // loop_header
    %s68 = sphi 0, %s72
    %p69 = scmp.ge.s32.totalorder %s68, 6
    %s75 = sphi 0, %s87
    %s76 = sphi 0, %s83
    %s77 = sphi 0, %s75
    %s78 = sphi 0, %s76
    %s79 = sphi 0, %s77
    %s80 = sphi 0, %s78
    %s94 = sphi 0, %s96
    %s97 = sphi 0, %s94
    %s98 = sphi 0, %s97
    %s114 = sphi 0, %s98
    %s124 = sphi 0, %s126
    %s127 = sphi 0, %s124
    %s128 = sphi 0, %s127
    %s144 = sphi 0, %s128
    %s148 = sphi 0, %s148
    %s150 = sphi 0, %s148
    %s151 = sphi 0, %s150
    %s165 = sphi 0, %s151
    %s169 = sphi 0, %s169
    %s171 = sphi 0, %s169
    %s172 = sphi 0, %s171
    %s186 = sphi 0, %s172
    %s190 = sphi 0, %s190
    %s192 = sphi 0, %s190
    %s193 = sphi 0, %s192
    %s207 = sphi 0, %s193
    %s211 = sphi 0, %s211
    %s213 = sphi 0, %s211
    %s214 = sphi 0, %s213
    %s228 = sphi 0, %s214
    %s232 = sphi 0, %s232
    %s234 = sphi 0, %s232
    %s235 = sphi 0, %s234
    %s249 = sphi 0, %s235
    %s253 = sphi 0, %s253
    %s255 = sphi 0, %s253
    %s256 = sphi 0, %s255
    %s270 = sphi 0, %s256
    %s274 = sphi 0, %s274
    %s276 = sphi 0, %s274
    %s277 = sphi 0, %s276
    %s291 = sphi 0, %s277
    %s295 = sphi 0, %s295
    %s297 = sphi 0, %s295
    %s298 = sphi 0, %s297
    %s312 = sphi 0, %s298
    %s316 = sphi 0, %s316
    %s318 = sphi 0, %s316
    %s319 = sphi 0, %s318
    %s333 = sphi 0, %s319
    %s337 = sphi 0, %s337
    %s339 = sphi 0, %s337
    %s340 = sphi 0, %s339
    %s354 = sphi 0, %s340
    %s358 = sphi 0, %s358
    %s360 = sphi 0, %s358
    %s361 = sphi 0, %s360
    %s375 = sphi 0, %s361
    %s379 = sphi 0, %s379
    %s381 = sphi 0, %s379
    %s382 = sphi 0, %s381
    %s396 = sphi 0, %s382
    %s400 = sphi 0, %s400
    %s402 = sphi 0, %s400
    %s403 = sphi 0, %s402
    %s417 = sphi 0, %s403
    %s421 = sphi 0, %s421
    %s423 = sphi 0, %s421
    %s424 = sphi 0, %s423
    %s438 = sphi 0, %s424
    %s442 = sphi 0, %s442
    %s444 = sphi 0, %s442
    %s445 = sphi 0, %s444
    %s459 = sphi 0, %s445
    %s463 = sphi 0, %s463
    %s465 = sphi 0, %s463
    %s466 = sphi 0, %s465
    %s480 = sphi 0, %s466
    %s484 = sphi 0, %s484
    %s486 = sphi 0, %s484
    %s487 = sphi 0, %s486
    %s501 = sphi 0, %s487
    %s505 = sphi 0, %s505
    %s507 = sphi 0, %s505
    %s508 = sphi 0, %s507
    %s522 = sphi 0, %s508
    %s526 = sphi 0, %s526
    %s528 = sphi 0, %s526
    %s529 = sphi 0, %s528
    %s543 = sphi 0, %s529
    %s547 = sphi 0, %s547
    %s549 = sphi 0, %s547
    %s550 = sphi 0, %s549
    %s564 = sphi 0, %s550
    %s568 = sphi 0, %s568
    %s570 = sphi 0, %s568
    %s571 = sphi 0, %s570
    %s585 = sphi 0, %s571
    %s589 = sphi 0, %s589
    %s591 = sphi 0, %s589
    %s592 = sphi 0, %s591
    %s606 = sphi 0, %s592
    %s610 = sphi 0, %s610
    %s612 = sphi 0, %s610
    %s613 = sphi 0, %s612
    %s627 = sphi 0, %s613
    %s631 = sphi 0, %s631
    %s633 = sphi 0, %s631
    %s634 = sphi 0, %s633
    %s648 = sphi 0, %s634
    %s652 = sphi 0, %s652
    %s654 = sphi 0, %s652
    %s655 = sphi 0, %s654
    %s669 = sphi 0, %s655
    %s673 = sphi 0, %s673
    %s675 = sphi 0, %s673
    %s676 = sphi 0, %s675
    %s690 = sphi 0, %s676
    %s700 = sphi 0, %s702
    %s703 = sphi 0, %s700
    %s704 = sphi 0, %s703
    %s720 = sphi 0, %s704
    %s726 = sphi 0, %s728
    %s729 = sphi 0, %s726
    %s730 = sphi 0, %s729
    %s746 = sphi 0, %s730
  $region4: #{node_edge_net_forward.8} parent=0 // loop_header_branch
    %71 = sbr.rel (%p69) target = $region8
  $region5: #{node_edge_net_forward.8} parent=0 // loop_body
    %s73 = ssub.s32 %s68, 1
    %s74 = ssub.s32 %s68, 2
    %s81 = sadd.s32 1, %s76
    %p82 = scmp.ge.s32.totalorder %s81, 2
    %s83 = scalar_select %p82, 0, %s81
    %s84 = sadd.s32 1, %s75
    %s85 = scalar_select %p82, %s84, %s75
    %p86 = scmp.ge.s32.totalorder %s85, 2
    %s87 = scalar_select %p86, 0, %s85
    %s88 = smul.u32 %s75, 2
    %s89 = sadd.s32 %s88, %s76
    %s90 = smul.u32 %s87, 2
    %s91 = sadd.s32 %s90, %s83
    %s92 = ssub.s32 %s89, %s91
    %p93 = scmp.eq.s32.totalorder %s92, 0
    %s95 = sadd.s32 %s94, 1
    %s96 = scalar_select %p93, %s94, %s95
    %p99 = pneg %p93
    %p100 = scmp.eq.s32.totalorder %s68, 3
    %p101 = por %p99, %p100
    %p102 = scmp.ne.s32.totalorder %s94, %s97
    %p103 = scmp.eq.s32.totalorder %s68, 0
    %p104 = por %p102, %p103
    %p105 = scmp.ne.s32.totalorder %s94, %s97
    %p106 = scmp.eq.s32.totalorder %s73, 3
    %p107 = por %p105, %p106
    %p108 = scmp.ne.s32.totalorder %s97, %s98
    %p109 = scmp.eq.s32.totalorder %s73, 0
    %p110 = por %p108, %p109
    %p111 = scmp.ne.s32.totalorder %s97, %s98
    %p112 = scmp.eq.s32.totalorder %s74, 3
    %p113 = por %p111, %p112
    %p115 = scmp.ne.s32.totalorder %s98, %s114
    %p116 = scmp.eq.s32.totalorder %s74, 0
    %p117 = por %p115, %p116
    %s118 = smul.u32 %s75, 2
    %s119 = sadd.s32 %s118, %s76
    %s120 = smul.u32 %s87, 2
    %s121 = sadd.s32 %s120, %s83
    %s122 = ssub.s32 %s119, %s121
    %p123 = scmp.eq.s32.totalorder %s122, 0
    %s125 = sadd.s32 %s124, 1
    %s126 = scalar_select %p123, %s124, %s125
    %p129 = pneg %p123
    %p130 = scmp.eq.s32.totalorder %s68, 3
    %p131 = por %p129, %p130
    %p132 = scmp.ne.s32.totalorder %s124, %s127
    %p133 = scmp.eq.s32.totalorder %s68, 0
    %p134 = por %p132, %p133
    %p135 = scmp.ne.s32.totalorder %s124, %s127
    %p136 = scmp.eq.s32.totalorder %s73, 3
    %p137 = por %p135, %p136
    %p138 = scmp.ne.s32.totalorder %s127, %s128
    %p139 = scmp.eq.s32.totalorder %s73, 0
    %p140 = por %p138, %p139
    %p141 = scmp.ne.s32.totalorder %s127, %s128
    %p142 = scmp.eq.s32.totalorder %s74, 3
    %p143 = por %p141, %p142
    %p145 = scmp.ne.s32.totalorder %s128, %s144
    %p146 = scmp.eq.s32.totalorder %s74, 0
    %p147 = por %p145, %p146
    %s149 = sadd.s32 %s148, 1
    %p152 = scmp.eq.s32.totalorder %s68, 3
    %p153 = scmp.ne.s32.totalorder %s148, %s150
    %p154 = scmp.eq.s32.totalorder %s68, 0
    %p155 = por %p153, %p154
    %p156 = scmp.ne.s32.totalorder %s148, %s150
    %p157 = scmp.eq.s32.totalorder %s73, 3
    %p158 = por %p156, %p157
    %p159 = scmp.ne.s32.totalorder %s150, %s151
    %p160 = scmp.eq.s32.totalorder %s73, 0
    %p161 = por %p159, %p160
    %p162 = scmp.ne.s32.totalorder %s150, %s151
    %p163 = scmp.eq.s32.totalorder %s74, 3
    %p164 = por %p162, %p163
    %p166 = scmp.ne.s32.totalorder %s151, %s165
    %p167 = scmp.eq.s32.totalorder %s74, 0
    %p168 = por %p166, %p167
    %s170 = sadd.s32 %s169, 1
    %p173 = scmp.eq.s32.totalorder %s68, 3
    %p174 = scmp.ne.s32.totalorder %s169, %s171
    %p175 = scmp.eq.s32.totalorder %s68, 0
    %p176 = por %p174, %p175
    %p177 = scmp.ne.s32.totalorder %s169, %s171
    %p178 = scmp.eq.s32.totalorder %s73, 3
    %p179 = por %p177, %p178
    %p180 = scmp.ne.s32.totalorder %s171, %s172
    %p181 = scmp.eq.s32.totalorder %s73, 0
    %p182 = por %p180, %p181
    %p183 = scmp.ne.s32.totalorder %s171, %s172
    %p184 = scmp.eq.s32.totalorder %s74, 3
    %p185 = por %p183, %p184
    %p187 = scmp.ne.s32.totalorder %s172, %s186
    %p188 = scmp.eq.s32.totalorder %s74, 0
    %p189 = por %p187, %p188
    %s191 = sadd.s32 %s190, 1
    %p194 = scmp.eq.s32.totalorder %s68, 3
    %p195 = scmp.ne.s32.totalorder %s190, %s192
    %p196 = scmp.eq.s32.totalorder %s68, 0
    %p197 = por %p195, %p196
    %p198 = scmp.ne.s32.totalorder %s190, %s192
    %p199 = scmp.eq.s32.totalorder %s73, 3
    %p200 = por %p198, %p199
    %p201 = scmp.ne.s32.totalorder %s192, %s193
    %p202 = scmp.eq.s32.totalorder %s73, 0
    %p203 = por %p201, %p202
    %p204 = scmp.ne.s32.totalorder %s192, %s193
    %p205 = scmp.eq.s32.totalorder %s74, 3
    %p206 = por %p204, %p205
    %p208 = scmp.ne.s32.totalorder %s193, %s207
    %p209 = scmp.eq.s32.totalorder %s74, 0
    %p210 = por %p208, %p209
    %s212 = sadd.s32 %s211, 1
    %p215 = scmp.eq.s32.totalorder %s68, 3
    %p216 = scmp.ne.s32.totalorder %s211, %s213
    %p217 = scmp.eq.s32.totalorder %s68, 0
    %p218 = por %p216, %p217
    %p219 = scmp.ne.s32.totalorder %s211, %s213
    %p220 = scmp.eq.s32.totalorder %s73, 3
    %p221 = por %p219, %p220
    %p222 = scmp.ne.s32.totalorder %s213, %s214
    %p223 = scmp.eq.s32.totalorder %s73, 0
    %p224 = por %p222, %p223
    %p225 = scmp.ne.s32.totalorder %s213, %s214
    %p226 = scmp.eq.s32.totalorder %s74, 3
    %p227 = por %p225, %p226
    %p229 = scmp.ne.s32.totalorder %s214, %s228
    %p230 = scmp.eq.s32.totalorder %s74, 0
    %p231 = por %p229, %p230
    %s233 = sadd.s32 %s232, 1
    %p236 = scmp.eq.s32.totalorder %s68, 3
    %p237 = scmp.ne.s32.totalorder %s232, %s234
    %p238 = scmp.eq.s32.totalorder %s68, 0
    %p239 = por %p237, %p238
    %p240 = scmp.ne.s32.totalorder %s232, %s234
    %p241 = scmp.eq.s32.totalorder %s73, 3
    %p242 = por %p240, %p241
    %p243 = scmp.ne.s32.totalorder %s234, %s235
    %p244 = scmp.eq.s32.totalorder %s73, 0
    %p245 = por %p243, %p244
    %p246 = scmp.ne.s32.totalorder %s234, %s235
    %p247 = scmp.eq.s32.totalorder %s74, 3
    %p248 = por %p246, %p247
    %p250 = scmp.ne.s32.totalorder %s235, %s249
    %p251 = scmp.eq.s32.totalorder %s74, 0
    %p252 = por %p250, %p251
    %s254 = sadd.s32 %s253, 1
    %p257 = scmp.eq.s32.totalorder %s68, 3
    %p258 = scmp.ne.s32.totalorder %s253, %s255
    %p259 = scmp.eq.s32.totalorder %s68, 0
    %p260 = por %p258, %p259
    %p261 = scmp.ne.s32.totalorder %s253, %s255
    %p262 = scmp.eq.s32.totalorder %s73, 3
    %p263 = por %p261, %p262
    %p264 = scmp.ne.s32.totalorder %s255, %s256
    %p265 = scmp.eq.s32.totalorder %s73, 0
    %p266 = por %p264, %p265
    %p267 = scmp.ne.s32.totalorder %s255, %s256
    %p268 = scmp.eq.s32.totalorder %s74, 3
    %p269 = por %p267, %p268
    %p271 = scmp.ne.s32.totalorder %s256, %s270
    %p272 = scmp.eq.s32.totalorder %s74, 0
    %p273 = por %p271, %p272
    %s275 = sadd.s32 %s274, 1
    %p278 = scmp.eq.s32.totalorder %s68, 3
    %p279 = scmp.ne.s32.totalorder %s274, %s276
    %p280 = scmp.eq.s32.totalorder %s68, 0
    %p281 = por %p279, %p280
    %p282 = scmp.ne.s32.totalorder %s274, %s276
    %p283 = scmp.eq.s32.totalorder %s73, 3
    %p284 = por %p282, %p283
    %p285 = scmp.ne.s32.totalorder %s276, %s277
    %p286 = scmp.eq.s32.totalorder %s73, 0
    %p287 = por %p285, %p286
    %p288 = scmp.ne.s32.totalorder %s276, %s277
    %p289 = scmp.eq.s32.totalorder %s74, 3
    %p290 = por %p288, %p289
    %p292 = scmp.ne.s32.totalorder %s277, %s291
    %p293 = scmp.eq.s32.totalorder %s74, 0
    %p294 = por %p292, %p293
    %s296 = sadd.s32 %s295, 1
    %p299 = scmp.eq.s32.totalorder %s68, 3
    %p300 = scmp.ne.s32.totalorder %s295, %s297
    %p301 = scmp.eq.s32.totalorder %s68, 0
    %p302 = por %p300, %p301
    %p303 = scmp.ne.s32.totalorder %s295, %s297
    %p304 = scmp.eq.s32.totalorder %s73, 3
    %p305 = por %p303, %p304
    %p306 = scmp.ne.s32.totalorder %s297, %s298
    %p307 = scmp.eq.s32.totalorder %s73, 0
    %p308 = por %p306, %p307
    %p309 = scmp.ne.s32.totalorder %s297, %s298
    %p310 = scmp.eq.s32.totalorder %s74, 3
    %p311 = por %p309, %p310
    %p313 = scmp.ne.s32.totalorder %s298, %s312
    %p314 = scmp.eq.s32.totalorder %s74, 0
    %p315 = por %p313, %p314
    %s317 = sadd.s32 %s316, 1
    %p320 = scmp.eq.s32.totalorder %s68, 3
    %p321 = scmp.ne.s32.totalorder %s316, %s318
    %p322 = scmp.eq.s32.totalorder %s68, 0
    %p323 = por %p321, %p322
    %p324 = scmp.ne.s32.totalorder %s316, %s318
    %p325 = scmp.eq.s32.totalorder %s73, 3
    %p326 = por %p324, %p325
    %p327 = scmp.ne.s32.totalorder %s318, %s319
    %p328 = scmp.eq.s32.totalorder %s73, 0
    %p329 = por %p327, %p328
    %p330 = scmp.ne.s32.totalorder %s318, %s319
    %p331 = scmp.eq.s32.totalorder %s74, 3
    %p332 = por %p330, %p331
    %p334 = scmp.ne.s32.totalorder %s319, %s333
    %p335 = scmp.eq.s32.totalorder %s74, 0
    %p336 = por %p334, %p335
    %s338 = sadd.s32 %s337, 1
    %p341 = scmp.eq.s32.totalorder %s68, 3
    %p342 = scmp.ne.s32.totalorder %s337, %s339
    %p343 = scmp.eq.s32.totalorder %s68, 0
    %p344 = por %p342, %p343
    %p345 = scmp.ne.s32.totalorder %s337, %s339
    %p346 = scmp.eq.s32.totalorder %s73, 3
    %p347 = por %p345, %p346
    %p348 = scmp.ne.s32.totalorder %s339, %s340
    %p349 = scmp.eq.s32.totalorder %s73, 0
    %p350 = por %p348, %p349
    %p351 = scmp.ne.s32.totalorder %s339, %s340
    %p352 = scmp.eq.s32.totalorder %s74, 3
    %p353 = por %p351, %p352
    %p355 = scmp.ne.s32.totalorder %s340, %s354
    %p356 = scmp.eq.s32.totalorder %s74, 0
    %p357 = por %p355, %p356
    %s359 = sadd.s32 %s358, 1
    %p362 = scmp.eq.s32.totalorder %s68, 3
    %p363 = scmp.ne.s32.totalorder %s358, %s360
    %p364 = scmp.eq.s32.totalorder %s68, 0
    %p365 = por %p363, %p364
    %p366 = scmp.ne.s32.totalorder %s358, %s360
    %p367 = scmp.eq.s32.totalorder %s73, 3
    %p368 = por %p366, %p367
    %p369 = scmp.ne.s32.totalorder %s360, %s361
    %p370 = scmp.eq.s32.totalorder %s73, 0
    %p371 = por %p369, %p370
    %p372 = scmp.ne.s32.totalorder %s360, %s361
    %p373 = scmp.eq.s32.totalorder %s74, 3
    %p374 = por %p372, %p373
    %p376 = scmp.ne.s32.totalorder %s361, %s375
    %p377 = scmp.eq.s32.totalorder %s74, 0
    %p378 = por %p376, %p377
    %s380 = sadd.s32 %s379, 1
    %p383 = scmp.eq.s32.totalorder %s68, 3
    %p384 = scmp.ne.s32.totalorder %s379, %s381
    %p385 = scmp.eq.s32.totalorder %s68, 0
    %p386 = por %p384, %p385
    %p387 = scmp.ne.s32.totalorder %s379, %s381
    %p388 = scmp.eq.s32.totalorder %s73, 3
    %p389 = por %p387, %p388
    %p390 = scmp.ne.s32.totalorder %s381, %s382
    %p391 = scmp.eq.s32.totalorder %s73, 0
    %p392 = por %p390, %p391
    %p393 = scmp.ne.s32.totalorder %s381, %s382
    %p394 = scmp.eq.s32.totalorder %s74, 3
    %p395 = por %p393, %p394
    %p397 = scmp.ne.s32.totalorder %s382, %s396
    %p398 = scmp.eq.s32.totalorder %s74, 0
    %p399 = por %p397, %p398
    %s401 = sadd.s32 %s400, 1
    %p404 = scmp.eq.s32.totalorder %s68, 3
    %p405 = scmp.ne.s32.totalorder %s400, %s402
    %p406 = scmp.eq.s32.totalorder %s68, 0
    %p407 = por %p405, %p406
    %p408 = scmp.ne.s32.totalorder %s400, %s402
    %p409 = scmp.eq.s32.totalorder %s73, 3
    %p410 = por %p408, %p409
    %p411 = scmp.ne.s32.totalorder %s402, %s403
    %p412 = scmp.eq.s32.totalorder %s73, 0
    %p413 = por %p411, %p412
    %p414 = scmp.ne.s32.totalorder %s402, %s403
    %p415 = scmp.eq.s32.totalorder %s74, 3
    %p416 = por %p414, %p415
    %p418 = scmp.ne.s32.totalorder %s403, %s417
    %p419 = scmp.eq.s32.totalorder %s74, 0
    %p420 = por %p418, %p419
    %s422 = sadd.s32 %s421, 1
    %p425 = scmp.eq.s32.totalorder %s68, 3
    %p426 = scmp.ne.s32.totalorder %s421, %s423
    %p427 = scmp.eq.s32.totalorder %s68, 0
    %p428 = por %p426, %p427
    %p429 = scmp.ne.s32.totalorder %s421, %s423
    %p430 = scmp.eq.s32.totalorder %s73, 3
    %p431 = por %p429, %p430
    %p432 = scmp.ne.s32.totalorder %s423, %s424
    %p433 = scmp.eq.s32.totalorder %s73, 0
    %p434 = por %p432, %p433
    %p435 = scmp.ne.s32.totalorder %s423, %s424
    %p436 = scmp.eq.s32.totalorder %s74, 3
    %p437 = por %p435, %p436
    %p439 = scmp.ne.s32.totalorder %s424, %s438
    %p440 = scmp.eq.s32.totalorder %s74, 0
    %p441 = por %p439, %p440
    %s443 = sadd.s32 %s442, 1
    %p446 = scmp.eq.s32.totalorder %s68, 3
    %p447 = scmp.ne.s32.totalorder %s442, %s444
    %p448 = scmp.eq.s32.totalorder %s68, 0
    %p449 = por %p447, %p448
    %p450 = scmp.ne.s32.totalorder %s442, %s444
    %p451 = scmp.eq.s32.totalorder %s73, 3
    %p452 = por %p450, %p451
    %p453 = scmp.ne.s32.totalorder %s444, %s445
    %p454 = scmp.eq.s32.totalorder %s73, 0
    %p455 = por %p453, %p454
    %p456 = scmp.ne.s32.totalorder %s444, %s445
    %p457 = scmp.eq.s32.totalorder %s74, 3
    %p458 = por %p456, %p457
    %p460 = scmp.ne.s32.totalorder %s445, %s459
    %p461 = scmp.eq.s32.totalorder %s74, 0
    %p462 = por %p460, %p461
    %s464 = sadd.s32 %s463, 1
    %p467 = scmp.eq.s32.totalorder %s68, 3
    %p468 = scmp.ne.s32.totalorder %s463, %s465
    %p469 = scmp.eq.s32.totalorder %s68, 0
    %p470 = por %p468, %p469
    %p471 = scmp.ne.s32.totalorder %s463, %s465
    %p472 = scmp.eq.s32.totalorder %s73, 3
    %p473 = por %p471, %p472
    %p474 = scmp.ne.s32.totalorder %s465, %s466
    %p475 = scmp.eq.s32.totalorder %s73, 0
    %p476 = por %p474, %p475
    %p477 = scmp.ne.s32.totalorder %s465, %s466
    %p478 = scmp.eq.s32.totalorder %s74, 3
    %p479 = por %p477, %p478
    %p481 = scmp.ne.s32.totalorder %s466, %s480
    %p482 = scmp.eq.s32.totalorder %s74, 0
    %p483 = por %p481, %p482
    %s485 = sadd.s32 %s484, 1
    %p488 = scmp.eq.s32.totalorder %s68, 3
    %p489 = scmp.ne.s32.totalorder %s484, %s486
    %p490 = scmp.eq.s32.totalorder %s68, 0
    %p491 = por %p489, %p490
    %p492 = scmp.ne.s32.totalorder %s484, %s486
    %p493 = scmp.eq.s32.totalorder %s73, 3
    %p494 = por %p492, %p493
    %p495 = scmp.ne.s32.totalorder %s486, %s487
    %p496 = scmp.eq.s32.totalorder %s73, 0
    %p497 = por %p495, %p496
    %p498 = scmp.ne.s32.totalorder %s486, %s487
    %p499 = scmp.eq.s32.totalorder %s74, 3
    %p500 = por %p498, %p499
    %p502 = scmp.ne.s32.totalorder %s487, %s501
    %p503 = scmp.eq.s32.totalorder %s74, 0
    %p504 = por %p502, %p503
    %s506 = sadd.s32 %s505, 1
    %p509 = scmp.eq.s32.totalorder %s68, 3
    %p510 = scmp.ne.s32.totalorder %s505, %s507
    %p511 = scmp.eq.s32.totalorder %s68, 0
    %p512 = por %p510, %p511
    %p513 = scmp.ne.s32.totalorder %s505, %s507
    %p514 = scmp.eq.s32.totalorder %s73, 3
    %p515 = por %p513, %p514
    %p516 = scmp.ne.s32.totalorder %s507, %s508
    %p517 = scmp.eq.s32.totalorder %s73, 0
    %p518 = por %p516, %p517
    %p519 = scmp.ne.s32.totalorder %s507, %s508
    %p520 = scmp.eq.s32.totalorder %s74, 3
    %p521 = por %p519, %p520
    %p523 = scmp.ne.s32.totalorder %s508, %s522
    %p524 = scmp.eq.s32.totalorder %s74, 0
    %p525 = por %p523, %p524
    %s527 = sadd.s32 %s526, 1
    %p530 = scmp.eq.s32.totalorder %s68, 3
    %p531 = scmp.ne.s32.totalorder %s526, %s528
    %p532 = scmp.eq.s32.totalorder %s68, 0
    %p533 = por %p531, %p532
    %p534 = scmp.ne.s32.totalorder %s526, %s528
    %p535 = scmp.eq.s32.totalorder %s73, 3
    %p536 = por %p534, %p535
    %p537 = scmp.ne.s32.totalorder %s528, %s529
    %p538 = scmp.eq.s32.totalorder %s73, 0
    %p539 = por %p537, %p538
    %p540 = scmp.ne.s32.totalorder %s528, %s529
    %p541 = scmp.eq.s32.totalorder %s74, 3
    %p542 = por %p540, %p541
    %p544 = scmp.ne.s32.totalorder %s529, %s543
    %p545 = scmp.eq.s32.totalorder %s74, 0
    %p546 = por %p544, %p545
    %s548 = sadd.s32 %s547, 1
    %p551 = scmp.eq.s32.totalorder %s68, 3
    %p552 = scmp.ne.s32.totalorder %s547, %s549
    %p553 = scmp.eq.s32.totalorder %s68, 0
    %p554 = por %p552, %p553
    %p555 = scmp.ne.s32.totalorder %s547, %s549
    %p556 = scmp.eq.s32.totalorder %s73, 3
    %p557 = por %p555, %p556
    %p558 = scmp.ne.s32.totalorder %s549, %s550
    %p559 = scmp.eq.s32.totalorder %s73, 0
    %p560 = por %p558, %p559
    %p561 = scmp.ne.s32.totalorder %s549, %s550
    %p562 = scmp.eq.s32.totalorder %s74, 3
    %p563 = por %p561, %p562
    %p565 = scmp.ne.s32.totalorder %s550, %s564
    %p566 = scmp.eq.s32.totalorder %s74, 0
    %p567 = por %p565, %p566
    %s569 = sadd.s32 %s568, 1
    %p572 = scmp.eq.s32.totalorder %s68, 3
    %p573 = scmp.ne.s32.totalorder %s568, %s570
    %p574 = scmp.eq.s32.totalorder %s68, 0
    %p575 = por %p573, %p574
    %p576 = scmp.ne.s32.totalorder %s568, %s570
    %p577 = scmp.eq.s32.totalorder %s73, 3
    %p578 = por %p576, %p577
    %p579 = scmp.ne.s32.totalorder %s570, %s571
    %p580 = scmp.eq.s32.totalorder %s73, 0
    %p581 = por %p579, %p580
    %p582 = scmp.ne.s32.totalorder %s570, %s571
    %p583 = scmp.eq.s32.totalorder %s74, 3
    %p584 = por %p582, %p583
    %p586 = scmp.ne.s32.totalorder %s571, %s585
    %p587 = scmp.eq.s32.totalorder %s74, 0
    %p588 = por %p586, %p587
    %s590 = sadd.s32 %s589, 1
    %p593 = scmp.eq.s32.totalorder %s68, 3
    %p594 = scmp.ne.s32.totalorder %s589, %s591
    %p595 = scmp.eq.s32.totalorder %s68, 0
    %p596 = por %p594, %p595
    %p597 = scmp.ne.s32.totalorder %s589, %s591
    %p598 = scmp.eq.s32.totalorder %s73, 3
    %p599 = por %p597, %p598
    %p600 = scmp.ne.s32.totalorder %s591, %s592
    %p601 = scmp.eq.s32.totalorder %s73, 0
    %p602 = por %p600, %p601
    %p603 = scmp.ne.s32.totalorder %s591, %s592
    %p604 = scmp.eq.s32.totalorder %s74, 3
    %p605 = por %p603, %p604
    %p607 = scmp.ne.s32.totalorder %s592, %s606
    %p608 = scmp.eq.s32.totalorder %s74, 0
    %p609 = por %p607, %p608
    %s611 = sadd.s32 %s610, 1
    %p614 = scmp.eq.s32.totalorder %s68, 3
    %p615 = scmp.ne.s32.totalorder %s610, %s612
    %p616 = scmp.eq.s32.totalorder %s68, 0
    %p617 = por %p615, %p616
    %p618 = scmp.ne.s32.totalorder %s610, %s612
    %p619 = scmp.eq.s32.totalorder %s73, 3
    %p620 = por %p618, %p619
    %p621 = scmp.ne.s32.totalorder %s612, %s613
    %p622 = scmp.eq.s32.totalorder %s73, 0
    %p623 = por %p621, %p622
    %p624 = scmp.ne.s32.totalorder %s612, %s613
    %p625 = scmp.eq.s32.totalorder %s74, 3
    %p626 = por %p624, %p625
    %p628 = scmp.ne.s32.totalorder %s613, %s627
    %p629 = scmp.eq.s32.totalorder %s74, 0
    %p630 = por %p628, %p629
    %s632 = sadd.s32 %s631, 1
    %p635 = scmp.eq.s32.totalorder %s68, 3
    %p636 = scmp.ne.s32.totalorder %s631, %s633
    %p637 = scmp.eq.s32.totalorder %s68, 0
    %p638 = por %p636, %p637
    %p639 = scmp.ne.s32.totalorder %s631, %s633
    %p640 = scmp.eq.s32.totalorder %s73, 3
    %p641 = por %p639, %p640
    %p642 = scmp.ne.s32.totalorder %s633, %s634
    %p643 = scmp.eq.s32.totalorder %s73, 0
    %p644 = por %p642, %p643
    %p645 = scmp.ne.s32.totalorder %s633, %s634
    %p646 = scmp.eq.s32.totalorder %s74, 3
    %p647 = por %p645, %p646
    %p649 = scmp.ne.s32.totalorder %s634, %s648
    %p650 = scmp.eq.s32.totalorder %s74, 0
    %p651 = por %p649, %p650
    %s653 = sadd.s32 %s652, 1
    %p656 = scmp.eq.s32.totalorder %s68, 3
    %p657 = scmp.ne.s32.totalorder %s652, %s654
    %p658 = scmp.eq.s32.totalorder %s68, 0
    %p659 = por %p657, %p658
    %p660 = scmp.ne.s32.totalorder %s652, %s654
    %p661 = scmp.eq.s32.totalorder %s73, 3
    %p662 = por %p660, %p661
    %p663 = scmp.ne.s32.totalorder %s654, %s655
    %p664 = scmp.eq.s32.totalorder %s73, 0
    %p665 = por %p663, %p664
    %p666 = scmp.ne.s32.totalorder %s654, %s655
    %p667 = scmp.eq.s32.totalorder %s74, 3
    %p668 = por %p666, %p667
    %p670 = scmp.ne.s32.totalorder %s655, %s669
    %p671 = scmp.eq.s32.totalorder %s74, 0
    %p672 = por %p670, %p671
    %s674 = sadd.s32 %s673, 1
    %p677 = scmp.eq.s32.totalorder %s68, 3
    %p678 = scmp.ne.s32.totalorder %s673, %s675
    %p679 = scmp.eq.s32.totalorder %s68, 0
    %p680 = por %p678, %p679
    %p681 = scmp.ne.s32.totalorder %s673, %s675
    %p682 = scmp.eq.s32.totalorder %s73, 3
    %p683 = por %p681, %p682
    %p684 = scmp.ne.s32.totalorder %s675, %s676
    %p685 = scmp.eq.s32.totalorder %s73, 0
    %p686 = por %p684, %p685
    %p687 = scmp.ne.s32.totalorder %s675, %s676
    %p688 = scmp.eq.s32.totalorder %s74, 3
    %p689 = por %p687, %p688
    %p691 = scmp.ne.s32.totalorder %s676, %s690
    %p692 = scmp.eq.s32.totalorder %s74, 0
    %p693 = por %p691, %p692
    %s694 = smul.u32 %s75, 2
    %s695 = sadd.s32 %s694, %s76
    %s696 = smul.u32 %s87, 2
    %s697 = sadd.s32 %s696, %s83
    %s698 = ssub.s32 %s695, %s697
    %p699 = scmp.eq.s32.totalorder %s698, 0
    %s701 = sadd.s32 %s700, 1
    %s702 = scalar_select %p699, %s700, %s701
    %p705 = pneg %p699
    %p706 = scmp.eq.s32.totalorder %s68, 3
    %p707 = por %p705, %p706
    %p708 = scmp.ne.s32.totalorder %s700, %s703
    %p709 = scmp.eq.s32.totalorder %s68, 0
    %p710 = por %p708, %p709
    %p711 = scmp.ne.s32.totalorder %s700, %s703
    %p712 = scmp.eq.s32.totalorder %s73, 3
    %p713 = por %p711, %p712
    %p714 = scmp.ne.s32.totalorder %s703, %s704
    %p715 = scmp.eq.s32.totalorder %s73, 0
    %p716 = por %p714, %p715
    %p717 = scmp.ne.s32.totalorder %s703, %s704
    %p718 = scmp.eq.s32.totalorder %s74, 3
    %p719 = por %p717, %p718
    %p721 = scmp.ne.s32.totalorder %s704, %s720
    %p722 = scmp.eq.s32.totalorder %s74, 0
    %p723 = por %p721, %p722
    %s724 = ssub.s32 %s75, %s87
    %p725 = scmp.eq.s32.totalorder %s724, 0
    %s727 = sadd.s32 %s726, 1
    %s728 = scalar_select %p725, %s726, %s727
    %p731 = pneg %p725
    %p732 = scmp.eq.s32.totalorder %s68, 3
    %p733 = por %p731, %p732
    %p734 = scmp.ne.s32.totalorder %s726, %s729
    %p735 = scmp.eq.s32.totalorder %s68, 0
    %p736 = por %p734, %p735
    %p737 = scmp.ne.s32.totalorder %s726, %s729
    %p738 = scmp.eq.s32.totalorder %s73, 3
    %p739 = por %p737, %p738
    %p740 = scmp.ne.s32.totalorder %s729, %s730
    %p741 = scmp.eq.s32.totalorder %s73, 0
    %p742 = por %p740, %p741
    %p743 = scmp.ne.s32.totalorder %s729, %s730
    %p744 = scmp.eq.s32.totalorder %s74, 3
    %p745 = por %p743, %p744
    %p747 = scmp.ne.s32.totalorder %s730, %s746
    %p748 = scmp.eq.s32.totalorder %s74, 0
    %p749 = por %p747, %p748
    %p750 = scmp.le.s32.totalorder 1, %s68
    %p751 = scmp.lt.s32.totalorder %s68, 5
    %p752 = pnand %p750, %p751
    %p753 = pneg %p752
    // Predicated region
    $region9: #{node_edge_net_forward.8} parent=5 // pred_check
      _
    $region10: #{node_edge_net_forward.8} parent=5 // pred_check_branch
      %755 = sbr.rel (%p752) target = $region12
    $region11: #{node_edge_net_forward.8} parent=5 // pred_region
      %s756 = ssub.s32 %s68, 1
      // Predicated region
      $region13: #{node_edge_net_forward.8} parent=11 // pred_check
        %p757 = pneg %p161
      $region14: #{node_edge_net_forward.8} parent=11 // pred_check_branch
        %759 = sbr.rel (%p757) target = $region16
      $region15: #{node_edge_net_forward.8} parent=11 // pred_region
        _
      $region16: #{node_edge_net_forward.8} parent=11 // pred_fallthru
        _
      // Predicated region
      $region17: #{node_edge_net_forward.8} parent=11 // pred_check
        %p760 = pneg %p182
      $region18: #{node_edge_net_forward.8} parent=11 // pred_check_branch
        %762 = sbr.rel (%p760) target = $region20
      $region19: #{node_edge_net_forward.8} parent=11 // pred_region
        _
      $region20: #{node_edge_net_forward.8} parent=11 // pred_fallthru
        _
      // Predicated region
      $region21: #{node_edge_net_forward.8} parent=11 // pred_check
        %p763 = pneg %p203
      $region22: #{node_edge_net_forward.8} parent=11 // pred_check_branch
        %765 = sbr.rel (%p763) target = $region24
      $region23: #{node_edge_net_forward.8} parent=11 // pred_region
        _
      $region24: #{node_edge_net_forward.8} parent=11 // pred_fallthru
        _
      // Predicated region
      $region25: #{node_edge_net_forward.8} parent=11 // pred_check
        %p766 = pneg %p224
      $region26: #{node_edge_net_forward.8} parent=11 // pred_check_branch
        %768 = sbr.rel (%p766) target = $region28
      $region27: #{node_edge_net_forward.8} parent=11 // pred_region
        _
      $region28: #{node_edge_net_forward.8} parent=11 // pred_fallthru
        _
      // Predicated region
      $region29: #{node_edge_net_forward.8} parent=11 // pred_check
        %p769 = pneg %p245
      $region30: #{node_edge_net_forward.8} parent=11 // pred_check_branch
        %771 = sbr.rel (%p769) target = $region32
      $region31: #{node_edge_net_forward.8} parent=11 // pred_region
        _
      $region32: #{node_edge_net_forward.8} parent=11 // pred_fallthru
        _
      // Predicated region
      $region33: #{node_edge_net_forward.8} parent=11 // pred_check
        %p772 = pneg %p266
      $region34: #{node_edge_net_forward.8} parent=11 // pred_check_branch
        %774 = sbr.rel (%p772) target = $region36
      $region35: #{node_edge_net_forward.8} parent=11 // pred_region
        _
      $region36: #{node_edge_net_forward.8} parent=11 // pred_fallthru
        _
      // Predicated region
      $region37: #{node_edge_net_forward.8} parent=11 // pred_check
        %p775 = pneg %p287
      $region38: #{node_edge_net_forward.8} parent=11 // pred_check_branch
        %777 = sbr.rel (%p775) target = $region40
      $region39: #{node_edge_net_forward.8} parent=11 // pred_region
        _
      $region40: #{node_edge_net_forward.8} parent=11 // pred_fallthru
        _
      // Predicated region
      $region41: #{node_edge_net_forward.8} parent=11 // pred_check
        %p778 = pneg %p308
      $region42: #{node_edge_net_forward.8} parent=11 // pred_check_branch
        %780 = sbr.rel (%p778) target = $region44
      $region43: #{node_edge_net_forward.8} parent=11 // pred_region
        _
      $region44: #{node_edge_net_forward.8} parent=11 // pred_fallthru
        _
      // Predicated region
      $region45: #{node_edge_net_forward.8} parent=11 // pred_check
        %p781 = pneg %p329
      $region46: #{node_edge_net_forward.8} parent=11 // pred_check_branch
        %783 = sbr.rel (%p781) target = $region48
      $region47: #{node_edge_net_forward.8} parent=11 // pred_region
        _
      $region48: #{node_edge_net_forward.8} parent=11 // pred_fallthru
        _
      // Predicated region
      $region49: #{node_edge_net_forward.8} parent=11 // pred_check
        %p784 = pneg %p350
      $region50: #{node_edge_net_forward.8} parent=11 // pred_check_branch
        %786 = sbr.rel (%p784) target = $region52
      $region51: #{node_edge_net_forward.8} parent=11 // pred_region
        _
      $region52: #{node_edge_net_forward.8} parent=11 // pred_fallthru
        _
      // Predicated region
      $region53: #{node_edge_net_forward.8} parent=11 // pred_check
        %p787 = pneg %p371
      $region54: #{node_edge_net_forward.8} parent=11 // pred_check_branch
        %789 = sbr.rel (%p787) target = $region56
      $region55: #{node_edge_net_forward.8} parent=11 // pred_region
        _
      $region56: #{node_edge_net_forward.8} parent=11 // pred_fallthru
        _
      // Predicated region
      $region57: #{node_edge_net_forward.8} parent=11 // pred_check
        %p790 = pneg %p392
      $region58: #{node_edge_net_forward.8} parent=11 // pred_check_branch
        %792 = sbr.rel (%p790) target = $region60
      $region59: #{node_edge_net_forward.8} parent=11 // pred_region
        _
      $region60: #{node_edge_net_forward.8} parent=11 // pred_fallthru
        _
      // Predicated region
      $region61: #{node_edge_net_forward.8} parent=11 // pred_check
        %p793 = pneg %p413
      $region62: #{node_edge_net_forward.8} parent=11 // pred_check_branch
        %795 = sbr.rel (%p793) target = $region64
      $region63: #{node_edge_net_forward.8} parent=11 // pred_region
        _
      $region64: #{node_edge_net_forward.8} parent=11 // pred_fallthru
        _
      // Predicated region
      $region65: #{node_edge_net_forward.8} parent=11 // pred_check
        %p796 = pneg %p434
      $region66: #{node_edge_net_forward.8} parent=11 // pred_check_branch
        %798 = sbr.rel (%p796) target = $region68
      $region67: #{node_edge_net_forward.8} parent=11 // pred_region
        _
      $region68: #{node_edge_net_forward.8} parent=11 // pred_fallthru
        _
      // Predicated region
      $region69: #{node_edge_net_forward.8} parent=11 // pred_check
        %p799 = pneg %p455
      $region70: #{node_edge_net_forward.8} parent=11 // pred_check_branch
        %801 = sbr.rel (%p799) target = $region72
      $region71: #{node_edge_net_forward.8} parent=11 // pred_region
        _
      $region72: #{node_edge_net_forward.8} parent=11 // pred_fallthru
        _
      // Predicated region
      $region73: #{node_edge_net_forward.8} parent=11 // pred_check
        %p802 = pneg %p476
      $region74: #{node_edge_net_forward.8} parent=11 // pred_check_branch
        %804 = sbr.rel (%p802) target = $region76
      $region75: #{node_edge_net_forward.8} parent=11 // pred_region
        _
      $region76: #{node_edge_net_forward.8} parent=11 // pred_fallthru
        _
      // Predicated region
      $region77: #{node_edge_net_forward.8} parent=11 // pred_check
        %p805 = pneg %p497
      $region78: #{node_edge_net_forward.8} parent=11 // pred_check_branch
        %807 = sbr.rel (%p805) target = $region80
      $region79: #{node_edge_net_forward.8} parent=11 // pred_region
        _
      $region80: #{node_edge_net_forward.8} parent=11 // pred_fallthru
        _
      // Predicated region
      $region81: #{node_edge_net_forward.8} parent=11 // pred_check
        %p808 = pneg %p518
      $region82: #{node_edge_net_forward.8} parent=11 // pred_check_branch
        %810 = sbr.rel (%p808) target = $region84
      $region83: #{node_edge_net_forward.8} parent=11 // pred_region
        _
      $region84: #{node_edge_net_forward.8} parent=11 // pred_fallthru
        _
      // Predicated region
      $region85: #{node_edge_net_forward.8} parent=11 // pred_check
        %p811 = pneg %p539
      $region86: #{node_edge_net_forward.8} parent=11 // pred_check_branch
        %813 = sbr.rel (%p811) target = $region88
      $region87: #{node_edge_net_forward.8} parent=11 // pred_region
        _
      $region88: #{node_edge_net_forward.8} parent=11 // pred_fallthru
        _
      // Predicated region
      $region89: #{node_edge_net_forward.8} parent=11 // pred_check
        %p814 = pneg %p560
      $region90: #{node_edge_net_forward.8} parent=11 // pred_check_branch
        %816 = sbr.rel (%p814) target = $region92
      $region91: #{node_edge_net_forward.8} parent=11 // pred_region
        _
      $region92: #{node_edge_net_forward.8} parent=11 // pred_fallthru
        _
      // Predicated region
      $region93: #{node_edge_net_forward.8} parent=11 // pred_check
        %p817 = pneg %p581
      $region94: #{node_edge_net_forward.8} parent=11 // pred_check_branch
        %819 = sbr.rel (%p817) target = $region96
      $region95: #{node_edge_net_forward.8} parent=11 // pred_region
        _
      $region96: #{node_edge_net_forward.8} parent=11 // pred_fallthru
        _
      // Predicated region
      $region97: #{node_edge_net_forward.8} parent=11 // pred_check
        %p820 = pneg %p602
      $region98: #{node_edge_net_forward.8} parent=11 // pred_check_branch
        %822 = sbr.rel (%p820) target = $region100
      $region99: #{node_edge_net_forward.8} parent=11 // pred_region
        _
      $region100: #{node_edge_net_forward.8} parent=11 // pred_fallthru
        _
      // Predicated region
      $region101: #{node_edge_net_forward.8} parent=11 // pred_check
        %p823 = pneg %p623
      $region102: #{node_edge_net_forward.8} parent=11 // pred_check_branch
        %825 = sbr.rel (%p823) target = $region104
      $region103: #{node_edge_net_forward.8} parent=11 // pred_region
        _
      $region104: #{node_edge_net_forward.8} parent=11 // pred_fallthru
        _
      // Predicated region
      $region105: #{node_edge_net_forward.8} parent=11 // pred_check
        %p826 = pneg %p644
      $region106: #{node_edge_net_forward.8} parent=11 // pred_check_branch
        %828 = sbr.rel (%p826) target = $region108
      $region107: #{node_edge_net_forward.8} parent=11 // pred_region
        _
      $region108: #{node_edge_net_forward.8} parent=11 // pred_fallthru
        _
      // Predicated region
      $region109: #{node_edge_net_forward.8} parent=11 // pred_check
        %p829 = pneg %p665
      $region110: #{node_edge_net_forward.8} parent=11 // pred_check_branch
        %831 = sbr.rel (%p829) target = $region112
      $region111: #{node_edge_net_forward.8} parent=11 // pred_region
        _
      $region112: #{node_edge_net_forward.8} parent=11 // pred_fallthru
        _
      // Predicated region
      $region113: #{node_edge_net_forward.8} parent=11 // pred_check
        %p832 = pneg %p686
      $region114: #{node_edge_net_forward.8} parent=11 // pred_check_branch
        %834 = sbr.rel (%p832) target = $region116
      $region115: #{node_edge_net_forward.8} parent=11 // pred_region
        _
      $region116: #{node_edge_net_forward.8} parent=11 // pred_fallthru
        _
    $region12: #{node_edge_net_forward.8} parent=5 // pred_fallthru
      _
    %p835 = scmp.lt.s32.totalorder %s68, 4
    // Predicated region
    $region117: #{node_edge_net_forward.8} parent=5 // pred_check
      %p836 = pneg %p835
    $region118: #{node_edge_net_forward.8} parent=5 // pred_check_branch
      %838 = sbr.rel (%p836) target = $region120
    $region119: #{node_edge_net_forward.8} parent=5 // pred_region
      // Predicated region
      $region121: #{node_edge_net_forward.8} parent=119 // pred_check
        %p839 = pneg %p104
      $region122: #{node_edge_net_forward.8} parent=119 // pred_check_branch
        %841 = sbr.rel (%p839) target = $region124
      $region123: #{node_edge_net_forward.8} parent=119 // pred_region
        %s842 = smul.u32 %s75, 2
        %s843 = sadd.s32 %s842, %s76
        %p844 = scmp.lt.s32.totalorder %s843, 3
        %s845 = scalar_select %p844, %s843, 3
        %s846 = smul.addr %s845, 8
        %s847 = scalar_lea.vmem %s1, %s846
        %s848 = smul.u32 %s75, 2
        %s849 = sadd.s32 %s848, %s76
      $region124: #{node_edge_net_forward.8} parent=119 // pred_fallthru
        _
      // Predicated region
      $region125: #{node_edge_net_forward.8} parent=119 // pred_check
        %p850 = pneg %p134
      $region126: #{node_edge_net_forward.8} parent=119 // pred_check_branch
        %852 = sbr.rel (%p850) target = $region128
      $region127: #{node_edge_net_forward.8} parent=119 // pred_region
        %s853 = smul.u32 %s75, 2
        %s854 = sadd.s32 %s853, %s76
        %p855 = scmp.lt.s32.totalorder %s854, 3
        %s856 = scalar_select %p855, %s854, 3
        %s857 = smul.addr %s856, 8
        %s858 = scalar_lea.vmem %s3, %s857
        %s859 = smul.u32 %s75, 2
        %s860 = sadd.s32 %s859, %s76
      $region128: #{node_edge_net_forward.8} parent=119 // pred_fallthru
        _
    $region120: #{node_edge_net_forward.8} parent=5 // pred_fallthru
      _
    %p861 = scmp.le.s32.totalorder 1, %s68
    %p862 = scmp.lt.s32.totalorder %s68, 5
    %p863 = pnand %p861, %p862
    %p864 = pneg %p863
    // Predicated region
    $region129: #{node_edge_net_forward.8} parent=5 // pred_check
      _
    $region130: #{node_edge_net_forward.8} parent=5 // pred_check_branch
      %866 = sbr.rel (%p863) target = $region132
    $region131: #{node_edge_net_forward.8} parent=5 // pred_region
      %s867 = ssub.s32 %s68, 1
      %s868 = smul.u32 %s77, 2
      %s869 = sadd.s32 %s868, %s78
      %p870 = scmp.lt.s32.totalorder %s869, 3
      %s871 = scalar_select %p870, %s869, 3
      %s872 = smul.addr %s871, 8
      %s873 = scalar_lea.vmem %s1, %s872
      %p874 = pneg %p110
      %p875 = pneg %p107
      %s876 = smul.u32 %s77, 2
      %s877 = sadd.s32 %s876, %s78
      %p878 = scmp.lt.s32.totalorder %s877, 3
      %s879 = scalar_select %p878, %s877, 3
      %s880 = smul.addr %s879, 8
      %s881 = scalar_lea.vmem %s3, %s880
      %p882 = pneg %p140
      %p883 = pneg %p137
      %p884 = pneg %p161
      %p885 = pneg %p158
      %p886 = pneg %p182
      %p887 = pneg %p179
      %p888 = pneg %p203
      %p889 = pneg %p200
      %p890 = pneg %p224
      %p891 = pneg %p221
      %p892 = pneg %p245
      %p893 = pneg %p242
      %p894 = pneg %p266
      %p895 = pneg %p263
      %p896 = pneg %p287
      %p897 = pneg %p284
      %p898 = pneg %p308
      %p899 = pneg %p305
      %p900 = pneg %p329
      %p901 = pneg %p326
      %p902 = pneg %p350
      %p903 = pneg %p347
      %p904 = pneg %p371
      %p905 = pneg %p368
      %p906 = pneg %p392
      %p907 = pneg %p389
      %p908 = pneg %p413
      %p909 = pneg %p410
      %p910 = pneg %p434
      %p911 = pneg %p431
      %p912 = pneg %p455
      %p913 = pneg %p452
      %p914 = pneg %p476
      %p915 = pneg %p473
      %p916 = pneg %p497
      %p917 = pneg %p494
      %p918 = pneg %p518
      %p919 = pneg %p515
      %p920 = pneg %p539
      %p921 = pneg %p536
      %p922 = pneg %p560
      %p923 = pneg %p557
      %p924 = pneg %p581
      %p925 = pneg %p578
      %p926 = pneg %p602
      %p927 = pneg %p599
      %p928 = pneg %p623
      %p929 = pneg %p620
      %p930 = pneg %p644
      %p931 = pneg %p641
      %p932 = pneg %p665
      %p933 = pneg %p662
      %p934 = pneg %p686
      %p935 = pneg %p683
      %p936 = pneg %p716
      %p937 = pneg %p713
      %s938 = smul.u32 %s77, 2
      %s939 = sadd.s32 %s938, %s78
      %p940 = scmp.lt.s32.totalorder %s939, 3
      %s941 = scalar_select %p940, %s939, 3
      %s942 = smul.addr %s941, 8
      %s943 = scalar_lea.vmem %s57, %s942
      %p944 = pneg %p742
      %p945 = pneg %p739
      %p946 = scmp.lt.s32.totalorder %s77, 1
      %s947 = scalar_select %p946, %s77, 1
      %s948 = smul.addr %s947, 8
      %s949 = scalar_lea.vmem %s59, %s948
      %s950 = smul.u32 %s77, 2
      %s951 = sadd.s32 %s950, %s78
      %p952 = scmp.lt.s32.totalorder %s951, 3
      %s953 = scalar_select %p952, %s951, 3
      %s954 = smul.addr %s953, 8
      %s955 = scalar_lea.vmem %s1, %s954
      %s956 = smul.u32 %s77, 2
      %s957 = sadd.s32 %s956, %s78
      %s958 = smul.u32 %s77, 2
      %s959 = sadd.s32 %s958, %s78
      %p960 = scmp.lt.s32.totalorder %s959, 3
      %s961 = scalar_select %p960, %s959, 3
      %s962 = smul.addr %s961, 8
      %s963 = scalar_lea.vmem %s3, %s962
      %s964 = smul.u32 %s77, 2
      %s965 = sadd.s32 %s964, %s78
      %s966 = smul.u32 %s77, 2
      %s967 = sadd.s32 %s966, %s78
      %p968 = scmp.lt.s32.totalorder %s967, 3
      %s969 = scalar_select %p968, %s967, 3
      %s970 = smul.addr %s969, 8
      %s971 = scalar_lea.vmem %s57, %s970
      %s972 = smul.u32 %s77, 2
      %s973 = sadd.s32 %s972, %s78
      %p974 = scmp.lt.s32.totalorder %s77, 1
      %s975 = scalar_select %p974, %s77, 1
      %s976 = smul.addr %s975, 8
      %s977 = scalar_lea.vmem %s59, %s976
      %p978 = scmp.eq.s32.totalorder %s78, 0
      // Predicated region
      $region133: #{node_edge_net_forward.8} parent=131 // pred_check
        %p979 = pneg %p978
      $region134: #{node_edge_net_forward.8} parent=131 // pred_check_branch
        %981 = sbr.rel (%p979) target = $region136
      $region135: #{node_edge_net_forward.8} parent=131 // pred_region
        %982 = vst [vmem:[%s977] sm:$0xff] 0.0
      $region136: #{node_edge_net_forward.8} parent=131 // pred_fallthru
        _
      %v983 = vlaneseq
      %v984 = vand.u32 %v983, 127
      %v985 = vld [vmem:[%s963] sm:$0xff]
      %986 = vset.pattern.permute.xlu0 0
      %987 = vperm.xlu0 %986, %v985
      %v988 = vpop.permute.xlu0 %987
      %vm989 = vcmp.eq.s32.totalorder %v984, %v988
      %v990 = vsel %vm989, 1, 0
      %v991 = vcvt.s32.f32 %v990
      %992 = vset.pattern.permute.xlu0 1
      %993 = vperm.xlu0 %992, %v985
      %v994 = vpop.permute.xlu0 %993
      %vm995 = vcmp.eq.s32.totalorder %v984, %v994
      %v996 = vsel %vm995, 1, 0
      %v997 = vcvt.s32.f32 %v996
      %v998 = vld [vmem:[%s5] sm:$0xff]
      %v999 = vld [vmem:[%s5 + $0x8] sm:$0xff]
      %v1000 = vld [vmem:[%s5 + $0x10] sm:$0xff]
      %v1001 = vld [vmem:[%s5 + $0x18] sm:$0xff]
      %v1002 = vld [vmem:[%s5 + $0x20] sm:$0xff]
      %v1003 = vld [vmem:[%s5 + $0x28] sm:$0xff]
      %v1004 = vld [vmem:[%s5 + $0x30] sm:$0xff]
      %v1005 = vld [vmem:[%s5 + $0x38] sm:$0xff]
      %v1006 = vld [vmem:[%s5 + $0x40] sm:$0xff]
      %v1007 = vld [vmem:[%s5 + $0x48] sm:$0xff]
      %v1008 = vld [vmem:[%s5 + $0x50] sm:$0xff]
      %v1009 = vld [vmem:[%s5 + $0x58] sm:$0xff]
      %v1010 = vld [vmem:[%s5 + $0x60] sm:$0xff]
      %v1011 = vld [vmem:[%s5 + $0x68] sm:$0xff]
      %v1012 = vld [vmem:[%s5 + $0x70] sm:$0xff]
      %v1013 = vld [vmem:[%s5 + $0x78] sm:$0xff]
      %1014 = vmatprep.subr.mxu0 0.0
      %1015 = vmatpush1.msra.mxu0 %v998
      %1016 = vmatprep.subr.mxu0 0.0
      %1017 = vmatpush1.msra.mxu0 %v999
      %1018 = vmatprep.subr.mxu0 0.0
      %1019 = vmatpush1.msra.mxu0 %v1000
      %1020 = vmatprep.subr.mxu0 0.0
      %1021 = vmatpush1.msra.mxu0 %v1001
      %1022 = vmatprep.subr.mxu0 0.0
      %1023 = vmatpush1.msra.mxu0 %v1002
      %1024 = vmatprep.subr.mxu0 0.0
      %1025 = vmatpush1.msra.mxu0 %v1003
      %1026 = vmatprep.subr.mxu0 0.0
      %1027 = vmatpush1.msra.mxu0 %v1004
      %1028 = vmatprep.subr.mxu0 0.0
      %1029 = vmatpush1.msra.mxu0 %v1005
      %1030 = vmatprep.subr.mxu0 0.0
      %1031 = vmatpush1.msra.mxu0 %v1006
      %1032 = vmatprep.subr.mxu0 0.0
      %1033 = vmatpush1.msra.mxu0 %v1007
      %1034 = vmatprep.subr.mxu0 0.0
      %1035 = vmatpush1.msra.mxu0 %v1008
      %1036 = vmatprep.subr.mxu0 0.0
      %1037 = vmatpush1.msra.mxu0 %v1009
      %1038 = vmatprep.subr.mxu0 0.0
      %1039 = vmatpush1.msra.mxu0 %v1010
      %1040 = vmatprep.subr.mxu0 0.0
      %1041 = vmatpush1.msra.mxu0 %v1011
      %1042 = vmatprep.subr.mxu0 0.0
      %1043 = vmatpush1.msra.mxu0 %v1012
      %1044 = vmatprep.subr.mxu0 0.0
      %1045 = vmatpush1.msra.mxu0 %v1013
      %1046 = vmatprep.subr.mxu0 0.0
      %1047 = vmatpush1.msra.mxu0 0.0
      %1048 = vmatprep.subr.mxu0 0.0
      %1049 = vmatpush1.msra.mxu0 0.0
      %1050 = vmatprep.subr.mxu0 0.0
      %1051 = vmatpush1.msra.mxu0 0.0
      %1052 = vmatprep.subr.mxu0 0.0
      %1053 = vmatpush1.msra.mxu0 0.0
      %1054 = vmatprep.subr.mxu0 0.0
      %1055 = vmatpush1.msra.mxu0 0.0
      %1056 = vmatprep.subr.mxu0 0.0
      %1057 = vmatpush1.msra.mxu0 0.0
      %1058 = vmatprep.subr.mxu0 0.0
      %1059 = vmatpush1.msra.mxu0 0.0
      %1060 = vmatprep.subr.mxu0 0.0
      %1061 = vmatpush1.msra.mxu0 0.0
      %1062 = vmatprep.subr.mxu0 0.0
      %1063 = vmatpush1.msra.mxu0 0.0
      %1064 = vmatprep.subr.mxu0 0.0
      %1065 = vmatpush1.msra.mxu0 0.0
      %1066 = vmatprep.subr.mxu0 0.0
      %1067 = vmatpush1.msra.mxu0 0.0
      %1068 = vmatprep.subr.mxu0 0.0
      %1069 = vmatpush1.msra.mxu0 0.0
      %1070 = vmatprep.subr.mxu0 0.0
      %1071 = vmatpush1.msra.mxu0 0.0
      %1072 = vmatprep.subr.mxu0 0.0
      %1073 = vmatpush1.msra.mxu0 0.0
      %1074 = vmatprep.subr.mxu0 0.0
      %1075 = vmatpush1.msra.mxu0 0.0
      %1076 = vmatprep.subr.mxu0 0.0
      %1077 = vmatpush1.msra.mxu0 0.0
      %1078 = vmatprep.mubr.f32.mxu0 0.0
      %1079 = vmatmul.mubr.f32.gmra.mrb[0].mxu0 %v991
      %v1080 = vpop.f32.mrb[0].mxu0
      %v1081 = vadd.f32 0.0, %v1080
      %v1082 = vpop.f32.mrb[0].mxu0
      %1083 = vdwg.mxu0
      %v1084 = vld [vmem:[%s7] sm:$0xff]
      %v1085 = vld [vmem:[%s7 + $0x8] sm:$0xff]
      %v1086 = vld [vmem:[%s7 + $0x10] sm:$0xff]
      %v1087 = vld [vmem:[%s7 + $0x18] sm:$0xff]
      %v1088 = vld [vmem:[%s7 + $0x20] sm:$0xff]
      %v1089 = vld [vmem:[%s7 + $0x28] sm:$0xff]
      %v1090 = vld [vmem:[%s7 + $0x30] sm:$0xff]
      %v1091 = vld [vmem:[%s7 + $0x38] sm:$0xff]
      %v1092 = vld [vmem:[%s7 + $0x40] sm:$0xff]
      %v1093 = vld [vmem:[%s7 + $0x48] sm:$0xff]
      %v1094 = vld [vmem:[%s7 + $0x50] sm:$0xff]
      %v1095 = vld [vmem:[%s7 + $0x58] sm:$0xff]
      %v1096 = vld [vmem:[%s7 + $0x60] sm:$0xff]
      %v1097 = vld [vmem:[%s7 + $0x68] sm:$0xff]
      %v1098 = vld [vmem:[%s7 + $0x70] sm:$0xff]
      %v1099 = vld [vmem:[%s7 + $0x78] sm:$0xff]
      %1100 = vmatprep.subr.mxu0 0.0
      %1101 = vmatpush1.msra.mxu0 %v1084
      %1102 = vmatprep.subr.mxu0 0.0
      %1103 = vmatpush1.msra.mxu0 %v1085
      %1104 = vmatprep.subr.mxu0 0.0
      %1105 = vmatpush1.msra.mxu0 %v1086
      %1106 = vmatprep.subr.mxu0 0.0
      %1107 = vmatpush1.msra.mxu0 %v1087
      %1108 = vmatprep.subr.mxu0 0.0
      %1109 = vmatpush1.msra.mxu0 %v1088
      %1110 = vmatprep.subr.mxu0 0.0
      %1111 = vmatpush1.msra.mxu0 %v1089
      %1112 = vmatprep.subr.mxu0 0.0
      %1113 = vmatpush1.msra.mxu0 %v1090
      %1114 = vmatprep.subr.mxu0 0.0
      %1115 = vmatpush1.msra.mxu0 %v1091
      %1116 = vmatprep.subr.mxu0 0.0
      %1117 = vmatpush1.msra.mxu0 %v1092
      %1118 = vmatprep.subr.mxu0 0.0
      %1119 = vmatpush1.msra.mxu0 %v1093
      %1120 = vmatprep.subr.mxu0 0.0
      %1121 = vmatpush1.msra.mxu0 %v1094
      %1122 = vmatprep.subr.mxu0 0.0
      %1123 = vmatpush1.msra.mxu0 %v1095
      %1124 = vmatprep.subr.mxu0 0.0
      %1125 = vmatpush1.msra.mxu0 %v1096
      %1126 = vmatprep.subr.mxu0 0.0
      %1127 = vmatpush1.msra.mxu0 %v1097
      %1128 = vmatprep.subr.mxu0 0.0
      %1129 = vmatpush1.msra.mxu0 %v1098
      %1130 = vmatprep.subr.mxu0 0.0
      %1131 = vmatpush1.msra.mxu0 %v1099
      %1132 = vmatprep.subr.mxu0 0.0
      %1133 = vmatpush1.msra.mxu0 0.0
      %1134 = vmatprep.subr.mxu0 0.0
      %1135 = vmatpush1.msra.mxu0 0.0
      %1136 = vmatprep.subr.mxu0 0.0
      %1137 = vmatpush1.msra.mxu0 0.0
      %1138 = vmatprep.subr.mxu0 0.0
      %1139 = vmatpush1.msra.mxu0 0.0
      %1140 = vmatprep.subr.mxu0 0.0
      %1141 = vmatpush1.msra.mxu0 0.0
      %1142 = vmatprep.subr.mxu0 0.0
      %1143 = vmatpush1.msra.mxu0 0.0
      %1144 = vmatprep.subr.mxu0 0.0
      %1145 = vmatpush1.msra.mxu0 0.0
      %1146 = vmatprep.subr.mxu0 0.0
      %1147 = vmatpush1.msra.mxu0 0.0
      %1148 = vmatprep.subr.mxu0 0.0
      %1149 = vmatpush1.msra.mxu0 0.0
      %1150 = vmatprep.subr.mxu0 0.0
      %1151 = vmatpush1.msra.mxu0 0.0
      %1152 = vmatprep.subr.mxu0 0.0
      %1153 = vmatpush1.msra.mxu0 0.0
      %1154 = vmatprep.subr.mxu0 0.0
      %1155 = vmatpush1.msra.mxu0 0.0
      %1156 = vmatprep.subr.mxu0 0.0
      %1157 = vmatpush1.msra.mxu0 0.0
      %1158 = vmatprep.subr.mxu0 0.0
      %1159 = vmatpush1.msra.mxu0 0.0
      %1160 = vmatprep.subr.mxu0 0.0
      %1161 = vmatpush1.msra.mxu0 0.0
      %1162 = vmatprep.subr.mxu0 0.0
      %1163 = vmatpush1.msra.mxu0 0.0
      %1164 = vmatprep.mubr.f32.mxu0 0.0
      %1165 = vmatmul.mubr.f32.gmra.mrb[0].mxu0 %v997
      %v1166 = vpop.f32.mrb[0].mxu0
      %v1167 = vadd.f32 0.0, %v1166
      %v1168 = vpop.f32.mrb[0].mxu0
      %1169 = vdwg.mxu0
      %v1170 = vld [vmem:[%s955] sm:$0xff]
      %v1171 = vadd.f32 %v1081, %v1167
      %v1172 = vld [vmem:[%s9] sm:$0xff]
      %v1173 = vld [vmem:[%s9 + $0x8] sm:$0xff]
      %v1174 = vld [vmem:[%s9 + $0x10] sm:$0xff]
      %v1175 = vld [vmem:[%s9 + $0x18] sm:$0xff]
      %vm1176 = vcmask 261120
      %v1178 = vsel %vm1176, %v1081, 0
      %1180 = vmatprep.subr.mxu0 0.0
      %1181 = vmatpush1.msra.mxu0 %v1172
      %1182 = vmatprep.subr.mxu0 0.0
      %1183 = vmatpush1.msra.mxu0 %v1173
      %1184 = vmatprep.subr.mxu0 0.0
      %1185 = vmatpush1.msra.mxu0 %v1174
      %1186 = vmatprep.subr.mxu0 0.0
      %1187 = vmatpush1.msra.mxu0 %v1175
      %1188 = vmatprep.subr.mxu0 0.0
      %1189 = vmatpush1.msra.mxu0 0.0
      %1190 = vmatprep.subr.mxu0 0.0
      %1191 = vmatpush1.msra.mxu0 0.0
      %1192 = vmatprep.subr.mxu0 0.0
      %1193 = vmatpush1.msra.mxu0 0.0
      %1194 = vmatprep.subr.mxu0 0.0
      %1195 = vmatpush1.msra.mxu0 0.0
      %1196 = vmatprep.subr.mxu0 0.0
      %1197 = vmatpush1.msra.mxu0 0.0
      %1198 = vmatprep.subr.mxu0 0.0
      %1199 = vmatpush1.msra.mxu0 0.0
      %1200 = vmatprep.subr.mxu0 0.0
      %1201 = vmatpush1.msra.mxu0 0.0
      %1202 = vmatprep.subr.mxu0 0.0
      %1203 = vmatpush1.msra.mxu0 0.0
      %1204 = vmatprep.subr.mxu0 0.0
      %1205 = vmatpush1.msra.mxu0 0.0
      %1206 = vmatprep.subr.mxu0 0.0
      %1207 = vmatpush1.msra.mxu0 0.0
      %1208 = vmatprep.subr.mxu0 0.0
      %1209 = vmatpush1.msra.mxu0 0.0
      %1210 = vmatprep.subr.mxu0 0.0
      %1211 = vmatpush1.msra.mxu0 0.0
      %1212 = vmatprep.subr.mxu0 0.0
      %1213 = vmatpush1.msra.mxu0 0.0
      %1214 = vmatprep.subr.mxu0 0.0
      %1215 = vmatpush1.msra.mxu0 0.0
      %1216 = vmatprep.subr.mxu0 0.0
      %1217 = vmatpush1.msra.mxu0 0.0
      %1218 = vmatprep.subr.mxu0 0.0
      %1219 = vmatpush1.msra.mxu0 0.0
      %1220 = vmatprep.subr.mxu0 0.0
      %1221 = vmatpush1.msra.mxu0 0.0
      %1222 = vmatprep.subr.mxu0 0.0
      %1223 = vmatpush1.msra.mxu0 0.0
      %1224 = vmatprep.subr.mxu0 0.0
      %1225 = vmatpush1.msra.mxu0 0.0
      %1226 = vmatprep.subr.mxu0 0.0
      %1227 = vmatpush1.msra.mxu0 0.0
      %1228 = vmatprep.subr.mxu0 0.0
      %1229 = vmatpush1.msra.mxu0 0.0
      %1230 = vmatprep.subr.mxu0 0.0
      %1231 = vmatpush1.msra.mxu0 0.0
      %1232 = vmatprep.subr.mxu0 0.0
      %1233 = vmatpush1.msra.mxu0 0.0
      %1234 = vmatprep.subr.mxu0 0.0
      %1235 = vmatpush1.msra.mxu0 0.0
      %1236 = vmatprep.subr.mxu0 0.0
      %1237 = vmatpush1.msra.mxu0 0.0
      %1238 = vmatprep.subr.mxu0 0.0
      %1239 = vmatpush1.msra.mxu0 0.0
      %1240 = vmatprep.subr.mxu0 0.0
      %1241 = vmatpush1.msra.mxu0 0.0
      %1242 = vmatprep.subr.mxu0 0.0
      %1243 = vmatpush1.msra.mxu0 0.0
      %1244 = vmatprep.mubr.f32.mxu0 0.0
      %1245 = vmatmul.mubr.f32.gmra.mrb[0].mxu0 %v1178
      %v1246 = vpop.f32.mrb[0].mxu0
      %v1247 = vadd.f32 0.0, %v1246
      %v1248 = vpop.f32.mrb[0].mxu0
      %1249 = vdwg.mxu0
      %1251 = vrot.lane.b32.xlu0 %v1247, 64
      %v1252 = vpop.permute.xlu0 %1251
      %v1254 = vadd.f32 %v1171, %v1252
      %v1255 = vld [vmem:[%s11] sm:$0x1]
      %v1257 = vlaneseq
      %v1258 = vshrl.u32 %v1257, 7
      %v1259 = vsub.s32 0, %v1258
      %v1260 = vrot.slane %v1255, %v1259
      %1261 = vrot.lane.b32.xlu0 %v1260, 64
      %v1262 = vpop.permute.xlu0 %1261
      %v1264 = vadd.f32 %v1254, %v1262
      %v1265 = vld [vmem:[%s13] sm:$0xff]
      %v1266 = vld [vmem:[%s13 + $0x8] sm:$0xff]
      %v1267 = vld [vmem:[%s13 + $0x10] sm:$0xff]
      %v1268 = vld [vmem:[%s13 + $0x18] sm:$0xff]
      %v1270 = vsel %vm1176, %v1167, 0
      %1272 = vmatprep.subr.mxu0 0.0
      %1273 = vmatpush1.msra.mxu0 %v1265
      %1274 = vmatprep.subr.mxu0 0.0
      %1275 = vmatpush1.msra.mxu0 %v1266
      %1276 = vmatprep.subr.mxu0 0.0
      %1277 = vmatpush1.msra.mxu0 %v1267
      %1278 = vmatprep.subr.mxu0 0.0
      %1279 = vmatpush1.msra.mxu0 %v1268
      %1280 = vmatprep.subr.mxu0 0.0
      %1281 = vmatpush1.msra.mxu0 0.0
      %1282 = vmatprep.subr.mxu0 0.0
      %1283 = vmatpush1.msra.mxu0 0.0
      %1284 = vmatprep.subr.mxu0 0.0
      %1285 = vmatpush1.msra.mxu0 0.0
      %1286 = vmatprep.subr.mxu0 0.0
      %1287 = vmatpush1.msra.mxu0 0.0
      %1288 = vmatprep.subr.mxu0 0.0
      %1289 = vmatpush1.msra.mxu0 0.0
      %1290 = vmatprep.subr.mxu0 0.0
      %1291 = vmatpush1.msra.mxu0 0.0
      %1292 = vmatprep.subr.mxu0 0.0
      %1293 = vmatpush1.msra.mxu0 0.0
      %1294 = vmatprep.subr.mxu0 0.0
      %1295 = vmatpush1.msra.mxu0 0.0
      %1296 = vmatprep.subr.mxu0 0.0
      %1297 = vmatpush1.msra.mxu0 0.0
      %1298 = vmatprep.subr.mxu0 0.0
      %1299 = vmatpush1.msra.mxu0 0.0
      %1300 = vmatprep.subr.mxu0 0.0
      %1301 = vmatpush1.msra.mxu0 0.0
      %1302 = vmatprep.subr.mxu0 0.0
      %1303 = vmatpush1.msra.mxu0 0.0
      %1304 = vmatprep.subr.mxu0 0.0
      %1305 = vmatpush1.msra.mxu0 0.0
      %1306 = vmatprep.subr.mxu0 0.0
      %1307 = vmatpush1.msra.mxu0 0.0
      %1308 = vmatprep.subr.mxu0 0.0
      %1309 = vmatpush1.msra.mxu0 0.0
      %1310 = vmatprep.subr.mxu0 0.0
      %1311 = vmatpush1.msra.mxu0 0.0
      %1312 = vmatprep.subr.mxu0 0.0
      %1313 = vmatpush1.msra.mxu0 0.0
      %1314 = vmatprep.subr.mxu0 0.0
      %1315 = vmatpush1.msra.mxu0 0.0
      %1316 = vmatprep.subr.mxu0 0.0
      %1317 = vmatpush1.msra.mxu0 0.0
      %1318 = vmatprep.subr.mxu0 0.0
      %1319 = vmatpush1.msra.mxu0 0.0
      %1320 = vmatprep.subr.mxu0 0.0
      %1321 = vmatpush1.msra.mxu0 0.0
      %1322 = vmatprep.subr.mxu0 0.0
      %1323 = vmatpush1.msra.mxu0 0.0
      %1324 = vmatprep.subr.mxu0 0.0
      %1325 = vmatpush1.msra.mxu0 0.0
      %1326 = vmatprep.subr.mxu0 0.0
      %1327 = vmatpush1.msra.mxu0 0.0
      %1328 = vmatprep.subr.mxu0 0.0
      %1329 = vmatpush1.msra.mxu0 0.0
      %1330 = vmatprep.subr.mxu0 0.0
      %1331 = vmatpush1.msra.mxu0 0.0
      %1332 = vmatprep.subr.mxu0 0.0
      %1333 = vmatpush1.msra.mxu0 0.0
      %1334 = vmatprep.subr.mxu0 0.0
      %1335 = vmatpush1.msra.mxu0 0.0
      %1336 = vmatprep.mubr.f32.mxu0 0.0
      %1337 = vmatmul.mubr.f32.gmra.mrb[0].mxu0 %v1270
      %v1338 = vpop.f32.mrb[0].mxu0
      %v1339 = vadd.f32 0.0, %v1338
      %v1340 = vpop.f32.mrb[0].mxu0
      %1341 = vdwg.mxu0
      %1343 = vrot.lane.b32.xlu0 %v1339, 64
      %v1344 = vpop.permute.xlu0 %1343
      %v1346 = vadd.f32 %v1264, %v1344
      %v1347 = vld [vmem:[%s15] sm:$0x1]
      %v1349 = vlaneseq
      %v1350 = vshrl.u32 %v1349, 7
      %v1351 = vsub.s32 0, %v1350
      %v1352 = vrot.slane %v1347, %v1351
      %1353 = vrot.lane.b32.xlu0 %v1352, 64
      %v1354 = vpop.permute.xlu0 %1353
      %v1356 = vadd.f32 %v1346, %v1354
      %v1357 = vld [vmem:[%s17] sm:$0xff]
      %v1358 = vld [vmem:[%s17 + $0x8] sm:$0xff]
      %v1359 = vld [vmem:[%s17 + $0x10] sm:$0xff]
      %v1360 = vld [vmem:[%s17 + $0x18] sm:$0xff]
      %v1362 = vsel %vm1176, %v1170, 0
      %1364 = vmatprep.subr.mxu0 0.0
      %1365 = vmatpush1.msra.mxu0 %v1357
      %1366 = vmatprep.subr.mxu0 0.0
      %1367 = vmatpush1.msra.mxu0 %v1358
      %1368 = vmatprep.subr.mxu0 0.0
      %1369 = vmatpush1.msra.mxu0 %v1359
      %1370 = vmatprep.subr.mxu0 0.0
      %1371 = vmatpush1.msra.mxu0 %v1360
      %1372 = vmatprep.subr.mxu0 0.0
      %1373 = vmatpush1.msra.mxu0 0.0
      %1374 = vmatprep.subr.mxu0 0.0
      %1375 = vmatpush1.msra.mxu0 0.0
      %1376 = vmatprep.subr.mxu0 0.0
      %1377 = vmatpush1.msra.mxu0 0.0
      %1378 = vmatprep.subr.mxu0 0.0
      %1379 = vmatpush1.msra.mxu0 0.0
      %1380 = vmatprep.subr.mxu0 0.0
      %1381 = vmatpush1.msra.mxu0 0.0
      %1382 = vmatprep.subr.mxu0 0.0
      %1383 = vmatpush1.msra.mxu0 0.0
      %1384 = vmatprep.subr.mxu0 0.0
      %1385 = vmatpush1.msra.mxu0 0.0
      %1386 = vmatprep.subr.mxu0 0.0
      %1387 = vmatpush1.msra.mxu0 0.0
      %1388 = vmatprep.subr.mxu0 0.0
      %1389 = vmatpush1.msra.mxu0 0.0
      %1390 = vmatprep.subr.mxu0 0.0
      %1391 = vmatpush1.msra.mxu0 0.0
      %1392 = vmatprep.subr.mxu0 0.0
      %1393 = vmatpush1.msra.mxu0 0.0
      %1394 = vmatprep.subr.mxu0 0.0
      %1395 = vmatpush1.msra.mxu0 0.0
      %1396 = vmatprep.subr.mxu0 0.0
      %1397 = vmatpush1.msra.mxu0 0.0
      %1398 = vmatprep.subr.mxu0 0.0
      %1399 = vmatpush1.msra.mxu0 0.0
      %1400 = vmatprep.subr.mxu0 0.0
      %1401 = vmatpush1.msra.mxu0 0.0
      %1402 = vmatprep.subr.mxu0 0.0
      %1403 = vmatpush1.msra.mxu0 0.0
      %1404 = vmatprep.subr.mxu0 0.0
      %1405 = vmatpush1.msra.mxu0 0.0
      %1406 = vmatprep.subr.mxu0 0.0
      %1407 = vmatpush1.msra.mxu0 0.0
      %1408 = vmatprep.subr.mxu0 0.0
      %1409 = vmatpush1.msra.mxu0 0.0
      %1410 = vmatprep.subr.mxu0 0.0
      %1411 = vmatpush1.msra.mxu0 0.0
      %1412 = vmatprep.subr.mxu0 0.0
      %1413 = vmatpush1.msra.mxu0 0.0
      %1414 = vmatprep.subr.mxu0 0.0
      %1415 = vmatpush1.msra.mxu0 0.0
      %1416 = vmatprep.subr.mxu0 0.0
      %1417 = vmatpush1.msra.mxu0 0.0
      %1418 = vmatprep.subr.mxu0 0.0
      %1419 = vmatpush1.msra.mxu0 0.0
      %1420 = vmatprep.subr.mxu0 0.0
      %1421 = vmatpush1.msra.mxu0 0.0
      %1422 = vmatprep.subr.mxu0 0.0
      %1423 = vmatpush1.msra.mxu0 0.0
      %1424 = vmatprep.subr.mxu0 0.0
      %1425 = vmatpush1.msra.mxu0 0.0
      %1426 = vmatprep.subr.mxu0 0.0
      %1427 = vmatpush1.msra.mxu0 0.0
      %1428 = vmatprep.mubr.f32.mxu0 0.0
      %1429 = vmatmul.mubr.f32.gmra.mrb[0].mxu0 %v1362
      %v1430 = vpop.f32.mrb[0].mxu0
      %v1431 = vadd.f32 0.0, %v1430
      %v1432 = vpop.f32.mrb[0].mxu0
      %1433 = vdwg.mxu0
      %1435 = vrot.lane.b32.xlu0 %v1431, 64
      %v1436 = vpop.permute.xlu0 %1435
      %v1438 = vadd.f32 %v1356, %v1436
      %v1439 = vld [vmem:[%s19] sm:$0x1]
      %v1441 = vlaneseq
      %v1442 = vshrl.u32 %v1441, 7
      %v1443 = vsub.s32 0, %v1442
      %v1444 = vrot.slane %v1439, %v1443
      %1445 = vrot.lane.b32.xlu0 %v1444, 64
      %v1446 = vpop.permute.xlu0 %1445
      %v1448 = vadd.f32 %v1438, %v1446
      %1450 = vrot.lane.b32.xlu0 %v1448, 64
      %v1451 = vpop.permute.xlu0 %1450
      %v1453 = vsel %vm1176, %v1451, 0.0
      %1454 = vadd.xlane.f32.xlu0 %v1453
      %v1455 = vpop.xlane.xlu0 %1454
      %v1456 = vrcp.pop 32.0
      %v1457 = vmul.f32 %v1455, %v1456
      %v1458 = vsub.f32 %v1448, %v1457
      %v1459 = vmul.f32 %v1458, %v1458
      %1461 = vrot.lane.b32.xlu0 %v1459, 64
      %v1462 = vpop.permute.xlu0 %1461
      %v1464 = vsel %vm1176, %v1462, 0.0
      %1465 = vadd.xlane.f32.xlu0 %v1464
      %v1466 = vpop.xlane.xlu0 %1465
      %v1467 = vmul.f32 %v1466, %v1456
      %v1468 = vadd.f32 %v1467, 1e-05
      %v1469 = vrsqrt.pop %v1468
      %v1470 = vmul.f32 %v1458, %v1469
      %v1471 = vld [vmem:[%s21] sm:$0x1]
      %v1473 = vlaneseq
      %v1474 = vshrl.u32 %v1473, 7
      %v1475 = vsub.s32 0, %v1474
      %v1476 = vrot.slane %v1471, %v1475
      %1477 = vrot.lane.b32.xlu0 %v1476, 64
      %v1478 = vpop.permute.xlu0 %1477
      %v1480 = vmul.f32 %v1470, %v1478
      %v1481 = vld [vmem:[%s23] sm:$0x1]
      %v1483 = vlaneseq
      %v1484 = vshrl.u32 %v1483, 7
      %v1485 = vsub.s32 0, %v1484
      %v1486 = vrot.slane %v1481, %v1485
      %1487 = vrot.lane.b32.xlu0 %v1486, 64
      %v1488 = vpop.permute.xlu0 %1487
      %v1490 = vadd.f32 %v1480, %v1488
      %v1491 = vmax.f32 %v1490, 0.0
      %v1492 = vld [vmem:[%s25] sm:$0xff]
      %v1493 = vld [vmem:[%s25 + $0x8] sm:$0xff]
      %v1494 = vld [vmem:[%s25 + $0x10] sm:$0xff]
      %v1495 = vld [vmem:[%s25 + $0x18] sm:$0xff]
      %1497 = vrot.lane.b32.xlu0 %v1491, 64
      %v1498 = vpop.permute.xlu0 %1497
      %v1499 = vsel %vm1176, %v1498, 0
      %1501 = vmatprep.subr.mxu0 0.0
      %1502 = vmatpush1.msra.mxu0 %v1492
      %1503 = vmatprep.subr.mxu0 0.0
      %1504 = vmatpush1.msra.mxu0 %v1493
      %1505 = vmatprep.subr.mxu0 0.0
      %1506 = vmatpush1.msra.mxu0 %v1494
      %1507 = vmatprep.subr.mxu0 0.0
      %1508 = vmatpush1.msra.mxu0 %v1495
      %1509 = vmatprep.subr.mxu0 0.0
      %1510 = vmatpush1.msra.mxu0 0.0
      %1511 = vmatprep.subr.mxu0 0.0
      %1512 = vmatpush1.msra.mxu0 0.0
      %1513 = vmatprep.subr.mxu0 0.0
      %1514 = vmatpush1.msra.mxu0 0.0
      %1515 = vmatprep.subr.mxu0 0.0
      %1516 = vmatpush1.msra.mxu0 0.0
      %1517 = vmatprep.subr.mxu0 0.0
      %1518 = vmatpush1.msra.mxu0 0.0
      %1519 = vmatprep.subr.mxu0 0.0
      %1520 = vmatpush1.msra.mxu0 0.0
      %1521 = vmatprep.subr.mxu0 0.0
      %1522 = vmatpush1.msra.mxu0 0.0
      %1523 = vmatprep.subr.mxu0 0.0
      %1524 = vmatpush1.msra.mxu0 0.0
      %1525 = vmatprep.subr.mxu0 0.0
      %1526 = vmatpush1.msra.mxu0 0.0
      %1527 = vmatprep.subr.mxu0 0.0
      %1528 = vmatpush1.msra.mxu0 0.0
      %1529 = vmatprep.subr.mxu0 0.0
      %1530 = vmatpush1.msra.mxu0 0.0
      %1531 = vmatprep.subr.mxu0 0.0
      %1532 = vmatpush1.msra.mxu0 0.0
      %1533 = vmatprep.subr.mxu0 0.0
      %1534 = vmatpush1.msra.mxu0 0.0
      %1535 = vmatprep.subr.mxu0 0.0
      %1536 = vmatpush1.msra.mxu0 0.0
      %1537 = vmatprep.subr.mxu0 0.0
      %1538 = vmatpush1.msra.mxu0 0.0
      %1539 = vmatprep.subr.mxu0 0.0
      %1540 = vmatpush1.msra.mxu0 0.0
      %1541 = vmatprep.subr.mxu0 0.0
      %1542 = vmatpush1.msra.mxu0 0.0
      %1543 = vmatprep.subr.mxu0 0.0
      %1544 = vmatpush1.msra.mxu0 0.0
      %1545 = vmatprep.subr.mxu0 0.0
      %1546 = vmatpush1.msra.mxu0 0.0
      %1547 = vmatprep.subr.mxu0 0.0
      %1548 = vmatpush1.msra.mxu0 0.0
      %1549 = vmatprep.subr.mxu0 0.0
      %1550 = vmatpush1.msra.mxu0 0.0
      %1551 = vmatprep.subr.mxu0 0.0
      %1552 = vmatpush1.msra.mxu0 0.0
      %1553 = vmatprep.subr.mxu0 0.0
      %1554 = vmatpush1.msra.mxu0 0.0
      %1555 = vmatprep.subr.mxu0 0.0
      %1556 = vmatpush1.msra.mxu0 0.0
      %1557 = vmatprep.subr.mxu0 0.0
      %1558 = vmatpush1.msra.mxu0 0.0
      %1559 = vmatprep.subr.mxu0 0.0
      %1560 = vmatpush1.msra.mxu0 0.0
      %1561 = vmatprep.subr.mxu0 0.0
      %1562 = vmatpush1.msra.mxu0 0.0
      %1563 = vmatprep.subr.mxu0 0.0
      %1564 = vmatpush1.msra.mxu0 0.0
      %1565 = vmatprep.mubr.f32.mxu0 0.0
      %1566 = vmatmul.mubr.f32.gmra.mrb[0].mxu0 %v1499
      %v1567 = vpop.f32.mrb[0].mxu0
      %v1568 = vadd.f32 0.0, %v1567
      %v1569 = vpop.f32.mrb[0].mxu0
      %1570 = vdwg.mxu0
      %v1571 = vadd.f32 %v1170, %v1568
      %v1572 = vld [vmem:[%s27] sm:$0x1]
      %v1574 = vlaneseq
      %v1575 = vshrl.u32 %v1574, 7
      %v1576 = vsub.s32 0, %v1575
      %v1577 = vrot.slane %v1572, %v1576
      %v1579 = vadd.f32 %v1571, %v1577
      %1580 = vst.msk [vmem:[%s971] sm:$0xff] %vm1176, %v1579
      %v1581 = vld [vmem:[%s29] sm:$0xff]
      %v1582 = vld [vmem:[%s29 + $0x8] sm:$0xff]
      %v1583 = vld [vmem:[%s29 + $0x10] sm:$0xff]
      %v1584 = vld [vmem:[%s29 + $0x18] sm:$0xff]
      %v1585 = vld [vmem:[%s31] sm:$0x1]
      %v1587 = vlaneseq
      %v1588 = vshrl.u32 %v1587, 7
      %v1589 = vsub.s32 0, %v1588
      %v1590 = vrot.slane %v1585, %v1589
      %1592 = vrot.lane.b32.xlu0 %v1081, 96
      %v1593 = vpop.permute.xlu0 %1592
      %v1594 = vsel %vm1176, %v1593, 0
      %1596 = vmatprep.subr.mxu0 0.0
      %1597 = vmatpush1.msra.mxu0 %v1581
      %1598 = vmatprep.subr.mxu0 0.0
      %1599 = vmatpush1.msra.mxu0 %v1582
      %1600 = vmatprep.subr.mxu0 0.0
      %1601 = vmatpush1.msra.mxu0 %v1583
      %1602 = vmatprep.subr.mxu0 0.0
      %1603 = vmatpush1.msra.mxu0 %v1584
      %1604 = vmatprep.subr.mxu0 0.0
      %1605 = vmatpush1.msra.mxu0 0.0
      %1606 = vmatprep.subr.mxu0 0.0
      %1607 = vmatpush1.msra.mxu0 0.0
      %1608 = vmatprep.subr.mxu0 0.0
      %1609 = vmatpush1.msra.mxu0 0.0
      %1610 = vmatprep.subr.mxu0 0.0
      %1611 = vmatpush1.msra.mxu0 0.0
      %1612 = vmatprep.subr.mxu0 0.0
      %1613 = vmatpush1.msra.mxu0 0.0
      %1614 = vmatprep.subr.mxu0 0.0
      %1615 = vmatpush1.msra.mxu0 0.0
      %1616 = vmatprep.subr.mxu0 0.0
      %1617 = vmatpush1.msra.mxu0 0.0
      %1618 = vmatprep.subr.mxu0 0.0
      %1619 = vmatpush1.msra.mxu0 0.0
      %1620 = vmatprep.subr.mxu0 0.0
      %1621 = vmatpush1.msra.mxu0 0.0
      %1622 = vmatprep.subr.mxu0 0.0
      %1623 = vmatpush1.msra.mxu0 0.0
      %1624 = vmatprep.subr.mxu0 0.0
      %1625 = vmatpush1.msra.mxu0 0.0
      %1626 = vmatprep.subr.mxu0 0.0
      %1627 = vmatpush1.msra.mxu0 0.0
      %1628 = vmatprep.subr.mxu0 0.0
      %1629 = vmatpush1.msra.mxu0 0.0
      %1630 = vmatprep.subr.mxu0 0.0
      %1631 = vmatpush1.msra.mxu0 0.0
      %1632 = vmatprep.subr.mxu0 0.0
      %1633 = vmatpush1.msra.mxu0 0.0
      %1634 = vmatprep.subr.mxu0 0.0
      %1635 = vmatpush1.msra.mxu0 0.0
      %1636 = vmatprep.subr.mxu0 0.0
      %1637 = vmatpush1.msra.mxu0 0.0
      %1638 = vmatprep.subr.mxu0 0.0
      %1639 = vmatpush1.msra.mxu0 0.0
      %1640 = vmatprep.subr.mxu0 0.0
      %1641 = vmatpush1.msra.mxu0 0.0
      %1642 = vmatprep.subr.mxu0 0.0
      %1643 = vmatpush1.msra.mxu0 0.0
      %1644 = vmatprep.subr.mxu0 0.0
      %1645 = vmatpush1.msra.mxu0 0.0
      %1646 = vmatprep.subr.mxu0 0.0
      %1647 = vmatpush1.msra.mxu0 0.0
      %1648 = vmatprep.subr.mxu0 0.0
      %1649 = vmatpush1.msra.mxu0 0.0
      %1650 = vmatprep.subr.mxu0 0.0
      %1651 = vmatpush1.msra.mxu0 0.0
      %1652 = vmatprep.subr.mxu0 0.0
      %1653 = vmatpush1.msra.mxu0 0.0
      %1654 = vmatprep.subr.mxu0 0.0
      %1655 = vmatpush1.msra.mxu0 0.0
      %1656 = vmatprep.subr.mxu0 0.0
      %1657 = vmatpush1.msra.mxu0 0.0
      %1658 = vmatprep.subr.mxu0 0.0
      %1659 = vmatpush1.msra.mxu0 0.0
      %1660 = vmatprep.mubr.f32.mxu0 0.0
      %1661 = vmatmul.mubr.f32.gmra.mrb[0].mxu0 %v1594
      %v1662 = vpop.f32.mrb[0].mxu0
      %v1663 = vadd.f32 %v1590, %v1662
      %v1664 = vpop.f32.mrb[0].mxu0
      %1665 = vdwg.mxu0
      %v1666 = vmax.f32 %v1663, 0.0
      %v1667 = vld [vmem:[%s33] sm:$0xff]
      %v1668 = vld [vmem:[%s33 + $0x8] sm:$0xff]
      %v1669 = vld [vmem:[%s33 + $0x10] sm:$0xff]
      %v1670 = vld [vmem:[%s33 + $0x18] sm:$0xff]
      %v1671 = vld [vmem:[%s35] sm:$0x1]
      %v1673 = vlaneseq
      %v1674 = vshrl.u32 %v1673, 7
      %v1675 = vsub.s32 0, %v1674
      %v1676 = vrot.slane %v1671, %v1675
      %v1679 = vsel %vm1176, %v1666, 0
      %1681 = vmatprep.subr.mxu0 0.0
      %1682 = vmatpush1.msra.mxu0 %v1667
      %1683 = vmatprep.subr.mxu0 0.0
      %1684 = vmatpush1.msra.mxu0 %v1668
      %1685 = vmatprep.subr.mxu0 0.0
      %1686 = vmatpush1.msra.mxu0 %v1669
      %1687 = vmatprep.subr.mxu0 0.0
      %1688 = vmatpush1.msra.mxu0 %v1670
      %1689 = vmatprep.subr.mxu0 0.0
      %1690 = vmatpush1.msra.mxu0 0.0
      %1691 = vmatprep.subr.mxu0 0.0
      %1692 = vmatpush1.msra.mxu0 0.0
      %1693 = vmatprep.subr.mxu0 0.0
      %1694 = vmatpush1.msra.mxu0 0.0
      %1695 = vmatprep.subr.mxu0 0.0
      %1696 = vmatpush1.msra.mxu0 0.0
      %1697 = vmatprep.subr.mxu0 0.0
      %1698 = vmatpush1.msra.mxu0 0.0
      %1699 = vmatprep.subr.mxu0 0.0
      %1700 = vmatpush1.msra.mxu0 0.0
      %1701 = vmatprep.subr.mxu0 0.0
      %1702 = vmatpush1.msra.mxu0 0.0
      %1703 = vmatprep.subr.mxu0 0.0
      %1704 = vmatpush1.msra.mxu0 0.0
      %1705 = vmatprep.subr.mxu0 0.0
      %1706 = vmatpush1.msra.mxu0 0.0
      %1707 = vmatprep.subr.mxu0 0.0
      %1708 = vmatpush1.msra.mxu0 0.0
      %1709 = vmatprep.subr.mxu0 0.0
      %1710 = vmatpush1.msra.mxu0 0.0
      %1711 = vmatprep.subr.mxu0 0.0
      %1712 = vmatpush1.msra.mxu0 0.0
      %1713 = vmatprep.subr.mxu0 0.0
      %1714 = vmatpush1.msra.mxu0 0.0
      %1715 = vmatprep.subr.mxu0 0.0
      %1716 = vmatpush1.msra.mxu0 0.0
      %1717 = vmatprep.subr.mxu0 0.0
      %1718 = vmatpush1.msra.mxu0 0.0
      %1719 = vmatprep.subr.mxu0 0.0
      %1720 = vmatpush1.msra.mxu0 0.0
      %1721 = vmatprep.subr.mxu0 0.0
      %1722 = vmatpush1.msra.mxu0 0.0
      %1723 = vmatprep.subr.mxu0 0.0
      %1724 = vmatpush1.msra.mxu0 0.0
      %1725 = vmatprep.subr.mxu0 0.0
      %1726 = vmatpush1.msra.mxu0 0.0
      %1727 = vmatprep.subr.mxu0 0.0
      %1728 = vmatpush1.msra.mxu0 0.0
      %1729 = vmatprep.subr.mxu0 0.0
      %1730 = vmatpush1.msra.mxu0 0.0
      %1731 = vmatprep.subr.mxu0 0.0
      %1732 = vmatpush1.msra.mxu0 0.0
      %1733 = vmatprep.subr.mxu0 0.0
      %1734 = vmatpush1.msra.mxu0 0.0
      %1735 = vmatprep.subr.mxu0 0.0
      %1736 = vmatpush1.msra.mxu0 0.0
      %1737 = vmatprep.subr.mxu0 0.0
      %1738 = vmatpush1.msra.mxu0 0.0
      %1739 = vmatprep.subr.mxu0 0.0
      %1740 = vmatpush1.msra.mxu0 0.0
      %1741 = vmatprep.subr.mxu0 0.0
      %1742 = vmatpush1.msra.mxu0 0.0
      %1743 = vmatprep.subr.mxu0 0.0
      %1744 = vmatpush1.msra.mxu0 0.0
      %1745 = vmatprep.mubr.f32.mxu0 0.0
      %1746 = vmatmul.mubr.f32.gmra.mrb[0].mxu0 %v1679
      %v1747 = vpop.f32.mrb[0].mxu0
      %v1748 = vadd.f32 %v1676, %v1747
      %v1749 = vpop.f32.mrb[0].mxu0
      %1750 = vdwg.mxu0
      %v1751 = vld [vmem:[%s37] sm:$0xff]
      %v1752 = vld [vmem:[%s37 + $0x8] sm:$0xff]
      %v1753 = vld [vmem:[%s37 + $0x10] sm:$0xff]
      %v1754 = vld [vmem:[%s37 + $0x18] sm:$0xff]
      %v1755 = vld [vmem:[%s39] sm:$0x1]
      %v1757 = vlaneseq
      %v1758 = vshrl.u32 %v1757, 7
      %v1759 = vsub.s32 0, %v1758
      %v1760 = vrot.slane %v1755, %v1759
      %1762 = vrot.lane.b32.xlu0 %v1167, 96
      %v1763 = vpop.permute.xlu0 %1762
      %v1764 = vsel %vm1176, %v1763, 0
      %1766 = vmatprep.subr.mxu0 0.0
      %1767 = vmatpush1.msra.mxu0 %v1751
      %1768 = vmatprep.subr.mxu0 0.0
      %1769 = vmatpush1.msra.mxu0 %v1752
      %1770 = vmatprep.subr.mxu0 0.0
      %1771 = vmatpush1.msra.mxu0 %v1753
      %1772 = vmatprep.subr.mxu0 0.0
      %1773 = vmatpush1.msra.mxu0 %v1754
      %1774 = vmatprep.subr.mxu0 0.0
      %1775 = vmatpush1.msra.mxu0 0.0
      %1776 = vmatprep.subr.mxu0 0.0
      %1777 = vmatpush1.msra.mxu0 0.0
      %1778 = vmatprep.subr.mxu0 0.0
      %1779 = vmatpush1.msra.mxu0 0.0
      %1780 = vmatprep.subr.mxu0 0.0
      %1781 = vmatpush1.msra.mxu0 0.0
      %1782 = vmatprep.subr.mxu0 0.0
      %1783 = vmatpush1.msra.mxu0 0.0
      %1784 = vmatprep.subr.mxu0 0.0
      %1785 = vmatpush1.msra.mxu0 0.0
      %1786 = vmatprep.subr.mxu0 0.0
      %1787 = vmatpush1.msra.mxu0 0.0
      %1788 = vmatprep.subr.mxu0 0.0
      %1789 = vmatpush1.msra.mxu0 0.0
      %1790 = vmatprep.subr.mxu0 0.0
      %1791 = vmatpush1.msra.mxu0 0.0
      %1792 = vmatprep.subr.mxu0 0.0
      %1793 = vmatpush1.msra.mxu0 0.0
      %1794 = vmatprep.subr.mxu0 0.0
      %1795 = vmatpush1.msra.mxu0 0.0
      %1796 = vmatprep.subr.mxu0 0.0
      %1797 = vmatpush1.msra.mxu0 0.0
      %1798 = vmatprep.subr.mxu0 0.0
      %1799 = vmatpush1.msra.mxu0 0.0
      %1800 = vmatprep.subr.mxu0 0.0
      %1801 = vmatpush1.msra.mxu0 0.0
      %1802 = vmatprep.subr.mxu0 0.0
      %1803 = vmatpush1.msra.mxu0 0.0
      %1804 = vmatprep.subr.mxu0 0.0
      %1805 = vmatpush1.msra.mxu0 0.0
      %1806 = vmatprep.subr.mxu0 0.0
      %1807 = vmatpush1.msra.mxu0 0.0
      %1808 = vmatprep.subr.mxu0 0.0
      %1809 = vmatpush1.msra.mxu0 0.0
      %1810 = vmatprep.subr.mxu0 0.0
      %1811 = vmatpush1.msra.mxu0 0.0
      %1812 = vmatprep.subr.mxu0 0.0
      %1813 = vmatpush1.msra.mxu0 0.0
      %1814 = vmatprep.subr.mxu0 0.0
      %1815 = vmatpush1.msra.mxu0 0.0
      %1816 = vmatprep.subr.mxu0 0.0
      %1817 = vmatpush1.msra.mxu0 0.0
      %1818 = vmatprep.subr.mxu0 0.0
      %1819 = vmatpush1.msra.mxu0 0.0
      %1820 = vmatprep.subr.mxu0 0.0
      %1821 = vmatpush1.msra.mxu0 0.0
      %1822 = vmatprep.subr.mxu0 0.0
      %1823 = vmatpush1.msra.mxu0 0.0
      %1824 = vmatprep.subr.mxu0 0.0
      %1825 = vmatpush1.msra.mxu0 0.0
      %1826 = vmatprep.subr.mxu0 0.0
      %1827 = vmatpush1.msra.mxu0 0.0
      %1828 = vmatprep.subr.mxu0 0.0
      %1829 = vmatpush1.msra.mxu0 0.0
      %1830 = vmatprep.mubr.f32.mxu0 0.0
      %1831 = vmatmul.mubr.f32.gmra.mrb[0].mxu0 %v1764
      %v1832 = vpop.f32.mrb[0].mxu0
      %v1833 = vadd.f32 %v1760, %v1832
      %v1834 = vpop.f32.mrb[0].mxu0
      %1835 = vdwg.mxu0
      %v1836 = vmax.f32 %v1833, 0.0
      %v1837 = vld [vmem:[%s41] sm:$0xff]
      %v1838 = vld [vmem:[%s41 + $0x8] sm:$0xff]
      %v1839 = vld [vmem:[%s41 + $0x10] sm:$0xff]
      %v1840 = vld [vmem:[%s41 + $0x18] sm:$0xff]
      %v1841 = vld [vmem:[%s43] sm:$0x1]
      %v1843 = vlaneseq
      %v1844 = vshrl.u32 %v1843, 7
      %v1845 = vsub.s32 0, %v1844
      %v1846 = vrot.slane %v1841, %v1845
      %v1849 = vsel %vm1176, %v1836, 0
      %1851 = vmatprep.subr.mxu0 0.0
      %1852 = vmatpush1.msra.mxu0 %v1837
      %1853 = vmatprep.subr.mxu0 0.0
      %1854 = vmatpush1.msra.mxu0 %v1838
      %1855 = vmatprep.subr.mxu0 0.0
      %1856 = vmatpush1.msra.mxu0 %v1839
      %1857 = vmatprep.subr.mxu0 0.0
      %1858 = vmatpush1.msra.mxu0 %v1840
      %1859 = vmatprep.subr.mxu0 0.0
      %1860 = vmatpush1.msra.mxu0 0.0
      %1861 = vmatprep.subr.mxu0 0.0
      %1862 = vmatpush1.msra.mxu0 0.0
      %1863 = vmatprep.subr.mxu0 0.0
      %1864 = vmatpush1.msra.mxu0 0.0
      %1865 = vmatprep.subr.mxu0 0.0
      %1866 = vmatpush1.msra.mxu0 0.0
      %1867 = vmatprep.subr.mxu0 0.0
      %1868 = vmatpush1.msra.mxu0 0.0
      %1869 = vmatprep.subr.mxu0 0.0
      %1870 = vmatpush1.msra.mxu0 0.0
      %1871 = vmatprep.subr.mxu0 0.0
      %1872 = vmatpush1.msra.mxu0 0.0
      %1873 = vmatprep.subr.mxu0 0.0
      %1874 = vmatpush1.msra.mxu0 0.0
      %1875 = vmatprep.subr.mxu0 0.0
      %1876 = vmatpush1.msra.mxu0 0.0
      %1877 = vmatprep.subr.mxu0 0.0
      %1878 = vmatpush1.msra.mxu0 0.0
      %1879 = vmatprep.subr.mxu0 0.0
      %1880 = vmatpush1.msra.mxu0 0.0
      %1881 = vmatprep.subr.mxu0 0.0
      %1882 = vmatpush1.msra.mxu0 0.0
      %1883 = vmatprep.subr.mxu0 0.0
      %1884 = vmatpush1.msra.mxu0 0.0
      %1885 = vmatprep.subr.mxu0 0.0
      %1886 = vmatpush1.msra.mxu0 0.0
      %1887 = vmatprep.subr.mxu0 0.0
      %1888 = vmatpush1.msra.mxu0 0.0
      %1889 = vmatprep.subr.mxu0 0.0
      %1890 = vmatpush1.msra.mxu0 0.0
      %1891 = vmatprep.subr.mxu0 0.0
      %1892 = vmatpush1.msra.mxu0 0.0
      %1893 = vmatprep.subr.mxu0 0.0
      %1894 = vmatpush1.msra.mxu0 0.0
      %1895 = vmatprep.subr.mxu0 0.0
      %1896 = vmatpush1.msra.mxu0 0.0
      %1897 = vmatprep.subr.mxu0 0.0
      %1898 = vmatpush1.msra.mxu0 0.0
      %1899 = vmatprep.subr.mxu0 0.0
      %1900 = vmatpush1.msra.mxu0 0.0
      %1901 = vmatprep.subr.mxu0 0.0
      %1902 = vmatpush1.msra.mxu0 0.0
      %1903 = vmatprep.subr.mxu0 0.0
      %1904 = vmatpush1.msra.mxu0 0.0
      %1905 = vmatprep.subr.mxu0 0.0
      %1906 = vmatpush1.msra.mxu0 0.0
      %1907 = vmatprep.subr.mxu0 0.0
      %1908 = vmatpush1.msra.mxu0 0.0
      %1909 = vmatprep.subr.mxu0 0.0
      %1910 = vmatpush1.msra.mxu0 0.0
      %1911 = vmatprep.subr.mxu0 0.0
      %1912 = vmatpush1.msra.mxu0 0.0
      %1913 = vmatprep.subr.mxu0 0.0
      %1914 = vmatpush1.msra.mxu0 0.0
      %1915 = vmatprep.mubr.f32.mxu0 0.0
      %1916 = vmatmul.mubr.f32.gmra.mrb[0].mxu0 %v1849
      %v1917 = vpop.f32.mrb[0].mxu0
      %v1918 = vadd.f32 %v1846, %v1917
      %v1919 = vpop.f32.mrb[0].mxu0
      %1920 = vdwg.mxu0
      %v1921 = vld [vmem:[%s45] sm:$0xff]
      %v1922 = vld [vmem:[%s45 + $0x8] sm:$0xff]
      %v1923 = vld [vmem:[%s45 + $0x10] sm:$0xff]
      %v1924 = vld [vmem:[%s45 + $0x18] sm:$0xff]
      %v1926 = vsel %vm1176, %v1579, 0
      %1928 = vmatprep.subr.mxu0 0.0
      %1929 = vmatpush1.msra.mxu0 %v1921
      %1930 = vmatprep.subr.mxu0 0.0
      %1931 = vmatpush1.msra.mxu0 %v1922
      %1932 = vmatprep.subr.mxu0 0.0
      %1933 = vmatpush1.msra.mxu0 %v1923
      %1934 = vmatprep.subr.mxu0 0.0
      %1935 = vmatpush1.msra.mxu0 %v1924
      %1936 = vmatprep.subr.mxu0 0.0
      %1937 = vmatpush1.msra.mxu0 0.0
      %1938 = vmatprep.subr.mxu0 0.0
      %1939 = vmatpush1.msra.mxu0 0.0
      %1940 = vmatprep.subr.mxu0 0.0
      %1941 = vmatpush1.msra.mxu0 0.0
      %1942 = vmatprep.subr.mxu0 0.0
      %1943 = vmatpush1.msra.mxu0 0.0
      %1944 = vmatprep.subr.mxu0 0.0
      %1945 = vmatpush1.msra.mxu0 0.0
      %1946 = vmatprep.subr.mxu0 0.0
      %1947 = vmatpush1.msra.mxu0 0.0
      %1948 = vmatprep.subr.mxu0 0.0
      %1949 = vmatpush1.msra.mxu0 0.0
      %1950 = vmatprep.subr.mxu0 0.0
      %1951 = vmatpush1.msra.mxu0 0.0
      %1952 = vmatprep.subr.mxu0 0.0
      %1953 = vmatpush1.msra.mxu0 0.0
      %1954 = vmatprep.subr.mxu0 0.0
      %1955 = vmatpush1.msra.mxu0 0.0
      %1956 = vmatprep.subr.mxu0 0.0
      %1957 = vmatpush1.msra.mxu0 0.0
      %1958 = vmatprep.subr.mxu0 0.0
      %1959 = vmatpush1.msra.mxu0 0.0
      %1960 = vmatprep.subr.mxu0 0.0
      %1961 = vmatpush1.msra.mxu0 0.0
      %1962 = vmatprep.subr.mxu0 0.0
      %1963 = vmatpush1.msra.mxu0 0.0
      %1964 = vmatprep.subr.mxu0 0.0
      %1965 = vmatpush1.msra.mxu0 0.0
      %1966 = vmatprep.subr.mxu0 0.0
      %1967 = vmatpush1.msra.mxu0 0.0
      %1968 = vmatprep.subr.mxu0 0.0
      %1969 = vmatpush1.msra.mxu0 0.0
      %1970 = vmatprep.subr.mxu0 0.0
      %1971 = vmatpush1.msra.mxu0 0.0
      %1972 = vmatprep.subr.mxu0 0.0
      %1973 = vmatpush1.msra.mxu0 0.0
      %1974 = vmatprep.subr.mxu0 0.0
      %1975 = vmatpush1.msra.mxu0 0.0
      %1976 = vmatprep.subr.mxu0 0.0
      %1977 = vmatpush1.msra.mxu0 0.0
      %1978 = vmatprep.subr.mxu0 0.0
      %1979 = vmatpush1.msra.mxu0 0.0
      %1980 = vmatprep.subr.mxu0 0.0
      %1981 = vmatpush1.msra.mxu0 0.0
      %1982 = vmatprep.subr.mxu0 0.0
      %1983 = vmatpush1.msra.mxu0 0.0
      %1984 = vmatprep.subr.mxu0 0.0
      %1985 = vmatpush1.msra.mxu0 0.0
      %1986 = vmatprep.subr.mxu0 0.0
      %1987 = vmatpush1.msra.mxu0 0.0
      %1988 = vmatprep.subr.mxu0 0.0
      %1989 = vmatpush1.msra.mxu0 0.0
      %1990 = vmatprep.subr.mxu0 0.0
      %1991 = vmatpush1.msra.mxu0 0.0
      %1992 = vmatprep.mubr.f32.mxu0 0.0
      %1993 = vmatmul.mubr.f32.gmra.mrb[0].mxu0 %v1926
      %v1994 = vpop.f32.mrb[0].mxu0
      %v1995 = vadd.f32 0.0, %v1994
      %v1996 = vpop.f32.mrb[0].mxu0
      %1997 = vdwg.mxu0
      %v1998 = vmul.f32 %v1748, %v1918
      %v1999 = vld [vmem:[%s47] sm:$0xff]
      %v2000 = vld [vmem:[%s47 + $0x8] sm:$0xff]
      %v2001 = vld [vmem:[%s47 + $0x10] sm:$0xff]
      %v2002 = vld [vmem:[%s47 + $0x18] sm:$0xff]
      %v2004 = vsel %vm1176, %v1998, 0
      %2006 = vmatprep.subr.mxu0 0.0
      %2007 = vmatpush1.msra.mxu0 %v1999
      %2008 = vmatprep.subr.mxu0 0.0
      %2009 = vmatpush1.msra.mxu0 %v2000
      %2010 = vmatprep.subr.mxu0 0.0
      %2011 = vmatpush1.msra.mxu0 %v2001
      %2012 = vmatprep.subr.mxu0 0.0
      %2013 = vmatpush1.msra.mxu0 %v2002
      %2014 = vmatprep.subr.mxu0 0.0
      %2015 = vmatpush1.msra.mxu0 0.0
      %2016 = vmatprep.subr.mxu0 0.0
      %2017 = vmatpush1.msra.mxu0 0.0
      %2018 = vmatprep.subr.mxu0 0.0
      %2019 = vmatpush1.msra.mxu0 0.0
      %2020 = vmatprep.subr.mxu0 0.0
      %2021 = vmatpush1.msra.mxu0 0.0
      %2022 = vmatprep.subr.mxu0 0.0
      %2023 = vmatpush1.msra.mxu0 0.0
      %2024 = vmatprep.subr.mxu0 0.0
      %2025 = vmatpush1.msra.mxu0 0.0
      %2026 = vmatprep.subr.mxu0 0.0
      %2027 = vmatpush1.msra.mxu0 0.0
      %2028 = vmatprep.subr.mxu0 0.0
      %2029 = vmatpush1.msra.mxu0 0.0
      %2030 = vmatprep.subr.mxu0 0.0
      %2031 = vmatpush1.msra.mxu0 0.0
      %2032 = vmatprep.subr.mxu0 0.0
      %2033 = vmatpush1.msra.mxu0 0.0
      %2034 = vmatprep.subr.mxu0 0.0
      %2035 = vmatpush1.msra.mxu0 0.0
      %2036 = vmatprep.subr.mxu0 0.0
      %2037 = vmatpush1.msra.mxu0 0.0
      %2038 = vmatprep.subr.mxu0 0.0
      %2039 = vmatpush1.msra.mxu0 0.0
      %2040 = vmatprep.subr.mxu0 0.0
      %2041 = vmatpush1.msra.mxu0 0.0
      %2042 = vmatprep.subr.mxu0 0.0
      %2043 = vmatpush1.msra.mxu0 0.0
      %2044 = vmatprep.subr.mxu0 0.0
      %2045 = vmatpush1.msra.mxu0 0.0
      %2046 = vmatprep.subr.mxu0 0.0
      %2047 = vmatpush1.msra.mxu0 0.0
      %2048 = vmatprep.subr.mxu0 0.0
      %2049 = vmatpush1.msra.mxu0 0.0
      %2050 = vmatprep.subr.mxu0 0.0
      %2051 = vmatpush1.msra.mxu0 0.0
      %2052 = vmatprep.subr.mxu0 0.0
      %2053 = vmatpush1.msra.mxu0 0.0
      %2054 = vmatprep.subr.mxu0 0.0
      %2055 = vmatpush1.msra.mxu0 0.0
      %2056 = vmatprep.subr.mxu0 0.0
      %2057 = vmatpush1.msra.mxu0 0.0
      %2058 = vmatprep.subr.mxu0 0.0
      %2059 = vmatpush1.msra.mxu0 0.0
      %2060 = vmatprep.subr.mxu0 0.0
      %2061 = vmatpush1.msra.mxu0 0.0
      %2062 = vmatprep.subr.mxu0 0.0
      %2063 = vmatpush1.msra.mxu0 0.0
      %2064 = vmatprep.subr.mxu0 0.0
      %2065 = vmatpush1.msra.mxu0 0.0
      %2066 = vmatprep.subr.mxu0 0.0
      %2067 = vmatpush1.msra.mxu0 0.0
      %2068 = vmatprep.subr.mxu0 0.0
      %2069 = vmatpush1.msra.mxu0 0.0
      %2070 = vmatprep.mubr.f32.mxu0 0.0
      %2071 = vmatmul.mubr.f32.gmra.mrb[0].mxu0 %v2004
      %v2072 = vpop.f32.mrb[0].mxu0
      %v2073 = vadd.f32 0.0, %v2072
      %v2074 = vpop.f32.mrb[0].mxu0
      %2075 = vdwg.mxu0
      %v2076 = vmul.f32 %v1995, %v2073
      %v2077 = vld [vmem:[%s49] sm:$0xff]
      %v2078 = vld [vmem:[%s49 + $0x8] sm:$0xff]
      %v2079 = vld [vmem:[%s49 + $0x10] sm:$0xff]
      %v2080 = vld [vmem:[%s49 + $0x18] sm:$0xff]
      %v2081 = vld [vmem:[%s51] sm:$0x1]
      %v2083 = vlaneseq
      %v2084 = vshrl.u32 %v2083, 7
      %v2085 = vsub.s32 0, %v2084
      %v2086 = vrot.slane %v2081, %v2085
      %v2089 = vsel %vm1176, %v2076, 0
      %2091 = vmatprep.subr.mxu0 0.0
      %2092 = vmatpush1.msra.mxu0 %v2077
      %2093 = vmatprep.subr.mxu0 0.0
      %2094 = vmatpush1.msra.mxu0 %v2078
      %2095 = vmatprep.subr.mxu0 0.0
      %2096 = vmatpush1.msra.mxu0 %v2079
      %2097 = vmatprep.subr.mxu0 0.0
      %2098 = vmatpush1.msra.mxu0 %v2080
      %2099 = vmatprep.subr.mxu0 0.0
      %2100 = vmatpush1.msra.mxu0 0.0
      %2101 = vmatprep.subr.mxu0 0.0
      %2102 = vmatpush1.msra.mxu0 0.0
      %2103 = vmatprep.subr.mxu0 0.0
      %2104 = vmatpush1.msra.mxu0 0.0
      %2105 = vmatprep.subr.mxu0 0.0
      %2106 = vmatpush1.msra.mxu0 0.0
      %2107 = vmatprep.subr.mxu0 0.0
      %2108 = vmatpush1.msra.mxu0 0.0
      %2109 = vmatprep.subr.mxu0 0.0
      %2110 = vmatpush1.msra.mxu0 0.0
      %2111 = vmatprep.subr.mxu0 0.0
      %2112 = vmatpush1.msra.mxu0 0.0
      %2113 = vmatprep.subr.mxu0 0.0
      %2114 = vmatpush1.msra.mxu0 0.0
      %2115 = vmatprep.subr.mxu0 0.0
      %2116 = vmatpush1.msra.mxu0 0.0
      %2117 = vmatprep.subr.mxu0 0.0
      %2118 = vmatpush1.msra.mxu0 0.0
      %2119 = vmatprep.subr.mxu0 0.0
      %2120 = vmatpush1.msra.mxu0 0.0
      %2121 = vmatprep.subr.mxu0 0.0
      %2122 = vmatpush1.msra.mxu0 0.0
      %2123 = vmatprep.subr.mxu0 0.0
      %2124 = vmatpush1.msra.mxu0 0.0
      %2125 = vmatprep.subr.mxu0 0.0
      %2126 = vmatpush1.msra.mxu0 0.0
      %2127 = vmatprep.subr.mxu0 0.0
      %2128 = vmatpush1.msra.mxu0 0.0
      %2129 = vmatprep.subr.mxu0 0.0
      %2130 = vmatpush1.msra.mxu0 0.0
      %2131 = vmatprep.subr.mxu0 0.0
      %2132 = vmatpush1.msra.mxu0 0.0
      %2133 = vmatprep.subr.mxu0 0.0
      %2134 = vmatpush1.msra.mxu0 0.0
      %2135 = vmatprep.subr.mxu0 0.0
      %2136 = vmatpush1.msra.mxu0 0.0
      %2137 = vmatprep.subr.mxu0 0.0
      %2138 = vmatpush1.msra.mxu0 0.0
      %2139 = vmatprep.subr.mxu0 0.0
      %2140 = vmatpush1.msra.mxu0 0.0
      %2141 = vmatprep.subr.mxu0 0.0
      %2142 = vmatpush1.msra.mxu0 0.0
      %2143 = vmatprep.subr.mxu0 0.0
      %2144 = vmatpush1.msra.mxu0 0.0
      %2145 = vmatprep.subr.mxu0 0.0
      %2146 = vmatpush1.msra.mxu0 0.0
      %2147 = vmatprep.subr.mxu0 0.0
      %2148 = vmatpush1.msra.mxu0 0.0
      %2149 = vmatprep.subr.mxu0 0.0
      %2150 = vmatpush1.msra.mxu0 0.0
      %2151 = vmatprep.subr.mxu0 0.0
      %2152 = vmatpush1.msra.mxu0 0.0
      %2153 = vmatprep.subr.mxu0 0.0
      %2154 = vmatpush1.msra.mxu0 0.0
      %2155 = vmatprep.mubr.f32.mxu0 0.0
      %2156 = vmatmul.mubr.f32.gmra.mrb[0].mxu0 %v2089
      %v2157 = vpop.f32.mrb[0].mxu0
      %v2158 = vadd.f32 %v2086, %v2157
      %v2159 = vpop.f32.mrb[0].mxu0
      %2160 = vdwg.mxu0
      %v2161 = vmax.f32 %v2158, 0.0
      %v2162 = vld [vmem:[%s53] sm:$0x1]
      %v2164 = vlaneseq
      %v2165 = vshrl.u32 %v2164, 7
      %v2166 = vsub.s32 0, %v2165
      %v2167 = vrot.slane %v2162, %v2166
      %v2169 = vmul.f32 %v2161, %v2167
      %v2170 = vsel %vm1176, %v2169, 0.0
      %2171 = vadd.xlane.f32.xlu0 %v2170
      %v2172 = vpop.xlane.xlu0 %2171
      %v2173 = vld [vmem:[#allocation2] sm:$0x1]
      %v2175 = vlaneseq
      %v2176 = vshrl.u32 %v2175, 7
      %v2177 = vsub.s32 0, %v2176
      %v2178 = vrot.slane %v2173, %v2177
      %v2180 = vadd.f32 %v2172, %v2178
      %v2181 = vsub.f32 %v1081, %v1167
      %v2182 = vmul.f32 %v2181, %v2181
      %2184 = vrot.lane.b32.xlu0 %v2182, 32
      %v2185 = vpop.permute.xlu0 %2184
      %vm2187 = vcmask 64512
      %v2188 = vsel %vm2187, %v2185, 0.0
      %2189 = vadd.xlane.f32.xlu0 %v2188
      %v2190 = vpop.xlane.xlu0 %2189
      %v2191 = vrsqrt.pop %v2190
      %v2192 = vmul.f32 %v2190, %v2191
      %vm2193 = vcmp.eq.f32.partialorder %v2190, inf
      %v2194 = vsel %vm2193, %v2190, %v2192
      %vm2195 = vcmp.eq.f32.partialorder %v2190, 0.0
      %v2196 = vand.u32 %v2190, 2147483648
      %v2197 = vsel %vm2195, %v2196, %v2194
      %v2198 = vadd.f32 %v2197, 1.0
      %v2199 = vmul.f32 %v2197, %v2198
      %2201 = vset.pattern.permute.xlu0 0
      %2202 = vperm.xlu0 %2201, %v2180
      %v2203 = vpop.permute.xlu0 %2202
      %v2205 = vmul.f32 %v2203, %v2181
      %v2206 = vmax.f32 %v2199, 1e-20
      %v2207 = vrcp.pop %v2206
      %v2208 = vmul.f32 1.0, %v2207
      %v2209 = vmul.f32 %v2205, %v2208
      %v2210 = vld [vmem:[%s977] sm:$0xff]
      %2212 = vrot.lane.b32.xlu0 %v2209, 32
      %v2213 = vpop.permute.xlu0 %2212
      %2215 = vxpose.xlu0.b32.start [1/16] %v2213, 128
      %2216 = vxpose.xlu0.b32.cont [2/16] 0.0, 128
      %2217 = vxpose.xlu0.b32.cont [3/16] 0.0, 128
      %2218 = vxpose.xlu0.b32.cont [4/16] 0.0, 128
      %2219 = vxpose.xlu0.b32.cont [5/16] 0.0, 128
      %2220 = vxpose.xlu0.b32.cont [6/16] 0.0, 128
      %2221 = vxpose.xlu0.b32.cont [7/16] 0.0, 128
      %2222 = vxpose.xlu0.b32.cont [8/16] 0.0, 128
      %2223 = vxpose.xlu0.b32.cont [9/16] 0.0, 128
      %2224 = vxpose.xlu0.b32.cont [10/16] 0.0, 128
      %2225 = vxpose.xlu0.b32.cont [11/16] 0.0, 128
      %2226 = vxpose.xlu0.b32.cont [12/16] 0.0, 128
      %2227 = vxpose.xlu0.b32.cont [13/16] 0.0, 128
      %2228 = vxpose.xlu0.b32.cont [14/16] 0.0, 128
      %2229 = vxpose.xlu0.b32.cont [15/16] 0.0, 128
      %2230 = vxpose.xlu0.b32.end [16/16] 0.0, 128
      %v2231 = vpop.trf.xlu0
      %v2232 = vpop.trf.xlu0
      %v2233 = vpop.trf.xlu0
      %v2234 = vpop.trf.xlu0
      %v2235 = vpop.trf.xlu0
      %v2236 = vpop.trf.xlu0
      %v2237 = vpop.trf.xlu0
      %v2238 = vpop.trf.xlu0
      %v2239 = vpop.trf.xlu0
      %v2240 = vpop.trf.xlu0
      %v2241 = vpop.trf.xlu0
      %v2242 = vpop.trf.xlu0
      %v2243 = vpop.trf.xlu0
      %v2244 = vpop.trf.xlu0
      %v2245 = vpop.trf.xlu0
      %v2246 = vpop.trf.xlu0
      %v2248 = vsel %vm2187, %v2231, 0
      %2250 = vmatprep.subr.mxu0 0.0
      %2251 = vmatpush1.msra.mxu0 %v991
      %2252 = vmatprep.subr.mxu0 0.0
      %2253 = vmatpush1.msra.mxu0 0.0
      %2254 = vmatprep.subr.mxu0 0.0
      %2255 = vmatpush1.msra.mxu0 0.0
      %2256 = vmatprep.subr.mxu0 0.0
      %2257 = vmatpush1.msra.mxu0 0.0
      %2258 = vmatprep.subr.mxu0 0.0
      %2259 = vmatpush1.msra.mxu0 0.0
      %2260 = vmatprep.subr.mxu0 0.0
      %2261 = vmatpush1.msra.mxu0 0.0
      %2262 = vmatprep.subr.mxu0 0.0
      %2263 = vmatpush1.msra.mxu0 0.0
      %2264 = vmatprep.subr.mxu0 0.0
      %2265 = vmatpush1.msra.mxu0 0.0
      %2266 = vmatprep.subr.mxu0 0.0
      %2267 = vmatpush1.msra.mxu0 0.0
      %2268 = vmatprep.subr.mxu0 0.0
      %2269 = vmatpush1.msra.mxu0 0.0
      %2270 = vmatprep.subr.mxu0 0.0
      %2271 = vmatpush1.msra.mxu0 0.0
      %2272 = vmatprep.subr.mxu0 0.0
      %2273 = vmatpush1.msra.mxu0 0.0
      %2274 = vmatprep.subr.mxu0 0.0
      %2275 = vmatpush1.msra.mxu0 0.0
      %2276 = vmatprep.subr.mxu0 0.0
      %2277 = vmatpush1.msra.mxu0 0.0
      %2278 = vmatprep.subr.mxu0 0.0
      %2279 = vmatpush1.msra.mxu0 0.0
      %2280 = vmatprep.subr.mxu0 0.0
      %2281 = vmatpush1.msra.mxu0 0.0
      %2282 = vmatprep.subr.mxu0 0.0
      %2283 = vmatpush1.msra.mxu0 0.0
      %2284 = vmatprep.subr.mxu0 0.0
      %2285 = vmatpush1.msra.mxu0 0.0
      %2286 = vmatprep.subr.mxu0 0.0
      %2287 = vmatpush1.msra.mxu0 0.0
      %2288 = vmatprep.subr.mxu0 0.0
      %2289 = vmatpush1.msra.mxu0 0.0
      %2290 = vmatprep.subr.mxu0 0.0
      %2291 = vmatpush1.msra.mxu0 0.0
      %2292 = vmatprep.subr.mxu0 0.0
      %2293 = vmatpush1.msra.mxu0 0.0
      %2294 = vmatprep.subr.mxu0 0.0
      %2295 = vmatpush1.msra.mxu0 0.0
      %2296 = vmatprep.subr.mxu0 0.0
      %2297 = vmatpush1.msra.mxu0 0.0
      %2298 = vmatprep.subr.mxu0 0.0
      %2299 = vmatpush1.msra.mxu0 0.0
      %2300 = vmatprep.subr.mxu0 0.0
      %2301 = vmatpush1.msra.mxu0 0.0
      %2302 = vmatprep.subr.mxu0 0.0
      %2303 = vmatpush1.msra.mxu0 0.0
      %2304 = vmatprep.subr.mxu0 0.0
      %2305 = vmatpush1.msra.mxu0 0.0
      %2306 = vmatprep.subr.mxu0 0.0
      %2307 = vmatpush1.msra.mxu0 0.0
      %2308 = vmatprep.subr.mxu0 0.0
      %2309 = vmatpush1.msra.mxu0 0.0
      %2310 = vmatprep.subr.mxu0 0.0
      %2311 = vmatpush1.msra.mxu0 0.0
      %2312 = vmatprep.subr.mxu0 0.0
      %2313 = vmatpush1.msra.mxu0 0.0
      %2314 = vmatprep.mubr.f32.mxu0 0.0
      %2315 = vmatmul.mubr.f32.gmra.mrb[0].mxu0 %v2248
      %v2316 = vpop.f32.mrb[0].mxu0
      %v2317 = vadd.f32 0.0, %v2316
      %v2318 = vpop.f32.mrb[0].mxu0
      %2319 = vdwg.mxu0
      %v2320 = vadd.f32 %v2210, %v2317
      %2321 = vst [vmem:[%s977] sm:$0xff] %v2320
      %s2322 = smul.u32 %s77, 2
      %s2323 = sadd.s32 %s2322, %s78
      %p2324 = scmp.lt.s32.totalorder %s2323, 3
      %s2325 = scalar_select %p2324, %s2323, 3
      %s2326 = smul.addr %s2325, 8
      %s2327 = scalar_lea.vmem %s57, %s2326
      %p2328 = scmp.lt.s32.totalorder %s77, 1
      %s2329 = scalar_select %p2328, %s77, 1
      %s2330 = smul.addr %s2329, 8
      %s2331 = scalar_lea.vmem %s59, %s2330
      // Predicated region
      $region137: #{node_edge_net_forward.8} parent=131 // pred_check
        %p2332 = pneg %p713
      $region138: #{node_edge_net_forward.8} parent=131 // pred_check_branch
        %2334 = sbr.rel (%p2332) target = $region140
      $region139: #{node_edge_net_forward.8} parent=131 // pred_region
        %s2335 = smul.u32 %s77, 2
        %s2336 = sadd.s32 %s2335, %s78
      $region140: #{node_edge_net_forward.8} parent=131 // pred_fallthru
        _
      // Predicated region
      $region141: #{node_edge_net_forward.8} parent=131 // pred_check
        %p2337 = pneg %p739
      $region142: #{node_edge_net_forward.8} parent=131 // pred_check_branch
        %2339 = sbr.rel (%p2337) target = $region144
      $region143: #{node_edge_net_forward.8} parent=131 // pred_region
        _
      $region144: #{node_edge_net_forward.8} parent=131 // pred_fallthru
        _
    $region132: #{node_edge_net_forward.8} parent=5 // pred_fallthru
      _
    %p2340 = scmp.le.s32.totalorder 2, %s68
    // Predicated region
    $region145: #{node_edge_net_forward.8} parent=5 // pred_check
      %p2341 = pneg %p2340
    $region146: #{node_edge_net_forward.8} parent=5 // pred_check_branch
      %2343 = sbr.rel (%p2341) target = $region148
    $region147: #{node_edge_net_forward.8} parent=5 // pred_region
      %s2344 = ssub.s32 %s68, 2
      // Predicated region
      $region149: #{node_edge_net_forward.8} parent=147 // pred_check
        %p2345 = pneg %p719
      $region150: #{node_edge_net_forward.8} parent=147 // pred_check_branch
        %2347 = sbr.rel (%p2345) target = $region152
      $region151: #{node_edge_net_forward.8} parent=147 // pred_region
        %s2348 = smul.u32 %s79, 2
        %s2349 = sadd.s32 %s2348, %s80
        %p2350 = scmp.lt.s32.totalorder %s2349, 3
        %s2351 = scalar_select %p2350, %s2349, 3
        %s2352 = smul.addr %s2351, 8
        %s2353 = scalar_lea.vmem %s57, %s2352
      $region152: #{node_edge_net_forward.8} parent=147 // pred_fallthru
        _
      // Predicated region
      $region153: #{node_edge_net_forward.8} parent=147 // pred_check
        %p2354 = pneg %p745
      $region154: #{node_edge_net_forward.8} parent=147 // pred_check_branch
        %2356 = sbr.rel (%p2354) target = $region156
      $region155: #{node_edge_net_forward.8} parent=147 // pred_region
        %p2357 = scmp.lt.s32.totalorder %s79, 1
        %s2358 = scalar_select %p2357, %s79, 1
        %s2359 = smul.addr %s2358, 8
        %s2360 = scalar_lea.vmem %s59, %s2359
      $region156: #{node_edge_net_forward.8} parent=147 // pred_fallthru
        _
    $region148: #{node_edge_net_forward.8} parent=5 // pred_fallthru
      _
  $region6: #{node_edge_net_forward.8} parent=0 // loop_footer
    %s72 = sadd.s32 1, %s68
  $region7: #{node_edge_net_forward.8} parent=0 // loop_footer_branch
    %67 = sbr.rel target = $region3
  $region8: #{node_edge_net_forward.8} parent=0 // loop_exit
    _

</llo_original>
